<compile_context>
chip_gen: v6e
topology: v6e:2x2x1
jax: 0.10.0
libtpu: 0.0.40
codegen_flags: <defaults>
</compile_context>

<pallas_src>
import functools
import math

import jax
import jax.numpy as jnp
from jax.experimental import pallas as pl
from jax.experimental.pallas import tpu as pltpu


# ------------------------------- fused kernel --------------------------------

def _sigmoid(x):
    # sigmoid(x) = 0.5*(tanh(0.5x)+1): routes gate nonlinearities through the EUP tanh path.
    return 0.5 * (jnp.tanh(0.5 * x) + 1.0)


def _slim_kernel(
    # data
    e_ref, ov_ref, iv_ref, avg_ref, x_ref, eps_ref,
    # caption-encoder self-attention weights
    wq_ref, bq_ref, wk_ref, bk_ref, wv_ref, bv_ref,
    # viewpoint encoder / representation MLP / target-viewpoint encoder weights
    vwp_w_ref, vwp_b_ref, w1c_ref, w1v_ref, b1_ref, w2_ref, b2_ref,
    tvw_ref, tvb_ref,
    # DRAW encoder LSTM (fused (K, 4*hd) gate weights, rows split by input segment)
    ewx_x_ref, ewx_xh_ref, ewx_hd_ref, ewx_ctv_ref, ewx_cr_ref, ewh_ref, eb_ref,
    # DRAW decoder LSTM
    dwx_z_ref, dwx_ctv_ref, dwx_cr_ref, dwh_ref, db_ref,
    # posterior (mu|logvar) + canvas write weights
    qw_ref, qb_ref, ww_ref, wb_ref,
    # outputs
    recon_ref, stats_ref,
    *, iters, hd, zd, scale, inv_two_sigma_sq, nll_const):
    f32 = jnp.float32

    # ---------- caption encoder: batched QKV + self-attention + mean over tokens ----------
    e3 = e_ref[...]                                   # (BN, T, d)
    bn, t_len, d = e3.shape
    e2 = e3.reshape(bn * t_len, d)                    # T == 8 sublanes -> layout-free merge
    q = (jnp.dot(e2, wq_ref[...], preferred_element_type=f32) + bq_ref[...]).reshape(bn, t_len, d)
    k = (jnp.dot(e2, wk_ref[...], preferred_element_type=f32) + bk_ref[...]).reshape(bn, t_len, d)
    v = (jnp.dot(e2, wv_ref[...], preferred_element_type=f32) + bv_ref[...]).reshape(bn, t_len, d)
    # TODO(synk): no padding mask over T (reference SLIM may mask padded caption tokens).
    s = jnp.einsum('btd,bsd->bts', q, k, preferred_element_type=f32) * scale
    s = s - jnp.max(s, axis=-1, keepdims=True)
    ps = jnp.exp(s)
    attn = ps * pl.reciprocal(jnp.sum(ps, axis=-1, keepdims=True), approx=True)
    ctx = jnp.einsum('bts,bsd->btd', attn, v, preferred_element_type=f32)   # (BN, T, d)
    cpt_mean = jnp.sum(ctx, axis=1) * (1.0 / t_len)                          # (BN, d)

    # ---------- viewpoint encoder + representation MLP + per-scene mean + target view ----
    vw = jnp.dot(ov_ref[...], vwp_w_ref[...], preferred_element_type=f32) + vwp_b_ref[...]
    h = (jnp.dot(cpt_mean, w1c_ref[...], preferred_element_type=f32)
         + jnp.dot(vw, w1v_ref[...], preferred_element_type=f32) + b1_ref[...])
    h = jnp.maximum(h, 0.0)
    hout = jnp.dot(h, w2_ref[...], preferred_element_type=f32) + b2_ref[...]     # (BN, S)
    r = jnp.dot(avg_ref[...], hout, preferred_element_type=f32)                  # (B, S) scene mean
    tv = jnp.dot(iv_ref[...], tvw_ref[...], preferred_element_type=f32) + tvb_ref[...]  # (B, E)
    # cond = [tv | r] is never concatenated: its gate weights are split by row block.

    # ---------- DRAW recurrence (grid collapsed; state lives in vregs) --------------------
    x = x_ref[...]                                    # (B, D)
    b, dpix = x.shape
    ewx_x = ewx_x_ref[...]; ewx_xh = ewx_xh_ref[...]
    ewx_hd = ewx_hd_ref[...]; ewh = ewh_ref[...]; eb = eb_ref[...]
    dwx_z = dwx_z_ref[...]; dwh = dwh_ref[...]; db = db_ref[...]
    qw = qw_ref[...]; qb = qb_ref[...]; ww = ww_ref[...]; wb = wb_ref[...]

    # loop-invariant gate contributions hoisted out of the recurrence
    xg_e = jnp.dot(x.astype(ewx_x.dtype), ewx_x, preferred_element_type=f32)
    cg_e = (jnp.dot(tv, ewx_ctv_ref[...], preferred_element_type=f32)
            + jnp.dot(r, ewx_cr_ref[...], preferred_element_type=f32))
    cg_d = (jnp.dot(tv, dwx_ctv_ref[...], preferred_element_type=f32)
            + jnp.dot(r, dwx_cr_ref[...], preferred_element_type=f32))

    canvas = jnp.zeros((b, dpix), f32)
    h_e = jnp.zeros((b, hd), f32)
    c_e = jnp.zeros((b, hd), f32)
    h_d = jnp.zeros((b, hd), f32)
    c_d = jnp.zeros((b, hd), f32)
    kl = jnp.zeros((b, 1), f32)

    # iters == 4: a static Python loop here produces exactly the fully-unrolled recurrence a
    # lax.fori_loop(..., unroll=True) would, with static eps indexing and vreg-resident state.
    for t in range(iters):
        x_hat = x - _sigmoid(canvas)
        eg = (xg_e
              + jnp.dot(x_hat.astype(ewx_xh.dtype), ewx_xh, preferred_element_type=f32)
              + jnp.dot(h_d, ewx_hd, preferred_element_type=f32)
              + cg_e
              + jnp.dot(h_e, ewh, preferred_element_type=f32)
              + eb)                                                    # (B, 4*hd) lane-dense
        i_e = _sigmoid(eg[:, 0 * hd:1 * hd])
        f_e = _sigmoid(eg[:, 1 * hd:2 * hd])
        g_e = jnp.tanh(eg[:, 2 * hd:3 * hd])
        o_e = _sigmoid(eg[:, 3 * hd:4 * hd])
        c_e = f_e * c_e + i_e * g_e
        h_e = o_e * jnp.tanh(c_e)

        # posterior (columns ordered [mu | logvar]), reparameterization, KL
        qv = jnp.dot(h_e, qw, preferred_element_type=f32) + qb          # (B, 2*zd)
        mu = qv[:, :zd]
        logvar = qv[:, zd:]
        z = mu + jnp.exp(0.5 * logvar) * eps_ref[t]
        kl = kl + 0.5 * jnp.sum(mu * mu + jnp.exp(logvar) - logvar - 1.0,
                                axis=1, keepdims=True)

        dg = (jnp.dot(z, dwx_z, preferred_element_type=f32)
              + cg_d
              + jnp.dot(h_d, dwh, preferred_element_type=f32)
              + db)
        i_d = _sigmoid(dg[:, 0 * hd:1 * hd])
        f_d = _sigmoid(dg[:, 1 * hd:2 * hd])
        g_d = jnp.tanh(dg[:, 2 * hd:3 * hd])
        o_d = _sigmoid(dg[:, 3 * hd:4 * hd])
        c_d = f_d * c_d + i_d * g_d
        h_d = o_d * jnp.tanh(c_d)

        canvas = canvas + jnp.dot(h_d.astype(ww.dtype), ww, preferred_element_type=f32) + wb

    recon = _sigmoid(canvas)
    recon_ref[...] = recon
    diff = x - recon
    nll = jnp.sum(diff * diff, axis=1, keepdims=True) * inv_two_sigma_sq + nll_const
    # single (B, 2) output [kl | nll]; built with a select (no lane concatenate needed)
    col = jax.lax.broadcasted_iota(jnp.int32, (b, 2), 1)
    stats_ref[...] = jnp.where(col == 0, kl, nll)


# ----------------------------- parameter creation ----------------------------

def _xavier_uniform(key, shape):
    fan_in, fan_out = shape
    lim = math.sqrt(6.0 / (fan_in + fan_out))
    return jax.random.uniform(key, shape, jnp.float32, -lim, lim)


def _torch_linear(key, in_f, out_f):
    k1, k2 = jax.random.split(key)
    bound = 1.0 / math.sqrt(in_f)
    w = jax.random.uniform(k1, (in_f, out_f), jnp.float32, -bound, bound)
    b = jax.random.uniform(k2, (out_f,), jnp.float32, -bound, bound)
    return w, b


def init_slim_params(hp, key):
    """Arrays only (no Python scalars) so the dict is a clean jit pytree."""
    keys = jax.random.split(key, 14)
    d = hp["cptn_embs_sz"]; E = hp["vwp_embd_sz"]; S = hp["scnr_dim"]; H = hp["scnr_hidden_dim"]
    V = hp["vwp_size"]
    D = hp["image_color"] * hp["image_height"] * hp["image_width"]
    hd, zd = hp["draw_h_dim"], hp["draw_z_dim"]
    C = E + S
    p = {}

    # CaptionEncoder: token embedding + single-head self-attention
    p["cap_emb"] = 0.02 * jax.random.normal(keys[0], (hp["vocab_size"], d), jnp.float32)
    wq, bq = _torch_linear(keys[1], d, d); p["wq"], p["bq"] = wq, bq.reshape(1, d)
    wk, bk = _torch_linear(keys[2], d, d); p["wk"], p["bk"] = wk, bk.reshape(1, d)
    wv, bv = _torch_linear(keys[3], d, d); p["wv"], p["bv"] = wv, bv.reshape(1, d)

    # viewpoint / target-viewpoint encoders (xavier per SLIM.init_weights)
    p["vwp_w"] = _xavier_uniform(keys[4], (V, E)); p["vwp_b"] = jnp.zeros((1, E), jnp.float32)
    p["tvwp_w"] = _xavier_uniform(keys[5], (V, E)); p["tvwp_b"] = jnp.zeros((1, E), jnp.float32)

    # RepresentationNetwork MLP — w1 split into [caption | viewpoint] row blocks
    w1, b1 = _torch_linear(keys[6], d + E, H)
    w2, b2 = _torch_linear(keys[7], H, S)
    p["rep_w1c"], p["rep_w1v"], p["rep_b1"] = w1[:d], w1[d:], b1.reshape(1, H)
    p["rep_w2"], p["rep_b2"] = w2, b2.reshape(1, S)

    # DRAW — fused-gate layout (K, 4*hd), column blocks [i|f|g|o], rows split by input segment
    enc_in = 2 * D + hd + C                 # [x, x_hat, h_dec, cond]
    dec_in = zd + C                         # [z, cond]
    enc_wx, enc_b = _torch_linear(keys[8], enc_in, 4 * hd)
    enc_wh, _ = _torch_linear(keys[9], hd, 4 * hd)
    dec_wx, dec_b = _torch_linear(keys[10], dec_in, 4 * hd)
    dec_wh, _ = _torch_linear(keys[11], hd, 4 * hd)
    q_w, q_b = _torch_linear(keys[12], hd, 2 * zd)        # columns: [mu | logvar]
    write_w, write_b = _torch_linear(keys[13], hd, D)

    p["enc_wx_x"] = enc_wx[:D].astype(jnp.bfloat16)            # bf16: large D-dim weights
    p["enc_wx_xh"] = enc_wx[D:2 * D].astype(jnp.bfloat16)
    p["enc_wx_hd"] = enc_wx[2 * D:2 * D + hd]
    p["enc_wx_ctv"] = enc_wx[2 * D + hd:2 * D + hd + E]        # cond rows: target viewpoint
    p["enc_wx_cr"] = enc_wx[2 * D + hd + E:]                   # cond rows: scene representation
    p["enc_wh"] = enc_wh
    p["enc_b"] = enc_b.reshape(1, 4 * hd)
    p["dec_wx_z"] = dec_wx[:zd]
    p["dec_wx_ctv"] = dec_wx[zd:zd + E]
    p["dec_wx_cr"] = dec_wx[zd + E:]
    p["dec_wh"] = dec_wh
    p["dec_b"] = dec_b.reshape(1, 4 * hd)
    p["q_w"] = q_w
    p["q_b"] = q_b.reshape(1, 2 * zd)
    p["write_w"] = write_w.astype(jnp.bfloat16)
    p["write_b"] = write_b.reshape(1, D)
    # TODO(synk): draw_initc_tunning=True (cond-dependent initial LSTM state) not implemented.
    return p


# -------------------------------- model forward -------------------------------

def slim_forward(params, images, img_view, other_views, tokens, key, *, hp, s):
    """SLIM.forward with pretrain=None.  Returns (reconstruction, KL, NLL)."""
    B, n, T = tokens.shape
    d = hp["cptn_embs_sz"]
    hd, zd, iters = hp["draw_h_dim"], hp["draw_z_dim"], hp["draw_iter_num"]
    D = hp["image_color"] * hp["image_height"] * hp["image_width"]

    tokens_flat = tokens.reshape(-1, T)
    e = jnp.take(params["cap_emb"], tokens_flat, axis=0)                 # (B*n, T, d) gather (XLA)
    ov = other_views.reshape(-1, other_views.shape[-1]).astype(jnp.float32)
    x_flat = images.reshape(images.shape[0], -1).astype(jnp.float32)     # NCHW -> (B, C*H*W)
    avg = jnp.repeat(jnp.eye(B, dtype=jnp.float32), n, axis=1) / float(n)  # (B, B*n) scene mean
    eps = jax.random.normal(key, (iters, B, zd), jnp.float32)            # whole slab, VMEM-resident

    kernel = functools.partial(
        _slim_kernel,
        iters=iters, hd=hd, zd=zd,
        scale=1.0 / math.sqrt(float(d)),
        inv_two_sigma_sq=1.0 / (2.0 * s * s),
        nll_const=0.5 * float(D) * math.log(2.0 * math.pi * s * s))

    # Single launch, no grid: every operand is a whole-array VMEM block (single-buffered).
    # TODO(synk): at realistic SLIM sizes (64x64x3 images, hd>=256) add K-tiling of the D
    # contraction and a 'parallel' batch grid axis (v7x 2nd TensorCore / 64 MiB VMEM).
    recon, stats = pl.pallas_call(
        kernel,
        out_shape=(jax.ShapeDtypeStruct((B, D), jnp.float32),
                   jax.ShapeDtypeStruct((B, 2), jnp.float32)),
        compiler_params=pltpu.CompilerParams(vmem_limit_bytes=32 * 1024 * 1024),
    )(e, ov, img_view.astype(jnp.float32), avg, x_flat, eps,
      params["wq"], params["bq"], params["wk"], params["bk"], params["wv"], params["bv"],
      params["vwp_w"], params["vwp_b"], params["rep_w1c"], params["rep_w1v"], params["rep_b1"],
      params["rep_w2"], params["rep_b2"], params["tvwp_w"], params["tvwp_b"],
      params["enc_wx_x"], params["enc_wx_xh"], params["enc_wx_hd"],
      params["enc_wx_ctv"], params["enc_wx_cr"], params["enc_wh"], params["enc_b"],
      params["dec_wx_z"], params["dec_wx_ctv"], params["dec_wx_cr"],
      params["dec_wh"], params["dec_b"],
      params["q_w"], params["q_b"], params["write_w"], params["write_b"])
    return recon, stats[:, 0], stats[:, 1]


# ------------------------------------- main -----------------------------------

if __name__ == "__main__":
    hp = dict(
        vwp_size=4, vwp_embd_sz=32,
        vocab_size=50, cptn_embs_sz=32,
        scnr_dim=32, scnr_hidden_dim=64,
        image_width=16, image_height=16, image_color=3,
        draw_iter_num=4, draw_h_dim=64, draw_z_dim=16,
        draw_initc_tunning=False,
    )
    B, n, T = 2, 3, 8

    root = jax.random.PRNGKey(0)
    k_param, k_img, k_view, k_oview, k_tok, k_noise = jax.random.split(root, 6)
    params = init_slim_params(hp, k_param)

    images = jax.random.uniform(
        k_img, (B, hp["image_color"], hp["image_height"], hp["image_width"]), jnp.float32)
    img_view = jax.random.normal(k_view, (B, hp["vwp_size"]), jnp.float32)
    other_views = jax.random.normal(k_oview, (B, n, hp["vwp_size"]), jnp.float32)
    tokens = jax.random.randint(k_tok, (B, n, T), 0, hp["vocab_size"], jnp.int32)

    # hp and sigma are Python constants (closure), not traced jit arguments.
    fwd = jax.jit(functools.partial(slim_forward, hp=hp, s=0.7))
    recon, kl, nll = fwd(params, images, img_view, other_views, tokens, k_noise)
    jax.block_until_ready((recon, kl, nll))

    D = hp["image_color"] * hp["image_height"] * hp["image_width"]
    assert recon.shape == (B, D) and kl.shape == (B,) and nll.shape == (B,)
    assert bool(jnp.all(jnp.isfinite(recon)))
    assert bool(jnp.all(jnp.isfinite(kl))) and bool(jnp.all(jnp.isfinite(nll)))
    print("KERNEL_OK")
</pallas_src>

<mosaic_0001>
module attributes {stable_mosaic.version = 11 : i64} {
  func.func @_slim_kernel(%arg0: memref<6x8x32xf32, #tpu.memory_space<vmem>>, %arg1: memref<6x4xf32, #tpu.memory_space<vmem>>, %arg2: memref<2x4xf32, #tpu.memory_space<vmem>>, %arg3: memref<2x6xf32, #tpu.memory_space<vmem>>, %arg4: memref<2x768xf32, #tpu.memory_space<vmem>>, %arg5: memref<4x2x16xf32, #tpu.memory_space<vmem>>, %arg6: memref<32x32xf32, #tpu.memory_space<vmem>>, %arg7: memref<1x32xf32, #tpu.memory_space<vmem>>, %arg8: memref<32x32xf32, #tpu.memory_space<vmem>>, %arg9: memref<1x32xf32, #tpu.memory_space<vmem>>, %arg10: memref<32x32xf32, #tpu.memory_space<vmem>>, %arg11: memref<1x32xf32, #tpu.memory_space<vmem>>, %arg12: memref<4x32xf32, #tpu.memory_space<vmem>>, %arg13: memref<1x32xf32, #tpu.memory_space<vmem>>, %arg14: memref<32x64xf32, #tpu.memory_space<vmem>>, %arg15: memref<32x64xf32, #tpu.memory_space<vmem>>, %arg16: memref<1x64xf32, #tpu.memory_space<vmem>>, %arg17: memref<64x32xf32, #tpu.memory_space<vmem>>, %arg18: memref<1x32xf32, #tpu.memory_space<vmem>>, %arg19: memref<4x32xf32, #tpu.memory_space<vmem>>, %arg20: memref<1x32xf32, #tpu.memory_space<vmem>>, %arg21: memref<768x256xbf16, #tpu.memory_space<vmem>>, %arg22: memref<768x256xbf16, #tpu.memory_space<vmem>>, %arg23: memref<64x256xf32, #tpu.memory_space<vmem>>, %arg24: memref<32x256xf32, #tpu.memory_space<vmem>>, %arg25: memref<32x256xf32, #tpu.memory_space<vmem>>, %arg26: memref<64x256xf32, #tpu.memory_space<vmem>>, %arg27: memref<1x256xf32, #tpu.memory_space<vmem>>, %arg28: memref<16x256xf32, #tpu.memory_space<vmem>>, %arg29: memref<32x256xf32, #tpu.memory_space<vmem>>, %arg30: memref<32x256xf32, #tpu.memory_space<vmem>>, %arg31: memref<64x256xf32, #tpu.memory_space<vmem>>, %arg32: memref<1x256xf32, #tpu.memory_space<vmem>>, %arg33: memref<64x32xf32, #tpu.memory_space<vmem>>, %arg34: memref<1x32xf32, #tpu.memory_space<vmem>>, %arg35: memref<64x768xbf16, #tpu.memory_space<vmem>>, %arg36: memref<1x768xf32, #tpu.memory_space<vmem>>, %arg37: memref<2x768xf32, #tpu.memory_space<vmem>>, %arg38: memref<2x2xf32, #tpu.memory_space<vmem>>) attributes {dimension_semantics = [], scalar_prefetch = 0 : i64, scratch_operands = 0 : i64, tpu.core_type = #tpu.core_type<tc>} {
    %c0 = arith.constant 0 : index
    %c0_0 = arith.constant 0 : index
    %c0_1 = arith.constant 0 : index
    %0 = vector.load %arg0[%c0, %c0_0, %c0_1] : memref<6x8x32xf32, #tpu.memory_space<vmem>>, vector<6x8x32xf32>
    %1 = vector.shape_cast %0 : vector<6x8x32xf32> to vector<48x32xf32>
    %c0_2 = arith.constant 0 : index
    %c0_3 = arith.constant 0 : index
    %2 = vector.load %arg6[%c0_2, %c0_3] : memref<32x32xf32, #tpu.memory_space<vmem>>, vector<32x32xf32>
    %cst = arith.constant dense<0.000000e+00> : vector<48x32xf32>
    %3 = tpu.matmul %1, %2, %cst {dimension_numbers = #tpu.dot_dimension_numbers<[1], [0], [0], [1], [0, 0, 1, 1], [], []>} : vector<48x32xf32>, vector<32x32xf32>, vector<48x32xf32> -> vector<48x32xf32>
    %c0_4 = arith.constant 0 : index
    %c0_5 = arith.constant 0 : index
    %4 = vector.load %arg7[%c0_4, %c0_5] : memref<1x32xf32, #tpu.memory_space<vmem>>, vector<1x32xf32>
    %5 = vector.broadcast %4 : vector<1x32xf32> to vector<48x32xf32>
    %6 = arith.addf %3, %5 : vector<48x32xf32>
    %7 = vector.shape_cast %6 : vector<48x32xf32> to vector<6x8x32xf32>
    %c0_6 = arith.constant 0 : index
    %c0_7 = arith.constant 0 : index
    %8 = vector.load %arg8[%c0_6, %c0_7] : memref<32x32xf32, #tpu.memory_space<vmem>>, vector<32x32xf32>
    %cst_8 = arith.constant dense<0.000000e+00> : vector<48x32xf32>
    %9 = tpu.matmul %1, %8, %cst_8 {dimension_numbers = #tpu.dot_dimension_numbers<[1], [0], [0], [1], [0, 0, 1, 1], [], []>} : vector<48x32xf32>, vector<32x32xf32>, vector<48x32xf32> -> vector<48x32xf32>
    %c0_9 = arith.constant 0 : index
    %c0_10 = arith.constant 0 : index
    %10 = vector.load %arg9[%c0_9, %c0_10] : memref<1x32xf32, #tpu.memory_space<vmem>>, vector<1x32xf32>
    %11 = vector.broadcast %10 : vector<1x32xf32> to vector<48x32xf32>
    %12 = arith.addf %9, %11 : vector<48x32xf32>
    %13 = vector.shape_cast %12 : vector<48x32xf32> to vector<6x8x32xf32>
    %c0_11 = arith.constant 0 : index
    %c0_12 = arith.constant 0 : index
    %14 = vector.load %arg10[%c0_11, %c0_12] : memref<32x32xf32, #tpu.memory_space<vmem>>, vector<32x32xf32>
    %cst_13 = arith.constant dense<0.000000e+00> : vector<48x32xf32>
    %15 = tpu.matmul %1, %14, %cst_13 {dimension_numbers = #tpu.dot_dimension_numbers<[1], [0], [0], [1], [0, 0, 1, 1], [], []>} : vector<48x32xf32>, vector<32x32xf32>, vector<48x32xf32> -> vector<48x32xf32>
    %c0_14 = arith.constant 0 : index
    %c0_15 = arith.constant 0 : index
    %16 = vector.load %arg11[%c0_14, %c0_15] : memref<1x32xf32, #tpu.memory_space<vmem>>, vector<1x32xf32>
    %17 = vector.broadcast %16 : vector<1x32xf32> to vector<48x32xf32>
    %18 = arith.addf %15, %17 : vector<48x32xf32>
    %19 = vector.shape_cast %18 : vector<48x32xf32> to vector<6x8x32xf32>
    "tpu.trace_start"() <{level = 10 : i32, message = "btd,bsd->bts"}> : () -> ()
    %cst_16 = arith.constant dense<0.000000e+00> : vector<6x8x8xf32>
    %20 = tpu.matmul %7, %13, %cst_16 {dimension_numbers = #tpu.dot_dimension_numbers<[2], [2], [1], [1], [0, 0, 0, 1, 1, 1], [0], [0]>} : vector<6x8x32xf32>, vector<6x8x32xf32>, vector<6x8x8xf32> -> vector<6x8x8xf32>
    "tpu.trace_stop"() : () -> ()
    %cst_17 = arith.constant 0.176776692 : f32
    %21 = vector.broadcast %cst_17 : f32 to vector<6x8x8xf32>
    %22 = arith.mulf %20, %21 : vector<6x8x8xf32>
    %cst_18 = arith.constant dense<0xFF800000> : vector<6x8xf32>
    %23 = vector.multi_reduction <maximumf>, %22, %cst_18 [2] : vector<6x8x8xf32> to vector<6x8xf32>
    %24 = vector.shape_cast %23 : vector<6x8xf32> to vector<6x8x1xf32>
    %25 = vector.broadcast %24 : vector<6x8x1xf32> to vector<6x8x8xf32>
    %26 = arith.subf %22, %25 : vector<6x8x8xf32>
    %27 = math.exp %26 : vector<6x8x8xf32>
    %cst_19 = arith.constant dense<0.000000e+00> : vector<6x8xf32>
    %28 = vector.multi_reduction <add>, %27, %cst_19 [2] : vector<6x8x8xf32> to vector<6x8xf32>
    %29 = vector.shape_cast %28 : vector<6x8xf32> to vector<6x8x1xf32>
    %30 = tpu.reciprocal %29 {approx = true} : vector<6x8x1xf32> -> vector<6x8x1xf32>
    %31 = vector.broadcast %30 : vector<6x8x1xf32> to vector<6x8x8xf32>
    %32 = arith.mulf %27, %31 : vector<6x8x8xf32>
    "tpu.trace_start"() <{level = 10 : i32, message = "bts,bsd->btd"}> : () -> ()
    %cst_20 = arith.constant dense<0.000000e+00> : vector<6x8x32xf32>
    %33 = tpu.matmul %32, %19, %cst_20 {dimension_numbers = #tpu.dot_dimension_numbers<[2], [1], [1], [2], [0, 0, 0, 1, 1, 2], [0], [0]>} : vector<6x8x8xf32>, vector<6x8x32xf32>, vector<6x8x32xf32> -> vector<6x8x32xf32>
    "tpu.trace_stop"() : () -> ()
    %cst_21 = arith.constant dense<0.000000e+00> : vector<6x32xf32>
    %34 = vector.multi_reduction <add>, %33, %cst_21 [1] : vector<6x8x32xf32> to vector<6x32xf32>
    %cst_22 = arith.constant 1.250000e-01 : f32
    %35 = vector.broadcast %cst_22 : f32 to vector<6x32xf32>
    %36 = arith.mulf %34, %35 : vector<6x32xf32>
    %c0_23 = arith.constant 0 : index
    %c0_24 = arith.constant 0 : index
    %37 = vector.load %arg1[%c0_23, %c0_24] : memref<6x4xf32, #tpu.memory_space<vmem>>, vector<6x4xf32>
    %c0_25 = arith.constant 0 : index
    %c0_26 = arith.constant 0 : index
    %38 = vector.load %arg12[%c0_25, %c0_26] : memref<4x32xf32, #tpu.memory_space<vmem>>, vector<4x32xf32>
    %cst_27 = arith.constant dense<0.000000e+00> : vector<6x32xf32>
    %39 = tpu.matmul %37, %38, %cst_27 {dimension_numbers = #tpu.dot_dimension_numbers<[1], [0], [0], [1], [0, 0, 1, 1], [], []>} : vector<6x4xf32>, vector<4x32xf32>, vector<6x32xf32> -> vector<6x32xf32>
    %c0_28 = arith.constant 0 : index
    %c0_29 = arith.constant 0 : index
    %40 = vector.load %arg13[%c0_28, %c0_29] : memref<1x32xf32, #tpu.memory_space<vmem>>, vector<1x32xf32>
    %41 = vector.broadcast %40 : vector<1x32xf32> to vector<6x32xf32>
    %42 = arith.addf %39, %41 : vector<6x32xf32>
    %c0_30 = arith.constant 0 : index
    %c0_31 = arith.constant 0 : index
    %43 = vector.load %arg14[%c0_30, %c0_31] : memref<32x64xf32, #tpu.memory_space<vmem>>, vector<32x64xf32>
    %cst_32 = arith.constant dense<0.000000e+00> : vector<6x64xf32>
    %44 = tpu.matmul %36, %43, %cst_32 {dimension_numbers = #tpu.dot_dimension_numbers<[1], [0], [0], [1], [0, 0, 1, 1], [], []>} : vector<6x32xf32>, vector<32x64xf32>, vector<6x64xf32> -> vector<6x64xf32>
    %c0_33 = arith.constant 0 : index
    %c0_34 = arith.constant 0 : index
    %45 = vector.load %arg15[%c0_33, %c0_34] : memref<32x64xf32, #tpu.memory_space<vmem>>, vector<32x64xf32>
    %cst_35 = arith.constant dense<0.000000e+00> : vector<6x64xf32>
    %46 = tpu.matmul %42, %45, %cst_35 {dimension_numbers = #tpu.dot_dimension_numbers<[1], [0], [0], [1], [0, 0, 1, 1], [], []>} : vector<6x32xf32>, vector<32x64xf32>, vector<6x64xf32> -> vector<6x64xf32>
    %47 = arith.addf %44, %46 : vector<6x64xf32>
    %c0_36 = arith.constant 0 : index
    %c0_37 = arith.constant 0 : index
    %48 = vector.load %arg16[%c0_36, %c0_37] : memref<1x64xf32, #tpu.memory_space<vmem>>, vector<1x64xf32>
    %49 = vector.broadcast %48 : vector<1x64xf32> to vector<6x64xf32>
    %50 = arith.addf %47, %49 : vector<6x64xf32>
    %cst_38 = arith.constant 0.000000e+00 : f32
    %51 = vector.broadcast %cst_38 : f32 to vector<6x64xf32>
    %52 = arith.maximumf %50, %51 : vector<6x64xf32>
    %c0_39 = arith.constant 0 : index
    %c0_40 = arith.constant 0 : index
    %53 = vector.load %arg17[%c0_39, %c0_40] : memref<64x32xf32, #tpu.memory_space<vmem>>, vector<64x32xf32>
    %cst_41 = arith.constant dense<0.000000e+00> : vector<6x32xf32>
    %54 = tpu.matmul %52, %53, %cst_41 {dimension_numbers = #tpu.dot_dimension_numbers<[1], [0], [0], [1], [0, 0, 1, 1], [], []>} : vector<6x64xf32>, vector<64x32xf32>, vector<6x32xf32> -> vector<6x32xf32>
    %c0_42 = arith.constant 0 : index
    %c0_43 = arith.constant 0 : index
    %55 = vector.load %arg18[%c0_42, %c0_43] : memref<1x32xf32, #tpu.memory_space<vmem>>, vector<1x32xf32>
    %56 = vector.broadcast %55 : vector<1x32xf32> to vector<6x32xf32>
    %57 = arith.addf %54, %56 : vector<6x32xf32>
    %c0_44 = arith.constant 0 : index
    %c0_45 = arith.constant 0 : index
    %58 = vector.load %arg3[%c0_44, %c0_45] : memref<2x6xf32, #tpu.memory_space<vmem>>, vector<2x6xf32>
    %cst_46 = arith.constant dense<0.000000e+00> : vector<2x32xf32>
    %59 = tpu.matmul %58, %57, %cst_46 {dimension_numbers = #tpu.dot_dimension_numbers<[1], [0], [0], [1], [0, 0, 1, 1], [], []>} : vector<2x6xf32>, vector<6x32xf32>, vector<2x32xf32> -> vector<2x32xf32>
    %c0_47 = arith.constant 0 : index
    %c0_48 = arith.constant 0 : index
    %60 = vector.load %arg2[%c0_47, %c0_48] : memref<2x4xf32, #tpu.memory_space<vmem>>, vector<2x4xf32>
    %c0_49 = arith.constant 0 : index
    %c0_50 = arith.constant 0 : index
    %61 = vector.load %arg19[%c0_49, %c0_50] : memref<4x32xf32, #tpu.memory_space<vmem>>, vector<4x32xf32>
    %cst_51 = arith.constant dense<0.000000e+00> : vector<2x32xf32>
    %62 = tpu.matmul %60, %61, %cst_51 {dimension_numbers = #tpu.dot_dimension_numbers<[1], [0], [0], [1], [0, 0, 1, 1], [], []>} : vector<2x4xf32>, vector<4x32xf32>, vector<2x32xf32> -> vector<2x32xf32>
    %c0_52 = arith.constant 0 : index
    %c0_53 = arith.constant 0 : index
    %63 = vector.load %arg20[%c0_52, %c0_53] : memref<1x32xf32, #tpu.memory_space<vmem>>, vector<1x32xf32>
    %64 = vector.broadcast %63 : vector<1x32xf32> to vector<2x32xf32>
    %65 = arith.addf %62, %64 : vector<2x32xf32>
    %c0_54 = arith.constant 0 : index
    %c0_55 = arith.constant 0 : index
    %66 = vector.load %arg4[%c0_54, %c0_55] : memref<2x768xf32, #tpu.memory_space<vmem>>, vector<2x768xf32>
    %c0_56 = arith.constant 0 : index
    %c0_57 = arith.constant 0 : index
    %67 = vector.load %arg21[%c0_56, %c0_57] : memref<768x256xbf16, #tpu.memory_space<vmem>>, vector<768x256xbf16>
    %c0_58 = arith.constant 0 : index
    %c0_59 = arith.constant 0 : index
    %68 = vector.load %arg22[%c0_58, %c0_59] : memref<768x256xbf16, #tpu.memory_space<vmem>>, vector<768x256xbf16>
    %c0_60 = arith.constant 0 : index
    %c0_61 = arith.constant 0 : index
    %69 = vector.load %arg23[%c0_60, %c0_61] : memref<64x256xf32, #tpu.memory_space<vmem>>, vector<64x256xf32>
    %c0_62 = arith.constant 0 : index
    %c0_63 = arith.constant 0 : index
    %70 = vector.load %arg26[%c0_62, %c0_63] : memref<64x256xf32, #tpu.memory_space<vmem>>, vector<64x256xf32>
    %c0_64 = arith.constant 0 : index
    %c0_65 = arith.constant 0 : index
    %71 = vector.load %arg27[%c0_64, %c0_65] : memref<1x256xf32, #tpu.memory_space<vmem>>, vector<1x256xf32>
    %c0_66 = arith.constant 0 : index
    %c0_67 = arith.constant 0 : index
    %72 = vector.load %arg28[%c0_66, %c0_67] : memref<16x256xf32, #tpu.memory_space<vmem>>, vector<16x256xf32>
    %c0_68 = arith.constant 0 : index
    %c0_69 = arith.constant 0 : index
    %73 = vector.load %arg31[%c0_68, %c0_69] : memref<64x256xf32, #tpu.memory_space<vmem>>, vector<64x256xf32>
    %c0_70 = arith.constant 0 : index
    %c0_71 = arith.constant 0 : index
    %74 = vector.load %arg32[%c0_70, %c0_71] : memref<1x256xf32, #tpu.memory_space<vmem>>, vector<1x256xf32>
    %c0_72 = arith.constant 0 : index
    %c0_73 = arith.constant 0 : index
    %75 = vector.load %arg33[%c0_72, %c0_73] : memref<64x32xf32, #tpu.memory_space<vmem>>, vector<64x32xf32>
    %c0_74 = arith.constant 0 : index
    %c0_75 = arith.constant 0 : index
    %76 = vector.load %arg34[%c0_74, %c0_75] : memref<1x32xf32, #tpu.memory_space<vmem>>, vector<1x32xf32>
    %c0_76 = arith.constant 0 : index
    %c0_77 = arith.constant 0 : index
    %77 = vector.load %arg35[%c0_76, %c0_77] : memref<64x768xbf16, #tpu.memory_space<vmem>>, vector<64x768xbf16>
    %c0_78 = arith.constant 0 : index
    %c0_79 = arith.constant 0 : index
    %78 = vector.load %arg36[%c0_78, %c0_79] : memref<1x768xf32, #tpu.memory_space<vmem>>, vector<1x768xf32>
    %79 = arith.truncf %66 : vector<2x768xf32> to vector<2x768xbf16>
    %cst_80 = arith.constant dense<0.000000e+00> : vector<2x256xf32>
    %80 = tpu.matmul %79, %67, %cst_80 {dimension_numbers = #tpu.dot_dimension_numbers<[1], [0], [0], [1], [0, 0, 1, 1], [], []>} : vector<2x768xbf16>, vector<768x256xbf16>, vector<2x256xf32> -> vector<2x256xf32>
    %c0_81 = arith.constant 0 : index
    %c0_82 = arith.constant 0 : index
    %81 = vector.load %arg24[%c0_81, %c0_82] : memref<32x256xf32, #tpu.memory_space<vmem>>, vector<32x256xf32>
    %cst_83 = arith.constant dense<0.000000e+00> : vector<2x256xf32>
    %82 = tpu.matmul %65, %81, %cst_83 {dimension_numbers = #tpu.dot_dimension_numbers<[1], [0], [0], [1], [0, 0, 1, 1], [], []>} : vector<2x32xf32>, vector<32x256xf32>, vector<2x256xf32> -> vector<2x256xf32>
    %c0_84 = arith.constant 0 : index
    %c0_85 = arith.constant 0 : index
    %83 = vector.load %arg25[%c0_84, %c0_85] : memref<32x256xf32, #tpu.memory_space<vmem>>, vector<32x256xf32>
    %cst_86 = arith.constant dense<0.000000e+00> : vector<2x256xf32>
    %84 = tpu.matmul %59, %83, %cst_86 {dimension_numbers = #tpu.dot_dimension_numbers<[1], [0], [0], [1], [0, 0, 1, 1], [], []>} : vector<2x32xf32>, vector<32x256xf32>, vector<2x256xf32> -> vector<2x256xf32>
    %85 = arith.addf %82, %84 : vector<2x256xf32>
    %c0_87 = arith.constant 0 : index
    %c0_88 = arith.constant 0 : index
    %86 = vector.load %arg29[%c0_87, %c0_88] : memref<32x256xf32, #tpu.memory_space<vmem>>, vector<32x256xf32>
    %cst_89 = arith.constant dense<0.000000e+00> : vector<2x256xf32>
    %87 = tpu.matmul %65, %86, %cst_89 {dimension_numbers = #tpu.dot_dimension_numbers<[1], [0], [0], [1], [0, 0, 1, 1], [], []>} : vector<2x32xf32>, vector<32x256xf32>, vector<2x256xf32> -> vector<2x256xf32>
    %c0_90 = arith.constant 0 : index
    %c0_91 = arith.constant 0 : index
    %88 = vector.load %arg30[%c0_90, %c0_91] : memref<32x256xf32, #tpu.memory_space<vmem>>, vector<32x256xf32>
    %cst_92 = arith.constant dense<0.000000e+00> : vector<2x256xf32>
    %89 = tpu.matmul %59, %88, %cst_92 {dimension_numbers = #tpu.dot_dimension_numbers<[1], [0], [0], [1], [0, 0, 1, 1], [], []>} : vector<2x32xf32>, vector<32x256xf32>, vector<2x256xf32> -> vector<2x256xf32>
    %90 = arith.addf %87, %89 : vector<2x256xf32>
    %cst_93 = arith.constant 0.000000e+00 : f32
    %91 = vector.broadcast %cst_93 : f32 to vector<2x768xf32>
    %cst_94 = arith.constant 0.000000e+00 : f32
    %92 = vector.broadcast %cst_94 : f32 to vector<2x64xf32>
    %cst_95 = arith.constant 0.000000e+00 : f32
    %93 = vector.broadcast %cst_95 : f32 to vector<2x64xf32>
    %cst_96 = arith.constant 0.000000e+00 : f32
    %94 = vector.broadcast %cst_96 : f32 to vector<2x64xf32>
    %cst_97 = arith.constant 0.000000e+00 : f32
    %95 = vector.broadcast %cst_97 : f32 to vector<2x64xf32>
    %cst_98 = arith.constant 0.000000e+00 : f32
    %96 = vector.broadcast %cst_98 : f32 to vector<2x1xf32>
    %cst_99 = arith.constant 5.000000e-01 : f32
    %97 = vector.broadcast %cst_99 : f32 to vector<2x768xf32>
    %98 = arith.mulf %97, %91 : vector<2x768xf32>
    %99 = math.tanh %98 : vector<2x768xf32>
    %cst_100 = arith.constant 1.000000e+00 : f32
    %100 = vector.broadcast %cst_100 : f32 to vector<2x768xf32>
    %101 = arith.addf %99, %100 : vector<2x768xf32>
    %cst_101 = arith.constant 5.000000e-01 : f32
    %102 = vector.broadcast %cst_101 : f32 to vector<2x768xf32>
    %103 = arith.mulf %102, %101 : vector<2x768xf32>
    %104 = arith.subf %66, %103 : vector<2x768xf32>
    %105 = arith.truncf %104 : vector<2x768xf32> to vector<2x768xbf16>
    %cst_102 = arith.constant dense<0.000000e+00> : vector<2x256xf32>
    %106 = tpu.matmul %105, %68, %cst_102 {dimension_numbers = #tpu.dot_dimension_numbers<[1], [0], [0], [1], [0, 0, 1, 1], [], []>} : vector<2x768xbf16>, vector<768x256xbf16>, vector<2x256xf32> -> vector<2x256xf32>
    %107 = arith.addf %80, %106 : vector<2x256xf32>
    %cst_103 = arith.constant dense<0.000000e+00> : vector<2x256xf32>
    %108 = tpu.matmul %94, %69, %cst_103 {dimension_numbers = #tpu.dot_dimension_numbers<[1], [0], [0], [1], [0, 0, 1, 1], [], []>} : vector<2x64xf32>, vector<64x256xf32>, vector<2x256xf32> -> vector<2x256xf32>
    %109 = arith.addf %107, %108 : vector<2x256xf32>
    %110 = arith.addf %109, %85 : vector<2x256xf32>
    %cst_104 = arith.constant dense<0.000000e+00> : vector<2x256xf32>
    %111 = tpu.matmul %92, %70, %cst_104 {dimension_numbers = #tpu.dot_dimension_numbers<[1], [0], [0], [1], [0, 0, 1, 1], [], []>} : vector<2x64xf32>, vector<64x256xf32>, vector<2x256xf32> -> vector<2x256xf32>
    %112 = arith.addf %110, %111 : vector<2x256xf32>
    %113 = vector.broadcast %71 : vector<1x256xf32> to vector<2x256xf32>
    %114 = arith.addf %112, %113 : vector<2x256xf32>
    %115 = vector.extract_strided_slice %114 {offsets = [0, 0], sizes = [2, 64], strides = [1, 1]} : vector<2x256xf32> to vector<2x64xf32>
    %cst_105 = arith.constant 5.000000e-01 : f32
    %116 = vector.broadcast %cst_105 : f32 to vector<2x64xf32>
    %117 = arith.mulf %116, %115 : vector<2x64xf32>
    %118 = math.tanh %117 : vector<2x64xf32>
    %cst_106 = arith.constant 1.000000e+00 : f32
    %119 = vector.broadcast %cst_106 : f32 to vector<2x64xf32>
    %120 = arith.addf %118, %119 : vector<2x64xf32>
    %cst_107 = arith.constant 5.000000e-01 : f32
    %121 = vector.broadcast %cst_107 : f32 to vector<2x64xf32>
    %122 = arith.mulf %121, %120 : vector<2x64xf32>
    %123 = vector.extract_strided_slice %114 {offsets = [0, 64], sizes = [2, 64], strides = [1, 1]} : vector<2x256xf32> to vector<2x64xf32>
    %cst_108 = arith.constant 5.000000e-01 : f32
    %124 = vector.broadcast %cst_108 : f32 to vector<2x64xf32>
    %125 = arith.mulf %124, %123 : vector<2x64xf32>
    %126 = math.tanh %125 : vector<2x64xf32>
    %cst_109 = arith.constant 1.000000e+00 : f32
    %127 = vector.broadcast %cst_109 : f32 to vector<2x64xf32>
    %128 = arith.addf %126, %127 : vector<2x64xf32>
    %cst_110 = arith.constant 5.000000e-01 : f32
    %129 = vector.broadcast %cst_110 : f32 to vector<2x64xf32>
    %130 = arith.mulf %129, %128 : vector<2x64xf32>
    %131 = vector.extract_strided_slice %114 {offsets = [0, 128], sizes = [2, 64], strides = [1, 1]} : vector<2x256xf32> to vector<2x64xf32>
    %132 = math.tanh %131 : vector<2x64xf32>
    %133 = vector.extract_strided_slice %114 {offsets = [0, 192], sizes = [2, 64], strides = [1, 1]} : vector<2x256xf32> to vector<2x64xf32>
    %cst_111 = arith.constant 5.000000e-01 : f32
    %134 = vector.broadcast %cst_111 : f32 to vector<2x64xf32>
    %135 = arith.mulf %134, %133 : vector<2x64xf32>
    %136 = math.tanh %135 : vector<2x64xf32>
    %cst_112 = arith.constant 1.000000e+00 : f32
    %137 = vector.broadcast %cst_112 : f32 to vector<2x64xf32>
    %138 = arith.addf %136, %137 : vector<2x64xf32>
    %cst_113 = arith.constant 5.000000e-01 : f32
    %139 = vector.broadcast %cst_113 : f32 to vector<2x64xf32>
    %140 = arith.mulf %139, %138 : vector<2x64xf32>
    %141 = arith.mulf %130, %93 : vector<2x64xf32>
    %142 = arith.mulf %122, %132 : vector<2x64xf32>
    %143 = arith.addf %141, %142 : vector<2x64xf32>
    %144 = math.tanh %143 : vector<2x64xf32>
    %145 = arith.mulf %140, %144 : vector<2x64xf32>
    %cst_114 = arith.constant dense<0.000000e+00> : vector<2x32xf32>
    %146 = tpu.matmul %145, %75, %cst_114 {dimension_numbers = #tpu.dot_dimension_numbers<[1], [0], [0], [1], [0, 0, 1, 1], [], []>} : vector<2x64xf32>, vector<64x32xf32>, vector<2x32xf32> -> vector<2x32xf32>
    %147 = vector.broadcast %76 : vector<1x32xf32> to vector<2x32xf32>
    %148 = arith.addf %146, %147 : vector<2x32xf32>
    %149 = vector.extract_strided_slice %148 {offsets = [0, 0], sizes = [2, 16], strides = [1, 1]} : vector<2x32xf32> to vector<2x16xf32>
    %150 = vector.extract_strided_slice %148 {offsets = [0, 16], sizes = [2, 16], strides = [1, 1]} : vector<2x32xf32> to vector<2x16xf32>
    %cst_115 = arith.constant 5.000000e-01 : f32
    %151 = vector.broadcast %cst_115 : f32 to vector<2x16xf32>
    %152 = arith.mulf %151, %150 : vector<2x16xf32>
    %153 = math.exp %152 : vector<2x16xf32>
    %c0_116 = arith.constant 0 : index
    %c0_117 = arith.constant 0 : index
    %c0_118 = arith.constant 0 : index
    %154 = vector.load %arg5[%c0_116, %c0_117, %c0_118] : memref<4x2x16xf32, #tpu.memory_space<vmem>>, vector<1x2x16xf32>
    %155 = vector.shape_cast %154 : vector<1x2x16xf32> to vector<2x16xf32>
    %156 = arith.mulf %153, %155 : vector<2x16xf32>
    %157 = arith.addf %149, %156 : vector<2x16xf32>
    %158 = arith.mulf %149, %149 : vector<2x16xf32>
    %159 = math.exp %150 : vector<2x16xf32>
    %160 = arith.addf %158, %159 : vector<2x16xf32>
    %161 = arith.subf %160, %150 : vector<2x16xf32>
    %cst_119 = arith.constant 1.000000e+00 : f32
    %162 = vector.broadcast %cst_119 : f32 to vector<2x16xf32>
    %163 = arith.subf %161, %162 : vector<2x16xf32>
    %cst_120 = arith.constant dense<0.000000e+00> : vector<2xf32>
    %164 = vector.multi_reduction <add>, %163, %cst_120 [1] : vector<2x16xf32> to vector<2xf32>
    %165 = vector.shape_cast %164 : vector<2xf32> to vector<2x1xf32>
    %cst_121 = arith.constant 5.000000e-01 : f32
    %166 = vector.broadcast %cst_121 : f32 to vector<2x1xf32>
    %167 = arith.mulf %166, %165 : vector<2x1xf32>
    %168 = arith.addf %96, %167 : vector<2x1xf32>
    %cst_122 = arith.constant dense<0.000000e+00> : vector<2x256xf32>
    %169 = tpu.matmul %157, %72, %cst_122 {dimension_numbers = #tpu.dot_dimension_numbers<[1], [0], [0], [1], [0, 0, 1, 1], [], []>} : vector<2x16xf32>, vector<16x256xf32>, vector<2x256xf32> -> vector<2x256xf32>
    %170 = arith.addf %169, %90 : vector<2x256xf32>
    %cst_123 = arith.constant dense<0.000000e+00> : vector<2x256xf32>
    %171 = tpu.matmul %94, %73, %cst_123 {dimension_numbers = #tpu.dot_dimension_numbers<[1], [0], [0], [1], [0, 0, 1, 1], [], []>} : vector<2x64xf32>, vector<64x256xf32>, vector<2x256xf32> -> vector<2x256xf32>
    %172 = arith.addf %170, %171 : vector<2x256xf32>
    %173 = vector.broadcast %74 : vector<1x256xf32> to vector<2x256xf32>
    %174 = arith.addf %172, %173 : vector<2x256xf32>
    %175 = vector.extract_strided_slice %174 {offsets = [0, 0], sizes = [2, 64], strides = [1, 1]} : vector<2x256xf32> to vector<2x64xf32>
    %cst_124 = arith.constant 5.000000e-01 : f32
    %176 = vector.broadcast %cst_124 : f32 to vector<2x64xf32>
    %177 = arith.mulf %176, %175 : vector<2x64xf32>
    %178 = math.tanh %177 : vector<2x64xf32>
    %cst_125 = arith.constant 1.000000e+00 : f32
    %179 = vector.broadcast %cst_125 : f32 to vector<2x64xf32>
    %180 = arith.addf %178, %179 : vector<2x64xf32>
    %cst_126 = arith.constant 5.000000e-01 : f32
    %181 = vector.broadcast %cst_126 : f32 to vector<2x64xf32>
    %182 = arith.mulf %181, %180 : vector<2x64xf32>
    %183 = vector.extract_strided_slice %174 {offsets = [0, 64], sizes = [2, 64], strides = [1, 1]} : vector<2x256xf32> to vector<2x64xf32>
    %cst_127 = arith.constant 5.000000e-01 : f32
    %184 = vector.broadcast %cst_127 : f32 to vector<2x64xf32>
    %185 = arith.mulf %184, %183 : vector<2x64xf32>
    %186 = math.tanh %185 : vector<2x64xf32>
    %cst_128 = arith.constant 1.000000e+00 : f32
    %187 = vector.broadcast %cst_128 : f32 to vector<2x64xf32>
    %188 = arith.addf %186, %187 : vector<2x64xf32>
    %cst_129 = arith.constant 5.000000e-01 : f32
    %189 = vector.broadcast %cst_129 : f32 to vector<2x64xf32>
    %190 = arith.mulf %189, %188 : vector<2x64xf32>
    %191 = vector.extract_strided_slice %174 {offsets = [0, 128], sizes = [2, 64], strides = [1, 1]} : vector<2x256xf32> to vector<2x64xf32>
    %192 = math.tanh %191 : vector<2x64xf32>
    %193 = vector.extract_strided_slice %174 {offsets = [0, 192], sizes = [2, 64], strides = [1, 1]} : vector<2x256xf32> to vector<2x64xf32>
    %cst_130 = arith.constant 5.000000e-01 : f32
    %194 = vector.broadcast %cst_130 : f32 to vector<2x64xf32>
    %195 = arith.mulf %194, %193 : vector<2x64xf32>
    %196 = math.tanh %195 : vector<2x64xf32>
    %cst_131 = arith.constant 1.000000e+00 : f32
    %197 = vector.broadcast %cst_131 : f32 to vector<2x64xf32>
    %198 = arith.addf %196, %197 : vector<2x64xf32>
    %cst_132 = arith.constant 5.000000e-01 : f32
    %199 = vector.broadcast %cst_132 : f32 to vector<2x64xf32>
    %200 = arith.mulf %199, %198 : vector<2x64xf32>
    %201 = arith.mulf %190, %95 : vector<2x64xf32>
    %202 = arith.mulf %182, %192 : vector<2x64xf32>
    %203 = arith.addf %201, %202 : vector<2x64xf32>
    %204 = math.tanh %203 : vector<2x64xf32>
    %205 = arith.mulf %200, %204 : vector<2x64xf32>
    %206 = arith.truncf %205 : vector<2x64xf32> to vector<2x64xbf16>
    %cst_133 = arith.constant dense<0.000000e+00> : vector<2x768xf32>
    %207 = tpu.matmul %206, %77, %cst_133 {dimension_numbers = #tpu.dot_dimension_numbers<[1], [0], [0], [1], [0, 0, 1, 1], [], []>} : vector<2x64xbf16>, vector<64x768xbf16>, vector<2x768xf32> -> vector<2x768xf32>
    %208 = arith.addf %91, %207 : vector<2x768xf32>
    %209 = vector.broadcast %78 : vector<1x768xf32> to vector<2x768xf32>
    %210 = arith.addf %208, %209 : vector<2x768xf32>
    %cst_134 = arith.constant 5.000000e-01 : f32
    %211 = vector.broadcast %cst_134 : f32 to vector<2x768xf32>
    %212 = arith.mulf %211, %210 : vector<2x768xf32>
    %213 = math.tanh %212 : vector<2x768xf32>
    %cst_135 = arith.constant 1.000000e+00 : f32
    %214 = vector.broadcast %cst_135 : f32 to vector<2x768xf32>
    %215 = arith.addf %213, %214 : vector<2x768xf32>
    %cst_136 = arith.constant 5.000000e-01 : f32
    %216 = vector.broadcast %cst_136 : f32 to vector<2x768xf32>
    %217 = arith.mulf %216, %215 : vector<2x768xf32>
    %218 = arith.subf %66, %217 : vector<2x768xf32>
    %219 = arith.truncf %218 : vector<2x768xf32> to vector<2x768xbf16>
    %cst_137 = arith.constant dense<0.000000e+00> : vector<2x256xf32>
    %220 = tpu.matmul %219, %68, %cst_137 {dimension_numbers = #tpu.dot_dimension_numbers<[1], [0], [0], [1], [0, 0, 1, 1], [], []>} : vector<2x768xbf16>, vector<768x256xbf16>, vector<2x256xf32> -> vector<2x256xf32>
    %221 = arith.addf %80, %220 : vector<2x256xf32>
    %cst_138 = arith.constant dense<0.000000e+00> : vector<2x256xf32>
    %222 = tpu.matmul %205, %69, %cst_138 {dimension_numbers = #tpu.dot_dimension_numbers<[1], [0], [0], [1], [0, 0, 1, 1], [], []>} : vector<2x64xf32>, vector<64x256xf32>, vector<2x256xf32> -> vector<2x256xf32>
    %223 = arith.addf %221, %222 : vector<2x256xf32>
    %224 = arith.addf %223, %85 : vector<2x256xf32>
    %cst_139 = arith.constant dense<0.000000e+00> : vector<2x256xf32>
    %225 = tpu.matmul %145, %70, %cst_139 {dimension_numbers = #tpu.dot_dimension_numbers<[1], [0], [0], [1], [0, 0, 1, 1], [], []>} : vector<2x64xf32>, vector<64x256xf32>, vector<2x256xf32> -> vector<2x256xf32>
    %226 = arith.addf %224, %225 : vector<2x256xf32>
    %227 = vector.broadcast %71 : vector<1x256xf32> to vector<2x256xf32>
    %228 = arith.addf %226, %227 : vector<2x256xf32>
    %229 = vector.extract_strided_slice %228 {offsets = [0, 0], sizes = [2, 64], strides = [1, 1]} : vector<2x256xf32> to vector<2x64xf32>
    %cst_140 = arith.constant 5.000000e-01 : f32
    %230 = vector.broadcast %cst_140 : f32 to vector<2x64xf32>
    %231 = arith.mulf %230, %229 : vector<2x64xf32>
    %232 = math.tanh %231 : vector<2x64xf32>
    %cst_141 = arith.constant 1.000000e+00 : f32
    %233 = vector.broadcast %cst_141 : f32 to vector<2x64xf32>
    %234 = arith.addf %232, %233 : vector<2x64xf32>
    %cst_142 = arith.constant 5.000000e-01 : f32
    %235 = vector.broadcast %cst_142 : f32 to vector<2x64xf32>
    %236 = arith.mulf %235, %234 : vector<2x64xf32>
    %237 = vector.extract_strided_slice %228 {offsets = [0, 64], sizes = [2, 64], strides = [1, 1]} : vector<2x256xf32> to vector<2x64xf32>
    %cst_143 = arith.constant 5.000000e-01 : f32
    %238 = vector.broadcast %cst_143 : f32 to vector<2x64xf32>
    %239 = arith.mulf %238, %237 : vector<2x64xf32>
    %240 = math.tanh %239 : vector<2x64xf32>
    %cst_144 = arith.constant 1.000000e+00 : f32
    %241 = vector.broadcast %cst_144 : f32 to vector<2x64xf32>
    %242 = arith.addf %240, %241 : vector<2x64xf32>
    %cst_145 = arith.constant 5.000000e-01 : f32
    %243 = vector.broadcast %cst_145 : f32 to vector<2x64xf32>
    %244 = arith.mulf %243, %242 : vector<2x64xf32>
    %245 = vector.extract_strided_slice %228 {offsets = [0, 128], sizes = [2, 64], strides = [1, 1]} : vector<2x256xf32> to vector<2x64xf32>
    %246 = math.tanh %245 : vector<2x64xf32>
    %247 = vector.extract_strided_slice %228 {offsets = [0, 192], sizes = [2, 64], strides = [1, 1]} : vector<2x256xf32> to vector<2x64xf32>
    %cst_146 = arith.constant 5.000000e-01 : f32
    %248 = vector.broadcast %cst_146 : f32 to vector<2x64xf32>
    %249 = arith.mulf %248, %247 : vector<2x64xf32>
    %250 = math.tanh %249 : vector<2x64xf32>
    %cst_147 = arith.constant 1.000000e+00 : f32
    %251 = vector.broadcast %cst_147 : f32 to vector<2x64xf32>
    %252 = arith.addf %250, %251 : vector<2x64xf32>
    %cst_148 = arith.constant 5.000000e-01 : f32
    %253 = vector.broadcast %cst_148 : f32 to vector<2x64xf32>
    %254 = arith.mulf %253, %252 : vector<2x64xf32>
    %255 = arith.mulf %244, %143 : vector<2x64xf32>
    %256 = arith.mulf %236, %246 : vector<2x64xf32>
    %257 = arith.addf %255, %256 : vector<2x64xf32>
    %258 = math.tanh %257 : vector<2x64xf32>
    %259 = arith.mulf %254, %258 : vector<2x64xf32>
    %cst_149 = arith.constant dense<0.000000e+00> : vector<2x32xf32>
    %260 = tpu.matmul %259, %75, %cst_149 {dimension_numbers = #tpu.dot_dimension_numbers<[1], [0], [0], [1], [0, 0, 1, 1], [], []>} : vector<2x64xf32>, vector<64x32xf32>, vector<2x32xf32> -> vector<2x32xf32>
    %261 = vector.broadcast %76 : vector<1x32xf32> to vector<2x32xf32>
    %262 = arith.addf %260, %261 : vector<2x32xf32>
    %263 = vector.extract_strided_slice %262 {offsets = [0, 0], sizes = [2, 16], strides = [1, 1]} : vector<2x32xf32> to vector<2x16xf32>
    %264 = vector.extract_strided_slice %262 {offsets = [0, 16], sizes = [2, 16], strides = [1, 1]} : vector<2x32xf32> to vector<2x16xf32>
    %cst_150 = arith.constant 5.000000e-01 : f32
    %265 = vector.broadcast %cst_150 : f32 to vector<2x16xf32>
    %266 = arith.mulf %265, %264 : vector<2x16xf32>
    %267 = math.exp %266 : vector<2x16xf32>
    %c1 = arith.constant 1 : index
    %c0_151 = arith.constant 0 : index
    %c0_152 = arith.constant 0 : index
    %268 = vector.load %arg5[%c1, %c0_151, %c0_152] : memref<4x2x16xf32, #tpu.memory_space<vmem>>, vector<1x2x16xf32>
    %269 = vector.shape_cast %268 : vector<1x2x16xf32> to vector<2x16xf32>
    %270 = arith.mulf %267, %269 : vector<2x16xf32>
    %271 = arith.addf %263, %270 : vector<2x16xf32>
    %272 = arith.mulf %263, %263 : vector<2x16xf32>
    %273 = math.exp %264 : vector<2x16xf32>
    %274 = arith.addf %272, %273 : vector<2x16xf32>
    %275 = arith.subf %274, %264 : vector<2x16xf32>
    %cst_153 = arith.constant 1.000000e+00 : f32
    %276 = vector.broadcast %cst_153 : f32 to vector<2x16xf32>
    %277 = arith.subf %275, %276 : vector<2x16xf32>
    %cst_154 = arith.constant dense<0.000000e+00> : vector<2xf32>
    %278 = vector.multi_reduction <add>, %277, %cst_154 [1] : vector<2x16xf32> to vector<2xf32>
    %279 = vector.shape_cast %278 : vector<2xf32> to vector<2x1xf32>
    %cst_155 = arith.constant 5.000000e-01 : f32
    %280 = vector.broadcast %cst_155 : f32 to vector<2x1xf32>
    %281 = arith.mulf %280, %279 : vector<2x1xf32>
    %282 = arith.addf %168, %281 : vector<2x1xf32>
    %cst_156 = arith.constant dense<0.000000e+00> : vector<2x256xf32>
    %283 = tpu.matmul %271, %72, %cst_156 {dimension_numbers = #tpu.dot_dimension_numbers<[1], [0], [0], [1], [0, 0, 1, 1], [], []>} : vector<2x16xf32>, vector<16x256xf32>, vector<2x256xf32> -> vector<2x256xf32>
    %284 = arith.addf %283, %90 : vector<2x256xf32>
    %cst_157 = arith.constant dense<0.000000e+00> : vector<2x256xf32>
    %285 = tpu.matmul %205, %73, %cst_157 {dimension_numbers = #tpu.dot_dimension_numbers<[1], [0], [0], [1], [0, 0, 1, 1], [], []>} : vector<2x64xf32>, vector<64x256xf32>, vector<2x256xf32> -> vector<2x256xf32>
    %286 = arith.addf %284, %285 : vector<2x256xf32>
    %287 = vector.broadcast %74 : vector<1x256xf32> to vector<2x256xf32>
    %288 = arith.addf %286, %287 : vector<2x256xf32>
    %289 = vector.extract_strided_slice %288 {offsets = [0, 0], sizes = [2, 64], strides = [1, 1]} : vector<2x256xf32> to vector<2x64xf32>
    %cst_158 = arith.constant 5.000000e-01 : f32
    %290 = vector.broadcast %cst_158 : f32 to vector<2x64xf32>
    %291 = arith.mulf %290, %289 : vector<2x64xf32>
    %292 = math.tanh %291 : vector<2x64xf32>
    %cst_159 = arith.constant 1.000000e+00 : f32
    %293 = vector.broadcast %cst_159 : f32 to vector<2x64xf32>
    %294 = arith.addf %292, %293 : vector<2x64xf32>
    %cst_160 = arith.constant 5.000000e-01 : f32
    %295 = vector.broadcast %cst_160 : f32 to vector<2x64xf32>
    %296 = arith.mulf %295, %294 : vector<2x64xf32>
    %297 = vector.extract_strided_slice %288 {offsets = [0, 64], sizes = [2, 64], strides = [1, 1]} : vector<2x256xf32> to vector<2x64xf32>
    %cst_161 = arith.constant 5.000000e-01 : f32
    %298 = vector.broadcast %cst_161 : f32 to vector<2x64xf32>
    %299 = arith.mulf %298, %297 : vector<2x64xf32>
    %300 = math.tanh %299 : vector<2x64xf32>
    %cst_162 = arith.constant 1.000000e+00 : f32
    %301 = vector.broadcast %cst_162 : f32 to vector<2x64xf32>
    %302 = arith.addf %300, %301 : vector<2x64xf32>
    %cst_163 = arith.constant 5.000000e-01 : f32
    %303 = vector.broadcast %cst_163 : f32 to vector<2x64xf32>
    %304 = arith.mulf %303, %302 : vector<2x64xf32>
    %305 = vector.extract_strided_slice %288 {offsets = [0, 128], sizes = [2, 64], strides = [1, 1]} : vector<2x256xf32> to vector<2x64xf32>
    %306 = math.tanh %305 : vector<2x64xf32>
    %307 = vector.extract_strided_slice %288 {offsets = [0, 192], sizes = [2, 64], strides = [1, 1]} : vector<2x256xf32> to vector<2x64xf32>
    %cst_164 = arith.constant 5.000000e-01 : f32
    %308 = vector.broadcast %cst_164 : f32 to vector<2x64xf32>
    %309 = arith.mulf %308, %307 : vector<2x64xf32>
    %310 = math.tanh %309 : vector<2x64xf32>
    %cst_165 = arith.constant 1.000000e+00 : f32
    %311 = vector.broadcast %cst_165 : f32 to vector<2x64xf32>
    %312 = arith.addf %310, %311 : vector<2x64xf32>
    %cst_166 = arith.constant 5.000000e-01 : f32
    %313 = vector.broadcast %cst_166 : f32 to vector<2x64xf32>
    %314 = arith.mulf %313, %312 : vector<2x64xf32>
    %315 = arith.mulf %304, %203 : vector<2x64xf32>
    %316 = arith.mulf %296, %306 : vector<2x64xf32>
    %317 = arith.addf %315, %316 : vector<2x64xf32>
    %318 = math.tanh %317 : vector<2x64xf32>
    %319 = arith.mulf %314, %318 : vector<2x64xf32>
    %320 = arith.truncf %319 : vector<2x64xf32> to vector<2x64xbf16>
    %cst_167 = arith.constant dense<0.000000e+00> : vector<2x768xf32>
    %321 = tpu.matmul %320, %77, %cst_167 {dimension_numbers = #tpu.dot_dimension_numbers<[1], [0], [0], [1], [0, 0, 1, 1], [], []>} : vector<2x64xbf16>, vector<64x768xbf16>, vector<2x768xf32> -> vector<2x768xf32>
    %322 = arith.addf %210, %321 : vector<2x768xf32>
    %323 = vector.broadcast %78 : vector<1x768xf32> to vector<2x768xf32>
    %324 = arith.addf %322, %323 : vector<2x768xf32>
    %cst_168 = arith.constant 5.000000e-01 : f32
    %325 = vector.broadcast %cst_168 : f32 to vector<2x768xf32>
    %326 = arith.mulf %325, %324 : vector<2x768xf32>
    %327 = math.tanh %326 : vector<2x768xf32>
    %cst_169 = arith.constant 1.000000e+00 : f32
    %328 = vector.broadcast %cst_169 : f32 to vector<2x768xf32>
    %329 = arith.addf %327, %328 : vector<2x768xf32>
    %cst_170 = arith.constant 5.000000e-01 : f32
    %330 = vector.broadcast %cst_170 : f32 to vector<2x768xf32>
    %331 = arith.mulf %330, %329 : vector<2x768xf32>
    %332 = arith.subf %66, %331 : vector<2x768xf32>
    %333 = arith.truncf %332 : vector<2x768xf32> to vector<2x768xbf16>
    %cst_171 = arith.constant dense<0.000000e+00> : vector<2x256xf32>
    %334 = tpu.matmul %333, %68, %cst_171 {dimension_numbers = #tpu.dot_dimension_numbers<[1], [0], [0], [1], [0, 0, 1, 1], [], []>} : vector<2x768xbf16>, vector<768x256xbf16>, vector<2x256xf32> -> vector<2x256xf32>
    %335 = arith.addf %80, %334 : vector<2x256xf32>
    %cst_172 = arith.constant dense<0.000000e+00> : vector<2x256xf32>
    %336 = tpu.matmul %319, %69, %cst_172 {dimension_numbers = #tpu.dot_dimension_numbers<[1], [0], [0], [1], [0, 0, 1, 1], [], []>} : vector<2x64xf32>, vector<64x256xf32>, vector<2x256xf32> -> vector<2x256xf32>
    %337 = arith.addf %335, %336 : vector<2x256xf32>
    %338 = arith.addf %337, %85 : vector<2x256xf32>
    %cst_173 = arith.constant dense<0.000000e+00> : vector<2x256xf32>
    %339 = tpu.matmul %259, %70, %cst_173 {dimension_numbers = #tpu.dot_dimension_numbers<[1], [0], [0], [1], [0, 0, 1, 1], [], []>} : vector<2x64xf32>, vector<64x256xf32>, vector<2x256xf32> -> vector<2x256xf32>
    %340 = arith.addf %338, %339 : vector<2x256xf32>
    %341 = vector.broadcast %71 : vector<1x256xf32> to vector<2x256xf32>
    %342 = arith.addf %340, %341 : vector<2x256xf32>
    %343 = vector.extract_strided_slice %342 {offsets = [0, 0], sizes = [2, 64], strides = [1, 1]} : vector<2x256xf32> to vector<2x64xf32>
    %cst_174 = arith.constant 5.000000e-01 : f32
    %344 = vector.broadcast %cst_174 : f32 to vector<2x64xf32>
    %345 = arith.mulf %344, %343 : vector<2x64xf32>
    %346 = math.tanh %345 : vector<2x64xf32>
    %cst_175 = arith.constant 1.000000e+00 : f32
    %347 = vector.broadcast %cst_175 : f32 to vector<2x64xf32>
    %348 = arith.addf %346, %347 : vector<2x64xf32>
    %cst_176 = arith.constant 5.000000e-01 : f32
    %349 = vector.broadcast %cst_176 : f32 to vector<2x64xf32>
    %350 = arith.mulf %349, %348 : vector<2x64xf32>
    %351 = vector.extract_strided_slice %342 {offsets = [0, 64], sizes = [2, 64], strides = [1, 1]} : vector<2x256xf32> to vector<2x64xf32>
    %cst_177 = arith.constant 5.000000e-01 : f32
    %352 = vector.broadcast %cst_177 : f32 to vector<2x64xf32>
    %353 = arith.mulf %352, %351 : vector<2x64xf32>
    %354 = math.tanh %353 : vector<2x64xf32>
    %cst_178 = arith.constant 1.000000e+00 : f32
    %355 = vector.broadcast %cst_178 : f32 to vector<2x64xf32>
    %356 = arith.addf %354, %355 : vector<2x64xf32>
    %cst_179 = arith.constant 5.000000e-01 : f32
    %357 = vector.broadcast %cst_179 : f32 to vector<2x64xf32>
    %358 = arith.mulf %357, %356 : vector<2x64xf32>
    %359 = vector.extract_strided_slice %342 {offsets = [0, 128], sizes = [2, 64], strides = [1, 1]} : vector<2x256xf32> to vector<2x64xf32>
    %360 = math.tanh %359 : vector<2x64xf32>
    %361 = vector.extract_strided_slice %342 {offsets = [0, 192], sizes = [2, 64], strides = [1, 1]} : vector<2x256xf32> to vector<2x64xf32>
    %cst_180 = arith.constant 5.000000e-01 : f32
    %362 = vector.broadcast %cst_180 : f32 to vector<2x64xf32>
    %363 = arith.mulf %362, %361 : vector<2x64xf32>
    %364 = math.tanh %363 : vector<2x64xf32>
    %cst_181 = arith.constant 1.000000e+00 : f32
    %365 = vector.broadcast %cst_181 : f32 to vector<2x64xf32>
    %366 = arith.addf %364, %365 : vector<2x64xf32>
    %cst_182 = arith.constant 5.000000e-01 : f32
    %367 = vector.broadcast %cst_182 : f32 to vector<2x64xf32>
    %368 = arith.mulf %367, %366 : vector<2x64xf32>
    %369 = arith.mulf %358, %257 : vector<2x64xf32>
    %370 = arith.mulf %350, %360 : vector<2x64xf32>
    %371 = arith.addf %369, %370 : vector<2x64xf32>
    %372 = math.tanh %371 : vector<2x64xf32>
    %373 = arith.mulf %368, %372 : vector<2x64xf32>
    %cst_183 = arith.constant dense<0.000000e+00> : vector<2x32xf32>
    %374 = tpu.matmul %373, %75, %cst_183 {dimension_numbers = #tpu.dot_dimension_numbers<[1], [0], [0], [1], [0, 0, 1, 1], [], []>} : vector<2x64xf32>, vector<64x32xf32>, vector<2x32xf32> -> vector<2x32xf32>
    %375 = vector.broadcast %76 : vector<1x32xf32> to vector<2x32xf32>
    %376 = arith.addf %374, %375 : vector<2x32xf32>
    %377 = vector.extract_strided_slice %376 {offsets = [0, 0], sizes = [2, 16], strides = [1, 1]} : vector<2x32xf32> to vector<2x16xf32>
    %378 = vector.extract_strided_slice %376 {offsets = [0, 16], sizes = [2, 16], strides = [1, 1]} : vector<2x32xf32> to vector<2x16xf32>
    %cst_184 = arith.constant 5.000000e-01 : f32
    %379 = vector.broadcast %cst_184 : f32 to vector<2x16xf32>
    %380 = arith.mulf %379, %378 : vector<2x16xf32>
    %381 = math.exp %380 : vector<2x16xf32>
    %c2 = arith.constant 2 : index
    %c0_185 = arith.constant 0 : index
    %c0_186 = arith.constant 0 : index
    %382 = vector.load %arg5[%c2, %c0_185, %c0_186] : memref<4x2x16xf32, #tpu.memory_space<vmem>>, vector<1x2x16xf32>
    %383 = vector.shape_cast %382 : vector<1x2x16xf32> to vector<2x16xf32>
    %384 = arith.mulf %381, %383 : vector<2x16xf32>
    %385 = arith.addf %377, %384 : vector<2x16xf32>
    %386 = arith.mulf %377, %377 : vector<2x16xf32>
    %387 = math.exp %378 : vector<2x16xf32>
    %388 = arith.addf %386, %387 : vector<2x16xf32>
    %389 = arith.subf %388, %378 : vector<2x16xf32>
    %cst_187 = arith.constant 1.000000e+00 : f32
    %390 = vector.broadcast %cst_187 : f32 to vector<2x16xf32>
    %391 = arith.subf %389, %390 : vector<2x16xf32>
    %cst_188 = arith.constant dense<0.000000e+00> : vector<2xf32>
    %392 = vector.multi_reduction <add>, %391, %cst_188 [1] : vector<2x16xf32> to vector<2xf32>
    %393 = vector.shape_cast %392 : vector<2xf32> to vector<2x1xf32>
    %cst_189 = arith.constant 5.000000e-01 : f32
    %394 = vector.broadcast %cst_189 : f32 to vector<2x1xf32>
    %395 = arith.mulf %394, %393 : vector<2x1xf32>
    %396 = arith.addf %282, %395 : vector<2x1xf32>
    %cst_190 = arith.constant dense<0.000000e+00> : vector<2x256xf32>
    %397 = tpu.matmul %385, %72, %cst_190 {dimension_numbers = #tpu.dot_dimension_numbers<[1], [0], [0], [1], [0, 0, 1, 1], [], []>} : vector<2x16xf32>, vector<16x256xf32>, vector<2x256xf32> -> vector<2x256xf32>
    %398 = arith.addf %397, %90 : vector<2x256xf32>
    %cst_191 = arith.constant dense<0.000000e+00> : vector<2x256xf32>
    %399 = tpu.matmul %319, %73, %cst_191 {dimension_numbers = #tpu.dot_dimension_numbers<[1], [0], [0], [1], [0, 0, 1, 1], [], []>} : vector<2x64xf32>, vector<64x256xf32>, vector<2x256xf32> -> vector<2x256xf32>
    %400 = arith.addf %398, %399 : vector<2x256xf32>
    %401 = vector.broadcast %74 : vector<1x256xf32> to vector<2x256xf32>
    %402 = arith.addf %400, %401 : vector<2x256xf32>
    %403 = vector.extract_strided_slice %402 {offsets = [0, 0], sizes = [2, 64], strides = [1, 1]} : vector<2x256xf32> to vector<2x64xf32>
    %cst_192 = arith.constant 5.000000e-01 : f32
    %404 = vector.broadcast %cst_192 : f32 to vector<2x64xf32>
    %405 = arith.mulf %404, %403 : vector<2x64xf32>
    %406 = math.tanh %405 : vector<2x64xf32>
    %cst_193 = arith.constant 1.000000e+00 : f32
    %407 = vector.broadcast %cst_193 : f32 to vector<2x64xf32>
    %408 = arith.addf %406, %407 : vector<2x64xf32>
    %cst_194 = arith.constant 5.000000e-01 : f32
    %409 = vector.broadcast %cst_194 : f32 to vector<2x64xf32>
    %410 = arith.mulf %409, %408 : vector<2x64xf32>
    %411 = vector.extract_strided_slice %402 {offsets = [0, 64], sizes = [2, 64], strides = [1, 1]} : vector<2x256xf32> to vector<2x64xf32>
    %cst_195 = arith.constant 5.000000e-01 : f32
    %412 = vector.broadcast %cst_195 : f32 to vector<2x64xf32>
    %413 = arith.mulf %412, %411 : vector<2x64xf32>
    %414 = math.tanh %413 : vector<2x64xf32>
    %cst_196 = arith.constant 1.000000e+00 : f32
    %415 = vector.broadcast %cst_196 : f32 to vector<2x64xf32>
    %416 = arith.addf %414, %415 : vector<2x64xf32>
    %cst_197 = arith.constant 5.000000e-01 : f32
    %417 = vector.broadcast %cst_197 : f32 to vector<2x64xf32>
    %418 = arith.mulf %417, %416 : vector<2x64xf32>
    %419 = vector.extract_strided_slice %402 {offsets = [0, 128], sizes = [2, 64], strides = [1, 1]} : vector<2x256xf32> to vector<2x64xf32>
    %420 = math.tanh %419 : vector<2x64xf32>
    %421 = vector.extract_strided_slice %402 {offsets = [0, 192], sizes = [2, 64], strides = [1, 1]} : vector<2x256xf32> to vector<2x64xf32>
    %cst_198 = arith.constant 5.000000e-01 : f32
    %422 = vector.broadcast %cst_198 : f32 to vector<2x64xf32>
    %423 = arith.mulf %422, %421 : vector<2x64xf32>
    %424 = math.tanh %423 : vector<2x64xf32>
    %cst_199 = arith.constant 1.000000e+00 : f32
    %425 = vector.broadcast %cst_199 : f32 to vector<2x64xf32>
    %426 = arith.addf %424, %425 : vector<2x64xf32>
    %cst_200 = arith.constant 5.000000e-01 : f32
    %427 = vector.broadcast %cst_200 : f32 to vector<2x64xf32>
    %428 = arith.mulf %427, %426 : vector<2x64xf32>
    %429 = arith.mulf %418, %317 : vector<2x64xf32>
    %430 = arith.mulf %410, %420 : vector<2x64xf32>
    %431 = arith.addf %429, %430 : vector<2x64xf32>
    %432 = math.tanh %431 : vector<2x64xf32>
    %433 = arith.mulf %428, %432 : vector<2x64xf32>
    %434 = arith.truncf %433 : vector<2x64xf32> to vector<2x64xbf16>
    %cst_201 = arith.constant dense<0.000000e+00> : vector<2x768xf32>
    %435 = tpu.matmul %434, %77, %cst_201 {dimension_numbers = #tpu.dot_dimension_numbers<[1], [0], [0], [1], [0, 0, 1, 1], [], []>} : vector<2x64xbf16>, vector<64x768xbf16>, vector<2x768xf32> -> vector<2x768xf32>
    %436 = arith.addf %324, %435 : vector<2x768xf32>
    %437 = vector.broadcast %78 : vector<1x768xf32> to vector<2x768xf32>
    %438 = arith.addf %436, %437 : vector<2x768xf32>
    %cst_202 = arith.constant 5.000000e-01 : f32
    %439 = vector.broadcast %cst_202 : f32 to vector<2x768xf32>
    %440 = arith.mulf %439, %438 : vector<2x768xf32>
    %441 = math.tanh %440 : vector<2x768xf32>
    %cst_203 = arith.constant 1.000000e+00 : f32
    %442 = vector.broadcast %cst_203 : f32 to vector<2x768xf32>
    %443 = arith.addf %441, %442 : vector<2x768xf32>
    %cst_204 = arith.constant 5.000000e-01 : f32
    %444 = vector.broadcast %cst_204 : f32 to vector<2x768xf32>
    %445 = arith.mulf %444, %443 : vector<2x768xf32>
    %446 = arith.subf %66, %445 : vector<2x768xf32>
    %447 = arith.truncf %446 : vector<2x768xf32> to vector<2x768xbf16>
    %cst_205 = arith.constant dense<0.000000e+00> : vector<2x256xf32>
    %448 = tpu.matmul %447, %68, %cst_205 {dimension_numbers = #tpu.dot_dimension_numbers<[1], [0], [0], [1], [0, 0, 1, 1], [], []>} : vector<2x768xbf16>, vector<768x256xbf16>, vector<2x256xf32> -> vector<2x256xf32>
    %449 = arith.addf %80, %448 : vector<2x256xf32>
    %cst_206 = arith.constant dense<0.000000e+00> : vector<2x256xf32>
    %450 = tpu.matmul %433, %69, %cst_206 {dimension_numbers = #tpu.dot_dimension_numbers<[1], [0], [0], [1], [0, 0, 1, 1], [], []>} : vector<2x64xf32>, vector<64x256xf32>, vector<2x256xf32> -> vector<2x256xf32>
    %451 = arith.addf %449, %450 : vector<2x256xf32>
    %452 = arith.addf %451, %85 : vector<2x256xf32>
    %cst_207 = arith.constant dense<0.000000e+00> : vector<2x256xf32>
    %453 = tpu.matmul %373, %70, %cst_207 {dimension_numbers = #tpu.dot_dimension_numbers<[1], [0], [0], [1], [0, 0, 1, 1], [], []>} : vector<2x64xf32>, vector<64x256xf32>, vector<2x256xf32> -> vector<2x256xf32>
    %454 = arith.addf %452, %453 : vector<2x256xf32>
    %455 = vector.broadcast %71 : vector<1x256xf32> to vector<2x256xf32>
    %456 = arith.addf %454, %455 : vector<2x256xf32>
    %457 = vector.extract_strided_slice %456 {offsets = [0, 0], sizes = [2, 64], strides = [1, 1]} : vector<2x256xf32> to vector<2x64xf32>
    %cst_208 = arith.constant 5.000000e-01 : f32
    %458 = vector.broadcast %cst_208 : f32 to vector<2x64xf32>
    %459 = arith.mulf %458, %457 : vector<2x64xf32>
    %460 = math.tanh %459 : vector<2x64xf32>
    %cst_209 = arith.constant 1.000000e+00 : f32
    %461 = vector.broadcast %cst_209 : f32 to vector<2x64xf32>
    %462 = arith.addf %460, %461 : vector<2x64xf32>
    %cst_210 = arith.constant 5.000000e-01 : f32
    %463 = vector.broadcast %cst_210 : f32 to vector<2x64xf32>
    %464 = arith.mulf %463, %462 : vector<2x64xf32>
    %465 = vector.extract_strided_slice %456 {offsets = [0, 64], sizes = [2, 64], strides = [1, 1]} : vector<2x256xf32> to vector<2x64xf32>
    %cst_211 = arith.constant 5.000000e-01 : f32
    %466 = vector.broadcast %cst_211 : f32 to vector<2x64xf32>
    %467 = arith.mulf %466, %465 : vector<2x64xf32>
    %468 = math.tanh %467 : vector<2x64xf32>
    %cst_212 = arith.constant 1.000000e+00 : f32
    %469 = vector.broadcast %cst_212 : f32 to vector<2x64xf32>
    %470 = arith.addf %468, %469 : vector<2x64xf32>
    %cst_213 = arith.constant 5.000000e-01 : f32
    %471 = vector.broadcast %cst_213 : f32 to vector<2x64xf32>
    %472 = arith.mulf %471, %470 : vector<2x64xf32>
    %473 = vector.extract_strided_slice %456 {offsets = [0, 128], sizes = [2, 64], strides = [1, 1]} : vector<2x256xf32> to vector<2x64xf32>
    %474 = math.tanh %473 : vector<2x64xf32>
    %475 = vector.extract_strided_slice %456 {offsets = [0, 192], sizes = [2, 64], strides = [1, 1]} : vector<2x256xf32> to vector<2x64xf32>
    %cst_214 = arith.constant 5.000000e-01 : f32
    %476 = vector.broadcast %cst_214 : f32 to vector<2x64xf32>
    %477 = arith.mulf %476, %475 : vector<2x64xf32>
    %478 = math.tanh %477 : vector<2x64xf32>
    %cst_215 = arith.constant 1.000000e+00 : f32
    %479 = vector.broadcast %cst_215 : f32 to vector<2x64xf32>
    %480 = arith.addf %478, %479 : vector<2x64xf32>
    %cst_216 = arith.constant 5.000000e-01 : f32
    %481 = vector.broadcast %cst_216 : f32 to vector<2x64xf32>
    %482 = arith.mulf %481, %480 : vector<2x64xf32>
    %483 = arith.mulf %472, %371 : vector<2x64xf32>
    %484 = arith.mulf %464, %474 : vector<2x64xf32>
    %485 = arith.addf %483, %484 : vector<2x64xf32>
    %486 = math.tanh %485 : vector<2x64xf32>
    %487 = arith.mulf %482, %486 : vector<2x64xf32>
    %cst_217 = arith.constant dense<0.000000e+00> : vector<2x32xf32>
    %488 = tpu.matmul %487, %75, %cst_217 {dimension_numbers = #tpu.dot_dimension_numbers<[1], [0], [0], [1], [0, 0, 1, 1], [], []>} : vector<2x64xf32>, vector<64x32xf32>, vector<2x32xf32> -> vector<2x32xf32>
    %489 = vector.broadcast %76 : vector<1x32xf32> to vector<2x32xf32>
    %490 = arith.addf %488, %489 : vector<2x32xf32>
    %491 = vector.extract_strided_slice %490 {offsets = [0, 0], sizes = [2, 16], strides = [1, 1]} : vector<2x32xf32> to vector<2x16xf32>
    %492 = vector.extract_strided_slice %490 {offsets = [0, 16], sizes = [2, 16], strides = [1, 1]} : vector<2x32xf32> to vector<2x16xf32>
    %cst_218 = arith.constant 5.000000e-01 : f32
    %493 = vector.broadcast %cst_218 : f32 to vector<2x16xf32>
    %494 = arith.mulf %493, %492 : vector<2x16xf32>
    %495 = math.exp %494 : vector<2x16xf32>
    %c3 = arith.constant 3 : index
    %c0_219 = arith.constant 0 : index
    %c0_220 = arith.constant 0 : index
    %496 = vector.load %arg5[%c3, %c0_219, %c0_220] : memref<4x2x16xf32, #tpu.memory_space<vmem>>, vector<1x2x16xf32>
    %497 = vector.shape_cast %496 : vector<1x2x16xf32> to vector<2x16xf32>
    %498 = arith.mulf %495, %497 : vector<2x16xf32>
    %499 = arith.addf %491, %498 : vector<2x16xf32>
    %500 = arith.mulf %491, %491 : vector<2x16xf32>
    %501 = math.exp %492 : vector<2x16xf32>
    %502 = arith.addf %500, %501 : vector<2x16xf32>
    %503 = arith.subf %502, %492 : vector<2x16xf32>
    %cst_221 = arith.constant 1.000000e+00 : f32
    %504 = vector.broadcast %cst_221 : f32 to vector<2x16xf32>
    %505 = arith.subf %503, %504 : vector<2x16xf32>
    %cst_222 = arith.constant dense<0.000000e+00> : vector<2xf32>
    %506 = vector.multi_reduction <add>, %505, %cst_222 [1] : vector<2x16xf32> to vector<2xf32>
    %507 = vector.shape_cast %506 : vector<2xf32> to vector<2x1xf32>
    %cst_223 = arith.constant 5.000000e-01 : f32
    %508 = vector.broadcast %cst_223 : f32 to vector<2x1xf32>
    %509 = arith.mulf %508, %507 : vector<2x1xf32>
    %510 = arith.addf %396, %509 : vector<2x1xf32>
    %cst_224 = arith.constant dense<0.000000e+00> : vector<2x256xf32>
    %511 = tpu.matmul %499, %72, %cst_224 {dimension_numbers = #tpu.dot_dimension_numbers<[1], [0], [0], [1], [0, 0, 1, 1], [], []>} : vector<2x16xf32>, vector<16x256xf32>, vector<2x256xf32> -> vector<2x256xf32>
    %512 = arith.addf %511, %90 : vector<2x256xf32>
    %cst_225 = arith.constant dense<0.000000e+00> : vector<2x256xf32>
    %513 = tpu.matmul %433, %73, %cst_225 {dimension_numbers = #tpu.dot_dimension_numbers<[1], [0], [0], [1], [0, 0, 1, 1], [], []>} : vector<2x64xf32>, vector<64x256xf32>, vector<2x256xf32> -> vector<2x256xf32>
    %514 = arith.addf %512, %513 : vector<2x256xf32>
    %515 = vector.broadcast %74 : vector<1x256xf32> to vector<2x256xf32>
    %516 = arith.addf %514, %515 : vector<2x256xf32>
    %517 = vector.extract_strided_slice %516 {offsets = [0, 0], sizes = [2, 64], strides = [1, 1]} : vector<2x256xf32> to vector<2x64xf32>
    %cst_226 = arith.constant 5.000000e-01 : f32
    %518 = vector.broadcast %cst_226 : f32 to vector<2x64xf32>
    %519 = arith.mulf %518, %517 : vector<2x64xf32>
    %520 = math.tanh %519 : vector<2x64xf32>
    %cst_227 = arith.constant 1.000000e+00 : f32
    %521 = vector.broadcast %cst_227 : f32 to vector<2x64xf32>
    %522 = arith.addf %520, %521 : vector<2x64xf32>
    %cst_228 = arith.constant 5.000000e-01 : f32
    %523 = vector.broadcast %cst_228 : f32 to vector<2x64xf32>
    %524 = arith.mulf %523, %522 : vector<2x64xf32>
    %525 = vector.extract_strided_slice %516 {offsets = [0, 64], sizes = [2, 64], strides = [1, 1]} : vector<2x256xf32> to vector<2x64xf32>
    %cst_229 = arith.constant 5.000000e-01 : f32
    %526 = vector.broadcast %cst_229 : f32 to vector<2x64xf32>
    %527 = arith.mulf %526, %525 : vector<2x64xf32>
    %528 = math.tanh %527 : vector<2x64xf32>
    %cst_230 = arith.constant 1.000000e+00 : f32
    %529 = vector.broadcast %cst_230 : f32 to vector<2x64xf32>
    %530 = arith.addf %528, %529 : vector<2x64xf32>
    %cst_231 = arith.constant 5.000000e-01 : f32
    %531 = vector.broadcast %cst_231 : f32 to vector<2x64xf32>
    %532 = arith.mulf %531, %530 : vector<2x64xf32>
    %533 = vector.extract_strided_slice %516 {offsets = [0, 128], sizes = [2, 64], strides = [1, 1]} : vector<2x256xf32> to vector<2x64xf32>
    %534 = math.tanh %533 : vector<2x64xf32>
    %535 = vector.extract_strided_slice %516 {offsets = [0, 192], sizes = [2, 64], strides = [1, 1]} : vector<2x256xf32> to vector<2x64xf32>
    %cst_232 = arith.constant 5.000000e-01 : f32
    %536 = vector.broadcast %cst_232 : f32 to vector<2x64xf32>
    %537 = arith.mulf %536, %535 : vector<2x64xf32>
    %538 = math.tanh %537 : vector<2x64xf32>
    %cst_233 = arith.constant 1.000000e+00 : f32
    %539 = vector.broadcast %cst_233 : f32 to vector<2x64xf32>
    %540 = arith.addf %538, %539 : vector<2x64xf32>
    %cst_234 = arith.constant 5.000000e-01 : f32
    %541 = vector.broadcast %cst_234 : f32 to vector<2x64xf32>
    %542 = arith.mulf %541, %540 : vector<2x64xf32>
    %543 = arith.mulf %532, %431 : vector<2x64xf32>
    %544 = arith.mulf %524, %534 : vector<2x64xf32>
    %545 = arith.addf %543, %544 : vector<2x64xf32>
    %546 = math.tanh %545 : vector<2x64xf32>
    %547 = arith.mulf %542, %546 : vector<2x64xf32>
    %548 = arith.truncf %547 : vector<2x64xf32> to vector<2x64xbf16>
    %cst_235 = arith.constant dense<0.000000e+00> : vector<2x768xf32>
    %549 = tpu.matmul %548, %77, %cst_235 {dimension_numbers = #tpu.dot_dimension_numbers<[1], [0], [0], [1], [0, 0, 1, 1], [], []>} : vector<2x64xbf16>, vector<64x768xbf16>, vector<2x768xf32> -> vector<2x768xf32>
    %550 = arith.addf %438, %549 : vector<2x768xf32>
    %551 = vector.broadcast %78 : vector<1x768xf32> to vector<2x768xf32>
    %552 = arith.addf %550, %551 : vector<2x768xf32>
    %cst_236 = arith.constant 5.000000e-01 : f32
    %553 = vector.broadcast %cst_236 : f32 to vector<2x768xf32>
    %554 = arith.mulf %553, %552 : vector<2x768xf32>
    %555 = math.tanh %554 : vector<2x768xf32>
    %cst_237 = arith.constant 1.000000e+00 : f32
    %556 = vector.broadcast %cst_237 : f32 to vector<2x768xf32>
    %557 = arith.addf %555, %556 : vector<2x768xf32>
    %cst_238 = arith.constant 5.000000e-01 : f32
    %558 = vector.broadcast %cst_238 : f32 to vector<2x768xf32>
    %559 = arith.mulf %558, %557 : vector<2x768xf32>
    %c0_239 = arith.constant 0 : index
    %c0_240 = arith.constant 0 : index
    %560 = vector.load %arg37[%c0_239, %c0_240] : memref<2x768xf32, #tpu.memory_space<vmem>>, vector<2x768xf32>
    tpu.vector_store %arg37[%c0_239, %c0_240], %559 {strides = array<i32>} : memref<2x768xf32, #tpu.memory_space<vmem>>, vector<2x768xf32>,
    %561 = arith.subf %66, %559 : vector<2x768xf32>
    %562 = arith.mulf %561, %561 : vector<2x768xf32>
    %cst_241 = arith.constant dense<0.000000e+00> : vector<2xf32>
    %563 = vector.multi_reduction <add>, %562, %cst_241 [1] : vector<2x768xf32> to vector<2xf32>
    %564 = vector.shape_cast %563 : vector<2xf32> to vector<2x1xf32>
    %cst_242 = arith.constant 1.02040815 : f32
    %565 = vector.broadcast %cst_242 : f32 to vector<2x1xf32>
    %566 = arith.mulf %564, %565 : vector<2x1xf32>
    %cst_243 = arith.constant 431.818451 : f32
    %567 = vector.broadcast %cst_243 : f32 to vector<2x1xf32>
    %568 = arith.addf %566, %567 : vector<2x1xf32>
    %569 = tpu.iota {dimensions = array<i32: 1>} : vector<2x2xi32>
    %c0_i32 = arith.constant 0 : i32
    %570 = vector.broadcast %c0_i32 : i32 to vector<2x2xi32>
    %571 = arith.cmpi eq, %569, %570 : vector<2x2xi32>
    %572 = vector.shape_cast %510 : vector<2x1xf32> to vector<2x1xf32>
    %573 = vector.broadcast %572 : vector<2x1xf32> to vector<2x2xf32>
    %574 = vector.shape_cast %568 : vector<2x1xf32> to vector<2x1xf32>
    %575 = vector.broadcast %574 : vector<2x1xf32> to vector<2x2xf32>
    %576 = arith.select %571, %573, %575 : vector<2x2xi1>, vector<2x2xf32>
    %c0_244 = arith.constant 0 : index
    %c0_245 = arith.constant 0 : index
    %577 = vector.load %arg38[%c0_244, %c0_245] : memref<2x2xf32, #tpu.memory_space<vmem>>, vector<2x2xf32>
    tpu.vector_store %arg38[%c0_244, %c0_245], %576 {strides = array<i32>} : memref<2x2xf32, #tpu.memory_space<vmem>>, vector<2x2xf32>,
    return
  }
}

</mosaic_0001>

<llo_original>
// kernel: slim_forward.1
$region0: #{slim_forward.1}
  #allocation0 [shape = 'u32[]', space=smem, size = 0x4, offset = 0x4, fixed_abs, tag = 'smem constant byte address 0x4 - core index']
  #allocation1 [shape = 'u32[144,128]{1,0:T(1,128)}', space=vmem, size = 0x12000, scoped, tag = 'internal scratch']
  %s0 = inlined_call_operand.smem [shape: u32[39], index: -1, kind: input, shape index: {}]
  %s1 = sld [smem:[%s0]]
  %s2 = scalar_lea.smem %s0, 1
  %s3 = sld [smem:[%s2]]
  %s4 = scalar_lea.smem %s0, 2
  %s5 = sld [smem:[%s4]]
  %s6 = scalar_lea.smem %s0, 3
  %s7 = sld [smem:[%s6]]
  %s8 = scalar_lea.smem %s0, 4
  %s9 = sld [smem:[%s8]]
  %s10 = scalar_lea.smem %s0, 5
  %s11 = sld [smem:[%s10]]
  %s12 = scalar_lea.smem %s0, 6
  %s13 = sld [smem:[%s12]]
  %s14 = scalar_lea.smem %s0, 7
  %s15 = sld [smem:[%s14]]
  %s16 = scalar_lea.smem %s0, 8
  %s17 = sld [smem:[%s16]]
  %s18 = scalar_lea.smem %s0, 9
  %s19 = sld [smem:[%s18]]
  %s20 = scalar_lea.smem %s0, 10
  %s21 = sld [smem:[%s20]]
  %s22 = scalar_lea.smem %s0, 11
  %s23 = sld [smem:[%s22]]
  %s24 = scalar_lea.smem %s0, 12
  %s25 = sld [smem:[%s24]]
  %s26 = scalar_lea.smem %s0, 13
  %s27 = sld [smem:[%s26]]
  %s28 = scalar_lea.smem %s0, 14
  %s29 = sld [smem:[%s28]]
  %s30 = scalar_lea.smem %s0, 15
  %s31 = sld [smem:[%s30]]
  %s32 = scalar_lea.smem %s0, 16
  %s33 = sld [smem:[%s32]]
  %s34 = scalar_lea.smem %s0, 17
  %s35 = sld [smem:[%s34]]
  %s36 = scalar_lea.smem %s0, 18
  %s37 = sld [smem:[%s36]]
  %s38 = scalar_lea.smem %s0, 19
  %s39 = sld [smem:[%s38]]
  %s40 = scalar_lea.smem %s0, 20
  %s41 = sld [smem:[%s40]]
  %s42 = scalar_lea.smem %s0, 21
  %s43 = sld [smem:[%s42]]
  %s44 = scalar_lea.smem %s0, 22
  %s45 = sld [smem:[%s44]]
  %s46 = scalar_lea.smem %s0, 23
  %s47 = sld [smem:[%s46]]
  %s48 = scalar_lea.smem %s0, 24
  %s49 = sld [smem:[%s48]]
  %s50 = scalar_lea.smem %s0, 25
  %s51 = sld [smem:[%s50]]
  %s52 = scalar_lea.smem %s0, 26
  %s53 = sld [smem:[%s52]]
  %s54 = scalar_lea.smem %s0, 27
  %s55 = sld [smem:[%s54]]
  %s56 = scalar_lea.smem %s0, 28
  %s57 = sld [smem:[%s56]]
  %s58 = scalar_lea.smem %s0, 29
  %s59 = sld [smem:[%s58]]
  %s60 = scalar_lea.smem %s0, 30
  %s61 = sld [smem:[%s60]]
  %s62 = scalar_lea.smem %s0, 31
  %s63 = sld [smem:[%s62]]
  %s64 = scalar_lea.smem %s0, 32
  %s65 = sld [smem:[%s64]]
  %s66 = scalar_lea.smem %s0, 33
  %s67 = sld [smem:[%s66]]
  %s68 = scalar_lea.smem %s0, 34
  %s69 = sld [smem:[%s68]]
  %s70 = scalar_lea.smem %s0, 35
  %s71 = sld [smem:[%s70]]
  %s72 = scalar_lea.smem %s0, 36
  %s73 = sld [smem:[%s72]]
  %s74 = scalar_lea.smem %s0, 37
  %s75 = sld [smem:[%s74]]
  %s76 = scalar_lea.smem %s0, 38
  %s77 = sld [smem:[%s76]]
  %78 = xla_tuple %s75, %s77
  %s79 = sld [smem:[#allocation0]]
  $region262: #{slim_forward.1} parent=0
    _
  %s81 = ssub.s32 1, %s79
  %s82 = scalar_select 0, %s81, %s79
  $region1: #{slim_forward.1} parent=0
    #allocation2 [shape = 'u8[1024]{0}', space=vmem, size = 0x400, scoped, tag = 'input window, operand 2, single buffered']
    #allocation3 [shape = 's32[1]{0}', space=sflag, size = 0x4, scoped, tag = 'scoped memory for slim_forward.1']
    #allocation4 [shape = 's32[1]{0}', space=sflag, size = 0x4, scoped, tag = 'scoped memory for slim_forward.1']
    #allocation5 [shape = 'u8[16384]{0}', space=vmem, size = 0x4000, scoped, tag = 'input window, operand 6, single buffered']
    #allocation6 [shape = 's32[1]{0}', space=sflag, size = 0x4, scoped, tag = 'scoped memory for slim_forward.1']
    #allocation7 [shape = 'u8[512]{0}', space=vmem, size = 0x400, scoped, tag = 'input window, operand 7, single buffered']
    #allocation8 [shape = 'u8[16384]{0}', space=vmem, size = 0x4000, scoped, tag = 'input window, operand 8, single buffered']
    #allocation9 [shape = 's32[1]{0}', space=sflag, size = 0x4, scoped, tag = 'scoped memory for slim_forward.1']
    #allocation10 [shape = 'u8[512]{0}', space=vmem, size = 0x400, scoped, tag = 'input window, operand 9, single buffered']
    #allocation11 [shape = 'u8[16384]{0}', space=vmem, size = 0x4000, scoped, tag = 'input window, operand 10, single buffered']
    #allocation12 [shape = 's32[1]{0}', space=sflag, size = 0x4, scoped, tag = 'scoped memory for slim_forward.1']
    #allocation13 [shape = 'u8[512]{0}', space=vmem, size = 0x400, scoped, tag = 'input window, operand 11, single buffered']
    #allocation14 [shape = 'u8[2048]{0}', space=vmem, size = 0x800, scoped, tag = 'input window, operand 12, single buffered']
    #allocation15 [shape = 's32[1]{0}', space=sflag, size = 0x4, scoped, tag = 'scoped memory for slim_forward.1']
    #allocation16 [shape = 'u8[512]{0}', space=vmem, size = 0x400, scoped, tag = 'input window, operand 13, single buffered']
    #allocation17 [shape = 'u8[16384]{0}', space=vmem, size = 0x4000, scoped, tag = 'input window, operand 14, single buffered']
    #allocation18 [shape = 's32[1]{0}', space=sflag, size = 0x4, scoped, tag = 'scoped memory for slim_forward.1']
    #allocation19 [shape = 'u8[16384]{0}', space=vmem, size = 0x4000, scoped, tag = 'input window, operand 15, single buffered']
    #allocation20 [shape = 'u8[512]{0}', space=vmem, size = 0x400, scoped, tag = 'input window, operand 16, single buffered']
    #allocation21 [shape = 's32[1]{0}', space=sflag, size = 0x4, scoped, tag = 'scoped memory for slim_forward.1']
    #allocation22 [shape = 'u8[512]{0}', space=vmem, size = 0x400, scoped, tag = 'input window, operand 18, single buffered']
    #allocation23 [shape = 'u8[2048]{0}', space=vmem, size = 0x800, scoped, tag = 'input window, operand 19, single buffered']
    #allocation24 [shape = 's32[1]{0}', space=sflag, size = 0x4, scoped, tag = 'scoped memory for slim_forward.1']
    #allocation25 [shape = 'u8[512]{0}', space=vmem, size = 0x400, scoped, tag = 'input window, operand 20, single buffered']
    #allocation26 [shape = 'u8[393216]{0}', space=vmem, size = 0x60000, scoped, tag = 'input window, operand 22, single buffered']
    #allocation27 [shape = 's32[1]{0}', space=sflag, size = 0x4, scoped, tag = 'scoped memory for slim_forward.1']
    #allocation28 [shape = 'u8[32768]{0}', space=vmem, size = 0x8000, scoped, tag = 'input window, operand 24, single buffered']
    #allocation29 [shape = 'u8[32768]{0}', space=vmem, size = 0x8000, scoped, tag = 'input window, operand 25, single buffered']
    #allocation30 [shape = 's32[1]{0}', space=sflag, size = 0x4, scoped, tag = 'scoped memory for slim_forward.1']
    #allocation31 [shape = 'u8[65536]{0}', space=vmem, size = 0x10000, scoped, tag = 'input window, operand 26, single buffered']
    #allocation32 [shape = 'u8[1024]{0}', space=vmem, size = 0x400, scoped, tag = 'input window, operand 27, single buffered']
    #allocation33 [shape = 's32[1]{0}', space=sflag, size = 0x4, scoped, tag = 'scoped memory for slim_forward.1']
    #allocation34 [shape = 'u8[16384]{0}', space=vmem, size = 0x4000, scoped, tag = 'input window, operand 28, single buffered']
    #allocation35 [shape = 'u8[32768]{0}', space=vmem, size = 0x8000, scoped, tag = 'input window, operand 30, single buffered']
    #allocation36 [shape = 's32[1]{0}', space=sflag, size = 0x4, scoped, tag = 'scoped memory for slim_forward.1']
    #allocation37 [shape = 'u8[65536]{0}', space=vmem, size = 0x10000, scoped, tag = 'input window, operand 31, single buffered']
    #allocation38 [shape = 'u8[1024]{0}', space=vmem, size = 0x400, scoped, tag = 'input window, operand 32, single buffered']
    #allocation39 [shape = 's32[1]{0}', space=sflag, size = 0x4, scoped, tag = 'scoped memory for slim_forward.1']
    #allocation40 [shape = 'u8[6144]{0}', space=vmem, size = 0x1800, scoped, tag = 'output window, operand 0, single buffered']
    %83 = vsyncpa [#allocation3], 0
    %84 = vsyncpa [#allocation6], 0
    %85 = vsyncpa [#allocation9], 0
    %86 = vsyncpa [#allocation12], 0
    %87 = vsyncpa [#allocation15], 0
    %88 = vsyncpa [#allocation18], 0
    %89 = vsyncpa [#allocation21], 0
    %90 = vsyncpa [#allocation24], 0
    %91 = vsyncpa [#allocation27], 0
    %92 = vsyncpa [#allocation30], 0
    %93 = vsyncpa [#allocation33], 0
    %94 = vsyncpa [#allocation36], 0
    %95 = vsyncpa [#allocation39], 0
    %96 = vsyncpa [#allocation4], 0
    // Predicated region
    $region2: #{slim_forward.1} parent=1 // pred_check
      _
    $region3: #{slim_forward.1} parent=1 // pred_check_branch
      %98 = sbr.rel (0) target = $region5
    $region4: #{slim_forward.1} parent=1 // pred_region
      _
    $region5: #{slim_forward.1} parent=1 // pred_fallthru
      _
    // Predicated region
    $region6: #{slim_forward.1} parent=1 // pred_check
      _
    $region7: #{slim_forward.1} parent=1 // pred_check_branch
      %100 = sbr.rel (0) target = $region9
    $region8: #{slim_forward.1} parent=1 // pred_region
      _
    $region9: #{slim_forward.1} parent=1 // pred_fallthru
      _
    // Predicated region
    $region10: #{slim_forward.1} parent=1 // pred_check
      _
    $region11: #{slim_forward.1} parent=1 // pred_check_branch
      %102 = sbr.rel (0) target = $region13
    $region12: #{slim_forward.1} parent=1 // pred_region
      %s104 = ssub.s32 32, 32
      %105 = vsyncadd [#allocation3], %s104
      %s107 = sshll.u32 [#allocation2], 4
      %s108 = int_to_ptr.vmem [resolvable:$true] %s107
      %110 = dma.hbm_to_vmem [thread:$0]  %s5, 32, %s108, [#allocation3]
    $region13: #{slim_forward.1} parent=1 // pred_fallthru
      _
    // Predicated region
    $region14: #{slim_forward.1} parent=1 // pred_check
      _
    $region15: #{slim_forward.1} parent=1 // pred_check_branch
      %112 = sbr.rel (0) target = $region17
    $region16: #{slim_forward.1} parent=1 // pred_region
      _
    $region17: #{slim_forward.1} parent=1 // pred_fallthru
      _
    // Predicated region
    $region18: #{slim_forward.1} parent=1 // pred_check
      _
    $region19: #{slim_forward.1} parent=1 // pred_check_branch
      %114 = sbr.rel (0) target = $region21
    $region20: #{slim_forward.1} parent=1 // pred_region
      _
    $region21: #{slim_forward.1} parent=1 // pred_fallthru
      _
    // Predicated region
    $region22: #{slim_forward.1} parent=1 // pred_check
      _
    $region23: #{slim_forward.1} parent=1 // pred_check_branch
      %116 = sbr.rel (0) target = $region25
    $region24: #{slim_forward.1} parent=1 // pred_region
      _
    $region25: #{slim_forward.1} parent=1 // pred_fallthru
      _
    // Predicated region
    $region26: #{slim_forward.1} parent=1 // pred_check
      _
    $region27: #{slim_forward.1} parent=1 // pred_check_branch
      %118 = sbr.rel (0) target = $region29
    $region28: #{slim_forward.1} parent=1 // pred_region
      %s120 = ssub.s32 512, 512
      %121 = vsyncadd [#allocation6], %s120
      %s122 = sshll.u32 [#allocation5], 4
      %s123 = int_to_ptr.vmem [resolvable:$true] %s122
      %128 = dma.hbm_to_vmem [thread:$0]  %s13, 512, %s123, [#allocation6], 128, 128, 8
    $region29: #{slim_forward.1} parent=1 // pred_fallthru
      _
    // Predicated region
    $region30: #{slim_forward.1} parent=1 // pred_check
      _
    $region31: #{slim_forward.1} parent=1 // pred_check_branch
      %130 = sbr.rel (0) target = $region33
    $region32: #{slim_forward.1} parent=1 // pred_region
      %s132 = ssub.s32 16, 16
      %133 = vsyncadd [#allocation6], %s132
      %s135 = sshll.u32 [#allocation7], 4
      %s136 = int_to_ptr.vmem [resolvable:$true] %s135
      %138 = dma.hbm_to_vmem [thread:$0]  %s15, 16, %s136, [#allocation6]
    $region33: #{slim_forward.1} parent=1 // pred_fallthru
      _
    // Predicated region
    $region34: #{slim_forward.1} parent=1 // pred_check
      _
    $region35: #{slim_forward.1} parent=1 // pred_check_branch
      %140 = sbr.rel (0) target = $region37
    $region36: #{slim_forward.1} parent=1 // pred_region
      %s142 = ssub.s32 512, 512
      %143 = vsyncadd [#allocation9], %s142
      %s144 = sshll.u32 [#allocation8], 4
      %s145 = int_to_ptr.vmem [resolvable:$true] %s144
      %150 = dma.hbm_to_vmem [thread:$0]  %s17, 512, %s145, [#allocation9], 128, 128, 8
    $region37: #{slim_forward.1} parent=1 // pred_fallthru
      _
    // Predicated region
    $region38: #{slim_forward.1} parent=1 // pred_check
      _
    $region39: #{slim_forward.1} parent=1 // pred_check_branch
      %152 = sbr.rel (0) target = $region41
    $region40: #{slim_forward.1} parent=1 // pred_region
      %s154 = ssub.s32 16, 16
      %155 = vsyncadd [#allocation9], %s154
      %s157 = sshll.u32 [#allocation10], 4
      %s158 = int_to_ptr.vmem [resolvable:$true] %s157
      %160 = dma.hbm_to_vmem [thread:$0]  %s19, 16, %s158, [#allocation9]
    $region41: #{slim_forward.1} parent=1 // pred_fallthru
      _
    // Predicated region
    $region42: #{slim_forward.1} parent=1 // pred_check
      _
    $region43: #{slim_forward.1} parent=1 // pred_check_branch
      %162 = sbr.rel (0) target = $region45
    $region44: #{slim_forward.1} parent=1 // pred_region
      %s164 = ssub.s32 512, 512
      %165 = vsyncadd [#allocation12], %s164
      %s166 = sshll.u32 [#allocation11], 4
      %s167 = int_to_ptr.vmem [resolvable:$true] %s166
      %172 = dma.hbm_to_vmem [thread:$0]  %s21, 512, %s167, [#allocation12], 128, 128, 8
    $region45: #{slim_forward.1} parent=1 // pred_fallthru
      _
    // Predicated region
    $region46: #{slim_forward.1} parent=1 // pred_check
      _
    $region47: #{slim_forward.1} parent=1 // pred_check_branch
      %174 = sbr.rel (0) target = $region49
    $region48: #{slim_forward.1} parent=1 // pred_region
      %s176 = ssub.s32 16, 16
      %177 = vsyncadd [#allocation12], %s176
      %s179 = sshll.u32 [#allocation13], 4
      %s180 = int_to_ptr.vmem [resolvable:$true] %s179
      %182 = dma.hbm_to_vmem [thread:$0]  %s23, 16, %s180, [#allocation12]
    $region49: #{slim_forward.1} parent=1 // pred_fallthru
      _
    // Predicated region
    $region50: #{slim_forward.1} parent=1 // pred_check
      _
    $region51: #{slim_forward.1} parent=1 // pred_check_branch
      %184 = sbr.rel (0) target = $region53
    $region52: #{slim_forward.1} parent=1 // pred_region
      %s186 = ssub.s32 64, 64
      %187 = vsyncadd [#allocation15], %s186
      %s189 = sshll.u32 [#allocation14], 4
      %s190 = int_to_ptr.vmem [resolvable:$true] %s189
      %192 = dma.hbm_to_vmem [thread:$0]  %s25, 64, %s190, [#allocation15]
    $region53: #{slim_forward.1} parent=1 // pred_fallthru
      _
    // Predicated region
    $region54: #{slim_forward.1} parent=1 // pred_check
      _
    $region55: #{slim_forward.1} parent=1 // pred_check_branch
      %194 = sbr.rel (0) target = $region57
    $region56: #{slim_forward.1} parent=1 // pred_region
      %s196 = ssub.s32 16, 16
      %197 = vsyncadd [#allocation15], %s196
      %s199 = sshll.u32 [#allocation16], 4
      %s200 = int_to_ptr.vmem [resolvable:$true] %s199
      %202 = dma.hbm_to_vmem [thread:$0]  %s27, 16, %s200, [#allocation15]
    $region57: #{slim_forward.1} parent=1 // pred_fallthru
      _
    // Predicated region
    $region58: #{slim_forward.1} parent=1 // pred_check
      _
    $region59: #{slim_forward.1} parent=1 // pred_check_branch
      %204 = sbr.rel (0) target = $region61
    $region60: #{slim_forward.1} parent=1 // pred_region
      %s206 = ssub.s32 512, 512
      %207 = vsyncadd [#allocation18], %s206
      %s208 = sshll.u32 [#allocation17], 4
      %s209 = int_to_ptr.vmem [resolvable:$true] %s208
      %214 = dma.hbm_to_vmem [thread:$0]  %s29, 512, %s209, [#allocation18], 128, 128, 8
    $region61: #{slim_forward.1} parent=1 // pred_fallthru
      _
    // Predicated region
    $region62: #{slim_forward.1} parent=1 // pred_check
      _
    $region63: #{slim_forward.1} parent=1 // pred_check_branch
      %216 = sbr.rel (0) target = $region65
    $region64: #{slim_forward.1} parent=1 // pred_region
      %s218 = ssub.s32 512, 512
      %219 = vsyncadd [#allocation18], %s218
      %s220 = sshll.u32 [#allocation19], 4
      %s221 = int_to_ptr.vmem [resolvable:$true] %s220
      %226 = dma.hbm_to_vmem [thread:$0]  %s31, 512, %s221, [#allocation18], 128, 128, 8
    $region65: #{slim_forward.1} parent=1 // pred_fallthru
      _
    // Predicated region
    $region66: #{slim_forward.1} parent=1 // pred_check
      _
    $region67: #{slim_forward.1} parent=1 // pred_check_branch
      %228 = sbr.rel (0) target = $region69
    $region68: #{slim_forward.1} parent=1 // pred_region
      %s230 = ssub.s32 16, 16
      %231 = vsyncadd [#allocation21], %s230
      %s233 = sshll.u32 [#allocation20], 4
      %s234 = int_to_ptr.vmem [resolvable:$true] %s233
      %236 = dma.hbm_to_vmem [thread:$0]  %s33, 16, %s234, [#allocation21]
    $region69: #{slim_forward.1} parent=1 // pred_fallthru
      _
    // Predicated region
    $region70: #{slim_forward.1} parent=1 // pred_check
      _
    $region71: #{slim_forward.1} parent=1 // pred_check_branch
      %238 = sbr.rel (0) target = $region73
    $region72: #{slim_forward.1} parent=1 // pred_region
      _
    $region73: #{slim_forward.1} parent=1 // pred_fallthru
      _
    // Predicated region
    $region74: #{slim_forward.1} parent=1 // pred_check
      _
    $region75: #{slim_forward.1} parent=1 // pred_check_branch
      %240 = sbr.rel (0) target = $region77
    $region76: #{slim_forward.1} parent=1 // pred_region
      %s242 = ssub.s32 16, 16
      %243 = vsyncadd [#allocation21], %s242
      %s245 = sshll.u32 [#allocation22], 4
      %s246 = int_to_ptr.vmem [resolvable:$true] %s245
      %248 = dma.hbm_to_vmem [thread:$0]  %s37, 16, %s246, [#allocation21]
    $region77: #{slim_forward.1} parent=1 // pred_fallthru
      _
    // Predicated region
    $region78: #{slim_forward.1} parent=1 // pred_check
      _
    $region79: #{slim_forward.1} parent=1 // pred_check_branch
      %250 = sbr.rel (0) target = $region81
    $region80: #{slim_forward.1} parent=1 // pred_region
      %s252 = ssub.s32 64, 64
      %253 = vsyncadd [#allocation24], %s252
      %s255 = sshll.u32 [#allocation23], 4
      %s256 = int_to_ptr.vmem [resolvable:$true] %s255
      %258 = dma.hbm_to_vmem [thread:$0]  %s39, 64, %s256, [#allocation24]
    $region81: #{slim_forward.1} parent=1 // pred_fallthru
      _
    // Predicated region
    $region82: #{slim_forward.1} parent=1 // pred_check
      _
    $region83: #{slim_forward.1} parent=1 // pred_check_branch
      %260 = sbr.rel (0) target = $region85
    $region84: #{slim_forward.1} parent=1 // pred_region
      %s262 = ssub.s32 16, 16
      %263 = vsyncadd [#allocation24], %s262
      %s265 = sshll.u32 [#allocation25], 4
      %s266 = int_to_ptr.vmem [resolvable:$true] %s265
      %268 = dma.hbm_to_vmem [thread:$0]  %s41, 16, %s266, [#allocation24]
    $region85: #{slim_forward.1} parent=1 // pred_fallthru
      _
    // Predicated region
    $region86: #{slim_forward.1} parent=1 // pred_check
      _
    $region87: #{slim_forward.1} parent=1 // pred_check_branch
      %270 = sbr.rel (0) target = $region89
    $region88: #{slim_forward.1} parent=1 // pred_region
      _
    $region89: #{slim_forward.1} parent=1 // pred_fallthru
      _
    // Predicated region
    $region90: #{slim_forward.1} parent=1 // pred_check
      _
    $region91: #{slim_forward.1} parent=1 // pred_check_branch
      %272 = sbr.rel (0) target = $region93
    $region92: #{slim_forward.1} parent=1 // pred_region
      %s274 = ssub.s32 12288, 12288
      %275 = vsyncadd [#allocation27], %s274
      %s276 = sshll.u32 [#allocation26], 4
      %s277 = int_to_ptr.vmem [resolvable:$true] %s276
      %282 = dma.hbm_to_vmem [thread:$0]  %s45, 12288, %s277, [#allocation27], 128, 128, 8
    $region93: #{slim_forward.1} parent=1 // pred_fallthru
      _
    // Predicated region
    $region94: #{slim_forward.1} parent=1 // pred_check
      _
    $region95: #{slim_forward.1} parent=1 // pred_check_branch
      %284 = sbr.rel (0) target = $region97
    $region96: #{slim_forward.1} parent=1 // pred_region
      _
    $region97: #{slim_forward.1} parent=1 // pred_fallthru
      _
    // Predicated region
    $region98: #{slim_forward.1} parent=1 // pred_check
      _
    $region99: #{slim_forward.1} parent=1 // pred_check_branch
      %286 = sbr.rel (0) target = $region101
    $region100: #{slim_forward.1} parent=1 // pred_region
      %s288 = ssub.s32 1024, 1024
      %289 = vsyncadd [#allocation27], %s288
      %s290 = sshll.u32 [#allocation28], 4
      %s291 = int_to_ptr.vmem [resolvable:$true] %s290
      %296 = dma.hbm_to_vmem [thread:$0]  %s49, 1024, %s291, [#allocation27], 256, 256, 16
    $region101: #{slim_forward.1} parent=1 // pred_fallthru
      _
    // Predicated region
    $region102: #{slim_forward.1} parent=1 // pred_check
      _
    $region103: #{slim_forward.1} parent=1 // pred_check_branch
      %298 = sbr.rel (0) target = $region105
    $region104: #{slim_forward.1} parent=1 // pred_region
      %s300 = ssub.s32 1024, 1024
      %301 = vsyncadd [#allocation30], %s300
      %s302 = sshll.u32 [#allocation29], 4
      %s303 = int_to_ptr.vmem [resolvable:$true] %s302
      %308 = dma.hbm_to_vmem [thread:$0]  %s51, 1024, %s303, [#allocation30], 256, 256, 16
    $region105: #{slim_forward.1} parent=1 // pred_fallthru
      _
    // Predicated region
    $region106: #{slim_forward.1} parent=1 // pred_check
      _
    $region107: #{slim_forward.1} parent=1 // pred_check_branch
      %310 = sbr.rel (0) target = $region109
    $region108: #{slim_forward.1} parent=1 // pred_region
      %s312 = ssub.s32 2048, 2048
      %313 = vsyncadd [#allocation30], %s312
      %s314 = sshll.u32 [#allocation31], 4
      %s315 = int_to_ptr.vmem [resolvable:$true] %s314
      %320 = dma.hbm_to_vmem [thread:$0]  %s53, 2048, %s315, [#allocation30], 256, 256, 16
    $region109: #{slim_forward.1} parent=1 // pred_fallthru
      _
    // Predicated region
    $region110: #{slim_forward.1} parent=1 // pred_check
      _
    $region111: #{slim_forward.1} parent=1 // pred_check_branch
      %322 = sbr.rel (0) target = $region113
    $region112: #{slim_forward.1} parent=1 // pred_region
      %s324 = ssub.s32 32, 32
      %325 = vsyncadd [#allocation33], %s324
      %s327 = sshll.u32 [#allocation32], 4
      %s328 = int_to_ptr.vmem [resolvable:$true] %s327
      %330 = dma.hbm_to_vmem [thread:$0]  %s55, 32, %s328, [#allocation33]
    $region113: #{slim_forward.1} parent=1 // pred_fallthru
      _
    // Predicated region
    $region114: #{slim_forward.1} parent=1 // pred_check
      _
    $region115: #{slim_forward.1} parent=1 // pred_check_branch
      %332 = sbr.rel (0) target = $region117
    $region116: #{slim_forward.1} parent=1 // pred_region
      %s334 = ssub.s32 512, 512
      %335 = vsyncadd [#allocation33], %s334
      %s336 = sshll.u32 [#allocation34], 4
      %s337 = int_to_ptr.vmem [resolvable:$true] %s336
      %342 = dma.hbm_to_vmem [thread:$0]  %s57, 512, %s337, [#allocation33], 256, 256, 16
    $region117: #{slim_forward.1} parent=1 // pred_fallthru
      _
    // Predicated region
    $region118: #{slim_forward.1} parent=1 // pred_check
      _
    $region119: #{slim_forward.1} parent=1 // pred_check_branch
      %344 = sbr.rel (0) target = $region121
    $region120: #{slim_forward.1} parent=1 // pred_region
      _
    $region121: #{slim_forward.1} parent=1 // pred_fallthru
      _
    // Predicated region
    $region122: #{slim_forward.1} parent=1 // pred_check
      _
    $region123: #{slim_forward.1} parent=1 // pred_check_branch
      %346 = sbr.rel (0) target = $region125
    $region124: #{slim_forward.1} parent=1 // pred_region
      %s348 = ssub.s32 1024, 1024
      %349 = vsyncadd [#allocation36], %s348
      %s350 = sshll.u32 [#allocation35], 4
      %s351 = int_to_ptr.vmem [resolvable:$true] %s350
      %356 = dma.hbm_to_vmem [thread:$0]  %s61, 1024, %s351, [#allocation36], 256, 256, 16
    $region125: #{slim_forward.1} parent=1 // pred_fallthru
      _
    // Predicated region
    $region126: #{slim_forward.1} parent=1 // pred_check
      _
    $region127: #{slim_forward.1} parent=1 // pred_check_branch
      %358 = sbr.rel (0) target = $region129
    $region128: #{slim_forward.1} parent=1 // pred_region
      %s360 = ssub.s32 2048, 2048
      %361 = vsyncadd [#allocation36], %s360
      %s362 = sshll.u32 [#allocation37], 4
      %s363 = int_to_ptr.vmem [resolvable:$true] %s362
      %368 = dma.hbm_to_vmem [thread:$0]  %s63, 2048, %s363, [#allocation36], 256, 256, 16
    $region129: #{slim_forward.1} parent=1 // pred_fallthru
      _
    // Predicated region
    $region130: #{slim_forward.1} parent=1 // pred_check
      _
    $region131: #{slim_forward.1} parent=1 // pred_check_branch
      %370 = sbr.rel (0) target = $region133
    $region132: #{slim_forward.1} parent=1 // pred_region
      %s372 = ssub.s32 32, 32
      %373 = vsyncadd [#allocation39], %s372
      %s375 = sshll.u32 [#allocation38], 4
      %s376 = int_to_ptr.vmem [resolvable:$true] %s375
      %378 = dma.hbm_to_vmem [thread:$0]  %s65, 32, %s376, [#allocation39]
    $region133: #{slim_forward.1} parent=1 // pred_fallthru
      _
    // Predicated region
    $region134: #{slim_forward.1} parent=1 // pred_check
      _
    $region135: #{slim_forward.1} parent=1 // pred_check_branch
      %380 = sbr.rel (0) target = $region137
    $region136: #{slim_forward.1} parent=1 // pred_region
      _
    $region137: #{slim_forward.1} parent=1 // pred_fallthru
      _
    // Predicated region
    $region138: #{slim_forward.1} parent=1 // pred_check
      _
    $region139: #{slim_forward.1} parent=1 // pred_check_branch
      %382 = sbr.rel (0) target = $region141
    $region140: #{slim_forward.1} parent=1 // pred_region
      _
    $region141: #{slim_forward.1} parent=1 // pred_fallthru
      _
    // Predicated region
    $region142: #{slim_forward.1} parent=1 // pred_check
      _
    $region143: #{slim_forward.1} parent=1 // pred_check_branch
      %384 = sbr.rel (0) target = $region145
    $region144: #{slim_forward.1} parent=1 // pred_region
      _
    $region145: #{slim_forward.1} parent=1 // pred_fallthru
      _
    // Predicated region
    $region146: #{slim_forward.1} parent=1 // pred_check
      _
    $region147: #{slim_forward.1} parent=1 // pred_check_branch
      %386 = sbr.rel (0) target = $region149
    $region148: #{slim_forward.1} parent=1 // pred_region
      _
    $region149: #{slim_forward.1} parent=1 // pred_fallthru
      _
    // Predicated region
    $region150: #{slim_forward.1} parent=1 // pred_check
      _
    $region151: #{slim_forward.1} parent=1 // pred_check_branch
      %388 = sbr.rel (0) target = $region153
    $region152: #{slim_forward.1} parent=1 // pred_region
      %389 = dma.done [#allocation3], 32
    $region153: #{slim_forward.1} parent=1 // pred_fallthru
      _
    // Predicated region
    $region154: #{slim_forward.1} parent=1 // pred_check
      _
    $region155: #{slim_forward.1} parent=1 // pred_check_branch
      %391 = sbr.rel (0) target = $region157
    $region156: #{slim_forward.1} parent=1 // pred_region
      %392 = dma.done [#allocation6], 512
    $region157: #{slim_forward.1} parent=1 // pred_fallthru
      _
    // Predicated region
    $region158: #{slim_forward.1} parent=1 // pred_check
      _
    $region159: #{slim_forward.1} parent=1 // pred_check_branch
      %394 = sbr.rel (0) target = $region161
    $region160: #{slim_forward.1} parent=1 // pred_region
      %395 = dma.done [#allocation6], 16
    $region161: #{slim_forward.1} parent=1 // pred_fallthru
      _
    // Predicated region
    $region162: #{slim_forward.1} parent=1 // pred_check
      _
    $region163: #{slim_forward.1} parent=1 // pred_check_branch
      %397 = sbr.rel (0) target = $region165
    $region164: #{slim_forward.1} parent=1 // pred_region
      %398 = dma.done [#allocation9], 512
    $region165: #{slim_forward.1} parent=1 // pred_fallthru
      _
    // Predicated region
    $region166: #{slim_forward.1} parent=1 // pred_check
      _
    $region167: #{slim_forward.1} parent=1 // pred_check_branch
      %400 = sbr.rel (0) target = $region169
    $region168: #{slim_forward.1} parent=1 // pred_region
      %401 = dma.done [#allocation9], 16
    $region169: #{slim_forward.1} parent=1 // pred_fallthru
      _
    // Predicated region
    $region170: #{slim_forward.1} parent=1 // pred_check
      _
    $region171: #{slim_forward.1} parent=1 // pred_check_branch
      %403 = sbr.rel (0) target = $region173
    $region172: #{slim_forward.1} parent=1 // pred_region
      %404 = dma.done [#allocation12], 512
    $region173: #{slim_forward.1} parent=1 // pred_fallthru
      _
    // Predicated region
    $region174: #{slim_forward.1} parent=1 // pred_check
      _
    $region175: #{slim_forward.1} parent=1 // pred_check_branch
      %406 = sbr.rel (0) target = $region177
    $region176: #{slim_forward.1} parent=1 // pred_region
      %407 = dma.done [#allocation12], 16
    $region177: #{slim_forward.1} parent=1 // pred_fallthru
      _
    // Predicated region
    $region178: #{slim_forward.1} parent=1 // pred_check
      _
    $region179: #{slim_forward.1} parent=1 // pred_check_branch
      %409 = sbr.rel (0) target = $region181
    $region180: #{slim_forward.1} parent=1 // pred_region
      %410 = dma.done [#allocation15], 64
    $region181: #{slim_forward.1} parent=1 // pred_fallthru
      _
    // Predicated region
    $region182: #{slim_forward.1} parent=1 // pred_check
      _
    $region183: #{slim_forward.1} parent=1 // pred_check_branch
      %412 = sbr.rel (0) target = $region185
    $region184: #{slim_forward.1} parent=1 // pred_region
      %413 = dma.done [#allocation15], 16
    $region185: #{slim_forward.1} parent=1 // pred_fallthru
      _
    // Predicated region
    $region186: #{slim_forward.1} parent=1 // pred_check
      _
    $region187: #{slim_forward.1} parent=1 // pred_check_branch
      %415 = sbr.rel (0) target = $region189
    $region188: #{slim_forward.1} parent=1 // pred_region
      %416 = dma.done [#allocation18], 512
    $region189: #{slim_forward.1} parent=1 // pred_fallthru
      _
    // Predicated region
    $region190: #{slim_forward.1} parent=1 // pred_check
      _
    $region191: #{slim_forward.1} parent=1 // pred_check_branch
      %418 = sbr.rel (0) target = $region193
    $region192: #{slim_forward.1} parent=1 // pred_region
      %419 = dma.done [#allocation18], 512
    $region193: #{slim_forward.1} parent=1 // pred_fallthru
      _
    // Predicated region
    $region194: #{slim_forward.1} parent=1 // pred_check
      _
    $region195: #{slim_forward.1} parent=1 // pred_check_branch
      %421 = sbr.rel (0) target = $region197
    $region196: #{slim_forward.1} parent=1 // pred_region
      %422 = dma.done [#allocation21], 16
    $region197: #{slim_forward.1} parent=1 // pred_fallthru
      _
    // Predicated region
    $region198: #{slim_forward.1} parent=1 // pred_check
      _
    $region199: #{slim_forward.1} parent=1 // pred_check_branch
      %424 = sbr.rel (0) target = $region201
    $region200: #{slim_forward.1} parent=1 // pred_region
      %425 = dma.done [#allocation21], 16
    $region201: #{slim_forward.1} parent=1 // pred_fallthru
      _
    // Predicated region
    $region202: #{slim_forward.1} parent=1 // pred_check
      _
    $region203: #{slim_forward.1} parent=1 // pred_check_branch
      %427 = sbr.rel (0) target = $region205
    $region204: #{slim_forward.1} parent=1 // pred_region
      %428 = dma.done [#allocation24], 64
    $region205: #{slim_forward.1} parent=1 // pred_fallthru
      _
    // Predicated region
    $region206: #{slim_forward.1} parent=1 // pred_check
      _
    $region207: #{slim_forward.1} parent=1 // pred_check_branch
      %430 = sbr.rel (0) target = $region209
    $region208: #{slim_forward.1} parent=1 // pred_region
      %431 = dma.done [#allocation24], 16
    $region209: #{slim_forward.1} parent=1 // pred_fallthru
      _
    // Predicated region
    $region210: #{slim_forward.1} parent=1 // pred_check
      _
    $region211: #{slim_forward.1} parent=1 // pred_check_branch
      %433 = sbr.rel (0) target = $region213
    $region212: #{slim_forward.1} parent=1 // pred_region
      %434 = dma.done [#allocation27], 12288
    $region213: #{slim_forward.1} parent=1 // pred_fallthru
      _
    // Predicated region
    $region214: #{slim_forward.1} parent=1 // pred_check
      _
    $region215: #{slim_forward.1} parent=1 // pred_check_branch
      %436 = sbr.rel (0) target = $region217
    $region216: #{slim_forward.1} parent=1 // pred_region
      %437 = dma.done [#allocation27], 1024
    $region217: #{slim_forward.1} parent=1 // pred_fallthru
      _
    // Predicated region
    $region218: #{slim_forward.1} parent=1 // pred_check
      _
    $region219: #{slim_forward.1} parent=1 // pred_check_branch
      %439 = sbr.rel (0) target = $region221
    $region220: #{slim_forward.1} parent=1 // pred_region
      %440 = dma.done [#allocation30], 1024
    $region221: #{slim_forward.1} parent=1 // pred_fallthru
      _
    // Predicated region
    $region222: #{slim_forward.1} parent=1 // pred_check
      _
    $region223: #{slim_forward.1} parent=1 // pred_check_branch
      %442 = sbr.rel (0) target = $region225
    $region224: #{slim_forward.1} parent=1 // pred_region
      %443 = dma.done [#allocation30], 2048
    $region225: #{slim_forward.1} parent=1 // pred_fallthru
      _
    // Predicated region
    $region226: #{slim_forward.1} parent=1 // pred_check
      _
    $region227: #{slim_forward.1} parent=1 // pred_check_branch
      %445 = sbr.rel (0) target = $region229
    $region228: #{slim_forward.1} parent=1 // pred_region
      %446 = dma.done [#allocation33], 32
    $region229: #{slim_forward.1} parent=1 // pred_fallthru
      _
    // Predicated region
    $region230: #{slim_forward.1} parent=1 // pred_check
      _
    $region231: #{slim_forward.1} parent=1 // pred_check_branch
      %448 = sbr.rel (0) target = $region233
    $region232: #{slim_forward.1} parent=1 // pred_region
      %449 = dma.done [#allocation33], 512
    $region233: #{slim_forward.1} parent=1 // pred_fallthru
      _
    // Predicated region
    $region234: #{slim_forward.1} parent=1 // pred_check
      _
    $region235: #{slim_forward.1} parent=1 // pred_check_branch
      %451 = sbr.rel (0) target = $region237
    $region236: #{slim_forward.1} parent=1 // pred_region
      %452 = dma.done [#allocation36], 1024
    $region237: #{slim_forward.1} parent=1 // pred_fallthru
      _
    // Predicated region
    $region238: #{slim_forward.1} parent=1 // pred_check
      _
    $region239: #{slim_forward.1} parent=1 // pred_check_branch
      %454 = sbr.rel (0) target = $region241
    $region240: #{slim_forward.1} parent=1 // pred_region
      %455 = dma.done [#allocation36], 2048
    $region241: #{slim_forward.1} parent=1 // pred_fallthru
      _
    // Predicated region
    $region242: #{slim_forward.1} parent=1 // pred_check
      _
    $region243: #{slim_forward.1} parent=1 // pred_check_branch
      %457 = sbr.rel (0) target = $region245
    $region244: #{slim_forward.1} parent=1 // pred_region
      %458 = dma.done [#allocation39], 32
    $region245: #{slim_forward.1} parent=1 // pred_fallthru
      _
    %v460 = vld [vmem:[%s1] sm:$0xff]
    %v461 = vld [vmem:[%s1 + $0x8] sm:$0xff]
    %v462 = vld [vmem:[%s1 + $0x10] sm:$0xff]
    %v463 = vld [vmem:[%s1 + $0x18] sm:$0xff]
    %v464 = vld [vmem:[%s1 + $0x20] sm:$0xff]
    %v465 = vld [vmem:[%s1 + $0x28] sm:$0xff]
    %v466 = vld [vmem:[#allocation5] sm:$0xff]
    %v467 = vld [vmem:[#allocation5 + $0x8] sm:$0xff]
    %v468 = vld [vmem:[#allocation5 + $0x10] sm:$0xff]
    %v469 = vld [vmem:[#allocation5 + $0x18] sm:$0xff]
    %v470 = vld [vmem:[#allocation7] sm:$0x1]
    %v472 = vlaneseq
    %v473 = vshrl.u32 %v472, 7
    %v474 = vsub.s32 0, %v473
    %v475 = vrot.slane %v470, %v474
    %vm477 = vcmask 261120
    %v479 = vsel %vm477, %v460, 0
    %v482 = vsel %vm477, %v461, 0
    %v485 = vsel %vm477, %v462, 0
    %v488 = vsel %vm477, %v463, 0
    %v491 = vsel %vm477, %v464, 0
    %v494 = vsel %vm477, %v465, 0
    %496 = vmatprep.subr.mxu0 0.0
    %497 = vmatpush1.msra.mxu0 0.0
    %498 = vmatprep.subr.mxu0 0.0
    %499 = vmatpush1.msra.mxu0 0.0
    %500 = vmatprep.subr.mxu0 0.0
    %501 = vmatpush1.msra.mxu0 0.0
    %502 = vmatprep.subr.mxu0 0.0
    %503 = vmatpush1.msra.mxu0 0.0
    %504 = vmatprep.subr.mxu0 0.0
    %505 = vmatpush1.msra.mxu0 0.0
    %506 = vmatprep.subr.mxu0 0.0
    %507 = vmatpush1.msra.mxu0 0.0
    %508 = vmatprep.subr.mxu0 0.0
    %509 = vmatpush1.msra.mxu0 0.0
    %510 = vmatprep.subr.mxu0 0.0
    %511 = vmatpush1.msra.mxu0 0.0
    %512 = vmatprep.subr.mxu0 0.0
    %513 = vmatpush1.msra.mxu0 0.0
    %514 = vmatprep.subr.mxu0 0.0
    %515 = vmatpush1.msra.mxu0 0.0
    %516 = vmatprep.subr.mxu0 0.0
    %517 = vmatpush1.msra.mxu0 0.0
    %518 = vmatprep.subr.mxu0 0.0
    %519 = vmatpush1.msra.mxu0 0.0
    %520 = vmatprep.subr.mxu0 0.0
    %521 = vmatpush1.msra.mxu0 %v469
    %522 = vmatprep.subr.mxu0 0.0
    %523 = vmatpush1.msra.mxu0 %v468
    %524 = vmatprep.subr.mxu0 0.0
    %525 = vmatpush1.msra.mxu0 %v467
    %526 = vmatprep.subr.mxu0 0.0
    %527 = vmatpush1.msra.mxu0 %v466
    %528 = vmatprep.subr.mxu0 0.0
    %529 = vmatpush2.msra.mxu0 0.0
    %530 = vmatprep.subr.mxu0 0.0
    %531 = vmatpush2.msra.mxu0 0.0
    %532 = vmatprep.subr.mxu0 0.0
    %533 = vmatpush2.msra.mxu0 0.0
    %534 = vmatprep.subr.mxu0 0.0
    %535 = vmatpush2.msra.mxu0 0.0
    %536 = vmatprep.subr.mxu0 0.0
    %537 = vmatpush2.msra.mxu0 0.0
    %538 = vmatprep.subr.mxu0 0.0
    %539 = vmatpush2.msra.mxu0 0.0
    %540 = vmatprep.subr.mxu0 0.0
    %541 = vmatpush2.msra.mxu0 0.0
    %542 = vmatprep.subr.mxu0 0.0
    %543 = vmatpush2.msra.mxu0 0.0
    %544 = vmatprep.subr.mxu0 0.0
    %545 = vmatpush2.msra.mxu0 0.0
    %546 = vmatprep.subr.mxu0 0.0
    %547 = vmatpush2.msra.mxu0 0.0
    %548 = vmatprep.subr.mxu0 0.0
    %549 = vmatpush2.msra.mxu0 0.0
    %550 = vmatprep.subr.mxu0 0.0
    %551 = vmatpush2.msra.mxu0 0.0
    %552 = vmatprep.subr.mxu0 0.0
    %553 = vmatpush2.msra.mxu0 0.0
    %554 = vmatprep.subr.mxu0 0.0
    %555 = vmatpush2.msra.mxu0 0.0
    %556 = vmatprep.subr.mxu0 0.0
    %557 = vmatpush2.msra.mxu0 0.0
    %558 = vmatprep.subr.mxu0 0.0
    %559 = vmatpush2.msra.mxu0 0.0
    %560 = vmatprep.mubr.f32.mxu0 0.0
    %561 = vmatmul.mubr.f32.gmra.mxu0 %v479
    %v562 = vpop.f32.mrf.mxu0
    %v563 = vadd.f32 %v475, %v562
    %v564 = vpop.f32.mrf.mxu0
    %565 = vmatprep.mubr.f32.mxu0 0.0
    %566 = vmatmul.mubr.f32.gmra.mxu0 %v482
    %v567 = vpop.f32.mrf.mxu0
    %v568 = vadd.f32 %v475, %v567
    %v569 = vpop.f32.mrf.mxu0
    %570 = vmatprep.mubr.f32.mxu0 0.0
    %571 = vmatmul.mubr.f32.gmra.mxu0 %v485
    %v572 = vpop.f32.mrf.mxu0
    %v573 = vadd.f32 %v475, %v572
    %v574 = vpop.f32.mrf.mxu0
    %575 = vmatprep.mubr.f32.mxu0 0.0
    %576 = vmatmul.mubr.f32.gmra.mxu0 %v488
    %v577 = vpop.f32.mrf.mxu0
    %v578 = vadd.f32 %v475, %v577
    %v579 = vpop.f32.mrf.mxu0
    %580 = vmatprep.mubr.f32.mxu0 0.0
    %581 = vmatmul.mubr.f32.gmra.mxu0 %v491
    %v582 = vpop.f32.mrf.mxu0
    %v583 = vadd.f32 %v475, %v582
    %v584 = vpop.f32.mrf.mxu0
    %585 = vmatprep.mubr.f32.mxu0 0.0
    %586 = vmatmul.mubr.f32.gmra.mxu0 %v494
    %v587 = vpop.f32.mrf.mxu0
    %v588 = vadd.f32 %v475, %v587
    %v589 = vpop.f32.mrf.mxu0
    %590 = vdwg.mxu0
    %v591 = vld [vmem:[#allocation8] sm:$0xff]
    %v592 = vld [vmem:[#allocation8 + $0x8] sm:$0xff]
    %v593 = vld [vmem:[#allocation8 + $0x10] sm:$0xff]
    %v594 = vld [vmem:[#allocation8 + $0x18] sm:$0xff]
    %v595 = vld [vmem:[#allocation10] sm:$0x1]
    %v597 = vlaneseq
    %v598 = vshrl.u32 %v597, 7
    %v599 = vsub.s32 0, %v598
    %v600 = vrot.slane %v595, %v599
    %602 = vmatprep.subr.mxu0 0.0
    %603 = vmatpush1.msra.mxu0 0.0
    %604 = vmatprep.subr.mxu0 0.0
    %605 = vmatpush1.msra.mxu0 0.0
    %606 = vmatprep.subr.mxu0 0.0
    %607 = vmatpush1.msra.mxu0 0.0
    %608 = vmatprep.subr.mxu0 0.0
    %609 = vmatpush1.msra.mxu0 0.0
    %610 = vmatprep.subr.mxu0 0.0
    %611 = vmatpush1.msra.mxu0 0.0
    %612 = vmatprep.subr.mxu0 0.0
    %613 = vmatpush1.msra.mxu0 0.0
    %614 = vmatprep.subr.mxu0 0.0
    %615 = vmatpush1.msra.mxu0 0.0
    %616 = vmatprep.subr.mxu0 0.0
    %617 = vmatpush1.msra.mxu0 0.0
    %618 = vmatprep.subr.mxu0 0.0
    %619 = vmatpush1.msra.mxu0 0.0
    %620 = vmatprep.subr.mxu0 0.0
    %621 = vmatpush1.msra.mxu0 0.0
    %622 = vmatprep.subr.mxu0 0.0
    %623 = vmatpush1.msra.mxu0 0.0
    %624 = vmatprep.subr.mxu0 0.0
    %625 = vmatpush1.msra.mxu0 0.0
    %626 = vmatprep.subr.mxu0 0.0
    %627 = vmatpush1.msra.mxu0 %v594
    %628 = vmatprep.subr.mxu0 0.0
    %629 = vmatpush1.msra.mxu0 %v593
    %630 = vmatprep.subr.mxu0 0.0
    %631 = vmatpush1.msra.mxu0 %v592
    %632 = vmatprep.subr.mxu0 0.0
    %633 = vmatpush1.msra.mxu0 %v591
    %634 = vmatprep.subr.mxu0 0.0
    %635 = vmatpush2.msra.mxu0 0.0
    %636 = vmatprep.subr.mxu0 0.0
    %637 = vmatpush2.msra.mxu0 0.0
    %638 = vmatprep.subr.mxu0 0.0
    %639 = vmatpush2.msra.mxu0 0.0
    %640 = vmatprep.subr.mxu0 0.0
    %641 = vmatpush2.msra.mxu0 0.0
    %642 = vmatprep.subr.mxu0 0.0
    %643 = vmatpush2.msra.mxu0 0.0
    %644 = vmatprep.subr.mxu0 0.0
    %645 = vmatpush2.msra.mxu0 0.0
    %646 = vmatprep.subr.mxu0 0.0
    %647 = vmatpush2.msra.mxu0 0.0
    %648 = vmatprep.subr.mxu0 0.0
    %649 = vmatpush2.msra.mxu0 0.0
    %650 = vmatprep.subr.mxu0 0.0
    %651 = vmatpush2.msra.mxu0 0.0
    %652 = vmatprep.subr.mxu0 0.0
    %653 = vmatpush2.msra.mxu0 0.0
    %654 = vmatprep.subr.mxu0 0.0
    %655 = vmatpush2.msra.mxu0 0.0
    %656 = vmatprep.subr.mxu0 0.0
    %657 = vmatpush2.msra.mxu0 0.0
    %658 = vmatprep.subr.mxu0 0.0
    %659 = vmatpush2.msra.mxu0 0.0
    %660 = vmatprep.subr.mxu0 0.0
    %661 = vmatpush2.msra.mxu0 0.0
    %662 = vmatprep.subr.mxu0 0.0
    %663 = vmatpush2.msra.mxu0 0.0
    %664 = vmatprep.subr.mxu0 0.0
    %665 = vmatpush2.msra.mxu0 0.0
    %666 = vmatprep.mubr.f32.mxu0 0.0
    %667 = vmatmul.mubr.f32.gmra.mxu0 %v479
    %v668 = vpop.f32.mrf.mxu0
    %v669 = vadd.f32 %v600, %v668
    %v670 = vpop.f32.mrf.mxu0
    %671 = vmatprep.mubr.f32.mxu0 0.0
    %672 = vmatmul.mubr.f32.gmra.mxu0 %v482
    %v673 = vpop.f32.mrf.mxu0
    %v674 = vadd.f32 %v600, %v673
    %v675 = vpop.f32.mrf.mxu0
    %676 = vmatprep.mubr.f32.mxu0 0.0
    %677 = vmatmul.mubr.f32.gmra.mxu0 %v485
    %v678 = vpop.f32.mrf.mxu0
    %v679 = vadd.f32 %v600, %v678
    %v680 = vpop.f32.mrf.mxu0
    %681 = vmatprep.mubr.f32.mxu0 0.0
    %682 = vmatmul.mubr.f32.gmra.mxu0 %v488
    %v683 = vpop.f32.mrf.mxu0
    %v684 = vadd.f32 %v600, %v683
    %v685 = vpop.f32.mrf.mxu0
    %686 = vmatprep.mubr.f32.mxu0 0.0
    %687 = vmatmul.mubr.f32.gmra.mxu0 %v491
    %v688 = vpop.f32.mrf.mxu0
    %v689 = vadd.f32 %v600, %v688
    %v690 = vpop.f32.mrf.mxu0
    %691 = vmatprep.mubr.f32.mxu0 0.0
    %692 = vmatmul.mubr.f32.gmra.mxu0 %v494
    %v693 = vpop.f32.mrf.mxu0
    %v694 = vadd.f32 %v600, %v693
    %v695 = vpop.f32.mrf.mxu0
    %696 = vdwg.mxu0
    %v697 = vld [vmem:[#allocation11] sm:$0xff]
    %v698 = vld [vmem:[#allocation11 + $0x8] sm:$0xff]
    %v699 = vld [vmem:[#allocation11 + $0x10] sm:$0xff]
    %v700 = vld [vmem:[#allocation11 + $0x18] sm:$0xff]
    %v701 = vld [vmem:[#allocation13] sm:$0x1]
    %v703 = vlaneseq
    %v704 = vshrl.u32 %v703, 7
    %v705 = vsub.s32 0, %v704
    %v706 = vrot.slane %v701, %v705
    %708 = vmatprep.subr.mxu0 0.0
    %709 = vmatpush1.msra.mxu0 0.0
    %710 = vmatprep.subr.mxu0 0.0
    %711 = vmatpush1.msra.mxu0 0.0
    %712 = vmatprep.subr.mxu0 0.0
    %713 = vmatpush1.msra.mxu0 0.0
    %714 = vmatprep.subr.mxu0 0.0
    %715 = vmatpush1.msra.mxu0 0.0
    %716 = vmatprep.subr.mxu0 0.0
    %717 = vmatpush1.msra.mxu0 0.0
    %718 = vmatprep.subr.mxu0 0.0
    %719 = vmatpush1.msra.mxu0 0.0
    %720 = vmatprep.subr.mxu0 0.0
    %721 = vmatpush1.msra.mxu0 0.0
    %722 = vmatprep.subr.mxu0 0.0
    %723 = vmatpush1.msra.mxu0 0.0
    %724 = vmatprep.subr.mxu0 0.0
    %725 = vmatpush1.msra.mxu0 0.0
    %726 = vmatprep.subr.mxu0 0.0
    %727 = vmatpush1.msra.mxu0 0.0
    %728 = vmatprep.subr.mxu0 0.0
    %729 = vmatpush1.msra.mxu0 0.0
    %730 = vmatprep.subr.mxu0 0.0
    %731 = vmatpush1.msra.mxu0 0.0
    %732 = vmatprep.subr.mxu0 0.0
    %733 = vmatpush1.msra.mxu0 %v700
    %734 = vmatprep.subr.mxu0 0.0
    %735 = vmatpush1.msra.mxu0 %v699
    %736 = vmatprep.subr.mxu0 0.0
    %737 = vmatpush1.msra.mxu0 %v698
    %738 = vmatprep.subr.mxu0 0.0
    %739 = vmatpush1.msra.mxu0 %v697
    %740 = vmatprep.subr.mxu0 0.0
    %741 = vmatpush2.msra.mxu0 0.0
    %742 = vmatprep.subr.mxu0 0.0
    %743 = vmatpush2.msra.mxu0 0.0
    %744 = vmatprep.subr.mxu0 0.0
    %745 = vmatpush2.msra.mxu0 0.0
    %746 = vmatprep.subr.mxu0 0.0
    %747 = vmatpush2.msra.mxu0 0.0
    %748 = vmatprep.subr.mxu0 0.0
    %749 = vmatpush2.msra.mxu0 0.0
    %750 = vmatprep.subr.mxu0 0.0
    %751 = vmatpush2.msra.mxu0 0.0
    %752 = vmatprep.subr.mxu0 0.0
    %753 = vmatpush2.msra.mxu0 0.0
    %754 = vmatprep.subr.mxu0 0.0
    %755 = vmatpush2.msra.mxu0 0.0
    %756 = vmatprep.subr.mxu0 0.0
    %757 = vmatpush2.msra.mxu0 0.0
    %758 = vmatprep.subr.mxu0 0.0
    %759 = vmatpush2.msra.mxu0 0.0
    %760 = vmatprep.subr.mxu0 0.0
    %761 = vmatpush2.msra.mxu0 0.0
    %762 = vmatprep.subr.mxu0 0.0
    %763 = vmatpush2.msra.mxu0 0.0
    %764 = vmatprep.subr.mxu0 0.0
    %765 = vmatpush2.msra.mxu0 0.0
    %766 = vmatprep.subr.mxu0 0.0
    %767 = vmatpush2.msra.mxu0 0.0
    %768 = vmatprep.subr.mxu0 0.0
    %769 = vmatpush2.msra.mxu0 0.0
    %770 = vmatprep.subr.mxu0 0.0
    %771 = vmatpush2.msra.mxu0 0.0
    %772 = vmatprep.mubr.f32.mxu0 0.0
    %773 = vmatmul.mubr.f32.gmra.mxu0 %v479
    %v774 = vpop.f32.mrf.mxu0
    %v775 = vadd.f32 %v706, %v774
    %v776 = vpop.f32.mrf.mxu0
    %777 = vmatprep.mubr.f32.mxu0 0.0
    %778 = vmatmul.mubr.f32.gmra.mxu0 %v482
    %v779 = vpop.f32.mrf.mxu0
    %v780 = vadd.f32 %v706, %v779
    %v781 = vpop.f32.mrf.mxu0
    %782 = vmatprep.mubr.f32.mxu0 0.0
    %783 = vmatmul.mubr.f32.gmra.mxu0 %v485
    %v784 = vpop.f32.mrf.mxu0
    %v785 = vadd.f32 %v706, %v784
    %v786 = vpop.f32.mrf.mxu0
    %787 = vmatprep.mubr.f32.mxu0 0.0
    %788 = vmatmul.mubr.f32.gmra.mxu0 %v488
    %v789 = vpop.f32.mrf.mxu0
    %v790 = vadd.f32 %v706, %v789
    %v791 = vpop.f32.mrf.mxu0
    %792 = vmatprep.mubr.f32.mxu0 0.0
    %793 = vmatmul.mubr.f32.gmra.mxu0 %v491
    %v794 = vpop.f32.mrf.mxu0
    %v795 = vadd.f32 %v706, %v794
    %v796 = vpop.f32.mrf.mxu0
    %797 = vmatprep.mubr.f32.mxu0 0.0
    %798 = vmatmul.mubr.f32.gmra.mxu0 %v494
    %v799 = vpop.f32.mrf.mxu0
    %v800 = vadd.f32 %v706, %v799
    %v801 = vpop.f32.mrf.mxu0
    %802 = vdwg.mxu0
    %v804 = vsel %vm477, %v563, 0
    %v807 = vsel %vm477, %v669, 0
    %809 = vmatprep.subr.mxu0 0.0
    %810 = vmatpush1.xpose.msra.mxu0 0.0
    %811 = vmatprep.subr.mxu0 0.0
    %812 = vmatpush1.xpose.msra.mxu0 0.0
    %813 = vmatprep.subr.mxu0 0.0
    %814 = vmatpush1.xpose.msra.mxu0 0.0
    %815 = vmatprep.subr.mxu0 0.0
    %816 = vmatpush1.xpose.msra.mxu0 0.0
    %817 = vmatprep.subr.mxu0 0.0
    %818 = vmatpush1.xpose.msra.mxu0 0.0
    %819 = vmatprep.subr.mxu0 0.0
    %820 = vmatpush1.xpose.msra.mxu0 0.0
    %821 = vmatprep.subr.mxu0 0.0
    %822 = vmatpush1.xpose.msra.mxu0 0.0
    %823 = vmatprep.subr.mxu0 0.0
    %824 = vmatpush1.xpose.msra.mxu0 0.0
    %825 = vmatprep.subr.mxu0 0.0
    %826 = vmatpush1.xpose.msra.mxu0 0.0
    %827 = vmatprep.subr.mxu0 0.0
    %828 = vmatpush1.xpose.msra.mxu0 0.0
    %829 = vmatprep.subr.mxu0 0.0
    %830 = vmatpush1.xpose.msra.mxu0 0.0
    %831 = vmatprep.subr.mxu0 0.0
    %832 = vmatpush1.xpose.msra.mxu0 0.0
    %833 = vmatprep.subr.mxu0 0.0
    %834 = vmatpush1.xpose.msra.mxu0 0.0
    %835 = vmatprep.subr.mxu0 0.0
    %836 = vmatpush1.xpose.msra.mxu0 0.0
    %837 = vmatprep.subr.mxu0 0.0
    %838 = vmatpush1.xpose.msra.mxu0 0.0
    %839 = vmatprep.subr.mxu0 0.0
    %840 = vmatpush1.xpose.msra.mxu0 %v807
    %841 = vmatprep.subr.mxu0 0.0
    %842 = vmatpush2.xpose.msra.mxu0 0.0
    %843 = vmatprep.subr.mxu0 0.0
    %844 = vmatpush2.xpose.msra.mxu0 0.0
    %845 = vmatprep.subr.mxu0 0.0
    %846 = vmatpush2.xpose.msra.mxu0 0.0
    %847 = vmatprep.subr.mxu0 0.0
    %848 = vmatpush2.xpose.msra.mxu0 0.0
    %849 = vmatprep.subr.mxu0 0.0
    %850 = vmatpush2.xpose.msra.mxu0 0.0
    %851 = vmatprep.subr.mxu0 0.0
    %852 = vmatpush2.xpose.msra.mxu0 0.0
    %853 = vmatprep.subr.mxu0 0.0
    %854 = vmatpush2.xpose.msra.mxu0 0.0
    %855 = vmatprep.subr.mxu0 0.0
    %856 = vmatpush2.xpose.msra.mxu0 0.0
    %857 = vmatprep.subr.mxu0 0.0
    %858 = vmatpush2.xpose.msra.mxu0 0.0
    %859 = vmatprep.subr.mxu0 0.0
    %860 = vmatpush2.xpose.msra.mxu0 0.0
    %861 = vmatprep.subr.mxu0 0.0
    %862 = vmatpush2.xpose.msra.mxu0 0.0
    %863 = vmatprep.subr.mxu0 0.0
    %864 = vmatpush2.xpose.msra.mxu0 0.0
    %865 = vmatprep.subr.mxu0 0.0
    %866 = vmatpush2.xpose.msra.mxu0 0.0
    %867 = vmatprep.subr.mxu0 0.0
    %868 = vmatpush2.xpose.msra.mxu0 0.0
    %869 = vmatprep.subr.mxu0 0.0
    %870 = vmatpush2.xpose.msra.mxu0 0.0
    %871 = vmatprep.subr.mxu0 0.0
    %872 = vmatpush2.xpose.msra.mxu0 0.0
    %873 = vmatprep.mubr.f32.mxu0 0.0
    %874 = vmatmul.mubr.f32.gmra.mxu0 %v804
    %v875 = vpop.f32.mrf.mxu0
    %v876 = vadd.f32 0.0, %v875
    %v877 = vpop.f32.mrf.mxu0
    %878 = vdwg.mxu0
    %v880 = vsel %vm477, %v568, 0
    %v883 = vsel %vm477, %v674, 0
    %885 = vmatprep.subr.mxu0 0.0
    %886 = vmatpush1.xpose.msra.mxu0 0.0
    %887 = vmatprep.subr.mxu0 0.0
    %888 = vmatpush1.xpose.msra.mxu0 0.0
    %889 = vmatprep.subr.mxu0 0.0
    %890 = vmatpush1.xpose.msra.mxu0 0.0
    %891 = vmatprep.subr.mxu0 0.0
    %892 = vmatpush1.xpose.msra.mxu0 0.0
    %893 = vmatprep.subr.mxu0 0.0
    %894 = vmatpush1.xpose.msra.mxu0 0.0
    %895 = vmatprep.subr.mxu0 0.0
    %896 = vmatpush1.xpose.msra.mxu0 0.0
    %897 = vmatprep.subr.mxu0 0.0
    %898 = vmatpush1.xpose.msra.mxu0 0.0
    %899 = vmatprep.subr.mxu0 0.0
    %900 = vmatpush1.xpose.msra.mxu0 0.0
    %901 = vmatprep.subr.mxu0 0.0
    %902 = vmatpush1.xpose.msra.mxu0 0.0
    %903 = vmatprep.subr.mxu0 0.0
    %904 = vmatpush1.xpose.msra.mxu0 0.0
    %905 = vmatprep.subr.mxu0 0.0
    %906 = vmatpush1.xpose.msra.mxu0 0.0
    %907 = vmatprep.subr.mxu0 0.0
    %908 = vmatpush1.xpose.msra.mxu0 0.0
    %909 = vmatprep.subr.mxu0 0.0
    %910 = vmatpush1.xpose.msra.mxu0 0.0
    %911 = vmatprep.subr.mxu0 0.0
    %912 = vmatpush1.xpose.msra.mxu0 0.0
    %913 = vmatprep.subr.mxu0 0.0
    %914 = vmatpush1.xpose.msra.mxu0 0.0
    %915 = vmatprep.subr.mxu0 0.0
    %916 = vmatpush1.xpose.msra.mxu0 %v883
    %917 = vmatprep.subr.mxu0 0.0
    %918 = vmatpush2.xpose.msra.mxu0 0.0
    %919 = vmatprep.subr.mxu0 0.0
    %920 = vmatpush2.xpose.msra.mxu0 0.0
    %921 = vmatprep.subr.mxu0 0.0
    %922 = vmatpush2.xpose.msra.mxu0 0.0
    %923 = vmatprep.subr.mxu0 0.0
    %924 = vmatpush2.xpose.msra.mxu0 0.0
    %925 = vmatprep.subr.mxu0 0.0
    %926 = vmatpush2.xpose.msra.mxu0 0.0
    %927 = vmatprep.subr.mxu0 0.0
    %928 = vmatpush2.xpose.msra.mxu0 0.0
    %929 = vmatprep.subr.mxu0 0.0
    %930 = vmatpush2.xpose.msra.mxu0 0.0
    %931 = vmatprep.subr.mxu0 0.0
    %932 = vmatpush2.xpose.msra.mxu0 0.0
    %933 = vmatprep.subr.mxu0 0.0
    %934 = vmatpush2.xpose.msra.mxu0 0.0
    %935 = vmatprep.subr.mxu0 0.0
    %936 = vmatpush2.xpose.msra.mxu0 0.0
    %937 = vmatprep.subr.mxu0 0.0
    %938 = vmatpush2.xpose.msra.mxu0 0.0
    %939 = vmatprep.subr.mxu0 0.0
    %940 = vmatpush2.xpose.msra.mxu0 0.0
    %941 = vmatprep.subr.mxu0 0.0
    %942 = vmatpush2.xpose.msra.mxu0 0.0
    %943 = vmatprep.subr.mxu0 0.0
    %944 = vmatpush2.xpose.msra.mxu0 0.0
    %945 = vmatprep.subr.mxu0 0.0
    %946 = vmatpush2.xpose.msra.mxu0 0.0
    %947 = vmatprep.subr.mxu0 0.0
    %948 = vmatpush2.xpose.msra.mxu0 0.0
    %949 = vmatprep.mubr.f32.mxu0 0.0
    %950 = vmatmul.mubr.f32.gmra.mxu0 %v880
    %v951 = vpop.f32.mrf.mxu0
    %v952 = vadd.f32 0.0, %v951
    %v953 = vpop.f32.mrf.mxu0
    %954 = vdwg.mxu0
    %v956 = vsel %vm477, %v573, 0
    %v959 = vsel %vm477, %v679, 0
    %961 = vmatprep.subr.mxu0 0.0
    %962 = vmatpush1.xpose.msra.mxu0 0.0
    %963 = vmatprep.subr.mxu0 0.0
    %964 = vmatpush1.xpose.msra.mxu0 0.0
    %965 = vmatprep.subr.mxu0 0.0
    %966 = vmatpush1.xpose.msra.mxu0 0.0
    %967 = vmatprep.subr.mxu0 0.0
    %968 = vmatpush1.xpose.msra.mxu0 0.0
    %969 = vmatprep.subr.mxu0 0.0
    %970 = vmatpush1.xpose.msra.mxu0 0.0
    %971 = vmatprep.subr.mxu0 0.0
    %972 = vmatpush1.xpose.msra.mxu0 0.0
    %973 = vmatprep.subr.mxu0 0.0
    %974 = vmatpush1.xpose.msra.mxu0 0.0
    %975 = vmatprep.subr.mxu0 0.0
    %976 = vmatpush1.xpose.msra.mxu0 0.0
    %977 = vmatprep.subr.mxu0 0.0
    %978 = vmatpush1.xpose.msra.mxu0 0.0
    %979 = vmatprep.subr.mxu0 0.0
    %980 = vmatpush1.xpose.msra.mxu0 0.0
    %981 = vmatprep.subr.mxu0 0.0
    %982 = vmatpush1.xpose.msra.mxu0 0.0
    %983 = vmatprep.subr.mxu0 0.0
    %984 = vmatpush1.xpose.msra.mxu0 0.0
    %985 = vmatprep.subr.mxu0 0.0
    %986 = vmatpush1.xpose.msra.mxu0 0.0
    %987 = vmatprep.subr.mxu0 0.0
    %988 = vmatpush1.xpose.msra.mxu0 0.0
    %989 = vmatprep.subr.mxu0 0.0
    %990 = vmatpush1.xpose.msra.mxu0 0.0
    %991 = vmatprep.subr.mxu0 0.0
    %992 = vmatpush1.xpose.msra.mxu0 %v959
    %993 = vmatprep.subr.mxu0 0.0
    %994 = vmatpush2.xpose.msra.mxu0 0.0
    %995 = vmatprep.subr.mxu0 0.0
    %996 = vmatpush2.xpose.msra.mxu0 0.0
    %997 = vmatprep.subr.mxu0 0.0
    %998 = vmatpush2.xpose.msra.mxu0 0.0
    %999 = vmatprep.subr.mxu0 0.0
    %1000 = vmatpush2.xpose.msra.mxu0 0.0
    %1001 = vmatprep.subr.mxu0 0.0
    %1002 = vmatpush2.xpose.msra.mxu0 0.0
    %1003 = vmatprep.subr.mxu0 0.0
    %1004 = vmatpush2.xpose.msra.mxu0 0.0
    %1005 = vmatprep.subr.mxu0 0.0
    %1006 = vmatpush2.xpose.msra.mxu0 0.0
    %1007 = vmatprep.subr.mxu0 0.0
    %1008 = vmatpush2.xpose.msra.mxu0 0.0
    %1009 = vmatprep.subr.mxu0 0.0
    %1010 = vmatpush2.xpose.msra.mxu0 0.0
    %1011 = vmatprep.subr.mxu0 0.0
    %1012 = vmatpush2.xpose.msra.mxu0 0.0
    %1013 = vmatprep.subr.mxu0 0.0
    %1014 = vmatpush2.xpose.msra.mxu0 0.0
    %1015 = vmatprep.subr.mxu0 0.0
    %1016 = vmatpush2.xpose.msra.mxu0 0.0
    %1017 = vmatprep.subr.mxu0 0.0
    %1018 = vmatpush2.xpose.msra.mxu0 0.0
    %1019 = vmatprep.subr.mxu0 0.0
    %1020 = vmatpush2.xpose.msra.mxu0 0.0
    %1021 = vmatprep.subr.mxu0 0.0
    %1022 = vmatpush2.xpose.msra.mxu0 0.0
    %1023 = vmatprep.subr.mxu0 0.0
    %1024 = vmatpush2.xpose.msra.mxu0 0.0
    %1025 = vmatprep.mubr.f32.mxu0 0.0
    %1026 = vmatmul.mubr.f32.gmra.mxu0 %v956
    %v1027 = vpop.f32.mrf.mxu0
    %v1028 = vadd.f32 0.0, %v1027
    %v1029 = vpop.f32.mrf.mxu0
    %1030 = vdwg.mxu0
    %v1032 = vsel %vm477, %v578, 0
    %v1035 = vsel %vm477, %v684, 0
    %1037 = vmatprep.subr.mxu0 0.0
    %1038 = vmatpush1.xpose.msra.mxu0 0.0
    %1039 = vmatprep.subr.mxu0 0.0
    %1040 = vmatpush1.xpose.msra.mxu0 0.0
    %1041 = vmatprep.subr.mxu0 0.0
    %1042 = vmatpush1.xpose.msra.mxu0 0.0
    %1043 = vmatprep.subr.mxu0 0.0
    %1044 = vmatpush1.xpose.msra.mxu0 0.0
    %1045 = vmatprep.subr.mxu0 0.0
    %1046 = vmatpush1.xpose.msra.mxu0 0.0
    %1047 = vmatprep.subr.mxu0 0.0
    %1048 = vmatpush1.xpose.msra.mxu0 0.0
    %1049 = vmatprep.subr.mxu0 0.0
    %1050 = vmatpush1.xpose.msra.mxu0 0.0
    %1051 = vmatprep.subr.mxu0 0.0
    %1052 = vmatpush1.xpose.msra.mxu0 0.0
    %1053 = vmatprep.subr.mxu0 0.0
    %1054 = vmatpush1.xpose.msra.mxu0 0.0
    %1055 = vmatprep.subr.mxu0 0.0
    %1056 = vmatpush1.xpose.msra.mxu0 0.0
    %1057 = vmatprep.subr.mxu0 0.0
    %1058 = vmatpush1.xpose.msra.mxu0 0.0
    %1059 = vmatprep.subr.mxu0 0.0
    %1060 = vmatpush1.xpose.msra.mxu0 0.0
    %1061 = vmatprep.subr.mxu0 0.0
    %1062 = vmatpush1.xpose.msra.mxu0 0.0
    %1063 = vmatprep.subr.mxu0 0.0
    %1064 = vmatpush1.xpose.msra.mxu0 0.0
    %1065 = vmatprep.subr.mxu0 0.0
    %1066 = vmatpush1.xpose.msra.mxu0 0.0
    %1067 = vmatprep.subr.mxu0 0.0
    %1068 = vmatpush1.xpose.msra.mxu0 %v1035
    %1069 = vmatprep.subr.mxu0 0.0
    %1070 = vmatpush2.xpose.msra.mxu0 0.0
    %1071 = vmatprep.subr.mxu0 0.0
    %1072 = vmatpush2.xpose.msra.mxu0 0.0
    %1073 = vmatprep.subr.mxu0 0.0
    %1074 = vmatpush2.xpose.msra.mxu0 0.0
    %1075 = vmatprep.subr.mxu0 0.0
    %1076 = vmatpush2.xpose.msra.mxu0 0.0
    %1077 = vmatprep.subr.mxu0 0.0
    %1078 = vmatpush2.xpose.msra.mxu0 0.0
    %1079 = vmatprep.subr.mxu0 0.0
    %1080 = vmatpush2.xpose.msra.mxu0 0.0
    %1081 = vmatprep.subr.mxu0 0.0
    %1082 = vmatpush2.xpose.msra.mxu0 0.0
    %1083 = vmatprep.subr.mxu0 0.0
    %1084 = vmatpush2.xpose.msra.mxu0 0.0
    %1085 = vmatprep.subr.mxu0 0.0
    %1086 = vmatpush2.xpose.msra.mxu0 0.0
    %1087 = vmatprep.subr.mxu0 0.0
    %1088 = vmatpush2.xpose.msra.mxu0 0.0
    %1089 = vmatprep.subr.mxu0 0.0
    %1090 = vmatpush2.xpose.msra.mxu0 0.0
    %1091 = vmatprep.subr.mxu0 0.0
    %1092 = vmatpush2.xpose.msra.mxu0 0.0
    %1093 = vmatprep.subr.mxu0 0.0
    %1094 = vmatpush2.xpose.msra.mxu0 0.0
    %1095 = vmatprep.subr.mxu0 0.0
    %1096 = vmatpush2.xpose.msra.mxu0 0.0
    %1097 = vmatprep.subr.mxu0 0.0
    %1098 = vmatpush2.xpose.msra.mxu0 0.0
    %1099 = vmatprep.subr.mxu0 0.0
    %1100 = vmatpush2.xpose.msra.mxu0 0.0
    %1101 = vmatprep.mubr.f32.mxu0 0.0
    %1102 = vmatmul.mubr.f32.gmra.mxu0 %v1032
    %v1103 = vpop.f32.mrf.mxu0
    %v1104 = vadd.f32 0.0, %v1103
    %v1105 = vpop.f32.mrf.mxu0
    %1106 = vdwg.mxu0
    %v1108 = vsel %vm477, %v583, 0
    %v1111 = vsel %vm477, %v689, 0
    %1113 = vmatprep.subr.mxu0 0.0
    %1114 = vmatpush1.xpose.msra.mxu0 0.0
    %1115 = vmatprep.subr.mxu0 0.0
    %1116 = vmatpush1.xpose.msra.mxu0 0.0
    %1117 = vmatprep.subr.mxu0 0.0
    %1118 = vmatpush1.xpose.msra.mxu0 0.0
    %1119 = vmatprep.subr.mxu0 0.0
    %1120 = vmatpush1.xpose.msra.mxu0 0.0
    %1121 = vmatprep.subr.mxu0 0.0
    %1122 = vmatpush1.xpose.msra.mxu0 0.0
    %1123 = vmatprep.subr.mxu0 0.0
    %1124 = vmatpush1.xpose.msra.mxu0 0.0
    %1125 = vmatprep.subr.mxu0 0.0
    %1126 = vmatpush1.xpose.msra.mxu0 0.0
    %1127 = vmatprep.subr.mxu0 0.0
    %1128 = vmatpush1.xpose.msra.mxu0 0.0
    %1129 = vmatprep.subr.mxu0 0.0
    %1130 = vmatpush1.xpose.msra.mxu0 0.0
    %1131 = vmatprep.subr.mxu0 0.0
    %1132 = vmatpush1.xpose.msra.mxu0 0.0
    %1133 = vmatprep.subr.mxu0 0.0
    %1134 = vmatpush1.xpose.msra.mxu0 0.0
    %1135 = vmatprep.subr.mxu0 0.0
    %1136 = vmatpush1.xpose.msra.mxu0 0.0
    %1137 = vmatprep.subr.mxu0 0.0
    %1138 = vmatpush1.xpose.msra.mxu0 0.0
    %1139 = vmatprep.subr.mxu0 0.0
    %1140 = vmatpush1.xpose.msra.mxu0 0.0
    %1141 = vmatprep.subr.mxu0 0.0
    %1142 = vmatpush1.xpose.msra.mxu0 0.0
    %1143 = vmatprep.subr.mxu0 0.0
    %1144 = vmatpush1.xpose.msra.mxu0 %v1111
    %1145 = vmatprep.subr.mxu0 0.0
    %1146 = vmatpush2.xpose.msra.mxu0 0.0
    %1147 = vmatprep.subr.mxu0 0.0
    %1148 = vmatpush2.xpose.msra.mxu0 0.0
    %1149 = vmatprep.subr.mxu0 0.0
    %1150 = vmatpush2.xpose.msra.mxu0 0.0
    %1151 = vmatprep.subr.mxu0 0.0
    %1152 = vmatpush2.xpose.msra.mxu0 0.0
    %1153 = vmatprep.subr.mxu0 0.0
    %1154 = vmatpush2.xpose.msra.mxu0 0.0
    %1155 = vmatprep.subr.mxu0 0.0
    %1156 = vmatpush2.xpose.msra.mxu0 0.0
    %1157 = vmatprep.subr.mxu0 0.0
    %1158 = vmatpush2.xpose.msra.mxu0 0.0
    %1159 = vmatprep.subr.mxu0 0.0
    %1160 = vmatpush2.xpose.msra.mxu0 0.0
    %1161 = vmatprep.subr.mxu0 0.0
    %1162 = vmatpush2.xpose.msra.mxu0 0.0
    %1163 = vmatprep.subr.mxu0 0.0
    %1164 = vmatpush2.xpose.msra.mxu0 0.0
    %1165 = vmatprep.subr.mxu0 0.0
    %1166 = vmatpush2.xpose.msra.mxu0 0.0
    %1167 = vmatprep.subr.mxu0 0.0
    %1168 = vmatpush2.xpose.msra.mxu0 0.0
    %1169 = vmatprep.subr.mxu0 0.0
    %1170 = vmatpush2.xpose.msra.mxu0 0.0
    %1171 = vmatprep.subr.mxu0 0.0
    %1172 = vmatpush2.xpose.msra.mxu0 0.0
    %1173 = vmatprep.subr.mxu0 0.0
    %1174 = vmatpush2.xpose.msra.mxu0 0.0
    %1175 = vmatprep.subr.mxu0 0.0
    %1176 = vmatpush2.xpose.msra.mxu0 0.0
    %1177 = vmatprep.mubr.f32.mxu0 0.0
    %1178 = vmatmul.mubr.f32.gmra.mxu0 %v1108
    %v1179 = vpop.f32.mrf.mxu0
    %v1180 = vadd.f32 0.0, %v1179
    %v1181 = vpop.f32.mrf.mxu0
    %1182 = vdwg.mxu0
    %v1184 = vsel %vm477, %v588, 0
    %v1187 = vsel %vm477, %v694, 0
    %1189 = vmatprep.subr.mxu0 0.0
    %1190 = vmatpush1.xpose.msra.mxu0 0.0
    %1191 = vmatprep.subr.mxu0 0.0
    %1192 = vmatpush1.xpose.msra.mxu0 0.0
    %1193 = vmatprep.subr.mxu0 0.0
    %1194 = vmatpush1.xpose.msra.mxu0 0.0
    %1195 = vmatprep.subr.mxu0 0.0
    %1196 = vmatpush1.xpose.msra.mxu0 0.0
    %1197 = vmatprep.subr.mxu0 0.0
    %1198 = vmatpush1.xpose.msra.mxu0 0.0
    %1199 = vmatprep.subr.mxu0 0.0
    %1200 = vmatpush1.xpose.msra.mxu0 0.0
    %1201 = vmatprep.subr.mxu0 0.0
    %1202 = vmatpush1.xpose.msra.mxu0 0.0
    %1203 = vmatprep.subr.mxu0 0.0
    %1204 = vmatpush1.xpose.msra.mxu0 0.0
    %1205 = vmatprep.subr.mxu0 0.0
    %1206 = vmatpush1.xpose.msra.mxu0 0.0
    %1207 = vmatprep.subr.mxu0 0.0
    %1208 = vmatpush1.xpose.msra.mxu0 0.0
    %1209 = vmatprep.subr.mxu0 0.0
    %1210 = vmatpush1.xpose.msra.mxu0 0.0
    %1211 = vmatprep.subr.mxu0 0.0
    %1212 = vmatpush1.xpose.msra.mxu0 0.0
    %1213 = vmatprep.subr.mxu0 0.0
    %1214 = vmatpush1.xpose.msra.mxu0 0.0
    %1215 = vmatprep.subr.mxu0 0.0
    %1216 = vmatpush1.xpose.msra.mxu0 0.0
    %1217 = vmatprep.subr.mxu0 0.0
    %1218 = vmatpush1.xpose.msra.mxu0 0.0
    %1219 = vmatprep.subr.mxu0 0.0
    %1220 = vmatpush1.xpose.msra.mxu0 %v1187
    %1221 = vmatprep.subr.mxu0 0.0
    %1222 = vmatpush2.xpose.msra.mxu0 0.0
    %1223 = vmatprep.subr.mxu0 0.0
    %1224 = vmatpush2.xpose.msra.mxu0 0.0
    %1225 = vmatprep.subr.mxu0 0.0
    %1226 = vmatpush2.xpose.msra.mxu0 0.0
    %1227 = vmatprep.subr.mxu0 0.0
    %1228 = vmatpush2.xpose.msra.mxu0 0.0
    %1229 = vmatprep.subr.mxu0 0.0
    %1230 = vmatpush2.xpose.msra.mxu0 0.0
    %1231 = vmatprep.subr.mxu0 0.0
    %1232 = vmatpush2.xpose.msra.mxu0 0.0
    %1233 = vmatprep.subr.mxu0 0.0
    %1234 = vmatpush2.xpose.msra.mxu0 0.0
    %1235 = vmatprep.subr.mxu0 0.0
    %1236 = vmatpush2.xpose.msra.mxu0 0.0
    %1237 = vmatprep.subr.mxu0 0.0
    %1238 = vmatpush2.xpose.msra.mxu0 0.0
    %1239 = vmatprep.subr.mxu0 0.0
    %1240 = vmatpush2.xpose.msra.mxu0 0.0
    %1241 = vmatprep.subr.mxu0 0.0
    %1242 = vmatpush2.xpose.msra.mxu0 0.0
    %1243 = vmatprep.subr.mxu0 0.0
    %1244 = vmatpush2.xpose.msra.mxu0 0.0
    %1245 = vmatprep.subr.mxu0 0.0
    %1246 = vmatpush2.xpose.msra.mxu0 0.0
    %1247 = vmatprep.subr.mxu0 0.0
    %1248 = vmatpush2.xpose.msra.mxu0 0.0
    %1249 = vmatprep.subr.mxu0 0.0
    %1250 = vmatpush2.xpose.msra.mxu0 0.0
    %1251 = vmatprep.subr.mxu0 0.0
    %1252 = vmatpush2.xpose.msra.mxu0 0.0
    %1253 = vmatprep.mubr.f32.mxu0 0.0
    %1254 = vmatmul.mubr.f32.gmra.mxu0 %v1184
    %v1255 = vpop.f32.mrf.mxu0
    %v1256 = vadd.f32 0.0, %v1255
    %v1257 = vpop.f32.mrf.mxu0
    %1258 = vdwg.mxu0
    %v1259 = vmul.f32 %v876, 0.17677669
    %v1260 = vmul.f32 %v952, 0.17677669
    %v1261 = vmul.f32 %v1028, 0.17677669
    %v1262 = vmul.f32 %v1104, 0.17677669
    %v1263 = vmul.f32 %v1180, 0.17677669
    %v1264 = vmul.f32 %v1256, 0.17677669
    %vm1265 = vcmask 64512
    %v1266 = vsel %vm1265, %v1259, -inf
    %1267 = vmax.xlane.f32.xlu0 %v1266
    %v1268 = vpop.xlane.xlu0 %1267
    %v1269 = vsel %vm1265, %v1260, -inf
    %1270 = vmax.xlane.f32.xlu0 %v1269
    %v1271 = vpop.xlane.xlu0 %1270
    %v1272 = vsel %vm1265, %v1261, -inf
    %1273 = vmax.xlane.f32.xlu0 %v1272
    %v1274 = vpop.xlane.xlu0 %1273
    %v1275 = vsel %vm1265, %v1262, -inf
    %1276 = vmax.xlane.f32.xlu0 %v1275
    %v1277 = vpop.xlane.xlu0 %1276
    %v1278 = vsel %vm1265, %v1263, -inf
    %1279 = vmax.xlane.f32.xlu0 %v1278
    %v1280 = vpop.xlane.xlu0 %1279
    %v1281 = vsel %vm1265, %v1264, -inf
    %1282 = vmax.xlane.f32.xlu0 %v1281
    %v1283 = vpop.xlane.xlu0 %1282
    %v1284 = vsub.f32 %v1259, %v1268
    %v1285 = vsub.f32 %v1260, %v1271
    %v1286 = vsub.f32 %v1261, %v1274
    %v1287 = vsub.f32 %v1262, %v1277
    %v1288 = vsub.f32 %v1263, %v1280
    %v1289 = vsub.f32 %v1264, %v1283
    %v1290 = vmul.f32 %v1284, 1.442695
    %v1291 = vpow.pop %v1290
    %v1292 = vmul.f32 %v1285, 1.442695
    %v1293 = vpow.pop %v1292
    %v1294 = vmul.f32 %v1286, 1.442695
    %v1295 = vpow.pop %v1294
    %v1296 = vmul.f32 %v1287, 1.442695
    %v1297 = vpow.pop %v1296
    %v1298 = vmul.f32 %v1288, 1.442695
    %v1299 = vpow.pop %v1298
    %v1300 = vmul.f32 %v1289, 1.442695
    %v1301 = vpow.pop %v1300
    %v1302 = vsel %vm1265, %v1291, 0.0
    %1303 = vadd.xlane.f32.xlu0 %v1302
    %v1304 = vpop.xlane.xlu0 %1303
    %v1305 = vsel %vm1265, %v1293, 0.0
    %1306 = vadd.xlane.f32.xlu0 %v1305
    %v1307 = vpop.xlane.xlu0 %1306
    %v1308 = vsel %vm1265, %v1295, 0.0
    %1309 = vadd.xlane.f32.xlu0 %v1308
    %v1310 = vpop.xlane.xlu0 %1309
    %v1311 = vsel %vm1265, %v1297, 0.0
    %1312 = vadd.xlane.f32.xlu0 %v1311
    %v1313 = vpop.xlane.xlu0 %1312
    %v1314 = vsel %vm1265, %v1299, 0.0
    %1315 = vadd.xlane.f32.xlu0 %v1314
    %v1316 = vpop.xlane.xlu0 %1315
    %v1317 = vsel %vm1265, %v1301, 0.0
    %1318 = vadd.xlane.f32.xlu0 %v1317
    %v1319 = vpop.xlane.xlu0 %1318
    %v1320 = vrcp.pop %v1304
    %v1321 = vrcp.pop %v1307
    %v1322 = vrcp.pop %v1310
    %v1323 = vrcp.pop %v1313
    %v1324 = vrcp.pop %v1316
    %v1325 = vrcp.pop %v1319
    %v1326 = vmul.f32 %v1291, %v1320
    %v1327 = vmul.f32 %v1293, %v1321
    %v1328 = vmul.f32 %v1295, %v1322
    %v1329 = vmul.f32 %v1297, %v1323
    %v1330 = vmul.f32 %v1299, %v1324
    %v1331 = vmul.f32 %v1301, %v1325
    %v1333 = vsel %vm1265, %v1326, 0
    %1335 = vmatprep.subr.mxu0 0.0
    %1336 = vmatpush1.msra.mxu0 0.0
    %1337 = vmatprep.subr.mxu0 0.0
    %1338 = vmatpush1.msra.mxu0 0.0
    %1339 = vmatprep.subr.mxu0 0.0
    %1340 = vmatpush1.msra.mxu0 0.0
    %1341 = vmatprep.subr.mxu0 0.0
    %1342 = vmatpush1.msra.mxu0 0.0
    %1343 = vmatprep.subr.mxu0 0.0
    %1344 = vmatpush1.msra.mxu0 0.0
    %1345 = vmatprep.subr.mxu0 0.0
    %1346 = vmatpush1.msra.mxu0 0.0
    %1347 = vmatprep.subr.mxu0 0.0
    %1348 = vmatpush1.msra.mxu0 0.0
    %1349 = vmatprep.subr.mxu0 0.0
    %1350 = vmatpush1.msra.mxu0 0.0
    %1351 = vmatprep.subr.mxu0 0.0
    %1352 = vmatpush1.msra.mxu0 0.0
    %1353 = vmatprep.subr.mxu0 0.0
    %1354 = vmatpush1.msra.mxu0 0.0
    %1355 = vmatprep.subr.mxu0 0.0
    %1356 = vmatpush1.msra.mxu0 0.0
    %1357 = vmatprep.subr.mxu0 0.0
    %1358 = vmatpush1.msra.mxu0 0.0
    %1359 = vmatprep.subr.mxu0 0.0
    %1360 = vmatpush1.msra.mxu0 0.0
    %1361 = vmatprep.subr.mxu0 0.0
    %1362 = vmatpush1.msra.mxu0 0.0
    %1363 = vmatprep.subr.mxu0 0.0
    %1364 = vmatpush1.msra.mxu0 0.0
    %1365 = vmatprep.subr.mxu0 0.0
    %1366 = vmatpush1.msra.mxu0 %v775
    %1367 = vmatprep.subr.mxu0 0.0
    %1368 = vmatpush2.msra.mxu0 0.0
    %1369 = vmatprep.subr.mxu0 0.0
    %1370 = vmatpush2.msra.mxu0 0.0
    %1371 = vmatprep.subr.mxu0 0.0
    %1372 = vmatpush2.msra.mxu0 0.0
    %1373 = vmatprep.subr.mxu0 0.0
    %1374 = vmatpush2.msra.mxu0 0.0
    %1375 = vmatprep.subr.mxu0 0.0
    %1376 = vmatpush2.msra.mxu0 0.0
    %1377 = vmatprep.subr.mxu0 0.0
    %1378 = vmatpush2.msra.mxu0 0.0
    %1379 = vmatprep.subr.mxu0 0.0
    %1380 = vmatpush2.msra.mxu0 0.0
    %1381 = vmatprep.subr.mxu0 0.0
    %1382 = vmatpush2.msra.mxu0 0.0
    %1383 = vmatprep.subr.mxu0 0.0
    %1384 = vmatpush2.msra.mxu0 0.0
    %1385 = vmatprep.subr.mxu0 0.0
    %1386 = vmatpush2.msra.mxu0 0.0
    %1387 = vmatprep.subr.mxu0 0.0
    %1388 = vmatpush2.msra.mxu0 0.0
    %1389 = vmatprep.subr.mxu0 0.0
    %1390 = vmatpush2.msra.mxu0 0.0
    %1391 = vmatprep.subr.mxu0 0.0
    %1392 = vmatpush2.msra.mxu0 0.0
    %1393 = vmatprep.subr.mxu0 0.0
    %1394 = vmatpush2.msra.mxu0 0.0
    %1395 = vmatprep.subr.mxu0 0.0
    %1396 = vmatpush2.msra.mxu0 0.0
    %1397 = vmatprep.subr.mxu0 0.0
    %1398 = vmatpush2.msra.mxu0 0.0
    %1399 = vmatprep.mubr.f32.mxu0 0.0
    %1400 = vmatmul.mubr.f32.gmra.mxu0 %v1333
    %v1401 = vpop.f32.mrf.mxu0
    %v1402 = vadd.f32 0.0, %v1401
    %v1403 = vpop.f32.mrf.mxu0
    %1404 = vdwg.mxu0
    %v1406 = vsel %vm1265, %v1327, 0
    %1408 = vmatprep.subr.mxu0 0.0
    %1409 = vmatpush1.msra.mxu0 0.0
    %1410 = vmatprep.subr.mxu0 0.0
    %1411 = vmatpush1.msra.mxu0 0.0
    %1412 = vmatprep.subr.mxu0 0.0
    %1413 = vmatpush1.msra.mxu0 0.0
    %1414 = vmatprep.subr.mxu0 0.0
    %1415 = vmatpush1.msra.mxu0 0.0
    %1416 = vmatprep.subr.mxu0 0.0
    %1417 = vmatpush1.msra.mxu0 0.0
    %1418 = vmatprep.subr.mxu0 0.0
    %1419 = vmatpush1.msra.mxu0 0.0
    %1420 = vmatprep.subr.mxu0 0.0
    %1421 = vmatpush1.msra.mxu0 0.0
    %1422 = vmatprep.subr.mxu0 0.0
    %1423 = vmatpush1.msra.mxu0 0.0
    %1424 = vmatprep.subr.mxu0 0.0
    %1425 = vmatpush1.msra.mxu0 0.0
    %1426 = vmatprep.subr.mxu0 0.0
    %1427 = vmatpush1.msra.mxu0 0.0
    %1428 = vmatprep.subr.mxu0 0.0
    %1429 = vmatpush1.msra.mxu0 0.0
    %1430 = vmatprep.subr.mxu0 0.0
    %1431 = vmatpush1.msra.mxu0 0.0
    %1432 = vmatprep.subr.mxu0 0.0
    %1433 = vmatpush1.msra.mxu0 0.0
    %1434 = vmatprep.subr.mxu0 0.0
    %1435 = vmatpush1.msra.mxu0 0.0
    %1436 = vmatprep.subr.mxu0 0.0
    %1437 = vmatpush1.msra.mxu0 0.0
    %1438 = vmatprep.subr.mxu0 0.0
    %1439 = vmatpush1.msra.mxu0 %v780
    %1440 = vmatprep.subr.mxu0 0.0
    %1441 = vmatpush2.msra.mxu0 0.0
    %1442 = vmatprep.subr.mxu0 0.0
    %1443 = vmatpush2.msra.mxu0 0.0
    %1444 = vmatprep.subr.mxu0 0.0
    %1445 = vmatpush2.msra.mxu0 0.0
    %1446 = vmatprep.subr.mxu0 0.0
    %1447 = vmatpush2.msra.mxu0 0.0
    %1448 = vmatprep.subr.mxu0 0.0
    %1449 = vmatpush2.msra.mxu0 0.0
    %1450 = vmatprep.subr.mxu0 0.0
    %1451 = vmatpush2.msra.mxu0 0.0
    %1452 = vmatprep.subr.mxu0 0.0
    %1453 = vmatpush2.msra.mxu0 0.0
    %1454 = vmatprep.subr.mxu0 0.0
    %1455 = vmatpush2.msra.mxu0 0.0
    %1456 = vmatprep.subr.mxu0 0.0
    %1457 = vmatpush2.msra.mxu0 0.0
    %1458 = vmatprep.subr.mxu0 0.0
    %1459 = vmatpush2.msra.mxu0 0.0
    %1460 = vmatprep.subr.mxu0 0.0
    %1461 = vmatpush2.msra.mxu0 0.0
    %1462 = vmatprep.subr.mxu0 0.0
    %1463 = vmatpush2.msra.mxu0 0.0
    %1464 = vmatprep.subr.mxu0 0.0
    %1465 = vmatpush2.msra.mxu0 0.0
    %1466 = vmatprep.subr.mxu0 0.0
    %1467 = vmatpush2.msra.mxu0 0.0
    %1468 = vmatprep.subr.mxu0 0.0
    %1469 = vmatpush2.msra.mxu0 0.0
    %1470 = vmatprep.subr.mxu0 0.0
    %1471 = vmatpush2.msra.mxu0 0.0
    %1472 = vmatprep.mubr.f32.mxu0 0.0
    %1473 = vmatmul.mubr.f32.gmra.mxu0 %v1406
    %v1474 = vpop.f32.mrf.mxu0
    %v1475 = vadd.f32 0.0, %v1474
    %v1476 = vpop.f32.mrf.mxu0
    %1477 = vdwg.mxu0
    %v1479 = vsel %vm1265, %v1328, 0
    %1481 = vmatprep.subr.mxu0 0.0
    %1482 = vmatpush1.msra.mxu0 0.0
    %1483 = vmatprep.subr.mxu0 0.0
    %1484 = vmatpush1.msra.mxu0 0.0
    %1485 = vmatprep.subr.mxu0 0.0
    %1486 = vmatpush1.msra.mxu0 0.0
    %1487 = vmatprep.subr.mxu0 0.0
    %1488 = vmatpush1.msra.mxu0 0.0
    %1489 = vmatprep.subr.mxu0 0.0
    %1490 = vmatpush1.msra.mxu0 0.0
    %1491 = vmatprep.subr.mxu0 0.0
    %1492 = vmatpush1.msra.mxu0 0.0
    %1493 = vmatprep.subr.mxu0 0.0
    %1494 = vmatpush1.msra.mxu0 0.0
    %1495 = vmatprep.subr.mxu0 0.0
    %1496 = vmatpush1.msra.mxu0 0.0
    %1497 = vmatprep.subr.mxu0 0.0
    %1498 = vmatpush1.msra.mxu0 0.0
    %1499 = vmatprep.subr.mxu0 0.0
    %1500 = vmatpush1.msra.mxu0 0.0
    %1501 = vmatprep.subr.mxu0 0.0
    %1502 = vmatpush1.msra.mxu0 0.0
    %1503 = vmatprep.subr.mxu0 0.0
    %1504 = vmatpush1.msra.mxu0 0.0
    %1505 = vmatprep.subr.mxu0 0.0
    %1506 = vmatpush1.msra.mxu0 0.0
    %1507 = vmatprep.subr.mxu0 0.0
    %1508 = vmatpush1.msra.mxu0 0.0
    %1509 = vmatprep.subr.mxu0 0.0
    %1510 = vmatpush1.msra.mxu0 0.0
    %1511 = vmatprep.subr.mxu0 0.0
    %1512 = vmatpush1.msra.mxu0 %v785
    %1513 = vmatprep.subr.mxu0 0.0
    %1514 = vmatpush2.msra.mxu0 0.0
    %1515 = vmatprep.subr.mxu0 0.0
    %1516 = vmatpush2.msra.mxu0 0.0
    %1517 = vmatprep.subr.mxu0 0.0
    %1518 = vmatpush2.msra.mxu0 0.0
    %1519 = vmatprep.subr.mxu0 0.0
    %1520 = vmatpush2.msra.mxu0 0.0
    %1521 = vmatprep.subr.mxu0 0.0
    %1522 = vmatpush2.msra.mxu0 0.0
    %1523 = vmatprep.subr.mxu0 0.0
    %1524 = vmatpush2.msra.mxu0 0.0
    %1525 = vmatprep.subr.mxu0 0.0
    %1526 = vmatpush2.msra.mxu0 0.0
    %1527 = vmatprep.subr.mxu0 0.0
    %1528 = vmatpush2.msra.mxu0 0.0
    %1529 = vmatprep.subr.mxu0 0.0
    %1530 = vmatpush2.msra.mxu0 0.0
    %1531 = vmatprep.subr.mxu0 0.0
    %1532 = vmatpush2.msra.mxu0 0.0
    %1533 = vmatprep.subr.mxu0 0.0
    %1534 = vmatpush2.msra.mxu0 0.0
    %1535 = vmatprep.subr.mxu0 0.0
    %1536 = vmatpush2.msra.mxu0 0.0
    %1537 = vmatprep.subr.mxu0 0.0
    %1538 = vmatpush2.msra.mxu0 0.0
    %1539 = vmatprep.subr.mxu0 0.0
    %1540 = vmatpush2.msra.mxu0 0.0
    %1541 = vmatprep.subr.mxu0 0.0
    %1542 = vmatpush2.msra.mxu0 0.0
    %1543 = vmatprep.subr.mxu0 0.0
    %1544 = vmatpush2.msra.mxu0 0.0
    %1545 = vmatprep.mubr.f32.mxu0 0.0
    %1546 = vmatmul.mubr.f32.gmra.mxu0 %v1479
    %v1547 = vpop.f32.mrf.mxu0
    %v1548 = vadd.f32 0.0, %v1547
    %v1549 = vpop.f32.mrf.mxu0
    %1550 = vdwg.mxu0
    %v1552 = vsel %vm1265, %v1329, 0
    %1554 = vmatprep.subr.mxu0 0.0
    %1555 = vmatpush1.msra.mxu0 0.0
    %1556 = vmatprep.subr.mxu0 0.0
    %1557 = vmatpush1.msra.mxu0 0.0
    %1558 = vmatprep.subr.mxu0 0.0
    %1559 = vmatpush1.msra.mxu0 0.0
    %1560 = vmatprep.subr.mxu0 0.0
    %1561 = vmatpush1.msra.mxu0 0.0
    %1562 = vmatprep.subr.mxu0 0.0
    %1563 = vmatpush1.msra.mxu0 0.0
    %1564 = vmatprep.subr.mxu0 0.0
    %1565 = vmatpush1.msra.mxu0 0.0
    %1566 = vmatprep.subr.mxu0 0.0
    %1567 = vmatpush1.msra.mxu0 0.0
    %1568 = vmatprep.subr.mxu0 0.0
    %1569 = vmatpush1.msra.mxu0 0.0
    %1570 = vmatprep.subr.mxu0 0.0
    %1571 = vmatpush1.msra.mxu0 0.0
    %1572 = vmatprep.subr.mxu0 0.0
    %1573 = vmatpush1.msra.mxu0 0.0
    %1574 = vmatprep.subr.mxu0 0.0
    %1575 = vmatpush1.msra.mxu0 0.0
    %1576 = vmatprep.subr.mxu0 0.0
    %1577 = vmatpush1.msra.mxu0 0.0
    %1578 = vmatprep.subr.mxu0 0.0
    %1579 = vmatpush1.msra.mxu0 0.0
    %1580 = vmatprep.subr.mxu0 0.0
    %1581 = vmatpush1.msra.mxu0 0.0
    %1582 = vmatprep.subr.mxu0 0.0
    %1583 = vmatpush1.msra.mxu0 0.0
    %1584 = vmatprep.subr.mxu0 0.0
    %1585 = vmatpush1.msra.mxu0 %v790
    %1586 = vmatprep.subr.mxu0 0.0
    %1587 = vmatpush2.msra.mxu0 0.0
    %1588 = vmatprep.subr.mxu0 0.0
    %1589 = vmatpush2.msra.mxu0 0.0
    %1590 = vmatprep.subr.mxu0 0.0
    %1591 = vmatpush2.msra.mxu0 0.0
    %1592 = vmatprep.subr.mxu0 0.0
    %1593 = vmatpush2.msra.mxu0 0.0
    %1594 = vmatprep.subr.mxu0 0.0
    %1595 = vmatpush2.msra.mxu0 0.0
    %1596 = vmatprep.subr.mxu0 0.0
    %1597 = vmatpush2.msra.mxu0 0.0
    %1598 = vmatprep.subr.mxu0 0.0
    %1599 = vmatpush2.msra.mxu0 0.0
    %1600 = vmatprep.subr.mxu0 0.0
    %1601 = vmatpush2.msra.mxu0 0.0
    %1602 = vmatprep.subr.mxu0 0.0
    %1603 = vmatpush2.msra.mxu0 0.0
    %1604 = vmatprep.subr.mxu0 0.0
    %1605 = vmatpush2.msra.mxu0 0.0
    %1606 = vmatprep.subr.mxu0 0.0
    %1607 = vmatpush2.msra.mxu0 0.0
    %1608 = vmatprep.subr.mxu0 0.0
    %1609 = vmatpush2.msra.mxu0 0.0
    %1610 = vmatprep.subr.mxu0 0.0
    %1611 = vmatpush2.msra.mxu0 0.0
    %1612 = vmatprep.subr.mxu0 0.0
    %1613 = vmatpush2.msra.mxu0 0.0
    %1614 = vmatprep.subr.mxu0 0.0
    %1615 = vmatpush2.msra.mxu0 0.0
    %1616 = vmatprep.subr.mxu0 0.0
    %1617 = vmatpush2.msra.mxu0 0.0
    %1618 = vmatprep.mubr.f32.mxu0 0.0
    %1619 = vmatmul.mubr.f32.gmra.mxu0 %v1552
    %v1620 = vpop.f32.mrf.mxu0
    %v1621 = vadd.f32 0.0, %v1620
    %v1622 = vpop.f32.mrf.mxu0
    %1623 = vdwg.mxu0
    %v1625 = vsel %vm1265, %v1330, 0
    %1627 = vmatprep.subr.mxu0 0.0
    %1628 = vmatpush1.msra.mxu0 0.0
    %1629 = vmatprep.subr.mxu0 0.0
    %1630 = vmatpush1.msra.mxu0 0.0
    %1631 = vmatprep.subr.mxu0 0.0
    %1632 = vmatpush1.msra.mxu0 0.0
    %1633 = vmatprep.subr.mxu0 0.0
    %1634 = vmatpush1.msra.mxu0 0.0
    %1635 = vmatprep.subr.mxu0 0.0
    %1636 = vmatpush1.msra.mxu0 0.0
    %1637 = vmatprep.subr.mxu0 0.0
    %1638 = vmatpush1.msra.mxu0 0.0
    %1639 = vmatprep.subr.mxu0 0.0
    %1640 = vmatpush1.msra.mxu0 0.0
    %1641 = vmatprep.subr.mxu0 0.0
    %1642 = vmatpush1.msra.mxu0 0.0
    %1643 = vmatprep.subr.mxu0 0.0
    %1644 = vmatpush1.msra.mxu0 0.0
    %1645 = vmatprep.subr.mxu0 0.0
    %1646 = vmatpush1.msra.mxu0 0.0
    %1647 = vmatprep.subr.mxu0 0.0
    %1648 = vmatpush1.msra.mxu0 0.0
    %1649 = vmatprep.subr.mxu0 0.0
    %1650 = vmatpush1.msra.mxu0 0.0
    %1651 = vmatprep.subr.mxu0 0.0
    %1652 = vmatpush1.msra.mxu0 0.0
    %1653 = vmatprep.subr.mxu0 0.0
    %1654 = vmatpush1.msra.mxu0 0.0
    %1655 = vmatprep.subr.mxu0 0.0
    %1656 = vmatpush1.msra.mxu0 0.0
    %1657 = vmatprep.subr.mxu0 0.0
    %1658 = vmatpush1.msra.mxu0 %v795
    %1659 = vmatprep.subr.mxu0 0.0
    %1660 = vmatpush2.msra.mxu0 0.0
    %1661 = vmatprep.subr.mxu0 0.0
    %1662 = vmatpush2.msra.mxu0 0.0
    %1663 = vmatprep.subr.mxu0 0.0
    %1664 = vmatpush2.msra.mxu0 0.0
    %1665 = vmatprep.subr.mxu0 0.0
    %1666 = vmatpush2.msra.mxu0 0.0
    %1667 = vmatprep.subr.mxu0 0.0
    %1668 = vmatpush2.msra.mxu0 0.0
    %1669 = vmatprep.subr.mxu0 0.0
    %1670 = vmatpush2.msra.mxu0 0.0
    %1671 = vmatprep.subr.mxu0 0.0
    %1672 = vmatpush2.msra.mxu0 0.0
    %1673 = vmatprep.subr.mxu0 0.0
    %1674 = vmatpush2.msra.mxu0 0.0
    %1675 = vmatprep.subr.mxu0 0.0
    %1676 = vmatpush2.msra.mxu0 0.0
    %1677 = vmatprep.subr.mxu0 0.0
    %1678 = vmatpush2.msra.mxu0 0.0
    %1679 = vmatprep.subr.mxu0 0.0
    %1680 = vmatpush2.msra.mxu0 0.0
    %1681 = vmatprep.subr.mxu0 0.0
    %1682 = vmatpush2.msra.mxu0 0.0
    %1683 = vmatprep.subr.mxu0 0.0
    %1684 = vmatpush2.msra.mxu0 0.0
    %1685 = vmatprep.subr.mxu0 0.0
    %1686 = vmatpush2.msra.mxu0 0.0
    %1687 = vmatprep.subr.mxu0 0.0
    %1688 = vmatpush2.msra.mxu0 0.0
    %1689 = vmatprep.subr.mxu0 0.0
    %1690 = vmatpush2.msra.mxu0 0.0
    %1691 = vmatprep.mubr.f32.mxu0 0.0
    %1692 = vmatmul.mubr.f32.gmra.mxu0 %v1625
    %v1693 = vpop.f32.mrf.mxu0
    %v1694 = vadd.f32 0.0, %v1693
    %v1695 = vpop.f32.mrf.mxu0
    %1696 = vdwg.mxu0
    %v1698 = vsel %vm1265, %v1331, 0
    %1700 = vmatprep.subr.mxu0 0.0
    %1701 = vmatpush1.msra.mxu0 0.0
    %1702 = vmatprep.subr.mxu0 0.0
    %1703 = vmatpush1.msra.mxu0 0.0
    %1704 = vmatprep.subr.mxu0 0.0
    %1705 = vmatpush1.msra.mxu0 0.0
    %1706 = vmatprep.subr.mxu0 0.0
    %1707 = vmatpush1.msra.mxu0 0.0
    %1708 = vmatprep.subr.mxu0 0.0
    %1709 = vmatpush1.msra.mxu0 0.0
    %1710 = vmatprep.subr.mxu0 0.0
    %1711 = vmatpush1.msra.mxu0 0.0
    %1712 = vmatprep.subr.mxu0 0.0
    %1713 = vmatpush1.msra.mxu0 0.0
    %1714 = vmatprep.subr.mxu0 0.0
    %1715 = vmatpush1.msra.mxu0 0.0
    %1716 = vmatprep.subr.mxu0 0.0
    %1717 = vmatpush1.msra.mxu0 0.0
    %1718 = vmatprep.subr.mxu0 0.0
    %1719 = vmatpush1.msra.mxu0 0.0
    %1720 = vmatprep.subr.mxu0 0.0
    %1721 = vmatpush1.msra.mxu0 0.0
    %1722 = vmatprep.subr.mxu0 0.0
    %1723 = vmatpush1.msra.mxu0 0.0
    %1724 = vmatprep.subr.mxu0 0.0
    %1725 = vmatpush1.msra.mxu0 0.0
    %1726 = vmatprep.subr.mxu0 0.0
    %1727 = vmatpush1.msra.mxu0 0.0
    %1728 = vmatprep.subr.mxu0 0.0
    %1729 = vmatpush1.msra.mxu0 0.0
    %1730 = vmatprep.subr.mxu0 0.0
    %1731 = vmatpush1.msra.mxu0 %v800
    %1732 = vmatprep.subr.mxu0 0.0
    %1733 = vmatpush2.msra.mxu0 0.0
    %1734 = vmatprep.subr.mxu0 0.0
    %1735 = vmatpush2.msra.mxu0 0.0
    %1736 = vmatprep.subr.mxu0 0.0
    %1737 = vmatpush2.msra.mxu0 0.0
    %1738 = vmatprep.subr.mxu0 0.0
    %1739 = vmatpush2.msra.mxu0 0.0
    %1740 = vmatprep.subr.mxu0 0.0
    %1741 = vmatpush2.msra.mxu0 0.0
    %1742 = vmatprep.subr.mxu0 0.0
    %1743 = vmatpush2.msra.mxu0 0.0
    %1744 = vmatprep.subr.mxu0 0.0
    %1745 = vmatpush2.msra.mxu0 0.0
    %1746 = vmatprep.subr.mxu0 0.0
    %1747 = vmatpush2.msra.mxu0 0.0
    %1748 = vmatprep.subr.mxu0 0.0
    %1749 = vmatpush2.msra.mxu0 0.0
    %1750 = vmatprep.subr.mxu0 0.0
    %1751 = vmatpush2.msra.mxu0 0.0
    %1752 = vmatprep.subr.mxu0 0.0
    %1753 = vmatpush2.msra.mxu0 0.0
    %1754 = vmatprep.subr.mxu0 0.0
    %1755 = vmatpush2.msra.mxu0 0.0
    %1756 = vmatprep.subr.mxu0 0.0
    %1757 = vmatpush2.msra.mxu0 0.0
    %1758 = vmatprep.subr.mxu0 0.0
    %1759 = vmatpush2.msra.mxu0 0.0
    %1760 = vmatprep.subr.mxu0 0.0
    %1761 = vmatpush2.msra.mxu0 0.0
    %1762 = vmatprep.subr.mxu0 0.0
    %1763 = vmatpush2.msra.mxu0 0.0
    %1764 = vmatprep.mubr.f32.mxu0 0.0
    %1765 = vmatmul.mubr.f32.gmra.mxu0 %v1698
    %v1766 = vpop.f32.mrf.mxu0
    %v1767 = vadd.f32 0.0, %v1766
    %v1768 = vpop.f32.mrf.mxu0
    %1769 = vdwg.mxu0
    %v1770 = vsel %vm477, %v1402, 0.0
    %v1771 = vrot.slane %v1770, 4
    %v1772 = vadd.f32 %v1770, %v1771
    %v1773 = vrot.slane %v1772, 2
    %v1774 = vadd.f32 %v1772, %v1773
    %v1775 = vrot.slane %v1774, 1
    %v1776 = vadd.f32 %v1774, %v1775
    %v1777 = vsel %vm477, %v1475, 0.0
    %v1778 = vrot.slane %v1777, 4
    %v1779 = vadd.f32 %v1777, %v1778
    %v1780 = vrot.slane %v1779, 2
    %v1781 = vadd.f32 %v1779, %v1780
    %v1782 = vrot.slane %v1781, 1
    %v1783 = vadd.f32 %v1781, %v1782
    %v1784 = vsel %vm477, %v1548, 0.0
    %v1785 = vrot.slane %v1784, 4
    %v1786 = vadd.f32 %v1784, %v1785
    %v1787 = vrot.slane %v1786, 2
    %v1788 = vadd.f32 %v1786, %v1787
    %v1789 = vrot.slane %v1788, 1
    %v1790 = vadd.f32 %v1788, %v1789
    %v1791 = vsel %vm477, %v1621, 0.0
    %v1792 = vrot.slane %v1791, 4
    %v1793 = vadd.f32 %v1791, %v1792
    %v1794 = vrot.slane %v1793, 2
    %v1795 = vadd.f32 %v1793, %v1794
    %v1796 = vrot.slane %v1795, 1
    %v1797 = vadd.f32 %v1795, %v1796
    %v1798 = vsel %vm477, %v1694, 0.0
    %v1799 = vrot.slane %v1798, 4
    %v1800 = vadd.f32 %v1798, %v1799
    %v1801 = vrot.slane %v1800, 2
    %v1802 = vadd.f32 %v1800, %v1801
    %v1803 = vrot.slane %v1802, 1
    %v1804 = vadd.f32 %v1802, %v1803
    %v1805 = vsel %vm477, %v1767, 0.0
    %v1806 = vrot.slane %v1805, 4
    %v1807 = vadd.f32 %v1805, %v1806
    %v1808 = vrot.slane %v1807, 2
    %v1809 = vadd.f32 %v1807, %v1808
    %v1810 = vrot.slane %v1809, 1
    %v1811 = vadd.f32 %v1809, %v1810
    %v1812 = vmul.f32 %v1776, 0.125
    %v1813 = vmul.f32 %v1783, 0.125
    %v1814 = vmul.f32 %v1790, 0.125
    %v1815 = vmul.f32 %v1797, 0.125
    %v1816 = vmul.f32 %v1804, 0.125
    %v1817 = vmul.f32 %v1811, 0.125
    %v1818 = vld [vmem:[%s3] sm:$0x3f]
    %v1819 = vld [vmem:[#allocation14] sm:$0xf]
    %v1820 = vld [vmem:[#allocation16] sm:$0x1]
    %v1822 = vlaneseq
    %v1823 = vshrl.u32 %v1822, 7
    %v1824 = vsub.s32 0, %v1823
    %v1825 = vrot.slane %v1820, %v1824
    %vm1827 = vcmask 31744
    %v1829 = vsel %vm1827, %v1818, 0
    %vm1831 = vcmask 1043456
    %v1833 = vsel %vm1831, %v1819, 0
    %1835 = vmatprep.subr.mxu0 0.0
    %1836 = vmatpush1.msra.mxu0 0.0
    %1837 = vmatprep.subr.mxu0 0.0
    %1838 = vmatpush1.msra.mxu0 0.0
    %1839 = vmatprep.subr.mxu0 0.0
    %1840 = vmatpush1.msra.mxu0 0.0
    %1841 = vmatprep.subr.mxu0 0.0
    %1842 = vmatpush1.msra.mxu0 0.0
    %1843 = vmatprep.subr.mxu0 0.0
    %1844 = vmatpush1.msra.mxu0 0.0
    %1845 = vmatprep.subr.mxu0 0.0
    %1846 = vmatpush1.msra.mxu0 0.0
    %1847 = vmatprep.subr.mxu0 0.0
    %1848 = vmatpush1.msra.mxu0 0.0
    %1849 = vmatprep.subr.mxu0 0.0
    %1850 = vmatpush1.msra.mxu0 0.0
    %1851 = vmatprep.subr.mxu0 0.0
    %1852 = vmatpush1.msra.mxu0 0.0
    %1853 = vmatprep.subr.mxu0 0.0
    %1854 = vmatpush1.msra.mxu0 0.0
    %1855 = vmatprep.subr.mxu0 0.0
    %1856 = vmatpush1.msra.mxu0 0.0
    %1857 = vmatprep.subr.mxu0 0.0
    %1858 = vmatpush1.msra.mxu0 0.0
    %1859 = vmatprep.subr.mxu0 0.0
    %1860 = vmatpush1.msra.mxu0 0.0
    %1861 = vmatprep.subr.mxu0 0.0
    %1862 = vmatpush1.msra.mxu0 0.0
    %1863 = vmatprep.subr.mxu0 0.0
    %1864 = vmatpush1.msra.mxu0 0.0
    %1865 = vmatprep.subr.mxu0 0.0
    %1866 = vmatpush1.msra.mxu0 %v1833
    %1867 = vmatprep.subr.mxu0 0.0
    %1868 = vmatpush2.msra.mxu0 0.0
    %1869 = vmatprep.subr.mxu0 0.0
    %1870 = vmatpush2.msra.mxu0 0.0
    %1871 = vmatprep.subr.mxu0 0.0
    %1872 = vmatpush2.msra.mxu0 0.0
    %1873 = vmatprep.subr.mxu0 0.0
    %1874 = vmatpush2.msra.mxu0 0.0
    %1875 = vmatprep.subr.mxu0 0.0
    %1876 = vmatpush2.msra.mxu0 0.0
    %1877 = vmatprep.subr.mxu0 0.0
    %1878 = vmatpush2.msra.mxu0 0.0
    %1879 = vmatprep.subr.mxu0 0.0
    %1880 = vmatpush2.msra.mxu0 0.0
    %1881 = vmatprep.subr.mxu0 0.0
    %1882 = vmatpush2.msra.mxu0 0.0
    %1883 = vmatprep.subr.mxu0 0.0
    %1884 = vmatpush2.msra.mxu0 0.0
    %1885 = vmatprep.subr.mxu0 0.0
    %1886 = vmatpush2.msra.mxu0 0.0
    %1887 = vmatprep.subr.mxu0 0.0
    %1888 = vmatpush2.msra.mxu0 0.0
    %1889 = vmatprep.subr.mxu0 0.0
    %1890 = vmatpush2.msra.mxu0 0.0
    %1891 = vmatprep.subr.mxu0 0.0
    %1892 = vmatpush2.msra.mxu0 0.0
    %1893 = vmatprep.subr.mxu0 0.0
    %1894 = vmatpush2.msra.mxu0 0.0
    %1895 = vmatprep.subr.mxu0 0.0
    %1896 = vmatpush2.msra.mxu0 0.0
    %1897 = vmatprep.subr.mxu0 0.0
    %1898 = vmatpush2.msra.mxu0 0.0
    %1899 = vmatprep.mubr.f32.mxu0 0.0
    %1900 = vmatmul.mubr.f32.gmra.mxu0 %v1829
    %v1901 = vpop.f32.mrf.mxu0
    %v1902 = vadd.f32 %v1825, %v1901
    %v1903 = vpop.f32.mrf.mxu0
    %1904 = vdwg.mxu0
    %v1905 = vld [vmem:[#allocation17] sm:$0xff]
    %v1906 = vld [vmem:[#allocation17 + $0x8] sm:$0xff]
    %v1907 = vld [vmem:[#allocation17 + $0x10] sm:$0xff]
    %v1908 = vld [vmem:[#allocation17 + $0x18] sm:$0xff]
    %v1909 = vld [vmem:[#allocation19] sm:$0xff]
    %v1910 = vld [vmem:[#allocation19 + $0x8] sm:$0xff]
    %v1911 = vld [vmem:[#allocation19 + $0x10] sm:$0xff]
    %v1912 = vld [vmem:[#allocation19 + $0x18] sm:$0xff]
    %v1914 = vsel %vm477, %v1902, 0
    %1916 = vmatprep.subr.mxu0 0.0
    %1917 = vmatpush1.msra.mxu0 0.0
    %1918 = vmatprep.subr.mxu0 0.0
    %1919 = vmatpush1.msra.mxu0 0.0
    %1920 = vmatprep.subr.mxu0 0.0
    %1921 = vmatpush1.msra.mxu0 0.0
    %1922 = vmatprep.subr.mxu0 0.0
    %1923 = vmatpush1.msra.mxu0 0.0
    %1924 = vmatprep.subr.mxu0 0.0
    %1925 = vmatpush1.msra.mxu0 0.0
    %1926 = vmatprep.subr.mxu0 0.0
    %1927 = vmatpush1.msra.mxu0 0.0
    %1928 = vmatprep.subr.mxu0 0.0
    %1929 = vmatpush1.msra.mxu0 0.0
    %1930 = vmatprep.subr.mxu0 0.0
    %1931 = vmatpush1.msra.mxu0 0.0
    %1932 = vmatprep.subr.mxu0 0.0
    %1933 = vmatpush1.msra.mxu0 0.0
    %1934 = vmatprep.subr.mxu0 0.0
    %1935 = vmatpush1.msra.mxu0 0.0
    %1936 = vmatprep.subr.mxu0 0.0
    %1937 = vmatpush1.msra.mxu0 0.0
    %1938 = vmatprep.subr.mxu0 0.0
    %1939 = vmatpush1.msra.mxu0 0.0
    %1940 = vmatprep.subr.mxu0 0.0
    %1941 = vmatpush1.msra.mxu0 %v1912
    %1942 = vmatprep.subr.mxu0 0.0
    %1943 = vmatpush1.msra.mxu0 %v1911
    %1944 = vmatprep.subr.mxu0 0.0
    %1945 = vmatpush1.msra.mxu0 %v1910
    %1946 = vmatprep.subr.mxu0 0.0
    %1947 = vmatpush1.msra.mxu0 %v1909
    %1948 = vmatprep.subr.mxu0 0.0
    %1949 = vmatpush2.msra.mxu0 0.0
    %1950 = vmatprep.subr.mxu0 0.0
    %1951 = vmatpush2.msra.mxu0 0.0
    %1952 = vmatprep.subr.mxu0 0.0
    %1953 = vmatpush2.msra.mxu0 0.0
    %1954 = vmatprep.subr.mxu0 0.0
    %1955 = vmatpush2.msra.mxu0 0.0
    %1956 = vmatprep.subr.mxu0 0.0
    %1957 = vmatpush2.msra.mxu0 0.0
    %1958 = vmatprep.subr.mxu0 0.0
    %1959 = vmatpush2.msra.mxu0 0.0
    %1960 = vmatprep.subr.mxu0 0.0
    %1961 = vmatpush2.msra.mxu0 0.0
    %1962 = vmatprep.subr.mxu0 0.0
    %1963 = vmatpush2.msra.mxu0 0.0
    %1964 = vmatprep.subr.mxu0 0.0
    %1965 = vmatpush2.msra.mxu0 0.0
    %1966 = vmatprep.subr.mxu0 0.0
    %1967 = vmatpush2.msra.mxu0 0.0
    %1968 = vmatprep.subr.mxu0 0.0
    %1969 = vmatpush2.msra.mxu0 0.0
    %1970 = vmatprep.subr.mxu0 0.0
    %1971 = vmatpush2.msra.mxu0 0.0
    %1972 = vmatprep.subr.mxu0 0.0
    %1973 = vmatpush2.msra.mxu0 0.0
    %1974 = vmatprep.subr.mxu0 0.0
    %1975 = vmatpush2.msra.mxu0 0.0
    %1976 = vmatprep.subr.mxu0 0.0
    %1977 = vmatpush2.msra.mxu0 0.0
    %1978 = vmatprep.subr.mxu0 0.0
    %1979 = vmatpush2.msra.mxu0 0.0
    %1980 = vmatprep.mubr.f32.mxu0 0.0
    %1981 = vmatmul.mubr.f32.gmra.mxu0 %v1914
    %v1982 = vpop.f32.mrf.mxu0
    %v1983 = vadd.f32 0.0, %v1982
    %v1984 = vpop.f32.mrf.mxu0
    %1985 = vdwg.mxu0
    %vm1992 = vcmask 1041409
    %v1993 = vsel %vm1992, %v1813, %v1812
    %vm1994 = vcmask 1042434
    %v1995 = vsel %vm1994, %v1814, %v1993
    %vm1996 = vcmask 1043459
    %v1997 = vsel %vm1996, %v1815, %v1995
    %vm1998 = vcmask 1044484
    %v1999 = vsel %vm1998, %v1816, %v1997
    %vm2000 = vcmask 1045509
    %v2001 = vsel %vm2000, %v1817, %v1999
    %v2002 = vsel %vm477, %v2001, 0
    %2004 = vmatprep.subr.mxu0 0.0
    %2005 = vmatpush1.msra.mxu0 0.0
    %2006 = vmatprep.subr.mxu0 0.0
    %2007 = vmatpush1.msra.mxu0 0.0
    %2008 = vmatprep.subr.mxu0 0.0
    %2009 = vmatpush1.msra.mxu0 0.0
    %2010 = vmatprep.subr.mxu0 0.0
    %2011 = vmatpush1.msra.mxu0 0.0
    %2012 = vmatprep.subr.mxu0 0.0
    %2013 = vmatpush1.msra.mxu0 0.0
    %2014 = vmatprep.subr.mxu0 0.0
    %2015 = vmatpush1.msra.mxu0 0.0
    %2016 = vmatprep.subr.mxu0 0.0
    %2017 = vmatpush1.msra.mxu0 0.0
    %2018 = vmatprep.subr.mxu0 0.0
    %2019 = vmatpush1.msra.mxu0 0.0
    %2020 = vmatprep.subr.mxu0 0.0
    %2021 = vmatpush1.msra.mxu0 0.0
    %2022 = vmatprep.subr.mxu0 0.0
    %2023 = vmatpush1.msra.mxu0 0.0
    %2024 = vmatprep.subr.mxu0 0.0
    %2025 = vmatpush1.msra.mxu0 0.0
    %2026 = vmatprep.subr.mxu0 0.0
    %2027 = vmatpush1.msra.mxu0 0.0
    %2028 = vmatprep.subr.mxu0 0.0
    %2029 = vmatpush1.msra.mxu0 %v1908
    %2030 = vmatprep.subr.mxu0 0.0
    %2031 = vmatpush1.msra.mxu0 %v1907
    %2032 = vmatprep.subr.mxu0 0.0
    %2033 = vmatpush1.msra.mxu0 %v1906
    %2034 = vmatprep.subr.mxu0 0.0
    %2035 = vmatpush1.msra.mxu0 %v1905
    %2036 = vmatprep.subr.mxu0 0.0
    %2037 = vmatpush2.msra.mxu0 0.0
    %2038 = vmatprep.subr.mxu0 0.0
    %2039 = vmatpush2.msra.mxu0 0.0
    %2040 = vmatprep.subr.mxu0 0.0
    %2041 = vmatpush2.msra.mxu0 0.0
    %2042 = vmatprep.subr.mxu0 0.0
    %2043 = vmatpush2.msra.mxu0 0.0
    %2044 = vmatprep.subr.mxu0 0.0
    %2045 = vmatpush2.msra.mxu0 0.0
    %2046 = vmatprep.subr.mxu0 0.0
    %2047 = vmatpush2.msra.mxu0 0.0
    %2048 = vmatprep.subr.mxu0 0.0
    %2049 = vmatpush2.msra.mxu0 0.0
    %2050 = vmatprep.subr.mxu0 0.0
    %2051 = vmatpush2.msra.mxu0 0.0
    %2052 = vmatprep.subr.mxu0 0.0
    %2053 = vmatpush2.msra.mxu0 0.0
    %2054 = vmatprep.subr.mxu0 0.0
    %2055 = vmatpush2.msra.mxu0 0.0
    %2056 = vmatprep.subr.mxu0 0.0
    %2057 = vmatpush2.msra.mxu0 0.0
    %2058 = vmatprep.subr.mxu0 0.0
    %2059 = vmatpush2.msra.mxu0 0.0
    %2060 = vmatprep.subr.mxu0 0.0
    %2061 = vmatpush2.msra.mxu0 0.0
    %2062 = vmatprep.subr.mxu0 0.0
    %2063 = vmatpush2.msra.mxu0 0.0
    %2064 = vmatprep.subr.mxu0 0.0
    %2065 = vmatpush2.msra.mxu0 0.0
    %2066 = vmatprep.subr.mxu0 0.0
    %2067 = vmatpush2.msra.mxu0 0.0
    %2068 = vmatprep.mubr.f32.mxu0 0.0
    %2069 = vmatmul.mubr.f32.gmra.mxu0 %v2002
    %v2070 = vpop.f32.mrf.mxu0
    %v2071 = vadd.f32 %v1983, %v2070
    %v2072 = vpop.f32.mrf.mxu0
    %2073 = vdwg.mxu0
    %v2074 = vld [vmem:[#allocation20] sm:$0x1]
    %v2076 = vlaneseq
    %v2077 = vshrl.u32 %v2076, 7
    %v2078 = vsub.s32 0, %v2077
    %v2079 = vrot.slane %v2074, %v2078
    %v2081 = vadd.f32 %v2071, %v2079
    %v2082 = vmax.f32 %v2081, 0.0
    %v2083 = vld [vmem:[%s35] sm:$0xff]
    %v2084 = vld [vmem:[%s35 + $0x8] sm:$0xff]
    %v2085 = vld [vmem:[%s35 + $0x10] sm:$0xff]
    %v2086 = vld [vmem:[%s35 + $0x18] sm:$0xff]
    %v2087 = vld [vmem:[%s35 + $0x20] sm:$0xff]
    %v2088 = vld [vmem:[%s35 + $0x28] sm:$0xff]
    %v2089 = vld [vmem:[%s35 + $0x30] sm:$0xff]
    %v2090 = vld [vmem:[%s35 + $0x38] sm:$0xff]
    %v2091 = vld [vmem:[#allocation22] sm:$0x1]
    %v2093 = vlaneseq
    %v2094 = vshrl.u32 %v2093, 7
    %v2095 = vsub.s32 0, %v2094
    %v2096 = vrot.slane %v2091, %v2095
    %vm2098 = vcmask 523264
    %v2100 = vsel %vm2098, %v2082, 0
    %2102 = vmatprep.subr.mxu0 0.0
    %2103 = vmatpush1.msra.mxu0 0.0
    %2104 = vmatprep.subr.mxu0 0.0
    %2105 = vmatpush1.msra.mxu0 0.0
    %2106 = vmatprep.subr.mxu0 0.0
    %2107 = vmatpush1.msra.mxu0 0.0
    %2108 = vmatprep.subr.mxu0 0.0
    %2109 = vmatpush1.msra.mxu0 0.0
    %2110 = vmatprep.subr.mxu0 0.0
    %2111 = vmatpush1.msra.mxu0 0.0
    %2112 = vmatprep.subr.mxu0 0.0
    %2113 = vmatpush1.msra.mxu0 0.0
    %2114 = vmatprep.subr.mxu0 0.0
    %2115 = vmatpush1.msra.mxu0 0.0
    %2116 = vmatprep.subr.mxu0 0.0
    %2117 = vmatpush1.msra.mxu0 0.0
    %2118 = vmatprep.subr.mxu0 0.0
    %2119 = vmatpush1.msra.mxu0 %v2090
    %2120 = vmatprep.subr.mxu0 0.0
    %2121 = vmatpush1.msra.mxu0 %v2089
    %2122 = vmatprep.subr.mxu0 0.0
    %2123 = vmatpush1.msra.mxu0 %v2088
    %2124 = vmatprep.subr.mxu0 0.0
    %2125 = vmatpush1.msra.mxu0 %v2087
    %2126 = vmatprep.subr.mxu0 0.0
    %2127 = vmatpush1.msra.mxu0 %v2086
    %2128 = vmatprep.subr.mxu0 0.0
    %2129 = vmatpush1.msra.mxu0 %v2085
    %2130 = vmatprep.subr.mxu0 0.0
    %2131 = vmatpush1.msra.mxu0 %v2084
    %2132 = vmatprep.subr.mxu0 0.0
    %2133 = vmatpush1.msra.mxu0 %v2083
    %2134 = vmatprep.subr.mxu0 0.0
    %2135 = vmatpush2.msra.mxu0 0.0
    %2136 = vmatprep.subr.mxu0 0.0
    %2137 = vmatpush2.msra.mxu0 0.0
    %2138 = vmatprep.subr.mxu0 0.0
    %2139 = vmatpush2.msra.mxu0 0.0
    %2140 = vmatprep.subr.mxu0 0.0
    %2141 = vmatpush2.msra.mxu0 0.0
    %2142 = vmatprep.subr.mxu0 0.0
    %2143 = vmatpush2.msra.mxu0 0.0
    %2144 = vmatprep.subr.mxu0 0.0
    %2145 = vmatpush2.msra.mxu0 0.0
    %2146 = vmatprep.subr.mxu0 0.0
    %2147 = vmatpush2.msra.mxu0 0.0
    %2148 = vmatprep.subr.mxu0 0.0
    %2149 = vmatpush2.msra.mxu0 0.0
    %2150 = vmatprep.subr.mxu0 0.0
    %2151 = vmatpush2.msra.mxu0 0.0
    %2152 = vmatprep.subr.mxu0 0.0
    %2153 = vmatpush2.msra.mxu0 0.0
    %2154 = vmatprep.subr.mxu0 0.0
    %2155 = vmatpush2.msra.mxu0 0.0
    %2156 = vmatprep.subr.mxu0 0.0
    %2157 = vmatpush2.msra.mxu0 0.0
    %2158 = vmatprep.subr.mxu0 0.0
    %2159 = vmatpush2.msra.mxu0 0.0
    %2160 = vmatprep.subr.mxu0 0.0
    %2161 = vmatpush2.msra.mxu0 0.0
    %2162 = vmatprep.subr.mxu0 0.0
    %2163 = vmatpush2.msra.mxu0 0.0
    %2164 = vmatprep.subr.mxu0 0.0
    %2165 = vmatpush2.msra.mxu0 0.0
    %2166 = vmatprep.mubr.f32.mxu0 0.0
    %2167 = vmatmul.mubr.f32.gmra.mxu0 %v2100
    %v2168 = vpop.f32.mrf.mxu0
    %v2169 = vadd.f32 %v2096, %v2168
    %v2170 = vpop.f32.mrf.mxu0
    %2171 = vdwg.mxu0
    %v2172 = vld [vmem:[%s7] sm:$0x3]
    %vm2173 = vcmask 48128
    %v2175 = vsel %vm2173, %v2172, 0
    %vm2177 = vcmask 1045504
    %v2179 = vsel %vm2177, %v2169, 0
    %2181 = vmatprep.subr.mxu0 0.0
    %2182 = vmatpush1.msra.mxu0 0.0
    %2183 = vmatprep.subr.mxu0 0.0
    %2184 = vmatpush1.msra.mxu0 0.0
    %2185 = vmatprep.subr.mxu0 0.0
    %2186 = vmatpush1.msra.mxu0 0.0
    %2187 = vmatprep.subr.mxu0 0.0
    %2188 = vmatpush1.msra.mxu0 0.0
    %2189 = vmatprep.subr.mxu0 0.0
    %2190 = vmatpush1.msra.mxu0 0.0
    %2191 = vmatprep.subr.mxu0 0.0
    %2192 = vmatpush1.msra.mxu0 0.0
    %2193 = vmatprep.subr.mxu0 0.0
    %2194 = vmatpush1.msra.mxu0 0.0
    %2195 = vmatprep.subr.mxu0 0.0
    %2196 = vmatpush1.msra.mxu0 0.0
    %2197 = vmatprep.subr.mxu0 0.0
    %2198 = vmatpush1.msra.mxu0 0.0
    %2199 = vmatprep.subr.mxu0 0.0
    %2200 = vmatpush1.msra.mxu0 0.0
    %2201 = vmatprep.subr.mxu0 0.0
    %2202 = vmatpush1.msra.mxu0 0.0
    %2203 = vmatprep.subr.mxu0 0.0
    %2204 = vmatpush1.msra.mxu0 0.0
    %2205 = vmatprep.subr.mxu0 0.0
    %2206 = vmatpush1.msra.mxu0 0.0
    %2207 = vmatprep.subr.mxu0 0.0
    %2208 = vmatpush1.msra.mxu0 0.0
    %2209 = vmatprep.subr.mxu0 0.0
    %2210 = vmatpush1.msra.mxu0 0.0
    %2211 = vmatprep.subr.mxu0 0.0
    %2212 = vmatpush1.msra.mxu0 %v2179
    %2213 = vmatprep.subr.mxu0 0.0
    %2214 = vmatpush2.msra.mxu0 0.0
    %2215 = vmatprep.subr.mxu0 0.0
    %2216 = vmatpush2.msra.mxu0 0.0
    %2217 = vmatprep.subr.mxu0 0.0
    %2218 = vmatpush2.msra.mxu0 0.0
    %2219 = vmatprep.subr.mxu0 0.0
    %2220 = vmatpush2.msra.mxu0 0.0
    %2221 = vmatprep.subr.mxu0 0.0
    %2222 = vmatpush2.msra.mxu0 0.0
    %2223 = vmatprep.subr.mxu0 0.0
    %2224 = vmatpush2.msra.mxu0 0.0
    %2225 = vmatprep.subr.mxu0 0.0
    %2226 = vmatpush2.msra.mxu0 0.0
    %2227 = vmatprep.subr.mxu0 0.0
    %2228 = vmatpush2.msra.mxu0 0.0
    %2229 = vmatprep.subr.mxu0 0.0
    %2230 = vmatpush2.msra.mxu0 0.0
    %2231 = vmatprep.subr.mxu0 0.0
    %2232 = vmatpush2.msra.mxu0 0.0
    %2233 = vmatprep.subr.mxu0 0.0
    %2234 = vmatpush2.msra.mxu0 0.0
    %2235 = vmatprep.subr.mxu0 0.0
    %2236 = vmatpush2.msra.mxu0 0.0
    %2237 = vmatprep.subr.mxu0 0.0
    %2238 = vmatpush2.msra.mxu0 0.0
    %2239 = vmatprep.subr.mxu0 0.0
    %2240 = vmatpush2.msra.mxu0 0.0
    %2241 = vmatprep.subr.mxu0 0.0
    %2242 = vmatpush2.msra.mxu0 0.0
    %2243 = vmatprep.subr.mxu0 0.0
    %2244 = vmatpush2.msra.mxu0 0.0
    %2245 = vmatprep.mubr.f32.mxu0 0.0
    %2246 = vmatmul.mubr.f32.gmra.mxu0 %v2175
    %v2247 = vpop.f32.mrf.mxu0
    %v2248 = vadd.f32 0.0, %v2247
    %v2249 = vpop.f32.mrf.mxu0
    %2250 = vdwg.mxu0
    %v2251 = vld [vmem:[#allocation2] sm:$0x3]
    %v2252 = vld [vmem:[#allocation23] sm:$0xf]
    %v2253 = vld [vmem:[#allocation25] sm:$0x1]
    %v2255 = vlaneseq
    %v2256 = vshrl.u32 %v2255, 7
    %v2257 = vsub.s32 0, %v2256
    %v2258 = vrot.slane %v2253, %v2257
    %v2261 = vsel %vm1827, %v2251, 0
    %v2264 = vsel %vm1831, %v2252, 0
    %2266 = vmatprep.subr.mxu0 0.0
    %2267 = vmatpush1.msra.mxu0 0.0
    %2268 = vmatprep.subr.mxu0 0.0
    %2269 = vmatpush1.msra.mxu0 0.0
    %2270 = vmatprep.subr.mxu0 0.0
    %2271 = vmatpush1.msra.mxu0 0.0
    %2272 = vmatprep.subr.mxu0 0.0
    %2273 = vmatpush1.msra.mxu0 0.0
    %2274 = vmatprep.subr.mxu0 0.0
    %2275 = vmatpush1.msra.mxu0 0.0
    %2276 = vmatprep.subr.mxu0 0.0
    %2277 = vmatpush1.msra.mxu0 0.0
    %2278 = vmatprep.subr.mxu0 0.0
    %2279 = vmatpush1.msra.mxu0 0.0
    %2280 = vmatprep.subr.mxu0 0.0
    %2281 = vmatpush1.msra.mxu0 0.0
    %2282 = vmatprep.subr.mxu0 0.0
    %2283 = vmatpush1.msra.mxu0 0.0
    %2284 = vmatprep.subr.mxu0 0.0
    %2285 = vmatpush1.msra.mxu0 0.0
    %2286 = vmatprep.subr.mxu0 0.0
    %2287 = vmatpush1.msra.mxu0 0.0
    %2288 = vmatprep.subr.mxu0 0.0
    %2289 = vmatpush1.msra.mxu0 0.0
    %2290 = vmatprep.subr.mxu0 0.0
    %2291 = vmatpush1.msra.mxu0 0.0
    %2292 = vmatprep.subr.mxu0 0.0
    %2293 = vmatpush1.msra.mxu0 0.0
    %2294 = vmatprep.subr.mxu0 0.0
    %2295 = vmatpush1.msra.mxu0 0.0
    %2296 = vmatprep.subr.mxu0 0.0
    %2297 = vmatpush1.msra.mxu0 %v2264
    %2298 = vmatprep.subr.mxu0 0.0
    %2299 = vmatpush2.msra.mxu0 0.0
    %2300 = vmatprep.subr.mxu0 0.0
    %2301 = vmatpush2.msra.mxu0 0.0
    %2302 = vmatprep.subr.mxu0 0.0
    %2303 = vmatpush2.msra.mxu0 0.0
    %2304 = vmatprep.subr.mxu0 0.0
    %2305 = vmatpush2.msra.mxu0 0.0
    %2306 = vmatprep.subr.mxu0 0.0
    %2307 = vmatpush2.msra.mxu0 0.0
    %2308 = vmatprep.subr.mxu0 0.0
    %2309 = vmatpush2.msra.mxu0 0.0
    %2310 = vmatprep.subr.mxu0 0.0
    %2311 = vmatpush2.msra.mxu0 0.0
    %2312 = vmatprep.subr.mxu0 0.0
    %2313 = vmatpush2.msra.mxu0 0.0
    %2314 = vmatprep.subr.mxu0 0.0
    %2315 = vmatpush2.msra.mxu0 0.0
    %2316 = vmatprep.subr.mxu0 0.0
    %2317 = vmatpush2.msra.mxu0 0.0
    %2318 = vmatprep.subr.mxu0 0.0
    %2319 = vmatpush2.msra.mxu0 0.0
    %2320 = vmatprep.subr.mxu0 0.0
    %2321 = vmatpush2.msra.mxu0 0.0
    %2322 = vmatprep.subr.mxu0 0.0
    %2323 = vmatpush2.msra.mxu0 0.0
    %2324 = vmatprep.subr.mxu0 0.0
    %2325 = vmatpush2.msra.mxu0 0.0
    %2326 = vmatprep.subr.mxu0 0.0
    %2327 = vmatpush2.msra.mxu0 0.0
    %2328 = vmatprep.subr.mxu0 0.0
    %2329 = vmatpush2.msra.mxu0 0.0
    %2330 = vmatprep.mubr.f32.mxu0 0.0
    %2331 = vmatmul.mubr.f32.gmra.mxu0 %v2261
    %v2332 = vpop.f32.mrf.mxu0
    %v2333 = vadd.f32 %v2258, %v2332
    %v2334 = vpop.f32.mrf.mxu0
    %2335 = vdwg.mxu0
    %v2336 = vld [vmem:[%s9] sm:$0xff]
    %v2337 = vld [vmem:[%s9 + $0x8] sm:$0xf]
    %v2338 = vld [vmem:[%s43] sm:$0xff]
    %v2339 = vld [vmem:[%s43 + $0x8] sm:$0xff]
    %v2340 = vld [vmem:[%s43 + $0x10] sm:$0xff]
    %v2341 = vld [vmem:[%s43 + $0x18] sm:$0xff]
    %v2342 = vld [vmem:[%s43 + $0x20] sm:$0xff]
    %v2343 = vld [vmem:[%s43 + $0x28] sm:$0xff]
    %v2344 = vld [vmem:[%s43 + $0x30] sm:$0xff]
    %v2345 = vld [vmem:[%s43 + $0x38] sm:$0xff]
    %v2346 = vld [vmem:[%s43 + $0x40] sm:$0xff]
    %v2347 = vld [vmem:[%s43 + $0x48] sm:$0xff]
    %v2348 = vld [vmem:[%s43 + $0x50] sm:$0xff]
    %v2349 = vld [vmem:[%s43 + $0x58] sm:$0xff]
    %v2350 = vld [vmem:[%s43 + $0x60] sm:$0xff]
    %v2351 = vld [vmem:[%s43 + $0x68] sm:$0xff]
    %v2352 = vld [vmem:[%s43 + $0x70] sm:$0xff]
    %v2353 = vld [vmem:[%s43 + $0x78] sm:$0xff]
    %v2354 = vld [vmem:[%s43 + $0x80] sm:$0xff]
    %v2355 = vld [vmem:[%s43 + $0x88] sm:$0xff]
    %v2356 = vld [vmem:[%s43 + $0x90] sm:$0xff]
    %v2357 = vld [vmem:[%s43 + $0x98] sm:$0xff]
    %v2358 = vld [vmem:[%s43 + $0xa0] sm:$0xff]
    %v2359 = vld [vmem:[%s43 + $0xa8] sm:$0xff]
    %v2360 = vld [vmem:[%s43 + $0xb0] sm:$0xff]
    %v2361 = vld [vmem:[%s43 + $0xb8] sm:$0xff]
    %v2362 = vld [vmem:[%s43 + $0xc0] sm:$0xff]
    %v2363 = vld [vmem:[%s43 + $0xc8] sm:$0xff]
    %v2364 = vld [vmem:[%s43 + $0xd0] sm:$0xff]
    %v2365 = vld [vmem:[%s43 + $0xd8] sm:$0xff]
    %v2366 = vld [vmem:[%s43 + $0xe0] sm:$0xff]
    %v2367 = vld [vmem:[%s43 + $0xe8] sm:$0xff]
    %v2368 = vld [vmem:[%s43 + $0xf0] sm:$0xff]
    %v2369 = vld [vmem:[%s43 + $0xf8] sm:$0xff]
    %v2370 = vld [vmem:[%s43 + $0x100] sm:$0xff]
    %v2371 = vld [vmem:[%s43 + $0x108] sm:$0xff]
    %v2372 = vld [vmem:[%s43 + $0x110] sm:$0xff]
    %v2373 = vld [vmem:[%s43 + $0x118] sm:$0xff]
    %v2374 = vld [vmem:[%s43 + $0x120] sm:$0xff]
    %v2375 = vld [vmem:[%s43 + $0x128] sm:$0xff]
    %v2376 = vld [vmem:[%s43 + $0x130] sm:$0xff]
    %v2377 = vld [vmem:[%s43 + $0x138] sm:$0xff]
    %v2378 = vld [vmem:[%s43 + $0x140] sm:$0xff]
    %v2379 = vld [vmem:[%s43 + $0x148] sm:$0xff]
    %v2380 = vld [vmem:[%s43 + $0x150] sm:$0xff]
    %v2381 = vld [vmem:[%s43 + $0x158] sm:$0xff]
    %v2382 = vld [vmem:[%s43 + $0x160] sm:$0xff]
    %v2383 = vld [vmem:[%s43 + $0x168] sm:$0xff]
    %v2384 = vld [vmem:[%s43 + $0x170] sm:$0xff]
    %v2385 = vld [vmem:[%s43 + $0x178] sm:$0xff]
    %v2386 = vld [vmem:[%s43 + $0x180] sm:$0xff]
    %v2387 = vld [vmem:[%s43 + $0x188] sm:$0xff]
    %v2388 = vld [vmem:[%s43 + $0x190] sm:$0xff]
    %v2389 = vld [vmem:[%s43 + $0x198] sm:$0xff]
    %v2390 = vld [vmem:[%s43 + $0x1a0] sm:$0xff]
    %v2391 = vld [vmem:[%s43 + $0x1a8] sm:$0xff]
    %v2392 = vld [vmem:[%s43 + $0x1b0] sm:$0xff]
    %v2393 = vld [vmem:[%s43 + $0x1b8] sm:$0xff]
    %v2394 = vld [vmem:[%s43 + $0x1c0] sm:$0xff]
    %v2395 = vld [vmem:[%s43 + $0x1c8] sm:$0xff]
    %v2396 = vld [vmem:[%s43 + $0x1d0] sm:$0xff]
    %v2397 = vld [vmem:[%s43 + $0x1d8] sm:$0xff]
    %v2398 = vld [vmem:[%s43 + $0x1e0] sm:$0xff]
    %v2399 = vld [vmem:[%s43 + $0x1e8] sm:$0xff]
    %v2400 = vld [vmem:[%s43 + $0x1f0] sm:$0xff]
    %v2401 = vld [vmem:[%s43 + $0x1f8] sm:$0xff]
    %v2402 = vld [vmem:[%s43 + $0x200] sm:$0xff]
    %v2403 = vld [vmem:[%s43 + $0x208] sm:$0xff]
    %v2404 = vld [vmem:[%s43 + $0x210] sm:$0xff]
    %v2405 = vld [vmem:[%s43 + $0x218] sm:$0xff]
    %v2406 = vld [vmem:[%s43 + $0x220] sm:$0xff]
    %v2407 = vld [vmem:[%s43 + $0x228] sm:$0xff]
    %v2408 = vld [vmem:[%s43 + $0x230] sm:$0xff]
    %v2409 = vld [vmem:[%s43 + $0x238] sm:$0xff]
    %v2410 = vld [vmem:[%s43 + $0x240] sm:$0xff]
    %v2411 = vld [vmem:[%s43 + $0x248] sm:$0xff]
    %v2412 = vld [vmem:[%s43 + $0x250] sm:$0xff]
    %v2413 = vld [vmem:[%s43 + $0x258] sm:$0xff]
    %v2414 = vld [vmem:[%s43 + $0x260] sm:$0xff]
    %v2415 = vld [vmem:[%s43 + $0x268] sm:$0xff]
    %v2416 = vld [vmem:[%s43 + $0x270] sm:$0xff]
    %v2417 = vld [vmem:[%s43 + $0x278] sm:$0xff]
    %v2418 = vld [vmem:[%s43 + $0x280] sm:$0xff]
    %v2419 = vld [vmem:[%s43 + $0x288] sm:$0xff]
    %v2420 = vld [vmem:[%s43 + $0x290] sm:$0xff]
    %v2421 = vld [vmem:[%s43 + $0x298] sm:$0xff]
    %v2422 = vld [vmem:[%s43 + $0x2a0] sm:$0xff]
    %v2423 = vld [vmem:[%s43 + $0x2a8] sm:$0xff]
    %v2424 = vld [vmem:[%s43 + $0x2b0] sm:$0xff]
    %v2425 = vld [vmem:[%s43 + $0x2b8] sm:$0xff]
    %v2426 = vld [vmem:[%s43 + $0x2c0] sm:$0xff]
    %v2427 = vld [vmem:[%s43 + $0x2c8] sm:$0xff]
    %v2428 = vld [vmem:[%s43 + $0x2d0] sm:$0xff]
    %v2429 = vld [vmem:[%s43 + $0x2d8] sm:$0xff]
    %v2430 = vld [vmem:[%s43 + $0x2e0] sm:$0xff]
    %v2431 = vld [vmem:[%s43 + $0x2e8] sm:$0xff]
    %v2432 = vld [vmem:[%s43 + $0x2f0] sm:$0xff]
    %v2433 = vld [vmem:[%s43 + $0x2f8] sm:$0xff]
    %v2434 = vld [vmem:[#allocation26] sm:$0xff]
    %v2435 = vld [vmem:[#allocation26 + $0x8] sm:$0xff]
    %v2436 = vld [vmem:[#allocation26 + $0x10] sm:$0xff]
    %v2437 = vld [vmem:[#allocation26 + $0x18] sm:$0xff]
    %v2438 = vld [vmem:[#allocation26 + $0x20] sm:$0xff]
    %v2439 = vld [vmem:[#allocation26 + $0x28] sm:$0xff]
    %v2440 = vld [vmem:[#allocation26 + $0x30] sm:$0xff]
    %v2441 = vld [vmem:[#allocation26 + $0x38] sm:$0xff]
    %v2442 = vld [vmem:[#allocation26 + $0x40] sm:$0xff]
    %v2443 = vld [vmem:[#allocation26 + $0x48] sm:$0xff]
    %v2444 = vld [vmem:[#allocation26 + $0x50] sm:$0xff]
    %v2445 = vld [vmem:[#allocation26 + $0x58] sm:$0xff]
    %v2446 = vld [vmem:[#allocation26 + $0x60] sm:$0xff]
    %v2447 = vld [vmem:[#allocation26 + $0x68] sm:$0xff]
    %v2448 = vld [vmem:[#allocation26 + $0x70] sm:$0xff]
    %v2449 = vld [vmem:[#allocation26 + $0x78] sm:$0xff]
    %v2450 = vld [vmem:[#allocation26 + $0x80] sm:$0xff]
    %v2451 = vld [vmem:[#allocation26 + $0x88] sm:$0xff]
    %v2452 = vld [vmem:[#allocation26 + $0x90] sm:$0xff]
    %v2453 = vld [vmem:[#allocation26 + $0x98] sm:$0xff]
    %v2454 = vld [vmem:[#allocation26 + $0xa0] sm:$0xff]
    %v2455 = vld [vmem:[#allocation26 + $0xa8] sm:$0xff]
    %v2456 = vld [vmem:[#allocation26 + $0xb0] sm:$0xff]
    %v2457 = vld [vmem:[#allocation26 + $0xb8] sm:$0xff]
    %v2458 = vld [vmem:[#allocation26 + $0xc0] sm:$0xff]
    %v2459 = vld [vmem:[#allocation26 + $0xc8] sm:$0xff]
    %v2460 = vld [vmem:[#allocation26 + $0xd0] sm:$0xff]
    %v2461 = vld [vmem:[#allocation26 + $0xd8] sm:$0xff]
    %v2462 = vld [vmem:[#allocation26 + $0xe0] sm:$0xff]
    %v2463 = vld [vmem:[#allocation26 + $0xe8] sm:$0xff]
    %v2464 = vld [vmem:[#allocation26 + $0xf0] sm:$0xff]
    %v2465 = vld [vmem:[#allocation26 + $0xf8] sm:$0xff]
    %v2466 = vld [vmem:[#allocation26 + $0x100] sm:$0xff]
    %v2467 = vld [vmem:[#allocation26 + $0x108] sm:$0xff]
    %v2468 = vld [vmem:[#allocation26 + $0x110] sm:$0xff]
    %v2469 = vld [vmem:[#allocation26 + $0x118] sm:$0xff]
    %v2470 = vld [vmem:[#allocation26 + $0x120] sm:$0xff]
    %v2471 = vld [vmem:[#allocation26 + $0x128] sm:$0xff]
    %v2472 = vld [vmem:[#allocation26 + $0x130] sm:$0xff]
    %v2473 = vld [vmem:[#allocation26 + $0x138] sm:$0xff]
    %v2474 = vld [vmem:[#allocation26 + $0x140] sm:$0xff]
    %v2475 = vld [vmem:[#allocation26 + $0x148] sm:$0xff]
    %v2476 = vld [vmem:[#allocation26 + $0x150] sm:$0xff]
    %v2477 = vld [vmem:[#allocation26 + $0x158] sm:$0xff]
    %v2478 = vld [vmem:[#allocation26 + $0x160] sm:$0xff]
    %v2479 = vld [vmem:[#allocation26 + $0x168] sm:$0xff]
    %v2480 = vld [vmem:[#allocation26 + $0x170] sm:$0xff]
    %v2481 = vld [vmem:[#allocation26 + $0x178] sm:$0xff]
    %v2482 = vld [vmem:[#allocation26 + $0x180] sm:$0xff]
    %v2483 = vld [vmem:[#allocation26 + $0x188] sm:$0xff]
    %v2484 = vld [vmem:[#allocation26 + $0x190] sm:$0xff]
    %v2485 = vld [vmem:[#allocation26 + $0x198] sm:$0xff]
    %v2486 = vld [vmem:[#allocation26 + $0x1a0] sm:$0xff]
    %v2487 = vld [vmem:[#allocation26 + $0x1a8] sm:$0xff]
    %v2488 = vld [vmem:[#allocation26 + $0x1b0] sm:$0xff]
    %v2489 = vld [vmem:[#allocation26 + $0x1b8] sm:$0xff]
    %v2490 = vld [vmem:[#allocation26 + $0x1c0] sm:$0xff]
    %v2491 = vld [vmem:[#allocation26 + $0x1c8] sm:$0xff]
    %v2492 = vld [vmem:[#allocation26 + $0x1d0] sm:$0xff]
    %v2493 = vld [vmem:[#allocation26 + $0x1d8] sm:$0xff]
    %v2494 = vld [vmem:[#allocation26 + $0x1e0] sm:$0xff]
    %v2495 = vld [vmem:[#allocation26 + $0x1e8] sm:$0xff]
    %v2496 = vld [vmem:[#allocation26 + $0x1f0] sm:$0xff]
    %v2497 = vld [vmem:[#allocation26 + $0x1f8] sm:$0xff]
    %v2498 = vld [vmem:[#allocation26 + $0x200] sm:$0xff]
    %v2499 = vld [vmem:[#allocation26 + $0x208] sm:$0xff]
    %v2500 = vld [vmem:[#allocation26 + $0x210] sm:$0xff]
    %v2501 = vld [vmem:[#allocation26 + $0x218] sm:$0xff]
    %v2502 = vld [vmem:[#allocation26 + $0x220] sm:$0xff]
    %v2503 = vld [vmem:[#allocation26 + $0x228] sm:$0xff]
    %v2504 = vld [vmem:[#allocation26 + $0x230] sm:$0xff]
    %v2505 = vld [vmem:[#allocation26 + $0x238] sm:$0xff]
    %v2506 = vld [vmem:[#allocation26 + $0x240] sm:$0xff]
    %v2507 = vld [vmem:[#allocation26 + $0x248] sm:$0xff]
    %v2508 = vld [vmem:[#allocation26 + $0x250] sm:$0xff]
    %v2509 = vld [vmem:[#allocation26 + $0x258] sm:$0xff]
    %v2510 = vld [vmem:[#allocation26 + $0x260] sm:$0xff]
    %v2511 = vld [vmem:[#allocation26 + $0x268] sm:$0xff]
    %v2512 = vld [vmem:[#allocation26 + $0x270] sm:$0xff]
    %v2513 = vld [vmem:[#allocation26 + $0x278] sm:$0xff]
    %v2514 = vld [vmem:[#allocation26 + $0x280] sm:$0xff]
    %v2515 = vld [vmem:[#allocation26 + $0x288] sm:$0xff]
    %v2516 = vld [vmem:[#allocation26 + $0x290] sm:$0xff]
    %v2517 = vld [vmem:[#allocation26 + $0x298] sm:$0xff]
    %v2518 = vld [vmem:[#allocation26 + $0x2a0] sm:$0xff]
    %v2519 = vld [vmem:[#allocation26 + $0x2a8] sm:$0xff]
    %v2520 = vld [vmem:[#allocation26 + $0x2b0] sm:$0xff]
    %v2521 = vld [vmem:[#allocation26 + $0x2b8] sm:$0xff]
    %v2522 = vld [vmem:[#allocation26 + $0x2c0] sm:$0xff]
    %v2523 = vld [vmem:[#allocation26 + $0x2c8] sm:$0xff]
    %v2524 = vld [vmem:[#allocation26 + $0x2d0] sm:$0xff]
    %v2525 = vld [vmem:[#allocation26 + $0x2d8] sm:$0xff]
    %v2526 = vld [vmem:[#allocation26 + $0x2e0] sm:$0xff]
    %v2527 = vld [vmem:[#allocation26 + $0x2e8] sm:$0xff]
    %v2528 = vld [vmem:[#allocation26 + $0x2f0] sm:$0xff]
    %v2529 = vld [vmem:[#allocation26 + $0x2f8] sm:$0xff]
    %v2530 = vld [vmem:[%s47] sm:$0xff]
    %v2531 = vld [vmem:[%s47 + $0x8] sm:$0xff]
    %v2532 = vld [vmem:[%s47 + $0x10] sm:$0xff]
    %v2533 = vld [vmem:[%s47 + $0x18] sm:$0xff]
    %v2534 = vld [vmem:[%s47 + $0x20] sm:$0xff]
    %v2535 = vld [vmem:[%s47 + $0x28] sm:$0xff]
    %v2536 = vld [vmem:[%s47 + $0x30] sm:$0xff]
    %v2537 = vld [vmem:[%s47 + $0x38] sm:$0xff]
    %v2538 = vld [vmem:[%s47 + $0x40] sm:$0xff]
    %v2539 = vld [vmem:[%s47 + $0x48] sm:$0xff]
    %v2540 = vld [vmem:[%s47 + $0x50] sm:$0xff]
    %v2541 = vld [vmem:[%s47 + $0x58] sm:$0xff]
    %v2542 = vld [vmem:[%s47 + $0x60] sm:$0xff]
    %v2543 = vld [vmem:[%s47 + $0x68] sm:$0xff]
    %v2544 = vld [vmem:[%s47 + $0x70] sm:$0xff]
    %v2545 = vld [vmem:[%s47 + $0x78] sm:$0xff]
    %v2546 = vld [vmem:[#allocation31] sm:$0xff]
    %v2547 = vld [vmem:[#allocation31 + $0x8] sm:$0xff]
    %v2548 = vld [vmem:[#allocation31 + $0x10] sm:$0xff]
    %v2549 = vld [vmem:[#allocation31 + $0x18] sm:$0xff]
    %v2550 = vld [vmem:[#allocation31 + $0x20] sm:$0xff]
    %v2551 = vld [vmem:[#allocation31 + $0x28] sm:$0xff]
    %v2552 = vld [vmem:[#allocation31 + $0x30] sm:$0xff]
    %v2553 = vld [vmem:[#allocation31 + $0x38] sm:$0xff]
    %v2554 = vld [vmem:[#allocation31 + $0x40] sm:$0xff]
    %v2555 = vld [vmem:[#allocation31 + $0x48] sm:$0xff]
    %v2556 = vld [vmem:[#allocation31 + $0x50] sm:$0xff]
    %v2557 = vld [vmem:[#allocation31 + $0x58] sm:$0xff]
    %v2558 = vld [vmem:[#allocation31 + $0x60] sm:$0xff]
    %v2559 = vld [vmem:[#allocation31 + $0x68] sm:$0xff]
    %v2560 = vld [vmem:[#allocation31 + $0x70] sm:$0xff]
    %v2561 = vld [vmem:[#allocation31 + $0x78] sm:$0xff]
    %v2562 = vld [vmem:[#allocation32] sm:$0x3]
    %v2563 = vld [vmem:[#allocation34] sm:$0xff]
    %v2564 = vld [vmem:[#allocation34 + $0x8] sm:$0xff]
    %v2565 = vld [vmem:[#allocation34 + $0x10] sm:$0xff]
    %v2566 = vld [vmem:[#allocation34 + $0x18] sm:$0xff]
    %v2567 = vld [vmem:[#allocation37] sm:$0xff]
    %v2568 = vld [vmem:[#allocation37 + $0x8] sm:$0xff]
    %v2569 = vld [vmem:[#allocation37 + $0x10] sm:$0xff]
    %v2570 = vld [vmem:[#allocation37 + $0x18] sm:$0xff]
    %v2571 = vld [vmem:[#allocation37 + $0x20] sm:$0xff]
    %v2572 = vld [vmem:[#allocation37 + $0x28] sm:$0xff]
    %v2573 = vld [vmem:[#allocation37 + $0x30] sm:$0xff]
    %v2574 = vld [vmem:[#allocation37 + $0x38] sm:$0xff]
    %v2575 = vld [vmem:[#allocation37 + $0x40] sm:$0xff]
    %v2576 = vld [vmem:[#allocation37 + $0x48] sm:$0xff]
    %v2577 = vld [vmem:[#allocation37 + $0x50] sm:$0xff]
    %v2578 = vld [vmem:[#allocation37 + $0x58] sm:$0xff]
    %v2579 = vld [vmem:[#allocation37 + $0x60] sm:$0xff]
    %v2580 = vld [vmem:[#allocation37 + $0x68] sm:$0xff]
    %v2581 = vld [vmem:[#allocation37 + $0x70] sm:$0xff]
    %v2582 = vld [vmem:[#allocation37 + $0x78] sm:$0xff]
    %v2583 = vld [vmem:[#allocation38] sm:$0x3]
    %v2584 = vld [vmem:[%s67] sm:$0xff]
    %v2585 = vld [vmem:[%s67 + $0x8] sm:$0xff]
    %v2586 = vld [vmem:[%s67 + $0x10] sm:$0xff]
    %v2587 = vld [vmem:[%s67 + $0x18] sm:$0xff]
    %v2588 = vld [vmem:[%s67 + $0x20] sm:$0xff]
    %v2589 = vld [vmem:[%s67 + $0x28] sm:$0xff]
    %v2590 = vld [vmem:[%s67 + $0x30] sm:$0xff]
    %v2591 = vld [vmem:[%s67 + $0x38] sm:$0xff]
    %v2592 = vld [vmem:[%s69] sm:$0x1]
    %v2593 = vld [vmem:[%s71] sm:$0xff]
    %v2594 = vld [vmem:[%s71 + $0x8] sm:$0xff]
    %v2595 = vld [vmem:[%s71 + $0x10] sm:$0xff]
    %v2596 = vld [vmem:[%s71 + $0x18] sm:$0xff]
    %v2597 = vld [vmem:[%s71 + $0x20] sm:$0xff]
    %v2598 = vld [vmem:[%s71 + $0x28] sm:$0xff]
    %v2599 = vld [vmem:[%s71 + $0x30] sm:$0xff]
    %v2600 = vld [vmem:[%s71 + $0x38] sm:$0xff]
    %v2601 = vld [vmem:[%s71 + $0x40] sm:$0xff]
    %v2602 = vld [vmem:[%s71 + $0x48] sm:$0xff]
    %v2603 = vld [vmem:[%s71 + $0x50] sm:$0xff]
    %v2604 = vld [vmem:[%s71 + $0x58] sm:$0xff]
    %v2605 = vld [vmem:[%s71 + $0x60] sm:$0xff]
    %v2606 = vld [vmem:[%s71 + $0x68] sm:$0xff]
    %v2607 = vld [vmem:[%s71 + $0x70] sm:$0xff]
    %v2608 = vld [vmem:[%s71 + $0x78] sm:$0xff]
    %v2609 = vld [vmem:[%s71 + $0x80] sm:$0xff]
    %v2610 = vld [vmem:[%s71 + $0x88] sm:$0xff]
    %v2611 = vld [vmem:[%s71 + $0x90] sm:$0xff]
    %v2612 = vld [vmem:[%s71 + $0x98] sm:$0xff]
    %v2613 = vld [vmem:[%s71 + $0xa0] sm:$0xff]
    %v2614 = vld [vmem:[%s71 + $0xa8] sm:$0xff]
    %v2615 = vld [vmem:[%s71 + $0xb0] sm:$0xff]
    %v2616 = vld [vmem:[%s71 + $0xb8] sm:$0xff]
    %v2617 = vld [vmem:[%s73] sm:$0x3f]
    %v2620 = vcombine.high %v2336, %v2336
    %v2622 = vunpack.c.l.s4 1983009808
    %v2623 = vunpack.c.0.s8 %v2622
    %v2624 = vlaneseq
    %v2625 = vshrl.u32 %v2624, 7
    %v2626 = vsub.s32 %v2623, %v2625
    %v2627 = vrot.slane %v2336, %v2626
    %v2629 = vunpack.c.l.s4 1983009808
    %v2630 = vunpack.c.0.s8 %v2629
    %v2631 = vlaneseq
    %v2632 = vshrl.u32 %v2631, 7
    %v2633 = vsub.s32 %v2630, %v2632
    %v2634 = vrot.slane %v2620, %v2633
    %v2635 = vcombine.high %v2627, %v2627
    %v2636 = vcombine.high %v2634, %v2634
    %v2638 = vunpack.c.l.s4 1983009808
    %v2639 = vunpack.c.0.s8 %v2638
    %v2640 = vlaneseq
    %v2641 = vshrl.u32 %v2640, 7
    %v2642 = vsub.s32 %v2639, %v2641
    %v2643 = vrot.slane %v2337, %v2642
    %v2644 = vcombine.high %v2643, %v2643
    %v2651 = vpack.c.bf16 %v2627, %v2627
    %v2652 = vpack.c.bf16 %v2635, %v2635
    %v2653 = vpack.c.bf16 %v2634, %v2634
    %v2654 = vpack.c.bf16 %v2636, %v2636
    %v2655 = vpack.c.bf16 %v2643, %v2643
    %v2656 = vpack.c.bf16 %v2644, %v2644
    %v2753 = vunpack.c.l.b16 %v2338
    %v2754 = vunpack.c.h.b16 %v2338
    %v2755 = vunpack.c.l.b16 %v2339
    %v2756 = vunpack.c.h.b16 %v2339
    %v2757 = vunpack.c.l.b16 %v2340
    %v2758 = vunpack.c.h.b16 %v2340
    %v2759 = vunpack.c.l.b16 %v2341
    %v2760 = vunpack.c.h.b16 %v2341
    %v2761 = vunpack.c.l.b16 %v2342
    %v2762 = vunpack.c.h.b16 %v2342
    %v2763 = vunpack.c.l.b16 %v2343
    %v2764 = vunpack.c.h.b16 %v2343
    %v2765 = vunpack.c.l.b16 %v2344
    %v2766 = vunpack.c.h.b16 %v2344
    %v2767 = vunpack.c.l.b16 %v2345
    %v2768 = vunpack.c.h.b16 %v2345
    %v2769 = vunpack.c.l.b16 %v2346
    %v2770 = vunpack.c.h.b16 %v2346
    %v2771 = vunpack.c.l.b16 %v2347
    %v2772 = vunpack.c.h.b16 %v2347
    %v2773 = vunpack.c.l.b16 %v2348
    %v2774 = vunpack.c.h.b16 %v2348
    %v2775 = vunpack.c.l.b16 %v2349
    %v2776 = vunpack.c.h.b16 %v2349
    %v2777 = vunpack.c.l.b16 %v2350
    %v2778 = vunpack.c.h.b16 %v2350
    %v2779 = vunpack.c.l.b16 %v2351
    %v2780 = vunpack.c.h.b16 %v2351
    %v2781 = vunpack.c.l.b16 %v2352
    %v2782 = vunpack.c.h.b16 %v2352
    %v2783 = vunpack.c.l.b16 %v2353
    %v2784 = vunpack.c.h.b16 %v2353
    %v2785 = vunpack.c.l.b16 %v2354
    %v2786 = vunpack.c.h.b16 %v2354
    %v2787 = vunpack.c.l.b16 %v2355
    %v2788 = vunpack.c.h.b16 %v2355
    %v2789 = vunpack.c.l.b16 %v2356
    %v2790 = vunpack.c.h.b16 %v2356
    %v2791 = vunpack.c.l.b16 %v2357
    %v2792 = vunpack.c.h.b16 %v2357
    %v2793 = vunpack.c.l.b16 %v2358
    %v2794 = vunpack.c.h.b16 %v2358
    %v2795 = vunpack.c.l.b16 %v2359
    %v2796 = vunpack.c.h.b16 %v2359
    %v2797 = vunpack.c.l.b16 %v2360
    %v2798 = vunpack.c.h.b16 %v2360
    %v2799 = vunpack.c.l.b16 %v2361
    %v2800 = vunpack.c.h.b16 %v2361
    %v2801 = vunpack.c.l.b16 %v2362
    %v2802 = vunpack.c.h.b16 %v2362
    %v2803 = vunpack.c.l.b16 %v2363
    %v2804 = vunpack.c.h.b16 %v2363
    %v2805 = vunpack.c.l.b16 %v2364
    %v2806 = vunpack.c.h.b16 %v2364
    %v2807 = vunpack.c.l.b16 %v2365
    %v2808 = vunpack.c.h.b16 %v2365
    %v2809 = vunpack.c.l.b16 %v2366
    %v2810 = vunpack.c.h.b16 %v2366
    %v2811 = vunpack.c.l.b16 %v2367
    %v2812 = vunpack.c.h.b16 %v2367
    %v2813 = vunpack.c.l.b16 %v2368
    %v2814 = vunpack.c.h.b16 %v2368
    %v2815 = vunpack.c.l.b16 %v2369
    %v2816 = vunpack.c.h.b16 %v2369
    %v2817 = vunpack.c.l.b16 %v2370
    %v2818 = vunpack.c.h.b16 %v2370
    %v2819 = vunpack.c.l.b16 %v2371
    %v2820 = vunpack.c.h.b16 %v2371
    %v2821 = vunpack.c.l.b16 %v2372
    %v2822 = vunpack.c.h.b16 %v2372
    %v2823 = vunpack.c.l.b16 %v2373
    %v2824 = vunpack.c.h.b16 %v2373
    %v2825 = vunpack.c.l.b16 %v2374
    %v2826 = vunpack.c.h.b16 %v2374
    %v2827 = vunpack.c.l.b16 %v2375
    %v2828 = vunpack.c.h.b16 %v2375
    %v2829 = vunpack.c.l.b16 %v2376
    %v2830 = vunpack.c.h.b16 %v2376
    %v2831 = vunpack.c.l.b16 %v2377
    %v2832 = vunpack.c.h.b16 %v2377
    %v2833 = vunpack.c.l.b16 %v2378
    %v2834 = vunpack.c.h.b16 %v2378
    %v2835 = vunpack.c.l.b16 %v2379
    %v2836 = vunpack.c.h.b16 %v2379
    %v2837 = vunpack.c.l.b16 %v2380
    %v2838 = vunpack.c.h.b16 %v2380
    %v2839 = vunpack.c.l.b16 %v2381
    %v2840 = vunpack.c.h.b16 %v2381
    %v2841 = vunpack.c.l.b16 %v2382
    %v2842 = vunpack.c.h.b16 %v2382
    %v2843 = vunpack.c.l.b16 %v2383
    %v2844 = vunpack.c.h.b16 %v2383
    %v2845 = vunpack.c.l.b16 %v2384
    %v2846 = vunpack.c.h.b16 %v2384
    %v2847 = vunpack.c.l.b16 %v2385
    %v2848 = vunpack.c.h.b16 %v2385
    %v2849 = vunpack.c.l.b16 %v2386
    %v2850 = vunpack.c.h.b16 %v2386
    %v2851 = vunpack.c.l.b16 %v2387
    %v2852 = vunpack.c.h.b16 %v2387
    %v2853 = vunpack.c.l.b16 %v2388
    %v2854 = vunpack.c.h.b16 %v2388
    %v2855 = vunpack.c.l.b16 %v2389
    %v2856 = vunpack.c.h.b16 %v2389
    %v2857 = vunpack.c.l.b16 %v2390
    %v2858 = vunpack.c.h.b16 %v2390
    %v2859 = vunpack.c.l.b16 %v2391
    %v2860 = vunpack.c.h.b16 %v2391
    %v2861 = vunpack.c.l.b16 %v2392
    %v2862 = vunpack.c.h.b16 %v2392
    %v2863 = vunpack.c.l.b16 %v2393
    %v2864 = vunpack.c.h.b16 %v2393
    %v2865 = vunpack.c.l.b16 %v2394
    %v2866 = vunpack.c.h.b16 %v2394
    %v2867 = vunpack.c.l.b16 %v2395
    %v2868 = vunpack.c.h.b16 %v2395
    %v2869 = vunpack.c.l.b16 %v2396
    %v2870 = vunpack.c.h.b16 %v2396
    %v2871 = vunpack.c.l.b16 %v2397
    %v2872 = vunpack.c.h.b16 %v2397
    %v2873 = vunpack.c.l.b16 %v2398
    %v2874 = vunpack.c.h.b16 %v2398
    %v2875 = vunpack.c.l.b16 %v2399
    %v2876 = vunpack.c.h.b16 %v2399
    %v2877 = vunpack.c.l.b16 %v2400
    %v2878 = vunpack.c.h.b16 %v2400
    %v2879 = vunpack.c.l.b16 %v2401
    %v2880 = vunpack.c.h.b16 %v2401
    %v2881 = vunpack.c.l.b16 %v2402
    %v2882 = vunpack.c.h.b16 %v2402
    %v2883 = vunpack.c.l.b16 %v2403
    %v2884 = vunpack.c.h.b16 %v2403
    %v2885 = vunpack.c.l.b16 %v2404
    %v2886 = vunpack.c.h.b16 %v2404
    %v2887 = vunpack.c.l.b16 %v2405
    %v2888 = vunpack.c.h.b16 %v2405
    %v2889 = vunpack.c.l.b16 %v2406
    %v2890 = vunpack.c.h.b16 %v2406
    %v2891 = vunpack.c.l.b16 %v2407
    %v2892 = vunpack.c.h.b16 %v2407
    %v2893 = vunpack.c.l.b16 %v2408
    %v2894 = vunpack.c.h.b16 %v2408
    %v2895 = vunpack.c.l.b16 %v2409
    %v2896 = vunpack.c.h.b16 %v2409
    %v2897 = vunpack.c.l.b16 %v2410
    %v2898 = vunpack.c.h.b16 %v2410
    %v2899 = vunpack.c.l.b16 %v2411
    %v2900 = vunpack.c.h.b16 %v2411
    %v2901 = vunpack.c.l.b16 %v2412
    %v2902 = vunpack.c.h.b16 %v2412
    %v2903 = vunpack.c.l.b16 %v2413
    %v2904 = vunpack.c.h.b16 %v2413
    %v2905 = vunpack.c.l.b16 %v2414
    %v2906 = vunpack.c.h.b16 %v2414
    %v2907 = vunpack.c.l.b16 %v2415
    %v2908 = vunpack.c.h.b16 %v2415
    %v2909 = vunpack.c.l.b16 %v2416
    %v2910 = vunpack.c.h.b16 %v2416
    %v2911 = vunpack.c.l.b16 %v2417
    %v2912 = vunpack.c.h.b16 %v2417
    %v2913 = vunpack.c.l.b16 %v2418
    %v2914 = vunpack.c.h.b16 %v2418
    %v2915 = vunpack.c.l.b16 %v2419
    %v2916 = vunpack.c.h.b16 %v2419
    %v2917 = vunpack.c.l.b16 %v2420
    %v2918 = vunpack.c.h.b16 %v2420
    %v2919 = vunpack.c.l.b16 %v2421
    %v2920 = vunpack.c.h.b16 %v2421
    %v2921 = vunpack.c.l.b16 %v2422
    %v2922 = vunpack.c.h.b16 %v2422
    %v2923 = vunpack.c.l.b16 %v2423
    %v2924 = vunpack.c.h.b16 %v2423
    %v2925 = vunpack.c.l.b16 %v2424
    %v2926 = vunpack.c.h.b16 %v2424
    %v2927 = vunpack.c.l.b16 %v2425
    %v2928 = vunpack.c.h.b16 %v2425
    %v2929 = vunpack.c.l.b16 %v2426
    %v2930 = vunpack.c.h.b16 %v2426
    %v2931 = vunpack.c.l.b16 %v2427
    %v2932 = vunpack.c.h.b16 %v2427
    %v2933 = vunpack.c.l.b16 %v2428
    %v2934 = vunpack.c.h.b16 %v2428
    %v2935 = vunpack.c.l.b16 %v2429
    %v2936 = vunpack.c.h.b16 %v2429
    %v2937 = vunpack.c.l.b16 %v2430
    %v2938 = vunpack.c.h.b16 %v2430
    %v2939 = vunpack.c.l.b16 %v2431
    %v2940 = vunpack.c.h.b16 %v2431
    %v2941 = vunpack.c.l.b16 %v2432
    %v2942 = vunpack.c.h.b16 %v2432
    %v2943 = vunpack.c.l.b16 %v2433
    %v2944 = vunpack.c.h.b16 %v2433
    %v2945 = vpack.c.b16 %v2755, %v2753
    %v2946 = vpack.c.b16 %v2756, %v2754
    %v2947 = vpack.c.b16 %v2759, %v2757
    %v2948 = vpack.c.b16 %v2760, %v2758
    %v2949 = vpack.c.b16 %v2763, %v2761
    %v2950 = vpack.c.b16 %v2764, %v2762
    %v2951 = vpack.c.b16 %v2767, %v2765
    %v2952 = vpack.c.b16 %v2768, %v2766
    %v2953 = vpack.c.b16 %v2771, %v2769
    %v2954 = vpack.c.b16 %v2772, %v2770
    %v2955 = vpack.c.b16 %v2775, %v2773
    %v2956 = vpack.c.b16 %v2776, %v2774
    %v2957 = vpack.c.b16 %v2779, %v2777
    %v2958 = vpack.c.b16 %v2780, %v2778
    %v2959 = vpack.c.b16 %v2783, %v2781
    %v2960 = vpack.c.b16 %v2784, %v2782
    %v2961 = vpack.c.b16 %v2787, %v2785
    %v2962 = vpack.c.b16 %v2788, %v2786
    %v2963 = vpack.c.b16 %v2791, %v2789
    %v2964 = vpack.c.b16 %v2792, %v2790
    %v2965 = vpack.c.b16 %v2795, %v2793
    %v2966 = vpack.c.b16 %v2796, %v2794
    %v2967 = vpack.c.b16 %v2799, %v2797
    %v2968 = vpack.c.b16 %v2800, %v2798
    %v2969 = vpack.c.b16 %v2803, %v2801
    %v2970 = vpack.c.b16 %v2804, %v2802
    %v2971 = vpack.c.b16 %v2807, %v2805
    %v2972 = vpack.c.b16 %v2808, %v2806
    %v2973 = vpack.c.b16 %v2811, %v2809
    %v2974 = vpack.c.b16 %v2812, %v2810
    %v2975 = vpack.c.b16 %v2815, %v2813
    %v2976 = vpack.c.b16 %v2816, %v2814
    %v2977 = vpack.c.b16 %v2819, %v2817
    %v2978 = vpack.c.b16 %v2820, %v2818
    %v2979 = vpack.c.b16 %v2823, %v2821
    %v2980 = vpack.c.b16 %v2824, %v2822
    %v2981 = vpack.c.b16 %v2827, %v2825
    %v2982 = vpack.c.b16 %v2828, %v2826
    %v2983 = vpack.c.b16 %v2831, %v2829
    %v2984 = vpack.c.b16 %v2832, %v2830
    %v2985 = vpack.c.b16 %v2835, %v2833
    %v2986 = vpack.c.b16 %v2836, %v2834
    %v2987 = vpack.c.b16 %v2839, %v2837
    %v2988 = vpack.c.b16 %v2840, %v2838
    %v2989 = vpack.c.b16 %v2843, %v2841
    %v2990 = vpack.c.b16 %v2844, %v2842
    %v2991 = vpack.c.b16 %v2847, %v2845
    %v2992 = vpack.c.b16 %v2848, %v2846
    %v2993 = vpack.c.b16 %v2851, %v2849
    %v2994 = vpack.c.b16 %v2852, %v2850
    %v2995 = vpack.c.b16 %v2855, %v2853
    %v2996 = vpack.c.b16 %v2856, %v2854
    %v2997 = vpack.c.b16 %v2859, %v2857
    %v2998 = vpack.c.b16 %v2860, %v2858
    %v2999 = vpack.c.b16 %v2863, %v2861
    %v3000 = vpack.c.b16 %v2864, %v2862
    %v3001 = vpack.c.b16 %v2867, %v2865
    %v3002 = vpack.c.b16 %v2868, %v2866
    %v3003 = vpack.c.b16 %v2871, %v2869
    %v3004 = vpack.c.b16 %v2872, %v2870
    %v3005 = vpack.c.b16 %v2875, %v2873
    %v3006 = vpack.c.b16 %v2876, %v2874
    %v3007 = vpack.c.b16 %v2879, %v2877
    %v3008 = vpack.c.b16 %v2880, %v2878
    %v3009 = vpack.c.b16 %v2883, %v2881
    %v3010 = vpack.c.b16 %v2884, %v2882
    %v3011 = vpack.c.b16 %v2887, %v2885
    %v3012 = vpack.c.b16 %v2888, %v2886
    %v3013 = vpack.c.b16 %v2891, %v2889
    %v3014 = vpack.c.b16 %v2892, %v2890
    %v3015 = vpack.c.b16 %v2895, %v2893
    %v3016 = vpack.c.b16 %v2896, %v2894
    %v3017 = vpack.c.b16 %v2899, %v2897
    %v3018 = vpack.c.b16 %v2900, %v2898
    %v3019 = vpack.c.b16 %v2903, %v2901
    %v3020 = vpack.c.b16 %v2904, %v2902
    %v3021 = vpack.c.b16 %v2907, %v2905
    %v3022 = vpack.c.b16 %v2908, %v2906
    %v3023 = vpack.c.b16 %v2911, %v2909
    %v3024 = vpack.c.b16 %v2912, %v2910
    %v3025 = vpack.c.b16 %v2915, %v2913
    %v3026 = vpack.c.b16 %v2916, %v2914
    %v3027 = vpack.c.b16 %v2919, %v2917
    %v3028 = vpack.c.b16 %v2920, %v2918
    %v3029 = vpack.c.b16 %v2923, %v2921
    %v3030 = vpack.c.b16 %v2924, %v2922
    %v3031 = vpack.c.b16 %v2927, %v2925
    %v3032 = vpack.c.b16 %v2928, %v2926
    %v3033 = vpack.c.b16 %v2931, %v2929
    %v3034 = vpack.c.b16 %v2932, %v2930
    %v3035 = vpack.c.b16 %v2935, %v2933
    %v3036 = vpack.c.b16 %v2936, %v2934
    %v3037 = vpack.c.b16 %v2939, %v2937
    %v3038 = vpack.c.b16 %v2940, %v2938
    %v3039 = vpack.c.b16 %v2943, %v2941
    %v3040 = vpack.c.b16 %v2944, %v2942
    %3137 = vmatprep.subr.bf16.mxu0 %v2960
    %3138 = vmatpush1.bf16.msra.mxu0 %v2959
    %3139 = vmatprep.subr.bf16.mxu0 %v2958
    %3140 = vmatpush1.bf16.msra.mxu0 %v2957
    %3141 = vmatprep.subr.bf16.mxu0 %v2956
    %3142 = vmatpush1.bf16.msra.mxu0 %v2955
    %3143 = vmatprep.subr.bf16.mxu0 %v2954
    %3144 = vmatpush1.bf16.msra.mxu0 %v2953
    %3145 = vmatprep.subr.bf16.mxu0 %v2952
    %3146 = vmatpush1.bf16.msra.mxu0 %v2951
    %3147 = vmatprep.subr.bf16.mxu0 %v2950
    %3148 = vmatpush1.bf16.msra.mxu0 %v2949
    %3149 = vmatprep.subr.bf16.mxu0 %v2948
    %3150 = vmatpush1.bf16.msra.mxu0 %v2947
    %3151 = vmatprep.subr.bf16.mxu0 %v2946
    %3152 = vmatpush1.bf16.msra.mxu0 %v2945
    %3153 = vmatprep.subr.bf16.mxu0 %v2976
    %3154 = vmatpush2.bf16.msra.mxu0 %v2975
    %3155 = vmatprep.subr.bf16.mxu0 %v2974
    %3156 = vmatpush2.bf16.msra.mxu0 %v2973
    %3157 = vmatprep.subr.bf16.mxu0 %v2972
    %3158 = vmatpush2.bf16.msra.mxu0 %v2971
    %3159 = vmatprep.subr.bf16.mxu0 %v2970
    %3160 = vmatpush2.bf16.msra.mxu0 %v2969
    %3161 = vmatprep.subr.bf16.mxu0 %v2968
    %3162 = vmatpush2.bf16.msra.mxu0 %v2967
    %3163 = vmatprep.subr.bf16.mxu0 %v2966
    %3164 = vmatpush2.bf16.msra.mxu0 %v2965
    %3165 = vmatprep.subr.bf16.mxu0 %v2964
    %3166 = vmatpush2.bf16.msra.mxu0 %v2963
    %3167 = vmatprep.subr.bf16.mxu0 %v2962
    %3168 = vmatpush2.bf16.msra.mxu0 %v2961
    %3169 = vmatprep.mubr.bf16.mxu0 %v2652
    %3170 = vmatmul.mubr.bf16.gmra.mxu0 %v2651
    %v3171 = vpop.f32.mrf.mxu0
    %v3172 = vadd.f32 0.0, %v3171
    %v3173 = vpop.f32.mrf.mxu0
    %v3174 = vadd.f32 0.0, %v3173
    %v3175 = vpop.f32.mrf.mxu0
    %v3176 = vpop.f32.mrf.mxu0
    %3177 = vdwg.mxu0
    %3178 = vmatprep.subr.bf16.mxu0 %v2992
    %3179 = vmatpush1.bf16.msra.mxu0 %v2991
    %3180 = vmatprep.subr.bf16.mxu0 %v2990
    %3181 = vmatpush1.bf16.msra.mxu0 %v2989
    %3182 = vmatprep.subr.bf16.mxu0 %v2988
    %3183 = vmatpush1.bf16.msra.mxu0 %v2987
    %3184 = vmatprep.subr.bf16.mxu0 %v2986
    %3185 = vmatpush1.bf16.msra.mxu0 %v2985
    %3186 = vmatprep.subr.bf16.mxu0 %v2984
    %3187 = vmatpush1.bf16.msra.mxu0 %v2983
    %3188 = vmatprep.subr.bf16.mxu0 %v2982
    %3189 = vmatpush1.bf16.msra.mxu0 %v2981
    %3190 = vmatprep.subr.bf16.mxu0 %v2980
    %3191 = vmatpush1.bf16.msra.mxu0 %v2979
    %3192 = vmatprep.subr.bf16.mxu0 %v2978
    %3193 = vmatpush1.bf16.msra.mxu0 %v2977
    %3194 = vmatprep.subr.bf16.mxu0 %v3008
    %3195 = vmatpush2.bf16.msra.mxu0 %v3007
    %3196 = vmatprep.subr.bf16.mxu0 %v3006
    %3197 = vmatpush2.bf16.msra.mxu0 %v3005
    %3198 = vmatprep.subr.bf16.mxu0 %v3004
    %3199 = vmatpush2.bf16.msra.mxu0 %v3003
    %3200 = vmatprep.subr.bf16.mxu0 %v3002
    %3201 = vmatpush2.bf16.msra.mxu0 %v3001
    %3202 = vmatprep.subr.bf16.mxu0 %v3000
    %3203 = vmatpush2.bf16.msra.mxu0 %v2999
    %3204 = vmatprep.subr.bf16.mxu0 %v2998
    %3205 = vmatpush2.bf16.msra.mxu0 %v2997
    %3206 = vmatprep.subr.bf16.mxu0 %v2996
    %3207 = vmatpush2.bf16.msra.mxu0 %v2995
    %3208 = vmatprep.subr.bf16.mxu0 %v2994
    %3209 = vmatpush2.bf16.msra.mxu0 %v2993
    %3210 = vmatprep.mubr.bf16.mxu0 %v2654
    %3211 = vmatmul.mubr.bf16.gmra.mxu0 %v2653
    %v3212 = vpop.f32.mrf.mxu0
    %v3213 = vadd.f32 %v3172, %v3212
    %v3214 = vpop.f32.mrf.mxu0
    %v3215 = vadd.f32 %v3174, %v3214
    %v3216 = vpop.f32.mrf.mxu0
    %v3217 = vpop.f32.mrf.mxu0
    %3218 = vdwg.mxu0
    %3219 = vmatprep.subr.bf16.mxu0 %v3024
    %3220 = vmatpush1.bf16.msra.mxu0 %v3023
    %3221 = vmatprep.subr.bf16.mxu0 %v3022
    %3222 = vmatpush1.bf16.msra.mxu0 %v3021
    %3223 = vmatprep.subr.bf16.mxu0 %v3020
    %3224 = vmatpush1.bf16.msra.mxu0 %v3019
    %3225 = vmatprep.subr.bf16.mxu0 %v3018
    %3226 = vmatpush1.bf16.msra.mxu0 %v3017
    %3227 = vmatprep.subr.bf16.mxu0 %v3016
    %3228 = vmatpush1.bf16.msra.mxu0 %v3015
    %3229 = vmatprep.subr.bf16.mxu0 %v3014
    %3230 = vmatpush1.bf16.msra.mxu0 %v3013
    %3231 = vmatprep.subr.bf16.mxu0 %v3012
    %3232 = vmatpush1.bf16.msra.mxu0 %v3011
    %3233 = vmatprep.subr.bf16.mxu0 %v3010
    %3234 = vmatpush1.bf16.msra.mxu0 %v3009
    %3235 = vmatprep.subr.bf16.mxu0 %v3040
    %3236 = vmatpush2.bf16.msra.mxu0 %v3039
    %3237 = vmatprep.subr.bf16.mxu0 %v3038
    %3238 = vmatpush2.bf16.msra.mxu0 %v3037
    %3239 = vmatprep.subr.bf16.mxu0 %v3036
    %3240 = vmatpush2.bf16.msra.mxu0 %v3035
    %3241 = vmatprep.subr.bf16.mxu0 %v3034
    %3242 = vmatpush2.bf16.msra.mxu0 %v3033
    %3243 = vmatprep.subr.bf16.mxu0 %v3032
    %3244 = vmatpush2.bf16.msra.mxu0 %v3031
    %3245 = vmatprep.subr.bf16.mxu0 %v3030
    %3246 = vmatpush2.bf16.msra.mxu0 %v3029
    %3247 = vmatprep.subr.bf16.mxu0 %v3028
    %3248 = vmatpush2.bf16.msra.mxu0 %v3027
    %3249 = vmatprep.subr.bf16.mxu0 %v3026
    %3250 = vmatpush2.bf16.msra.mxu0 %v3025
    %3251 = vmatprep.mubr.bf16.mxu0 %v2656
    %3252 = vmatmul.mubr.bf16.gmra.mxu0 %v2655
    %v3253 = vpop.f32.mrf.mxu0
    %v3254 = vadd.f32 %v3213, %v3253
    %v3255 = vpop.f32.mrf.mxu0
    %v3256 = vadd.f32 %v3215, %v3255
    %v3257 = vpop.f32.mrf.mxu0
    %v3258 = vpop.f32.mrf.mxu0
    %3259 = vdwg.mxu0
    %v3260 = vld [vmem:[#allocation28] sm:$0xff]
    %v3261 = vld [vmem:[#allocation28 + $0x8] sm:$0xff]
    %v3262 = vld [vmem:[#allocation28 + $0x10] sm:$0xff]
    %v3263 = vld [vmem:[#allocation28 + $0x18] sm:$0xff]
    %v3264 = vld [vmem:[#allocation28 + $0x20] sm:$0xff]
    %v3265 = vld [vmem:[#allocation28 + $0x28] sm:$0xff]
    %v3266 = vld [vmem:[#allocation28 + $0x30] sm:$0xff]
    %v3267 = vld [vmem:[#allocation28 + $0x38] sm:$0xff]
    %v3268 = vld [vmem:[#allocation29] sm:$0xff]
    %v3269 = vld [vmem:[#allocation29 + $0x8] sm:$0xff]
    %v3270 = vld [vmem:[#allocation29 + $0x10] sm:$0xff]
    %v3271 = vld [vmem:[#allocation29 + $0x18] sm:$0xff]
    %v3272 = vld [vmem:[#allocation29 + $0x20] sm:$0xff]
    %v3273 = vld [vmem:[#allocation29 + $0x28] sm:$0xff]
    %v3274 = vld [vmem:[#allocation29 + $0x30] sm:$0xff]
    %v3275 = vld [vmem:[#allocation29 + $0x38] sm:$0xff]
    %v3277 = vsel %vm477, %v2248, 0
    %3279 = vmatprep.subr.mxu0 0.0
    %3280 = vmatpush1.msra.mxu0 0.0
    %3281 = vmatprep.subr.mxu0 0.0
    %3282 = vmatpush1.msra.mxu0 0.0
    %3283 = vmatprep.subr.mxu0 0.0
    %3284 = vmatpush1.msra.mxu0 0.0
    %3285 = vmatprep.subr.mxu0 0.0
    %3286 = vmatpush1.msra.mxu0 0.0
    %3287 = vmatprep.subr.mxu0 0.0
    %3288 = vmatpush1.msra.mxu0 0.0
    %3289 = vmatprep.subr.mxu0 0.0
    %3290 = vmatpush1.msra.mxu0 0.0
    %3291 = vmatprep.subr.mxu0 0.0
    %3292 = vmatpush1.msra.mxu0 0.0
    %3293 = vmatprep.subr.mxu0 0.0
    %3294 = vmatpush1.msra.mxu0 0.0
    %3295 = vmatprep.subr.mxu0 0.0
    %3296 = vmatpush1.msra.mxu0 0.0
    %3297 = vmatprep.subr.mxu0 0.0
    %3298 = vmatpush1.msra.mxu0 0.0
    %3299 = vmatprep.subr.mxu0 0.0
    %3300 = vmatpush1.msra.mxu0 0.0
    %3301 = vmatprep.subr.mxu0 0.0
    %3302 = vmatpush1.msra.mxu0 0.0
    %3303 = vmatprep.subr.mxu0 %v3275
    %3304 = vmatpush1.msra.mxu0 %v3274
    %3305 = vmatprep.subr.mxu0 %v3273
    %3306 = vmatpush1.msra.mxu0 %v3272
    %3307 = vmatprep.subr.mxu0 %v3271
    %3308 = vmatpush1.msra.mxu0 %v3270
    %3309 = vmatprep.subr.mxu0 %v3269
    %3310 = vmatpush1.msra.mxu0 %v3268
    %3311 = vmatprep.subr.mxu0 0.0
    %3312 = vmatpush2.msra.mxu0 0.0
    %3313 = vmatprep.subr.mxu0 0.0
    %3314 = vmatpush2.msra.mxu0 0.0
    %3315 = vmatprep.subr.mxu0 0.0
    %3316 = vmatpush2.msra.mxu0 0.0
    %3317 = vmatprep.subr.mxu0 0.0
    %3318 = vmatpush2.msra.mxu0 0.0
    %3319 = vmatprep.subr.mxu0 0.0
    %3320 = vmatpush2.msra.mxu0 0.0
    %3321 = vmatprep.subr.mxu0 0.0
    %3322 = vmatpush2.msra.mxu0 0.0
    %3323 = vmatprep.subr.mxu0 0.0
    %3324 = vmatpush2.msra.mxu0 0.0
    %3325 = vmatprep.subr.mxu0 0.0
    %3326 = vmatpush2.msra.mxu0 0.0
    %3327 = vmatprep.subr.mxu0 0.0
    %3328 = vmatpush2.msra.mxu0 0.0
    %3329 = vmatprep.subr.mxu0 0.0
    %3330 = vmatpush2.msra.mxu0 0.0
    %3331 = vmatprep.subr.mxu0 0.0
    %3332 = vmatpush2.msra.mxu0 0.0
    %3333 = vmatprep.subr.mxu0 0.0
    %3334 = vmatpush2.msra.mxu0 0.0
    %3335 = vmatprep.subr.mxu0 0.0
    %3336 = vmatpush2.msra.mxu0 0.0
    %3337 = vmatprep.subr.mxu0 0.0
    %3338 = vmatpush2.msra.mxu0 0.0
    %3339 = vmatprep.subr.mxu0 0.0
    %3340 = vmatpush2.msra.mxu0 0.0
    %3341 = vmatprep.subr.mxu0 0.0
    %3342 = vmatpush2.msra.mxu0 0.0
    %3343 = vmatprep.mubr.f32.mxu0 0.0
    %3344 = vmatmul.mubr.f32.gmra.mxu0 %v3277
    %v3345 = vpop.f32.mrf.mxu0
    %v3346 = vadd.f32 0.0, %v3345
    %v3347 = vpop.f32.mrf.mxu0
    %v3348 = vadd.f32 0.0, %v3347
    %3349 = vdwg.mxu0
    %v3351 = vsel %vm477, %v2333, 0
    %3353 = vmatprep.subr.mxu0 0.0
    %3354 = vmatpush1.msra.mxu0 0.0
    %3355 = vmatprep.subr.mxu0 0.0
    %3356 = vmatpush1.msra.mxu0 0.0
    %3357 = vmatprep.subr.mxu0 0.0
    %3358 = vmatpush1.msra.mxu0 0.0
    %3359 = vmatprep.subr.mxu0 0.0
    %3360 = vmatpush1.msra.mxu0 0.0
    %3361 = vmatprep.subr.mxu0 0.0
    %3362 = vmatpush1.msra.mxu0 0.0
    %3363 = vmatprep.subr.mxu0 0.0
    %3364 = vmatpush1.msra.mxu0 0.0
    %3365 = vmatprep.subr.mxu0 0.0
    %3366 = vmatpush1.msra.mxu0 0.0
    %3367 = vmatprep.subr.mxu0 0.0
    %3368 = vmatpush1.msra.mxu0 0.0
    %3369 = vmatprep.subr.mxu0 0.0
    %3370 = vmatpush1.msra.mxu0 0.0
    %3371 = vmatprep.subr.mxu0 0.0
    %3372 = vmatpush1.msra.mxu0 0.0
    %3373 = vmatprep.subr.mxu0 0.0
    %3374 = vmatpush1.msra.mxu0 0.0
    %3375 = vmatprep.subr.mxu0 0.0
    %3376 = vmatpush1.msra.mxu0 0.0
    %3377 = vmatprep.subr.mxu0 %v3267
    %3378 = vmatpush1.msra.mxu0 %v3266
    %3379 = vmatprep.subr.mxu0 %v3265
    %3380 = vmatpush1.msra.mxu0 %v3264
    %3381 = vmatprep.subr.mxu0 %v3263
    %3382 = vmatpush1.msra.mxu0 %v3262
    %3383 = vmatprep.subr.mxu0 %v3261
    %3384 = vmatpush1.msra.mxu0 %v3260
    %3385 = vmatprep.subr.mxu0 0.0
    %3386 = vmatpush2.msra.mxu0 0.0
    %3387 = vmatprep.subr.mxu0 0.0
    %3388 = vmatpush2.msra.mxu0 0.0
    %3389 = vmatprep.subr.mxu0 0.0
    %3390 = vmatpush2.msra.mxu0 0.0
    %3391 = vmatprep.subr.mxu0 0.0
    %3392 = vmatpush2.msra.mxu0 0.0
    %3393 = vmatprep.subr.mxu0 0.0
    %3394 = vmatpush2.msra.mxu0 0.0
    %3395 = vmatprep.subr.mxu0 0.0
    %3396 = vmatpush2.msra.mxu0 0.0
    %3397 = vmatprep.subr.mxu0 0.0
    %3398 = vmatpush2.msra.mxu0 0.0
    %3399 = vmatprep.subr.mxu0 0.0
    %3400 = vmatpush2.msra.mxu0 0.0
    %3401 = vmatprep.subr.mxu0 0.0
    %3402 = vmatpush2.msra.mxu0 0.0
    %3403 = vmatprep.subr.mxu0 0.0
    %3404 = vmatpush2.msra.mxu0 0.0
    %3405 = vmatprep.subr.mxu0 0.0
    %3406 = vmatpush2.msra.mxu0 0.0
    %3407 = vmatprep.subr.mxu0 0.0
    %3408 = vmatpush2.msra.mxu0 0.0
    %3409 = vmatprep.subr.mxu0 0.0
    %3410 = vmatpush2.msra.mxu0 0.0
    %3411 = vmatprep.subr.mxu0 0.0
    %3412 = vmatpush2.msra.mxu0 0.0
    %3413 = vmatprep.subr.mxu0 0.0
    %3414 = vmatpush2.msra.mxu0 0.0
    %3415 = vmatprep.subr.mxu0 0.0
    %3416 = vmatpush2.msra.mxu0 0.0
    %3417 = vmatprep.mubr.f32.mxu0 0.0
    %3418 = vmatmul.mubr.f32.gmra.mxu0 %v3351
    %v3419 = vpop.f32.mrf.mxu0
    %v3420 = vadd.f32 %v3346, %v3419
    %v3421 = vpop.f32.mrf.mxu0
    %v3422 = vadd.f32 %v3348, %v3421
    %3423 = vdwg.mxu0
    %v3424 = vld [vmem:[%s59] sm:$0xff]
    %v3425 = vld [vmem:[%s59 + $0x8] sm:$0xff]
    %v3426 = vld [vmem:[%s59 + $0x10] sm:$0xff]
    %v3427 = vld [vmem:[%s59 + $0x18] sm:$0xff]
    %v3428 = vld [vmem:[%s59 + $0x20] sm:$0xff]
    %v3429 = vld [vmem:[%s59 + $0x28] sm:$0xff]
    %v3430 = vld [vmem:[%s59 + $0x30] sm:$0xff]
    %v3431 = vld [vmem:[%s59 + $0x38] sm:$0xff]
    %v3432 = vld [vmem:[#allocation35] sm:$0xff]
    %v3433 = vld [vmem:[#allocation35 + $0x8] sm:$0xff]
    %v3434 = vld [vmem:[#allocation35 + $0x10] sm:$0xff]
    %v3435 = vld [vmem:[#allocation35 + $0x18] sm:$0xff]
    %v3436 = vld [vmem:[#allocation35 + $0x20] sm:$0xff]
    %v3437 = vld [vmem:[#allocation35 + $0x28] sm:$0xff]
    %v3438 = vld [vmem:[#allocation35 + $0x30] sm:$0xff]
    %v3439 = vld [vmem:[#allocation35 + $0x38] sm:$0xff]
    %3440 = vmatprep.subr.mxu0 0.0
    %3441 = vmatpush1.msra.mxu0 0.0
    %3442 = vmatprep.subr.mxu0 0.0
    %3443 = vmatpush1.msra.mxu0 0.0
    %3444 = vmatprep.subr.mxu0 0.0
    %3445 = vmatpush1.msra.mxu0 0.0
    %3446 = vmatprep.subr.mxu0 0.0
    %3447 = vmatpush1.msra.mxu0 0.0
    %3448 = vmatprep.subr.mxu0 0.0
    %3449 = vmatpush1.msra.mxu0 0.0
    %3450 = vmatprep.subr.mxu0 0.0
    %3451 = vmatpush1.msra.mxu0 0.0
    %3452 = vmatprep.subr.mxu0 0.0
    %3453 = vmatpush1.msra.mxu0 0.0
    %3454 = vmatprep.subr.mxu0 0.0
    %3455 = vmatpush1.msra.mxu0 0.0
    %3456 = vmatprep.subr.mxu0 0.0
    %3457 = vmatpush1.msra.mxu0 0.0
    %3458 = vmatprep.subr.mxu0 0.0
    %3459 = vmatpush1.msra.mxu0 0.0
    %3460 = vmatprep.subr.mxu0 0.0
    %3461 = vmatpush1.msra.mxu0 0.0
    %3462 = vmatprep.subr.mxu0 0.0
    %3463 = vmatpush1.msra.mxu0 0.0
    %3464 = vmatprep.subr.mxu0 %v3439
    %3465 = vmatpush1.msra.mxu0 %v3438
    %3466 = vmatprep.subr.mxu0 %v3437
    %3467 = vmatpush1.msra.mxu0 %v3436
    %3468 = vmatprep.subr.mxu0 %v3435
    %3469 = vmatpush1.msra.mxu0 %v3434
    %3470 = vmatprep.subr.mxu0 %v3433
    %3471 = vmatpush1.msra.mxu0 %v3432
    %3472 = vmatprep.subr.mxu0 0.0
    %3473 = vmatpush2.msra.mxu0 0.0
    %3474 = vmatprep.subr.mxu0 0.0
    %3475 = vmatpush2.msra.mxu0 0.0
    %3476 = vmatprep.subr.mxu0 0.0
    %3477 = vmatpush2.msra.mxu0 0.0
    %3478 = vmatprep.subr.mxu0 0.0
    %3479 = vmatpush2.msra.mxu0 0.0
    %3480 = vmatprep.subr.mxu0 0.0
    %3481 = vmatpush2.msra.mxu0 0.0
    %3482 = vmatprep.subr.mxu0 0.0
    %3483 = vmatpush2.msra.mxu0 0.0
    %3484 = vmatprep.subr.mxu0 0.0
    %3485 = vmatpush2.msra.mxu0 0.0
    %3486 = vmatprep.subr.mxu0 0.0
    %3487 = vmatpush2.msra.mxu0 0.0
    %3488 = vmatprep.subr.mxu0 0.0
    %3489 = vmatpush2.msra.mxu0 0.0
    %3490 = vmatprep.subr.mxu0 0.0
    %3491 = vmatpush2.msra.mxu0 0.0
    %3492 = vmatprep.subr.mxu0 0.0
    %3493 = vmatpush2.msra.mxu0 0.0
    %3494 = vmatprep.subr.mxu0 0.0
    %3495 = vmatpush2.msra.mxu0 0.0
    %3496 = vmatprep.subr.mxu0 0.0
    %3497 = vmatpush2.msra.mxu0 0.0
    %3498 = vmatprep.subr.mxu0 0.0
    %3499 = vmatpush2.msra.mxu0 0.0
    %3500 = vmatprep.subr.mxu0 0.0
    %3501 = vmatpush2.msra.mxu0 0.0
    %3502 = vmatprep.subr.mxu0 0.0
    %3503 = vmatpush2.msra.mxu0 0.0
    %3504 = vmatprep.mubr.f32.mxu0 0.0
    %3505 = vmatmul.mubr.f32.gmra.mxu0 %v3277
    %v3506 = vpop.f32.mrf.mxu0
    %v3507 = vadd.f32 0.0, %v3506
    %v3508 = vpop.f32.mrf.mxu0
    %v3509 = vadd.f32 0.0, %v3508
    %3510 = vdwg.mxu0
    %3511 = vmatprep.subr.mxu0 0.0
    %3512 = vmatpush1.msra.mxu0 0.0
    %3513 = vmatprep.subr.mxu0 0.0
    %3514 = vmatpush1.msra.mxu0 0.0
    %3515 = vmatprep.subr.mxu0 0.0
    %3516 = vmatpush1.msra.mxu0 0.0
    %3517 = vmatprep.subr.mxu0 0.0
    %3518 = vmatpush1.msra.mxu0 0.0
    %3519 = vmatprep.subr.mxu0 0.0
    %3520 = vmatpush1.msra.mxu0 0.0
    %3521 = vmatprep.subr.mxu0 0.0
    %3522 = vmatpush1.msra.mxu0 0.0
    %3523 = vmatprep.subr.mxu0 0.0
    %3524 = vmatpush1.msra.mxu0 0.0
    %3525 = vmatprep.subr.mxu0 0.0
    %3526 = vmatpush1.msra.mxu0 0.0
    %3527 = vmatprep.subr.mxu0 0.0
    %3528 = vmatpush1.msra.mxu0 0.0
    %3529 = vmatprep.subr.mxu0 0.0
    %3530 = vmatpush1.msra.mxu0 0.0
    %3531 = vmatprep.subr.mxu0 0.0
    %3532 = vmatpush1.msra.mxu0 0.0
    %3533 = vmatprep.subr.mxu0 0.0
    %3534 = vmatpush1.msra.mxu0 0.0
    %3535 = vmatprep.subr.mxu0 %v3431
    %3536 = vmatpush1.msra.mxu0 %v3430
    %3537 = vmatprep.subr.mxu0 %v3429
    %3538 = vmatpush1.msra.mxu0 %v3428
    %3539 = vmatprep.subr.mxu0 %v3427
    %3540 = vmatpush1.msra.mxu0 %v3426
    %3541 = vmatprep.subr.mxu0 %v3425
    %3542 = vmatpush1.msra.mxu0 %v3424
    %3543 = vmatprep.subr.mxu0 0.0
    %3544 = vmatpush2.msra.mxu0 0.0
    %3545 = vmatprep.subr.mxu0 0.0
    %3546 = vmatpush2.msra.mxu0 0.0
    %3547 = vmatprep.subr.mxu0 0.0
    %3548 = vmatpush2.msra.mxu0 0.0
    %3549 = vmatprep.subr.mxu0 0.0
    %3550 = vmatpush2.msra.mxu0 0.0
    %3551 = vmatprep.subr.mxu0 0.0
    %3552 = vmatpush2.msra.mxu0 0.0
    %3553 = vmatprep.subr.mxu0 0.0
    %3554 = vmatpush2.msra.mxu0 0.0
    %3555 = vmatprep.subr.mxu0 0.0
    %3556 = vmatpush2.msra.mxu0 0.0
    %3557 = vmatprep.subr.mxu0 0.0
    %3558 = vmatpush2.msra.mxu0 0.0
    %3559 = vmatprep.subr.mxu0 0.0
    %3560 = vmatpush2.msra.mxu0 0.0
    %3561 = vmatprep.subr.mxu0 0.0
    %3562 = vmatpush2.msra.mxu0 0.0
    %3563 = vmatprep.subr.mxu0 0.0
    %3564 = vmatpush2.msra.mxu0 0.0
    %3565 = vmatprep.subr.mxu0 0.0
    %3566 = vmatpush2.msra.mxu0 0.0
    %3567 = vmatprep.subr.mxu0 0.0
    %3568 = vmatpush2.msra.mxu0 0.0
    %3569 = vmatprep.subr.mxu0 0.0
    %3570 = vmatpush2.msra.mxu0 0.0
    %3571 = vmatprep.subr.mxu0 0.0
    %3572 = vmatpush2.msra.mxu0 0.0
    %3573 = vmatprep.subr.mxu0 0.0
    %3574 = vmatpush2.msra.mxu0 0.0
    %3575 = vmatprep.mubr.f32.mxu0 0.0
    %3576 = vmatmul.mubr.f32.gmra.mxu0 %v3351
    %v3577 = vpop.f32.mrf.mxu0
    %v3578 = vadd.f32 %v3507, %v3577
    %v3579 = vpop.f32.mrf.mxu0
    %v3580 = vadd.f32 %v3509, %v3579
    %3581 = vdwg.mxu0
    %v3582 = vsub.f32 %v2336, 0.5
    %v3583 = vsub.f32 %v2337, 0.5
    %v3586 = vcombine.high %v3582, %v3582
    %v3588 = vunpack.c.l.s4 1983009808
    %v3589 = vunpack.c.0.s8 %v3588
    %v3590 = vlaneseq
    %v3591 = vshrl.u32 %v3590, 7
    %v3592 = vsub.s32 %v3589, %v3591
    %v3593 = vrot.slane %v3582, %v3592
    %v3595 = vunpack.c.l.s4 1983009808
    %v3596 = vunpack.c.0.s8 %v3595
    %v3597 = vlaneseq
    %v3598 = vshrl.u32 %v3597, 7
    %v3599 = vsub.s32 %v3596, %v3598
    %v3600 = vrot.slane %v3586, %v3599
    %v3601 = vcombine.high %v3593, %v3593
    %v3602 = vcombine.high %v3600, %v3600
    %v3604 = vunpack.c.l.s4 1983009808
    %v3605 = vunpack.c.0.s8 %v3604
    %v3606 = vlaneseq
    %v3607 = vshrl.u32 %v3606, 7
    %v3608 = vsub.s32 %v3605, %v3607
    %v3609 = vrot.slane %v3583, %v3608
    %v3610 = vcombine.high %v3609, %v3609
    %v3617 = vpack.c.bf16 %v3593, %v3593
    %v3618 = vpack.c.bf16 %v3601, %v3601
    %v3619 = vpack.c.bf16 %v3600, %v3600
    %v3620 = vpack.c.bf16 %v3602, %v3602
    %v3621 = vpack.c.bf16 %v3609, %v3609
    %v3622 = vpack.c.bf16 %v3610, %v3610
    %v3719 = vunpack.c.l.b16 %v2434
    %v3720 = vunpack.c.h.b16 %v2434
    %v3721 = vunpack.c.l.b16 %v2435
    %v3722 = vunpack.c.h.b16 %v2435
    %v3723 = vunpack.c.l.b16 %v2436
    %v3724 = vunpack.c.h.b16 %v2436
    %v3725 = vunpack.c.l.b16 %v2437
    %v3726 = vunpack.c.h.b16 %v2437
    %v3727 = vunpack.c.l.b16 %v2438
    %v3728 = vunpack.c.h.b16 %v2438
    %v3729 = vunpack.c.l.b16 %v2439
    %v3730 = vunpack.c.h.b16 %v2439
    %v3731 = vunpack.c.l.b16 %v2440
    %v3732 = vunpack.c.h.b16 %v2440
    %v3733 = vunpack.c.l.b16 %v2441
    %v3734 = vunpack.c.h.b16 %v2441
    %v3735 = vunpack.c.l.b16 %v2442
    %v3736 = vunpack.c.h.b16 %v2442
    %v3737 = vunpack.c.l.b16 %v2443
    %v3738 = vunpack.c.h.b16 %v2443
    %v3739 = vunpack.c.l.b16 %v2444
    %v3740 = vunpack.c.h.b16 %v2444
    %v3741 = vunpack.c.l.b16 %v2445
    %v3742 = vunpack.c.h.b16 %v2445
    %v3743 = vunpack.c.l.b16 %v2446
    %v3744 = vunpack.c.h.b16 %v2446
    %v3745 = vunpack.c.l.b16 %v2447
    %v3746 = vunpack.c.h.b16 %v2447
    %v3747 = vunpack.c.l.b16 %v2448
    %v3748 = vunpack.c.h.b16 %v2448
    %v3749 = vunpack.c.l.b16 %v2449
    %v3750 = vunpack.c.h.b16 %v2449
    %v3751 = vunpack.c.l.b16 %v2450
    %v3752 = vunpack.c.h.b16 %v2450
    %v3753 = vunpack.c.l.b16 %v2451
    %v3754 = vunpack.c.h.b16 %v2451
    %v3755 = vunpack.c.l.b16 %v2452
    %v3756 = vunpack.c.h.b16 %v2452
    %v3757 = vunpack.c.l.b16 %v2453
    %v3758 = vunpack.c.h.b16 %v2453
    %v3759 = vunpack.c.l.b16 %v2454
    %v3760 = vunpack.c.h.b16 %v2454
    %v3761 = vunpack.c.l.b16 %v2455
    %v3762 = vunpack.c.h.b16 %v2455
    %v3763 = vunpack.c.l.b16 %v2456
    %v3764 = vunpack.c.h.b16 %v2456
    %v3765 = vunpack.c.l.b16 %v2457
    %v3766 = vunpack.c.h.b16 %v2457
    %v3767 = vunpack.c.l.b16 %v2458
    %v3768 = vunpack.c.h.b16 %v2458
    %v3769 = vunpack.c.l.b16 %v2459
    %v3770 = vunpack.c.h.b16 %v2459
    %v3771 = vunpack.c.l.b16 %v2460
    %v3772 = vunpack.c.h.b16 %v2460
    %v3773 = vunpack.c.l.b16 %v2461
    %v3774 = vunpack.c.h.b16 %v2461
    %v3775 = vunpack.c.l.b16 %v2462
    %v3776 = vunpack.c.h.b16 %v2462
    %v3777 = vunpack.c.l.b16 %v2463
    %v3778 = vunpack.c.h.b16 %v2463
    %v3779 = vunpack.c.l.b16 %v2464
    %v3780 = vunpack.c.h.b16 %v2464
    %v3781 = vunpack.c.l.b16 %v2465
    %v3782 = vunpack.c.h.b16 %v2465
    %v3783 = vunpack.c.l.b16 %v2466
    %v3784 = vunpack.c.h.b16 %v2466
    %v3785 = vunpack.c.l.b16 %v2467
    %v3786 = vunpack.c.h.b16 %v2467
    %v3787 = vunpack.c.l.b16 %v2468
    %v3788 = vunpack.c.h.b16 %v2468
    %v3789 = vunpack.c.l.b16 %v2469
    %v3790 = vunpack.c.h.b16 %v2469
    %v3791 = vunpack.c.l.b16 %v2470
    %v3792 = vunpack.c.h.b16 %v2470
    %v3793 = vunpack.c.l.b16 %v2471
    %v3794 = vunpack.c.h.b16 %v2471
    %v3795 = vunpack.c.l.b16 %v2472
    %v3796 = vunpack.c.h.b16 %v2472
    %v3797 = vunpack.c.l.b16 %v2473
    %v3798 = vunpack.c.h.b16 %v2473
    %v3799 = vunpack.c.l.b16 %v2474
    %v3800 = vunpack.c.h.b16 %v2474
    %v3801 = vunpack.c.l.b16 %v2475
    %v3802 = vunpack.c.h.b16 %v2475
    %v3803 = vunpack.c.l.b16 %v2476
    %v3804 = vunpack.c.h.b16 %v2476
    %v3805 = vunpack.c.l.b16 %v2477
    %v3806 = vunpack.c.h.b16 %v2477
    %v3807 = vunpack.c.l.b16 %v2478
    %v3808 = vunpack.c.h.b16 %v2478
    %v3809 = vunpack.c.l.b16 %v2479
    %v3810 = vunpack.c.h.b16 %v2479
    %v3811 = vunpack.c.l.b16 %v2480
    %v3812 = vunpack.c.h.b16 %v2480
    %v3813 = vunpack.c.l.b16 %v2481
    %v3814 = vunpack.c.h.b16 %v2481
    %v3815 = vunpack.c.l.b16 %v2482
    %v3816 = vunpack.c.h.b16 %v2482
    %v3817 = vunpack.c.l.b16 %v2483
    %v3818 = vunpack.c.h.b16 %v2483
    %v3819 = vunpack.c.l.b16 %v2484
    %v3820 = vunpack.c.h.b16 %v2484
    %v3821 = vunpack.c.l.b16 %v2485
    %v3822 = vunpack.c.h.b16 %v2485
    %v3823 = vunpack.c.l.b16 %v2486
    %v3824 = vunpack.c.h.b16 %v2486
    %v3825 = vunpack.c.l.b16 %v2487
    %v3826 = vunpack.c.h.b16 %v2487
    %v3827 = vunpack.c.l.b16 %v2488
    %v3828 = vunpack.c.h.b16 %v2488
    %v3829 = vunpack.c.l.b16 %v2489
    %v3830 = vunpack.c.h.b16 %v2489
    %v3831 = vunpack.c.l.b16 %v2490
    %v3832 = vunpack.c.h.b16 %v2490
    %v3833 = vunpack.c.l.b16 %v2491
    %v3834 = vunpack.c.h.b16 %v2491
    %v3835 = vunpack.c.l.b16 %v2492
    %v3836 = vunpack.c.h.b16 %v2492
    %v3837 = vunpack.c.l.b16 %v2493
    %v3838 = vunpack.c.h.b16 %v2493
    %v3839 = vunpack.c.l.b16 %v2494
    %v3840 = vunpack.c.h.b16 %v2494
    %v3841 = vunpack.c.l.b16 %v2495
    %v3842 = vunpack.c.h.b16 %v2495
    %v3843 = vunpack.c.l.b16 %v2496
    %v3844 = vunpack.c.h.b16 %v2496
    %v3845 = vunpack.c.l.b16 %v2497
    %v3846 = vunpack.c.h.b16 %v2497
    %v3847 = vunpack.c.l.b16 %v2498
    %v3848 = vunpack.c.h.b16 %v2498
    %v3849 = vunpack.c.l.b16 %v2499
    %v3850 = vunpack.c.h.b16 %v2499
    %v3851 = vunpack.c.l.b16 %v2500
    %v3852 = vunpack.c.h.b16 %v2500
    %v3853 = vunpack.c.l.b16 %v2501
    %v3854 = vunpack.c.h.b16 %v2501
    %v3855 = vunpack.c.l.b16 %v2502
    %v3856 = vunpack.c.h.b16 %v2502
    %v3857 = vunpack.c.l.b16 %v2503
    %v3858 = vunpack.c.h.b16 %v2503
    %v3859 = vunpack.c.l.b16 %v2504
    %v3860 = vunpack.c.h.b16 %v2504
    %v3861 = vunpack.c.l.b16 %v2505
    %v3862 = vunpack.c.h.b16 %v2505
    %v3863 = vunpack.c.l.b16 %v2506
    %v3864 = vunpack.c.h.b16 %v2506
    %v3865 = vunpack.c.l.b16 %v2507
    %v3866 = vunpack.c.h.b16 %v2507
    %v3867 = vunpack.c.l.b16 %v2508
    %v3868 = vunpack.c.h.b16 %v2508
    %v3869 = vunpack.c.l.b16 %v2509
    %v3870 = vunpack.c.h.b16 %v2509
    %v3871 = vunpack.c.l.b16 %v2510
    %v3872 = vunpack.c.h.b16 %v2510
    %v3873 = vunpack.c.l.b16 %v2511
    %v3874 = vunpack.c.h.b16 %v2511
    %v3875 = vunpack.c.l.b16 %v2512
    %v3876 = vunpack.c.h.b16 %v2512
    %v3877 = vunpack.c.l.b16 %v2513
    %v3878 = vunpack.c.h.b16 %v2513
    %v3879 = vunpack.c.l.b16 %v2514
    %v3880 = vunpack.c.h.b16 %v2514
    %v3881 = vunpack.c.l.b16 %v2515
    %v3882 = vunpack.c.h.b16 %v2515
    %v3883 = vunpack.c.l.b16 %v2516
    %v3884 = vunpack.c.h.b16 %v2516
    %v3885 = vunpack.c.l.b16 %v2517
    %v3886 = vunpack.c.h.b16 %v2517
    %v3887 = vunpack.c.l.b16 %v2518
    %v3888 = vunpack.c.h.b16 %v2518
    %v3889 = vunpack.c.l.b16 %v2519
    %v3890 = vunpack.c.h.b16 %v2519
    %v3891 = vunpack.c.l.b16 %v2520
    %v3892 = vunpack.c.h.b16 %v2520
    %v3893 = vunpack.c.l.b16 %v2521
    %v3894 = vunpack.c.h.b16 %v2521
    %v3895 = vunpack.c.l.b16 %v2522
    %v3896 = vunpack.c.h.b16 %v2522
    %v3897 = vunpack.c.l.b16 %v2523
    %v3898 = vunpack.c.h.b16 %v2523
    %v3899 = vunpack.c.l.b16 %v2524
    %v3900 = vunpack.c.h.b16 %v2524
    %v3901 = vunpack.c.l.b16 %v2525
    %v3902 = vunpack.c.h.b16 %v2525
    %v3903 = vunpack.c.l.b16 %v2526
    %v3904 = vunpack.c.h.b16 %v2526
    %v3905 = vunpack.c.l.b16 %v2527
    %v3906 = vunpack.c.h.b16 %v2527
    %v3907 = vunpack.c.l.b16 %v2528
    %v3908 = vunpack.c.h.b16 %v2528
    %v3909 = vunpack.c.l.b16 %v2529
    %v3910 = vunpack.c.h.b16 %v2529
    %v3911 = vpack.c.b16 %v3721, %v3719
    %v3912 = vpack.c.b16 %v3722, %v3720
    %v3913 = vpack.c.b16 %v3725, %v3723
    %v3914 = vpack.c.b16 %v3726, %v3724
    %v3915 = vpack.c.b16 %v3729, %v3727
    %v3916 = vpack.c.b16 %v3730, %v3728
    %v3917 = vpack.c.b16 %v3733, %v3731
    %v3918 = vpack.c.b16 %v3734, %v3732
    %v3919 = vpack.c.b16 %v3737, %v3735
    %v3920 = vpack.c.b16 %v3738, %v3736
    %v3921 = vpack.c.b16 %v3741, %v3739
    %v3922 = vpack.c.b16 %v3742, %v3740
    %v3923 = vpack.c.b16 %v3745, %v3743
    %v3924 = vpack.c.b16 %v3746, %v3744
    %v3925 = vpack.c.b16 %v3749, %v3747
    %v3926 = vpack.c.b16 %v3750, %v3748
    %v3927 = vpack.c.b16 %v3753, %v3751
    %v3928 = vpack.c.b16 %v3754, %v3752
    %v3929 = vpack.c.b16 %v3757, %v3755
    %v3930 = vpack.c.b16 %v3758, %v3756
    %v3931 = vpack.c.b16 %v3761, %v3759
    %v3932 = vpack.c.b16 %v3762, %v3760
    %v3933 = vpack.c.b16 %v3765, %v3763
    %v3934 = vpack.c.b16 %v3766, %v3764
    %v3935 = vpack.c.b16 %v3769, %v3767
    %v3936 = vpack.c.b16 %v3770, %v3768
    %v3937 = vpack.c.b16 %v3773, %v3771
    %v3938 = vpack.c.b16 %v3774, %v3772
    %v3939 = vpack.c.b16 %v3777, %v3775
    %v3940 = vpack.c.b16 %v3778, %v3776
    %v3941 = vpack.c.b16 %v3781, %v3779
    %v3942 = vpack.c.b16 %v3782, %v3780
    %v3943 = vpack.c.b16 %v3785, %v3783
    %v3944 = vpack.c.b16 %v3786, %v3784
    %v3945 = vpack.c.b16 %v3789, %v3787
    %v3946 = vpack.c.b16 %v3790, %v3788
    %v3947 = vpack.c.b16 %v3793, %v3791
    %v3948 = vpack.c.b16 %v3794, %v3792
    %v3949 = vpack.c.b16 %v3797, %v3795
    %v3950 = vpack.c.b16 %v3798, %v3796
    %v3951 = vpack.c.b16 %v3801, %v3799
    %v3952 = vpack.c.b16 %v3802, %v3800
    %v3953 = vpack.c.b16 %v3805, %v3803
    %v3954 = vpack.c.b16 %v3806, %v3804
    %v3955 = vpack.c.b16 %v3809, %v3807
    %v3956 = vpack.c.b16 %v3810, %v3808
    %v3957 = vpack.c.b16 %v3813, %v3811
    %v3958 = vpack.c.b16 %v3814, %v3812
    %v3959 = vpack.c.b16 %v3817, %v3815
    %v3960 = vpack.c.b16 %v3818, %v3816
    %v3961 = vpack.c.b16 %v3821, %v3819
    %v3962 = vpack.c.b16 %v3822, %v3820
    %v3963 = vpack.c.b16 %v3825, %v3823
    %v3964 = vpack.c.b16 %v3826, %v3824
    %v3965 = vpack.c.b16 %v3829, %v3827
    %v3966 = vpack.c.b16 %v3830, %v3828
    %v3967 = vpack.c.b16 %v3833, %v3831
    %v3968 = vpack.c.b16 %v3834, %v3832
    %v3969 = vpack.c.b16 %v3837, %v3835
    %v3970 = vpack.c.b16 %v3838, %v3836
    %v3971 = vpack.c.b16 %v3841, %v3839
    %v3972 = vpack.c.b16 %v3842, %v3840
    %v3973 = vpack.c.b16 %v3845, %v3843
    %v3974 = vpack.c.b16 %v3846, %v3844
    %v3975 = vpack.c.b16 %v3849, %v3847
    %v3976 = vpack.c.b16 %v3850, %v3848
    %v3977 = vpack.c.b16 %v3853, %v3851
    %v3978 = vpack.c.b16 %v3854, %v3852
    %v3979 = vpack.c.b16 %v3857, %v3855
    %v3980 = vpack.c.b16 %v3858, %v3856
    %v3981 = vpack.c.b16 %v3861, %v3859
    %v3982 = vpack.c.b16 %v3862, %v3860
    %v3983 = vpack.c.b16 %v3865, %v3863
    %v3984 = vpack.c.b16 %v3866, %v3864
    %v3985 = vpack.c.b16 %v3869, %v3867
    %v3986 = vpack.c.b16 %v3870, %v3868
    %v3987 = vpack.c.b16 %v3873, %v3871
    %v3988 = vpack.c.b16 %v3874, %v3872
    %v3989 = vpack.c.b16 %v3877, %v3875
    %v3990 = vpack.c.b16 %v3878, %v3876
    %v3991 = vpack.c.b16 %v3881, %v3879
    %v3992 = vpack.c.b16 %v3882, %v3880
    %v3993 = vpack.c.b16 %v3885, %v3883
    %v3994 = vpack.c.b16 %v3886, %v3884
    %v3995 = vpack.c.b16 %v3889, %v3887
    %v3996 = vpack.c.b16 %v3890, %v3888
    %v3997 = vpack.c.b16 %v3893, %v3891
    %v3998 = vpack.c.b16 %v3894, %v3892
    %v3999 = vpack.c.b16 %v3897, %v3895
    %v4000 = vpack.c.b16 %v3898, %v3896
    %v4001 = vpack.c.b16 %v3901, %v3899
    %v4002 = vpack.c.b16 %v3902, %v3900
    %v4003 = vpack.c.b16 %v3905, %v3903
    %v4004 = vpack.c.b16 %v3906, %v3904
    %v4005 = vpack.c.b16 %v3909, %v3907
    %v4006 = vpack.c.b16 %v3910, %v3908
    %4103 = vmatprep.subr.bf16.mxu0 %v3926
    %4104 = vmatpush1.bf16.msra.mxu0 %v3925
    %4105 = vmatprep.subr.bf16.mxu0 %v3924
    %4106 = vmatpush1.bf16.msra.mxu0 %v3923
    %4107 = vmatprep.subr.bf16.mxu0 %v3922
    %4108 = vmatpush1.bf16.msra.mxu0 %v3921
    %4109 = vmatprep.subr.bf16.mxu0 %v3920
    %4110 = vmatpush1.bf16.msra.mxu0 %v3919
    %4111 = vmatprep.subr.bf16.mxu0 %v3918
    %4112 = vmatpush1.bf16.msra.mxu0 %v3917
    %4113 = vmatprep.subr.bf16.mxu0 %v3916
    %4114 = vmatpush1.bf16.msra.mxu0 %v3915
    %4115 = vmatprep.subr.bf16.mxu0 %v3914
    %4116 = vmatpush1.bf16.msra.mxu0 %v3913
    %4117 = vmatprep.subr.bf16.mxu0 %v3912
    %4118 = vmatpush1.bf16.msra.mxu0 %v3911
    %4119 = vmatprep.subr.bf16.mxu0 %v3942
    %4120 = vmatpush2.bf16.msra.mxu0 %v3941
    %4121 = vmatprep.subr.bf16.mxu0 %v3940
    %4122 = vmatpush2.bf16.msra.mxu0 %v3939
    %4123 = vmatprep.subr.bf16.mxu0 %v3938
    %4124 = vmatpush2.bf16.msra.mxu0 %v3937
    %4125 = vmatprep.subr.bf16.mxu0 %v3936
    %4126 = vmatpush2.bf16.msra.mxu0 %v3935
    %4127 = vmatprep.subr.bf16.mxu0 %v3934
    %4128 = vmatpush2.bf16.msra.mxu0 %v3933
    %4129 = vmatprep.subr.bf16.mxu0 %v3932
    %4130 = vmatpush2.bf16.msra.mxu0 %v3931
    %4131 = vmatprep.subr.bf16.mxu0 %v3930
    %4132 = vmatpush2.bf16.msra.mxu0 %v3929
    %4133 = vmatprep.subr.bf16.mxu0 %v3928
    %4134 = vmatpush2.bf16.msra.mxu0 %v3927
    %4135 = vmatprep.mubr.bf16.mxu0 %v3618
    %4136 = vmatmul.mubr.bf16.gmra.mxu0 %v3617
    %v4137 = vpop.f32.mrf.mxu0
    %v4138 = vadd.f32 0.0, %v4137
    %v4139 = vpop.f32.mrf.mxu0
    %v4140 = vadd.f32 0.0, %v4139
    %v4141 = vpop.f32.mrf.mxu0
    %v4142 = vpop.f32.mrf.mxu0
    %4143 = vdwg.mxu0
    %4144 = vmatprep.subr.bf16.mxu0 %v3958
    %4145 = vmatpush1.bf16.msra.mxu0 %v3957
    %4146 = vmatprep.subr.bf16.mxu0 %v3956
    %4147 = vmatpush1.bf16.msra.mxu0 %v3955
    %4148 = vmatprep.subr.bf16.mxu0 %v3954
    %4149 = vmatpush1.bf16.msra.mxu0 %v3953
    %4150 = vmatprep.subr.bf16.mxu0 %v3952
    %4151 = vmatpush1.bf16.msra.mxu0 %v3951
    %4152 = vmatprep.subr.bf16.mxu0 %v3950
    %4153 = vmatpush1.bf16.msra.mxu0 %v3949
    %4154 = vmatprep.subr.bf16.mxu0 %v3948
    %4155 = vmatpush1.bf16.msra.mxu0 %v3947
    %4156 = vmatprep.subr.bf16.mxu0 %v3946
    %4157 = vmatpush1.bf16.msra.mxu0 %v3945
    %4158 = vmatprep.subr.bf16.mxu0 %v3944
    %4159 = vmatpush1.bf16.msra.mxu0 %v3943
    %4160 = vmatprep.subr.bf16.mxu0 %v3974
    %4161 = vmatpush2.bf16.msra.mxu0 %v3973
    %4162 = vmatprep.subr.bf16.mxu0 %v3972
    %4163 = vmatpush2.bf16.msra.mxu0 %v3971
    %4164 = vmatprep.subr.bf16.mxu0 %v3970
    %4165 = vmatpush2.bf16.msra.mxu0 %v3969
    %4166 = vmatprep.subr.bf16.mxu0 %v3968
    %4167 = vmatpush2.bf16.msra.mxu0 %v3967
    %4168 = vmatprep.subr.bf16.mxu0 %v3966
    %4169 = vmatpush2.bf16.msra.mxu0 %v3965
    %4170 = vmatprep.subr.bf16.mxu0 %v3964
    %4171 = vmatpush2.bf16.msra.mxu0 %v3963
    %4172 = vmatprep.subr.bf16.mxu0 %v3962
    %4173 = vmatpush2.bf16.msra.mxu0 %v3961
    %4174 = vmatprep.subr.bf16.mxu0 %v3960
    %4175 = vmatpush2.bf16.msra.mxu0 %v3959
    %4176 = vmatprep.mubr.bf16.mxu0 %v3620
    %4177 = vmatmul.mubr.bf16.gmra.mxu0 %v3619
    %v4178 = vpop.f32.mrf.mxu0
    %v4179 = vadd.f32 %v4138, %v4178
    %v4180 = vpop.f32.mrf.mxu0
    %v4181 = vadd.f32 %v4140, %v4180
    %v4182 = vpop.f32.mrf.mxu0
    %v4183 = vpop.f32.mrf.mxu0
    %4184 = vdwg.mxu0
    %4185 = vmatprep.subr.bf16.mxu0 %v3990
    %4186 = vmatpush1.bf16.msra.mxu0 %v3989
    %4187 = vmatprep.subr.bf16.mxu0 %v3988
    %4188 = vmatpush1.bf16.msra.mxu0 %v3987
    %4189 = vmatprep.subr.bf16.mxu0 %v3986
    %4190 = vmatpush1.bf16.msra.mxu0 %v3985
    %4191 = vmatprep.subr.bf16.mxu0 %v3984
    %4192 = vmatpush1.bf16.msra.mxu0 %v3983
    %4193 = vmatprep.subr.bf16.mxu0 %v3982
    %4194 = vmatpush1.bf16.msra.mxu0 %v3981
    %4195 = vmatprep.subr.bf16.mxu0 %v3980
    %4196 = vmatpush1.bf16.msra.mxu0 %v3979
    %4197 = vmatprep.subr.bf16.mxu0 %v3978
    %4198 = vmatpush1.bf16.msra.mxu0 %v3977
    %4199 = vmatprep.subr.bf16.mxu0 %v3976
    %4200 = vmatpush1.bf16.msra.mxu0 %v3975
    %4201 = vmatprep.subr.bf16.mxu0 %v4006
    %4202 = vmatpush2.bf16.msra.mxu0 %v4005
    %4203 = vmatprep.subr.bf16.mxu0 %v4004
    %4204 = vmatpush2.bf16.msra.mxu0 %v4003
    %4205 = vmatprep.subr.bf16.mxu0 %v4002
    %4206 = vmatpush2.bf16.msra.mxu0 %v4001
    %4207 = vmatprep.subr.bf16.mxu0 %v4000
    %4208 = vmatpush2.bf16.msra.mxu0 %v3999
    %4209 = vmatprep.subr.bf16.mxu0 %v3998
    %4210 = vmatpush2.bf16.msra.mxu0 %v3997
    %4211 = vmatprep.subr.bf16.mxu0 %v3996
    %4212 = vmatpush2.bf16.msra.mxu0 %v3995
    %4213 = vmatprep.subr.bf16.mxu0 %v3994
    %4214 = vmatpush2.bf16.msra.mxu0 %v3993
    %4215 = vmatprep.subr.bf16.mxu0 %v3992
    %4216 = vmatpush2.bf16.msra.mxu0 %v3991
    %4217 = vmatprep.mubr.bf16.mxu0 %v3622
    %4218 = vmatmul.mubr.bf16.gmra.mxu0 %v3621
    %v4219 = vpop.f32.mrf.mxu0
    %v4220 = vadd.f32 %v4179, %v4219
    %v4221 = vpop.f32.mrf.mxu0
    %v4222 = vadd.f32 %v4181, %v4221
    %v4223 = vpop.f32.mrf.mxu0
    %v4224 = vpop.f32.mrf.mxu0
    %4225 = vdwg.mxu0
    %v4226 = vadd.f32 %v3254, %v4220
    %v4227 = vadd.f32 %v3256, %v4222
    %v4229 = vsel %vm2098, 0.0, 0
    %4231 = vmatprep.subr.mxu0 0.0
    %4232 = vmatpush1.msra.mxu0 0.0
    %4233 = vmatprep.subr.mxu0 0.0
    %4234 = vmatpush1.msra.mxu0 0.0
    %4235 = vmatprep.subr.mxu0 0.0
    %4236 = vmatpush1.msra.mxu0 0.0
    %4237 = vmatprep.subr.mxu0 0.0
    %4238 = vmatpush1.msra.mxu0 0.0
    %4239 = vmatprep.subr.mxu0 0.0
    %4240 = vmatpush1.msra.mxu0 0.0
    %4241 = vmatprep.subr.mxu0 0.0
    %4242 = vmatpush1.msra.mxu0 0.0
    %4243 = vmatprep.subr.mxu0 0.0
    %4244 = vmatpush1.msra.mxu0 0.0
    %4245 = vmatprep.subr.mxu0 0.0
    %4246 = vmatpush1.msra.mxu0 0.0
    %4247 = vmatprep.subr.mxu0 %v2545
    %4248 = vmatpush1.msra.mxu0 %v2544
    %4249 = vmatprep.subr.mxu0 %v2543
    %4250 = vmatpush1.msra.mxu0 %v2542
    %4251 = vmatprep.subr.mxu0 %v2541
    %4252 = vmatpush1.msra.mxu0 %v2540
    %4253 = vmatprep.subr.mxu0 %v2539
    %4254 = vmatpush1.msra.mxu0 %v2538
    %4255 = vmatprep.subr.mxu0 %v2537
    %4256 = vmatpush1.msra.mxu0 %v2536
    %4257 = vmatprep.subr.mxu0 %v2535
    %4258 = vmatpush1.msra.mxu0 %v2534
    %4259 = vmatprep.subr.mxu0 %v2533
    %4260 = vmatpush1.msra.mxu0 %v2532
    %4261 = vmatprep.subr.mxu0 %v2531
    %4262 = vmatpush1.msra.mxu0 %v2530
    %4263 = vmatprep.subr.mxu0 0.0
    %4264 = vmatpush2.msra.mxu0 0.0
    %4265 = vmatprep.subr.mxu0 0.0
    %4266 = vmatpush2.msra.mxu0 0.0
    %4267 = vmatprep.subr.mxu0 0.0
    %4268 = vmatpush2.msra.mxu0 0.0
    %4269 = vmatprep.subr.mxu0 0.0
    %4270 = vmatpush2.msra.mxu0 0.0
    %4271 = vmatprep.subr.mxu0 0.0
    %4272 = vmatpush2.msra.mxu0 0.0
    %4273 = vmatprep.subr.mxu0 0.0
    %4274 = vmatpush2.msra.mxu0 0.0
    %4275 = vmatprep.subr.mxu0 0.0
    %4276 = vmatpush2.msra.mxu0 0.0
    %4277 = vmatprep.subr.mxu0 0.0
    %4278 = vmatpush2.msra.mxu0 0.0
    %4279 = vmatprep.subr.mxu0 0.0
    %4280 = vmatpush2.msra.mxu0 0.0
    %4281 = vmatprep.subr.mxu0 0.0
    %4282 = vmatpush2.msra.mxu0 0.0
    %4283 = vmatprep.subr.mxu0 0.0
    %4284 = vmatpush2.msra.mxu0 0.0
    %4285 = vmatprep.subr.mxu0 0.0
    %4286 = vmatpush2.msra.mxu0 0.0
    %4287 = vmatprep.subr.mxu0 0.0
    %4288 = vmatpush2.msra.mxu0 0.0
    %4289 = vmatprep.subr.mxu0 0.0
    %4290 = vmatpush2.msra.mxu0 0.0
    %4291 = vmatprep.subr.mxu0 0.0
    %4292 = vmatpush2.msra.mxu0 0.0
    %4293 = vmatprep.subr.mxu0 0.0
    %4294 = vmatpush2.msra.mxu0 0.0
    %4295 = vmatprep.mubr.f32.mxu0 0.0
    %4296 = vmatmul.mubr.f32.gmra.mxu0 %v4229
    %v4297 = vpop.f32.mrf.mxu0
    %v4298 = vadd.f32 0.0, %v4297
    %v4299 = vpop.f32.mrf.mxu0
    %v4300 = vadd.f32 0.0, %v4299
    %4301 = vdwg.mxu0
    %v4302 = vadd.f32 %v4226, %v4298
    %v4303 = vadd.f32 %v4227, %v4300
    %v4304 = vadd.f32 %v4302, %v3420
    %v4305 = vadd.f32 %v4303, %v3422
    %4306 = vmatprep.subr.mxu0 0.0
    %4307 = vmatpush1.msra.mxu0 0.0
    %4308 = vmatprep.subr.mxu0 0.0
    %4309 = vmatpush1.msra.mxu0 0.0
    %4310 = vmatprep.subr.mxu0 0.0
    %4311 = vmatpush1.msra.mxu0 0.0
    %4312 = vmatprep.subr.mxu0 0.0
    %4313 = vmatpush1.msra.mxu0 0.0
    %4314 = vmatprep.subr.mxu0 0.0
    %4315 = vmatpush1.msra.mxu0 0.0
    %4316 = vmatprep.subr.mxu0 0.0
    %4317 = vmatpush1.msra.mxu0 0.0
    %4318 = vmatprep.subr.mxu0 0.0
    %4319 = vmatpush1.msra.mxu0 0.0
    %4320 = vmatprep.subr.mxu0 0.0
    %4321 = vmatpush1.msra.mxu0 0.0
    %4322 = vmatprep.subr.mxu0 %v2561
    %4323 = vmatpush1.msra.mxu0 %v2560
    %4324 = vmatprep.subr.mxu0 %v2559
    %4325 = vmatpush1.msra.mxu0 %v2558
    %4326 = vmatprep.subr.mxu0 %v2557
    %4327 = vmatpush1.msra.mxu0 %v2556
    %4328 = vmatprep.subr.mxu0 %v2555
    %4329 = vmatpush1.msra.mxu0 %v2554
    %4330 = vmatprep.subr.mxu0 %v2553
    %4331 = vmatpush1.msra.mxu0 %v2552
    %4332 = vmatprep.subr.mxu0 %v2551
    %4333 = vmatpush1.msra.mxu0 %v2550
    %4334 = vmatprep.subr.mxu0 %v2549
    %4335 = vmatpush1.msra.mxu0 %v2548
    %4336 = vmatprep.subr.mxu0 %v2547
    %4337 = vmatpush1.msra.mxu0 %v2546
    %4338 = vmatprep.subr.mxu0 0.0
    %4339 = vmatpush2.msra.mxu0 0.0
    %4340 = vmatprep.subr.mxu0 0.0
    %4341 = vmatpush2.msra.mxu0 0.0
    %4342 = vmatprep.subr.mxu0 0.0
    %4343 = vmatpush2.msra.mxu0 0.0
    %4344 = vmatprep.subr.mxu0 0.0
    %4345 = vmatpush2.msra.mxu0 0.0
    %4346 = vmatprep.subr.mxu0 0.0
    %4347 = vmatpush2.msra.mxu0 0.0
    %4348 = vmatprep.subr.mxu0 0.0
    %4349 = vmatpush2.msra.mxu0 0.0
    %4350 = vmatprep.subr.mxu0 0.0
    %4351 = vmatpush2.msra.mxu0 0.0
    %4352 = vmatprep.subr.mxu0 0.0
    %4353 = vmatpush2.msra.mxu0 0.0
    %4354 = vmatprep.subr.mxu0 0.0
    %4355 = vmatpush2.msra.mxu0 0.0
    %4356 = vmatprep.subr.mxu0 0.0
    %4357 = vmatpush2.msra.mxu0 0.0
    %4358 = vmatprep.subr.mxu0 0.0
    %4359 = vmatpush2.msra.mxu0 0.0
    %4360 = vmatprep.subr.mxu0 0.0
    %4361 = vmatpush2.msra.mxu0 0.0
    %4362 = vmatprep.subr.mxu0 0.0
    %4363 = vmatpush2.msra.mxu0 0.0
    %4364 = vmatprep.subr.mxu0 0.0
    %4365 = vmatpush2.msra.mxu0 0.0
    %4366 = vmatprep.subr.mxu0 0.0
    %4367 = vmatpush2.msra.mxu0 0.0
    %4368 = vmatprep.subr.mxu0 0.0
    %4369 = vmatpush2.msra.mxu0 0.0
    %4370 = vmatprep.mubr.f32.mxu0 0.0
    %4371 = vmatmul.mubr.f32.gmra.mxu0 %v4229
    %v4372 = vpop.f32.mrf.mxu0
    %v4373 = vadd.f32 0.0, %v4372
    %v4374 = vpop.f32.mrf.mxu0
    %v4375 = vadd.f32 0.0, %v4374
    %4376 = vdwg.mxu0
    %v4377 = vadd.f32 %v4304, %v4373
    %v4378 = vadd.f32 %v4305, %v4375
    %v4380 = vlaneseq
    %v4381 = vshrl.u32 %v4380, 7
    %v4382 = vsub.s32 0, %v4381
    %v4383 = vrot.slane %v2562, %v4382
    %v4384 = vlaneseq
    %v4385 = vshrl.u32 %v4384, 7
    %v4386 = vsub.s32 1, %v4385
    %v4387 = vrot.slane %v2562, %v4386
    %v4390 = vadd.f32 %v4377, %v4383
    %v4391 = vadd.f32 %v4378, %v4387
    %v4392 = vmul.f32 %v4390, 0.5
    %v4393 = vtanh.pop %v4392
    %v4394 = vadd.f32 %v4393, 1.0
    %v4395 = vmul.f32 %v4394, 0.5
    %v4396 = vtanh.pop %v4391
    %v4397 = vmul.f32 %v4391, 0.5
    %v4398 = vtanh.pop %v4397
    %v4399 = vadd.f32 %v4398, 1.0
    %v4400 = vmul.f32 %v4399, 0.5
    %v4401 = vmul.f32 %v4395, 0.0
    %v4402 = vmul.f32 %v4395, %v4396
    %4404 = vrot.lane.b32.xlu0 %v4402, 64
    %v4405 = vpop.permute.xlu0 %4404
    %v4407 = vadd.f32 %v4401, %v4405
    %v4408 = vtanh.pop %v4407
    %v4409 = vmul.f32 %v4400, %v4408
    %v4411 = vlaneseq
    %v4412 = vshrl.u32 %v4411, 7
    %v4413 = vsub.s32 0, %v4412
    %v4414 = vrot.slane %v2592, %v4413
    %4417 = vrot.lane.b32.xlu0 %v4409, 64
    %v4418 = vpop.permute.xlu0 %4417
    %v4419 = vsel %vm2098, %v4418, 0
    %4421 = vmatprep.subr.mxu0 0.0
    %4422 = vmatpush1.msra.mxu0 0.0
    %4423 = vmatprep.subr.mxu0 0.0
    %4424 = vmatpush1.msra.mxu0 0.0
    %4425 = vmatprep.subr.mxu0 0.0
    %4426 = vmatpush1.msra.mxu0 0.0
    %4427 = vmatprep.subr.mxu0 0.0
    %4428 = vmatpush1.msra.mxu0 0.0
    %4429 = vmatprep.subr.mxu0 0.0
    %4430 = vmatpush1.msra.mxu0 0.0
    %4431 = vmatprep.subr.mxu0 0.0
    %4432 = vmatpush1.msra.mxu0 0.0
    %4433 = vmatprep.subr.mxu0 0.0
    %4434 = vmatpush1.msra.mxu0 0.0
    %4435 = vmatprep.subr.mxu0 0.0
    %4436 = vmatpush1.msra.mxu0 0.0
    %4437 = vmatprep.subr.mxu0 0.0
    %4438 = vmatpush1.msra.mxu0 %v2591
    %4439 = vmatprep.subr.mxu0 0.0
    %4440 = vmatpush1.msra.mxu0 %v2590
    %4441 = vmatprep.subr.mxu0 0.0
    %4442 = vmatpush1.msra.mxu0 %v2589
    %4443 = vmatprep.subr.mxu0 0.0
    %4444 = vmatpush1.msra.mxu0 %v2588
    %4445 = vmatprep.subr.mxu0 0.0
    %4446 = vmatpush1.msra.mxu0 %v2587
    %4447 = vmatprep.subr.mxu0 0.0
    %4448 = vmatpush1.msra.mxu0 %v2586
    %4449 = vmatprep.subr.mxu0 0.0
    %4450 = vmatpush1.msra.mxu0 %v2585
    %4451 = vmatprep.subr.mxu0 0.0
    %4452 = vmatpush1.msra.mxu0 %v2584
    %4453 = vmatprep.subr.mxu0 0.0
    %4454 = vmatpush2.msra.mxu0 0.0
    %4455 = vmatprep.subr.mxu0 0.0
    %4456 = vmatpush2.msra.mxu0 0.0
    %4457 = vmatprep.subr.mxu0 0.0
    %4458 = vmatpush2.msra.mxu0 0.0
    %4459 = vmatprep.subr.mxu0 0.0
    %4460 = vmatpush2.msra.mxu0 0.0
    %4461 = vmatprep.subr.mxu0 0.0
    %4462 = vmatpush2.msra.mxu0 0.0
    %4463 = vmatprep.subr.mxu0 0.0
    %4464 = vmatpush2.msra.mxu0 0.0
    %4465 = vmatprep.subr.mxu0 0.0
    %4466 = vmatpush2.msra.mxu0 0.0
    %4467 = vmatprep.subr.mxu0 0.0
    %4468 = vmatpush2.msra.mxu0 0.0
    %4469 = vmatprep.subr.mxu0 0.0
    %4470 = vmatpush2.msra.mxu0 0.0
    %4471 = vmatprep.subr.mxu0 0.0
    %4472 = vmatpush2.msra.mxu0 0.0
    %4473 = vmatprep.subr.mxu0 0.0
    %4474 = vmatpush2.msra.mxu0 0.0
    %4475 = vmatprep.subr.mxu0 0.0
    %4476 = vmatpush2.msra.mxu0 0.0
    %4477 = vmatprep.subr.mxu0 0.0
    %4478 = vmatpush2.msra.mxu0 0.0
    %4479 = vmatprep.subr.mxu0 0.0
    %4480 = vmatpush2.msra.mxu0 0.0
    %4481 = vmatprep.subr.mxu0 0.0
    %4482 = vmatpush2.msra.mxu0 0.0
    %4483 = vmatprep.subr.mxu0 0.0
    %4484 = vmatpush2.msra.mxu0 0.0
    %4485 = vmatprep.mubr.f32.mxu0 0.0
    %4486 = vmatmul.mubr.f32.gmra.mxu0 %v4419
    %v4487 = vpop.f32.mrf.mxu0
    %v4488 = vadd.f32 %v4414, %v4487
    %v4489 = vpop.f32.mrf.mxu0
    %4490 = vdwg.mxu0
    %v4491 = vmul.f32 %v4488, 0.5
    %v4492 = vmul.f32 %v4491, 1.442695
    %v4493 = vpow.pop %v4492
    %v4494 = vld [vmem:[%s11] sm:$0x3]
    %4496 = vrot.lane.b32.xlu0 %v4494, 16
    %v4497 = vpop.permute.xlu0 %4496
    %v4499 = vmul.f32 %v4493, %v4497
    %4501 = vrot.lane.b32.xlu0 %v4499, 112
    %v4502 = vpop.permute.xlu0 %4501
    %v4504 = vadd.f32 %v4488, %v4502
    %v4505 = vmul.f32 %v4488, %v4488
    %v4506 = vmul.f32 %v4488, 1.442695
    %v4507 = vpow.pop %v4506
    %4509 = vrot.lane.b32.xlu0 %v4507, 112
    %v4510 = vpop.permute.xlu0 %4509
    %v4512 = vadd.f32 %v4505, %v4510
    %4514 = vrot.lane.b32.xlu0 %v4488, 112
    %v4515 = vpop.permute.xlu0 %4514
    %v4517 = vsub.f32 %v4512, %v4515
    %v4518 = vsub.f32 %v4517, 1.0
    %vm4519 = vcmask 123904
    %v4520 = vsel %vm4519, %v4518, 0.0
    %4521 = vadd.xlane.f32.xlu0 %v4520
    %v4522 = vpop.xlane.xlu0 %4521
    %v4523 = vmul.f32 %v4522, 0.5
    %v4524 = vadd.f32 %v4523, 0.0
    %vm4525 = vcmask 130048
    %v4527 = vsel %vm4525, %v4504, 0
    %4529 = vmatprep.subr.mxu0 0.0
    %4530 = vmatpush1.msra.mxu0 0.0
    %4531 = vmatprep.subr.mxu0 0.0
    %4532 = vmatpush1.msra.mxu0 0.0
    %4533 = vmatprep.subr.mxu0 0.0
    %4534 = vmatpush1.msra.mxu0 0.0
    %4535 = vmatprep.subr.mxu0 0.0
    %4536 = vmatpush1.msra.mxu0 0.0
    %4537 = vmatprep.subr.mxu0 0.0
    %4538 = vmatpush1.msra.mxu0 0.0
    %4539 = vmatprep.subr.mxu0 0.0
    %4540 = vmatpush1.msra.mxu0 0.0
    %4541 = vmatprep.subr.mxu0 0.0
    %4542 = vmatpush1.msra.mxu0 0.0
    %4543 = vmatprep.subr.mxu0 0.0
    %4544 = vmatpush1.msra.mxu0 0.0
    %4545 = vmatprep.subr.mxu0 0.0
    %4546 = vmatpush1.msra.mxu0 0.0
    %4547 = vmatprep.subr.mxu0 0.0
    %4548 = vmatpush1.msra.mxu0 0.0
    %4549 = vmatprep.subr.mxu0 0.0
    %4550 = vmatpush1.msra.mxu0 0.0
    %4551 = vmatprep.subr.mxu0 0.0
    %4552 = vmatpush1.msra.mxu0 0.0
    %4553 = vmatprep.subr.mxu0 0.0
    %4554 = vmatpush1.msra.mxu0 0.0
    %4555 = vmatprep.subr.mxu0 0.0
    %4556 = vmatpush1.msra.mxu0 0.0
    %4557 = vmatprep.subr.mxu0 %v2566
    %4558 = vmatpush1.msra.mxu0 %v2565
    %4559 = vmatprep.subr.mxu0 %v2564
    %4560 = vmatpush1.msra.mxu0 %v2563
    %4561 = vmatprep.subr.mxu0 0.0
    %4562 = vmatpush2.msra.mxu0 0.0
    %4563 = vmatprep.subr.mxu0 0.0
    %4564 = vmatpush2.msra.mxu0 0.0
    %4565 = vmatprep.subr.mxu0 0.0
    %4566 = vmatpush2.msra.mxu0 0.0
    %4567 = vmatprep.subr.mxu0 0.0
    %4568 = vmatpush2.msra.mxu0 0.0
    %4569 = vmatprep.subr.mxu0 0.0
    %4570 = vmatpush2.msra.mxu0 0.0
    %4571 = vmatprep.subr.mxu0 0.0
    %4572 = vmatpush2.msra.mxu0 0.0
    %4573 = vmatprep.subr.mxu0 0.0
    %4574 = vmatpush2.msra.mxu0 0.0
    %4575 = vmatprep.subr.mxu0 0.0
    %4576 = vmatpush2.msra.mxu0 0.0
    %4577 = vmatprep.subr.mxu0 0.0
    %4578 = vmatpush2.msra.mxu0 0.0
    %4579 = vmatprep.subr.mxu0 0.0
    %4580 = vmatpush2.msra.mxu0 0.0
    %4581 = vmatprep.subr.mxu0 0.0
    %4582 = vmatpush2.msra.mxu0 0.0
    %4583 = vmatprep.subr.mxu0 0.0
    %4584 = vmatpush2.msra.mxu0 0.0
    %4585 = vmatprep.subr.mxu0 0.0
    %4586 = vmatpush2.msra.mxu0 0.0
    %4587 = vmatprep.subr.mxu0 0.0
    %4588 = vmatpush2.msra.mxu0 0.0
    %4589 = vmatprep.subr.mxu0 0.0
    %4590 = vmatpush2.msra.mxu0 0.0
    %4591 = vmatprep.subr.mxu0 0.0
    %4592 = vmatpush2.msra.mxu0 0.0
    %4593 = vmatprep.mubr.f32.mxu0 0.0
    %4594 = vmatmul.mubr.f32.gmra.mxu0 %v4527
    %v4595 = vpop.f32.mrf.mxu0
    %v4596 = vadd.f32 %v3578, %v4595
    %v4597 = vpop.f32.mrf.mxu0
    %v4598 = vadd.f32 %v3580, %v4597
    %4599 = vdwg.mxu0
    %4600 = vmatprep.subr.mxu0 0.0
    %4601 = vmatpush1.msra.mxu0 0.0
    %4602 = vmatprep.subr.mxu0 0.0
    %4603 = vmatpush1.msra.mxu0 0.0
    %4604 = vmatprep.subr.mxu0 0.0
    %4605 = vmatpush1.msra.mxu0 0.0
    %4606 = vmatprep.subr.mxu0 0.0
    %4607 = vmatpush1.msra.mxu0 0.0
    %4608 = vmatprep.subr.mxu0 0.0
    %4609 = vmatpush1.msra.mxu0 0.0
    %4610 = vmatprep.subr.mxu0 0.0
    %4611 = vmatpush1.msra.mxu0 0.0
    %4612 = vmatprep.subr.mxu0 0.0
    %4613 = vmatpush1.msra.mxu0 0.0
    %4614 = vmatprep.subr.mxu0 0.0
    %4615 = vmatpush1.msra.mxu0 0.0
    %4616 = vmatprep.subr.mxu0 %v2582
    %4617 = vmatpush1.msra.mxu0 %v2581
    %4618 = vmatprep.subr.mxu0 %v2580
    %4619 = vmatpush1.msra.mxu0 %v2579
    %4620 = vmatprep.subr.mxu0 %v2578
    %4621 = vmatpush1.msra.mxu0 %v2577
    %4622 = vmatprep.subr.mxu0 %v2576
    %4623 = vmatpush1.msra.mxu0 %v2575
    %4624 = vmatprep.subr.mxu0 %v2574
    %4625 = vmatpush1.msra.mxu0 %v2573
    %4626 = vmatprep.subr.mxu0 %v2572
    %4627 = vmatpush1.msra.mxu0 %v2571
    %4628 = vmatprep.subr.mxu0 %v2570
    %4629 = vmatpush1.msra.mxu0 %v2569
    %4630 = vmatprep.subr.mxu0 %v2568
    %4631 = vmatpush1.msra.mxu0 %v2567
    %4632 = vmatprep.subr.mxu0 0.0
    %4633 = vmatpush2.msra.mxu0 0.0
    %4634 = vmatprep.subr.mxu0 0.0
    %4635 = vmatpush2.msra.mxu0 0.0
    %4636 = vmatprep.subr.mxu0 0.0
    %4637 = vmatpush2.msra.mxu0 0.0
    %4638 = vmatprep.subr.mxu0 0.0
    %4639 = vmatpush2.msra.mxu0 0.0
    %4640 = vmatprep.subr.mxu0 0.0
    %4641 = vmatpush2.msra.mxu0 0.0
    %4642 = vmatprep.subr.mxu0 0.0
    %4643 = vmatpush2.msra.mxu0 0.0
    %4644 = vmatprep.subr.mxu0 0.0
    %4645 = vmatpush2.msra.mxu0 0.0
    %4646 = vmatprep.subr.mxu0 0.0
    %4647 = vmatpush2.msra.mxu0 0.0
    %4648 = vmatprep.subr.mxu0 0.0
    %4649 = vmatpush2.msra.mxu0 0.0
    %4650 = vmatprep.subr.mxu0 0.0
    %4651 = vmatpush2.msra.mxu0 0.0
    %4652 = vmatprep.subr.mxu0 0.0
    %4653 = vmatpush2.msra.mxu0 0.0
    %4654 = vmatprep.subr.mxu0 0.0
    %4655 = vmatpush2.msra.mxu0 0.0
    %4656 = vmatprep.subr.mxu0 0.0
    %4657 = vmatpush2.msra.mxu0 0.0
    %4658 = vmatprep.subr.mxu0 0.0
    %4659 = vmatpush2.msra.mxu0 0.0
    %4660 = vmatprep.subr.mxu0 0.0
    %4661 = vmatpush2.msra.mxu0 0.0
    %4662 = vmatprep.subr.mxu0 0.0
    %4663 = vmatpush2.msra.mxu0 0.0
    %4664 = vmatprep.mubr.f32.mxu0 0.0
    %4665 = vmatmul.mubr.f32.gmra.mxu0 %v4229
    %v4666 = vpop.f32.mrf.mxu0
    %v4667 = vadd.f32 0.0, %v4666
    %v4668 = vpop.f32.mrf.mxu0
    %v4669 = vadd.f32 0.0, %v4668
    %4670 = vdwg.mxu0
    %v4671 = vadd.f32 %v4596, %v4667
    %v4672 = vadd.f32 %v4598, %v4669
    %v4674 = vlaneseq
    %v4675 = vshrl.u32 %v4674, 7
    %v4676 = vsub.s32 0, %v4675
    %v4677 = vrot.slane %v2583, %v4676
    %v4678 = vlaneseq
    %v4679 = vshrl.u32 %v4678, 7
    %v4680 = vsub.s32 1, %v4679
    %v4681 = vrot.slane %v2583, %v4680
    %v4684 = vadd.f32 %v4671, %v4677
    %v4685 = vadd.f32 %v4672, %v4681
    %v4686 = vmul.f32 %v4684, 0.5
    %v4687 = vtanh.pop %v4686
    %v4688 = vadd.f32 %v4687, 1.0
    %v4689 = vmul.f32 %v4688, 0.5
    %v4690 = vtanh.pop %v4685
    %v4691 = vmul.f32 %v4685, 0.5
    %v4692 = vtanh.pop %v4691
    %v4693 = vadd.f32 %v4692, 1.0
    %v4694 = vmul.f32 %v4693, 0.5
    %v4695 = vmul.f32 %v4689, 0.0
    %v4696 = vmul.f32 %v4689, %v4690
    %4698 = vrot.lane.b32.xlu0 %v4696, 64
    %v4699 = vpop.permute.xlu0 %4698
    %v4701 = vadd.f32 %v4695, %v4699
    %v4702 = vtanh.pop %v4701
    %v4703 = vmul.f32 %v4694, %v4702
    %v4704 = vpack.c.bf16 %v4703, %v4703
    %v4706 = vlaneseq
    %v4707 = vshrl.u32 %v4706, 7
    %v4708 = vsub.s32 0, %v4707
    %v4709 = vrot.slane %v2617, %v4708
    %v4710 = vlaneseq
    %v4711 = vshrl.u32 %v4710, 7
    %v4712 = vsub.s32 1, %v4711
    %v4713 = vrot.slane %v2617, %v4712
    %v4714 = vlaneseq
    %v4715 = vshrl.u32 %v4714, 7
    %v4716 = vsub.s32 2, %v4715
    %v4717 = vrot.slane %v2617, %v4716
    %v4718 = vlaneseq
    %v4719 = vshrl.u32 %v4718, 7
    %v4720 = vsub.s32 3, %v4719
    %v4721 = vrot.slane %v2617, %v4720
    %v4722 = vlaneseq
    %v4723 = vshrl.u32 %v4722, 7
    %v4724 = vsub.s32 4, %v4723
    %v4725 = vrot.slane %v2617, %v4724
    %v4726 = vlaneseq
    %v4727 = vshrl.u32 %v4726, 7
    %v4728 = vsub.s32 5, %v4727
    %v4729 = vrot.slane %v2617, %v4728
    %4737 = vrot.lane.b32.xlu0 %v4704, 64
    %v4738 = vpop.permute.xlu0 %4737
    %v4763 = vunpack.c.l.b16 %v2593
    %v4764 = vunpack.c.h.b16 %v2593
    %v4765 = vunpack.c.l.b16 %v2594
    %v4766 = vunpack.c.h.b16 %v2594
    %v4767 = vunpack.c.l.b16 %v2595
    %v4768 = vunpack.c.h.b16 %v2595
    %v4769 = vunpack.c.l.b16 %v2596
    %v4770 = vunpack.c.h.b16 %v2596
    %v4771 = vunpack.c.l.b16 %v2597
    %v4772 = vunpack.c.h.b16 %v2597
    %v4773 = vunpack.c.l.b16 %v2598
    %v4774 = vunpack.c.h.b16 %v2598
    %v4775 = vunpack.c.l.b16 %v2599
    %v4776 = vunpack.c.h.b16 %v2599
    %v4777 = vunpack.c.l.b16 %v2600
    %v4778 = vunpack.c.h.b16 %v2600
    %v4779 = vunpack.c.l.b16 %v2601
    %v4780 = vunpack.c.h.b16 %v2601
    %v4781 = vunpack.c.l.b16 %v2602
    %v4782 = vunpack.c.h.b16 %v2602
    %v4783 = vunpack.c.l.b16 %v2603
    %v4784 = vunpack.c.h.b16 %v2603
    %v4785 = vunpack.c.l.b16 %v2604
    %v4786 = vunpack.c.h.b16 %v2604
    %v4787 = vunpack.c.l.b16 %v2605
    %v4788 = vunpack.c.h.b16 %v2605
    %v4789 = vunpack.c.l.b16 %v2606
    %v4790 = vunpack.c.h.b16 %v2606
    %v4791 = vunpack.c.l.b16 %v2607
    %v4792 = vunpack.c.h.b16 %v2607
    %v4793 = vunpack.c.l.b16 %v2608
    %v4794 = vunpack.c.h.b16 %v2608
    %v4795 = vunpack.c.l.b16 %v2609
    %v4796 = vunpack.c.h.b16 %v2609
    %v4797 = vunpack.c.l.b16 %v2610
    %v4798 = vunpack.c.h.b16 %v2610
    %v4799 = vunpack.c.l.b16 %v2611
    %v4800 = vunpack.c.h.b16 %v2611
    %v4801 = vunpack.c.l.b16 %v2612
    %v4802 = vunpack.c.h.b16 %v2612
    %v4803 = vunpack.c.l.b16 %v2613
    %v4804 = vunpack.c.h.b16 %v2613
    %v4805 = vunpack.c.l.b16 %v2614
    %v4806 = vunpack.c.h.b16 %v2614
    %v4807 = vunpack.c.l.b16 %v2615
    %v4808 = vunpack.c.h.b16 %v2615
    %v4809 = vunpack.c.l.b16 %v2616
    %v4810 = vunpack.c.h.b16 %v2616
    %v4811 = vpack.c.b16 %v4769, %v4763
    %v4812 = vpack.c.b16 %v4770, %v4764
    %v4813 = vpack.c.b16 %v4771, %v4765
    %v4814 = vpack.c.b16 %v4772, %v4766
    %v4815 = vpack.c.b16 %v4773, %v4767
    %v4816 = vpack.c.b16 %v4774, %v4768
    %v4817 = vpack.c.b16 %v4781, %v4775
    %v4818 = vpack.c.b16 %v4782, %v4776
    %v4819 = vpack.c.b16 %v4783, %v4777
    %v4820 = vpack.c.b16 %v4784, %v4778
    %v4821 = vpack.c.b16 %v4785, %v4779
    %v4822 = vpack.c.b16 %v4786, %v4780
    %v4823 = vpack.c.b16 %v4793, %v4787
    %v4824 = vpack.c.b16 %v4794, %v4788
    %v4825 = vpack.c.b16 %v4795, %v4789
    %v4826 = vpack.c.b16 %v4796, %v4790
    %v4827 = vpack.c.b16 %v4797, %v4791
    %v4828 = vpack.c.b16 %v4798, %v4792
    %v4829 = vpack.c.b16 %v4805, %v4799
    %v4830 = vpack.c.b16 %v4806, %v4800
    %v4831 = vpack.c.b16 %v4807, %v4801
    %v4832 = vpack.c.b16 %v4808, %v4802
    %v4833 = vpack.c.b16 %v4809, %v4803
    %v4834 = vpack.c.b16 %v4810, %v4804
    %v4860 = vsel %vm2098, %v4738, 0
    %4862 = vmatprep.subr.bf16.mxu0 0
    %4863 = vmatpush1.bf16.msra.mxu0 0
    %4864 = vmatprep.subr.bf16.mxu0 0
    %4865 = vmatpush1.bf16.msra.mxu0 0
    %4866 = vmatprep.subr.bf16.mxu0 0
    %4867 = vmatpush1.bf16.msra.mxu0 0
    %4868 = vmatprep.subr.bf16.mxu0 0
    %4869 = vmatpush1.bf16.msra.mxu0 0
    %4870 = vmatprep.subr.bf16.mxu0 %v4830
    %4871 = vmatpush1.bf16.msra.mxu0 %v4829
    %4872 = vmatprep.subr.bf16.mxu0 %v4824
    %4873 = vmatpush1.bf16.msra.mxu0 %v4823
    %4874 = vmatprep.subr.bf16.mxu0 %v4818
    %4875 = vmatpush1.bf16.msra.mxu0 %v4817
    %4876 = vmatprep.subr.bf16.mxu0 %v4812
    %4877 = vmatpush1.bf16.msra.mxu0 %v4811
    %4878 = vmatprep.subr.bf16.mxu0 0
    %4879 = vmatpush2.bf16.msra.mxu0 0
    %4880 = vmatprep.subr.bf16.mxu0 0
    %4881 = vmatpush2.bf16.msra.mxu0 0
    %4882 = vmatprep.subr.bf16.mxu0 0
    %4883 = vmatpush2.bf16.msra.mxu0 0
    %4884 = vmatprep.subr.bf16.mxu0 0
    %4885 = vmatpush2.bf16.msra.mxu0 0
    %4886 = vmatprep.subr.bf16.mxu0 0
    %4887 = vmatpush2.bf16.msra.mxu0 0
    %4888 = vmatprep.subr.bf16.mxu0 0
    %4889 = vmatpush2.bf16.msra.mxu0 0
    %4890 = vmatprep.subr.bf16.mxu0 0
    %4891 = vmatpush2.bf16.msra.mxu0 0
    %4892 = vmatprep.subr.bf16.mxu0 0
    %4893 = vmatpush2.bf16.msra.mxu0 0
    %4894 = vmatprep.mubr.bf16.mxu0 0
    %4895 = vmatmul.mubr.bf16.gmra.mxu0 %v4860
    %v4896 = vpop.f32.mrf.mxu0
    %v4897 = vadd.f32 %v4709, %v4896
    %v4898 = vpop.f32.mrf.mxu0
    %v4899 = vadd.f32 %v4713, %v4898
    %v4900 = vpop.f32.mrf.mxu0
    %v4901 = vpop.f32.mrf.mxu0
    %4902 = vdwg.mxu0
    %4903 = vmatprep.subr.bf16.mxu0 0
    %4904 = vmatpush1.bf16.msra.mxu0 0
    %4905 = vmatprep.subr.bf16.mxu0 0
    %4906 = vmatpush1.bf16.msra.mxu0 0
    %4907 = vmatprep.subr.bf16.mxu0 0
    %4908 = vmatpush1.bf16.msra.mxu0 0
    %4909 = vmatprep.subr.bf16.mxu0 0
    %4910 = vmatpush1.bf16.msra.mxu0 0
    %4911 = vmatprep.subr.bf16.mxu0 %v4832
    %4912 = vmatpush1.bf16.msra.mxu0 %v4831
    %4913 = vmatprep.subr.bf16.mxu0 %v4826
    %4914 = vmatpush1.bf16.msra.mxu0 %v4825
    %4915 = vmatprep.subr.bf16.mxu0 %v4820
    %4916 = vmatpush1.bf16.msra.mxu0 %v4819
    %4917 = vmatprep.subr.bf16.mxu0 %v4814
    %4918 = vmatpush1.bf16.msra.mxu0 %v4813
    %4919 = vmatprep.subr.bf16.mxu0 0
    %4920 = vmatpush2.bf16.msra.mxu0 0
    %4921 = vmatprep.subr.bf16.mxu0 0
    %4922 = vmatpush2.bf16.msra.mxu0 0
    %4923 = vmatprep.subr.bf16.mxu0 0
    %4924 = vmatpush2.bf16.msra.mxu0 0
    %4925 = vmatprep.subr.bf16.mxu0 0
    %4926 = vmatpush2.bf16.msra.mxu0 0
    %4927 = vmatprep.subr.bf16.mxu0 0
    %4928 = vmatpush2.bf16.msra.mxu0 0
    %4929 = vmatprep.subr.bf16.mxu0 0
    %4930 = vmatpush2.bf16.msra.mxu0 0
    %4931 = vmatprep.subr.bf16.mxu0 0
    %4932 = vmatpush2.bf16.msra.mxu0 0
    %4933 = vmatprep.subr.bf16.mxu0 0
    %4934 = vmatpush2.bf16.msra.mxu0 0
    %4935 = vmatprep.mubr.bf16.mxu0 0
    %4936 = vmatmul.mubr.bf16.gmra.mxu0 %v4860
    %v4937 = vpop.f32.mrf.mxu0
    %v4938 = vadd.f32 %v4717, %v4937
    %v4939 = vpop.f32.mrf.mxu0
    %v4940 = vadd.f32 %v4721, %v4939
    %v4941 = vpop.f32.mrf.mxu0
    %v4942 = vpop.f32.mrf.mxu0
    %4943 = vdwg.mxu0
    %4944 = vmatprep.subr.bf16.mxu0 0
    %4945 = vmatpush1.bf16.msra.mxu0 0
    %4946 = vmatprep.subr.bf16.mxu0 0
    %4947 = vmatpush1.bf16.msra.mxu0 0
    %4948 = vmatprep.subr.bf16.mxu0 0
    %4949 = vmatpush1.bf16.msra.mxu0 0
    %4950 = vmatprep.subr.bf16.mxu0 0
    %4951 = vmatpush1.bf16.msra.mxu0 0
    %4952 = vmatprep.subr.bf16.mxu0 %v4834
    %4953 = vmatpush1.bf16.msra.mxu0 %v4833
    %4954 = vmatprep.subr.bf16.mxu0 %v4828
    %4955 = vmatpush1.bf16.msra.mxu0 %v4827
    %4956 = vmatprep.subr.bf16.mxu0 %v4822
    %4957 = vmatpush1.bf16.msra.mxu0 %v4821
    %4958 = vmatprep.subr.bf16.mxu0 %v4816
    %4959 = vmatpush1.bf16.msra.mxu0 %v4815
    %4960 = vmatprep.subr.bf16.mxu0 0
    %4961 = vmatpush2.bf16.msra.mxu0 0
    %4962 = vmatprep.subr.bf16.mxu0 0
    %4963 = vmatpush2.bf16.msra.mxu0 0
    %4964 = vmatprep.subr.bf16.mxu0 0
    %4965 = vmatpush2.bf16.msra.mxu0 0
    %4966 = vmatprep.subr.bf16.mxu0 0
    %4967 = vmatpush2.bf16.msra.mxu0 0
    %4968 = vmatprep.subr.bf16.mxu0 0
    %4969 = vmatpush2.bf16.msra.mxu0 0
    %4970 = vmatprep.subr.bf16.mxu0 0
    %4971 = vmatpush2.bf16.msra.mxu0 0
    %4972 = vmatprep.subr.bf16.mxu0 0
    %4973 = vmatpush2.bf16.msra.mxu0 0
    %4974 = vmatprep.subr.bf16.mxu0 0
    %4975 = vmatpush2.bf16.msra.mxu0 0
    %4976 = vmatprep.mubr.bf16.mxu0 0
    %4977 = vmatmul.mubr.bf16.gmra.mxu0 %v4860
    %v4978 = vpop.f32.mrf.mxu0
    %v4979 = vadd.f32 %v4725, %v4978
    %v4980 = vpop.f32.mrf.mxu0
    %v4981 = vadd.f32 %v4729, %v4980
    %v4982 = vpop.f32.mrf.mxu0
    %v4983 = vpop.f32.mrf.mxu0
    %4984 = vdwg.mxu0
    %v4985 = vmul.f32 %v4897, 0.5
    %v4986 = vmul.f32 %v4899, 0.5
    %v4987 = vmul.f32 %v4938, 0.5
    %v4988 = vmul.f32 %v4940, 0.5
    %v4989 = vmul.f32 %v4979, 0.5
    %v4990 = vmul.f32 %v4981, 0.5
    %v4991 = vtanh.pop %v4985
    %v4992 = vtanh.pop %v4986
    %v4993 = vtanh.pop %v4987
    %v4994 = vtanh.pop %v4988
    %v4995 = vtanh.pop %v4989
    %v4996 = vtanh.pop %v4990
    %v4997 = vadd.f32 %v4991, 1.0
    %v4998 = vadd.f32 %v4992, 1.0
    %v4999 = vadd.f32 %v4993, 1.0
    %v5000 = vadd.f32 %v4994, 1.0
    %v5001 = vadd.f32 %v4995, 1.0
    %v5002 = vadd.f32 %v4996, 1.0
    %v5003 = vmul.f32 %v4997, 0.5
    %v5004 = vmul.f32 %v4998, 0.5
    %v5005 = vmul.f32 %v4999, 0.5
    %v5006 = vmul.f32 %v5000, 0.5
    %v5007 = vmul.f32 %v5001, 0.5
    %v5008 = vmul.f32 %v5002, 0.5
    %v5015 = vcombine.low %v5003, %v5004
    %v5016 = vcombine.low %v5005, %v5006
    %v5018 = vunpack.c.l.s4 1983009808
    %v5019 = vunpack.c.0.s8 %v5018
    %v5020 = vlaneseq
    %v5021 = vshrl.u32 %v5020, 7
    %v5022 = vsub.s32 %v5019, %v5021
    %v5023 = vrot.slane %v5015, %v5022
    %v5025 = vunpack.c.l.s4 1983009808
    %v5026 = vunpack.c.0.s8 %v5025
    %v5027 = vlaneseq
    %v5028 = vshrl.u32 %v5027, 7
    %v5029 = vsub.s32 %v5026, %v5028
    %v5030 = vrot.slane %v5016, %v5029
    %v5031 = vcombine.low %v5023, %v5030
    %v5032 = vcombine.low %v5007, %v5008
    %v5034 = vunpack.c.l.s4 1983009808
    %v5035 = vunpack.c.0.s8 %v5034
    %v5036 = vlaneseq
    %v5037 = vshrl.u32 %v5036, 7
    %v5038 = vsub.s32 %v5035, %v5037
    %v5039 = vrot.slane %v5032, %v5038
    %v5042 = vsub.f32 %v2336, %v5031
    %v5043 = vsub.f32 %v2337, %v5039
    %v5046 = vcombine.high %v5042, %v5042
    %v5048 = vunpack.c.l.s4 1983009808
    %v5049 = vunpack.c.0.s8 %v5048
    %v5050 = vlaneseq
    %v5051 = vshrl.u32 %v5050, 7
    %v5052 = vsub.s32 %v5049, %v5051
    %v5053 = vrot.slane %v5042, %v5052
    %v5055 = vunpack.c.l.s4 1983009808
    %v5056 = vunpack.c.0.s8 %v5055
    %v5057 = vlaneseq
    %v5058 = vshrl.u32 %v5057, 7
    %v5059 = vsub.s32 %v5056, %v5058
    %v5060 = vrot.slane %v5046, %v5059
    %v5061 = vcombine.high %v5053, %v5053
    %v5062 = vcombine.high %v5060, %v5060
    %v5064 = vunpack.c.l.s4 1983009808
    %v5065 = vunpack.c.0.s8 %v5064
    %v5066 = vlaneseq
    %v5067 = vshrl.u32 %v5066, 7
    %v5068 = vsub.s32 %v5065, %v5067
    %v5069 = vrot.slane %v5043, %v5068
    %v5070 = vcombine.high %v5069, %v5069
    %v5077 = vpack.c.bf16 %v5053, %v5053
    %v5078 = vpack.c.bf16 %v5061, %v5061
    %v5079 = vpack.c.bf16 %v5060, %v5060
    %v5080 = vpack.c.bf16 %v5062, %v5062
    %v5081 = vpack.c.bf16 %v5069, %v5069
    %v5082 = vpack.c.bf16 %v5070, %v5070
    %5083 = vmatprep.subr.bf16.mxu0 %v3926
    %5084 = vmatpush1.bf16.msra.mxu0 %v3925
    %5085 = vmatprep.subr.bf16.mxu0 %v3924
    %5086 = vmatpush1.bf16.msra.mxu0 %v3923
    %5087 = vmatprep.subr.bf16.mxu0 %v3922
    %5088 = vmatpush1.bf16.msra.mxu0 %v3921
    %5089 = vmatprep.subr.bf16.mxu0 %v3920
    %5090 = vmatpush1.bf16.msra.mxu0 %v3919
    %5091 = vmatprep.subr.bf16.mxu0 %v3918
    %5092 = vmatpush1.bf16.msra.mxu0 %v3917
    %5093 = vmatprep.subr.bf16.mxu0 %v3916
    %5094 = vmatpush1.bf16.msra.mxu0 %v3915
    %5095 = vmatprep.subr.bf16.mxu0 %v3914
    %5096 = vmatpush1.bf16.msra.mxu0 %v3913
    %5097 = vmatprep.subr.bf16.mxu0 %v3912
    %5098 = vmatpush1.bf16.msra.mxu0 %v3911
    %5099 = vmatprep.subr.bf16.mxu0 %v3942
    %5100 = vmatpush2.bf16.msra.mxu0 %v3941
    %5101 = vmatprep.subr.bf16.mxu0 %v3940
    %5102 = vmatpush2.bf16.msra.mxu0 %v3939
    %5103 = vmatprep.subr.bf16.mxu0 %v3938
    %5104 = vmatpush2.bf16.msra.mxu0 %v3937
    %5105 = vmatprep.subr.bf16.mxu0 %v3936
    %5106 = vmatpush2.bf16.msra.mxu0 %v3935
    %5107 = vmatprep.subr.bf16.mxu0 %v3934
    %5108 = vmatpush2.bf16.msra.mxu0 %v3933
    %5109 = vmatprep.subr.bf16.mxu0 %v3932
    %5110 = vmatpush2.bf16.msra.mxu0 %v3931
    %5111 = vmatprep.subr.bf16.mxu0 %v3930
    %5112 = vmatpush2.bf16.msra.mxu0 %v3929
    %5113 = vmatprep.subr.bf16.mxu0 %v3928
    %5114 = vmatpush2.bf16.msra.mxu0 %v3927
    %5115 = vmatprep.mubr.bf16.mxu0 %v5078
    %5116 = vmatmul.mubr.bf16.gmra.mxu0 %v5077
    %v5117 = vpop.f32.mrf.mxu0
    %v5118 = vadd.f32 0.0, %v5117
    %v5119 = vpop.f32.mrf.mxu0
    %v5120 = vadd.f32 0.0, %v5119
    %v5121 = vpop.f32.mrf.mxu0
    %v5122 = vpop.f32.mrf.mxu0
    %5123 = vdwg.mxu0
    %5124 = vmatprep.subr.bf16.mxu0 %v3958
    %5125 = vmatpush1.bf16.msra.mxu0 %v3957
    %5126 = vmatprep.subr.bf16.mxu0 %v3956
    %5127 = vmatpush1.bf16.msra.mxu0 %v3955
    %5128 = vmatprep.subr.bf16.mxu0 %v3954
    %5129 = vmatpush1.bf16.msra.mxu0 %v3953
    %5130 = vmatprep.subr.bf16.mxu0 %v3952
    %5131 = vmatpush1.bf16.msra.mxu0 %v3951
    %5132 = vmatprep.subr.bf16.mxu0 %v3950
    %5133 = vmatpush1.bf16.msra.mxu0 %v3949
    %5134 = vmatprep.subr.bf16.mxu0 %v3948
    %5135 = vmatpush1.bf16.msra.mxu0 %v3947
    %5136 = vmatprep.subr.bf16.mxu0 %v3946
    %5137 = vmatpush1.bf16.msra.mxu0 %v3945
    %5138 = vmatprep.subr.bf16.mxu0 %v3944
    %5139 = vmatpush1.bf16.msra.mxu0 %v3943
    %5140 = vmatprep.subr.bf16.mxu0 %v3974
    %5141 = vmatpush2.bf16.msra.mxu0 %v3973
    %5142 = vmatprep.subr.bf16.mxu0 %v3972
    %5143 = vmatpush2.bf16.msra.mxu0 %v3971
    %5144 = vmatprep.subr.bf16.mxu0 %v3970
    %5145 = vmatpush2.bf16.msra.mxu0 %v3969
    %5146 = vmatprep.subr.bf16.mxu0 %v3968
    %5147 = vmatpush2.bf16.msra.mxu0 %v3967
    %5148 = vmatprep.subr.bf16.mxu0 %v3966
    %5149 = vmatpush2.bf16.msra.mxu0 %v3965
    %5150 = vmatprep.subr.bf16.mxu0 %v3964
    %5151 = vmatpush2.bf16.msra.mxu0 %v3963
    %5152 = vmatprep.subr.bf16.mxu0 %v3962
    %5153 = vmatpush2.bf16.msra.mxu0 %v3961
    %5154 = vmatprep.subr.bf16.mxu0 %v3960
    %5155 = vmatpush2.bf16.msra.mxu0 %v3959
    %5156 = vmatprep.mubr.bf16.mxu0 %v5080
    %5157 = vmatmul.mubr.bf16.gmra.mxu0 %v5079
    %v5158 = vpop.f32.mrf.mxu0
    %v5159 = vadd.f32 %v5118, %v5158
    %v5160 = vpop.f32.mrf.mxu0
    %v5161 = vadd.f32 %v5120, %v5160
    %v5162 = vpop.f32.mrf.mxu0
    %v5163 = vpop.f32.mrf.mxu0
    %5164 = vdwg.mxu0
    %5165 = vmatprep.subr.bf16.mxu0 %v3990
    %5166 = vmatpush1.bf16.msra.mxu0 %v3989
    %5167 = vmatprep.subr.bf16.mxu0 %v3988
    %5168 = vmatpush1.bf16.msra.mxu0 %v3987
    %5169 = vmatprep.subr.bf16.mxu0 %v3986
    %5170 = vmatpush1.bf16.msra.mxu0 %v3985
    %5171 = vmatprep.subr.bf16.mxu0 %v3984
    %5172 = vmatpush1.bf16.msra.mxu0 %v3983
    %5173 = vmatprep.subr.bf16.mxu0 %v3982
    %5174 = vmatpush1.bf16.msra.mxu0 %v3981
    %5175 = vmatprep.subr.bf16.mxu0 %v3980
    %5176 = vmatpush1.bf16.msra.mxu0 %v3979
    %5177 = vmatprep.subr.bf16.mxu0 %v3978
    %5178 = vmatpush1.bf16.msra.mxu0 %v3977
    %5179 = vmatprep.subr.bf16.mxu0 %v3976
    %5180 = vmatpush1.bf16.msra.mxu0 %v3975
    %5181 = vmatprep.subr.bf16.mxu0 %v4006
    %5182 = vmatpush2.bf16.msra.mxu0 %v4005
    %5183 = vmatprep.subr.bf16.mxu0 %v4004
    %5184 = vmatpush2.bf16.msra.mxu0 %v4003
    %5185 = vmatprep.subr.bf16.mxu0 %v4002
    %5186 = vmatpush2.bf16.msra.mxu0 %v4001
    %5187 = vmatprep.subr.bf16.mxu0 %v4000
    %5188 = vmatpush2.bf16.msra.mxu0 %v3999
    %5189 = vmatprep.subr.bf16.mxu0 %v3998
    %5190 = vmatpush2.bf16.msra.mxu0 %v3997
    %5191 = vmatprep.subr.bf16.mxu0 %v3996
    %5192 = vmatpush2.bf16.msra.mxu0 %v3995
    %5193 = vmatprep.subr.bf16.mxu0 %v3994
    %5194 = vmatpush2.bf16.msra.mxu0 %v3993
    %5195 = vmatprep.subr.bf16.mxu0 %v3992
    %5196 = vmatpush2.bf16.msra.mxu0 %v3991
    %5197 = vmatprep.mubr.bf16.mxu0 %v5082
    %5198 = vmatmul.mubr.bf16.gmra.mxu0 %v5081
    %v5199 = vpop.f32.mrf.mxu0
    %v5200 = vadd.f32 %v5159, %v5199
    %v5201 = vpop.f32.mrf.mxu0
    %v5202 = vadd.f32 %v5161, %v5201
    %v5203 = vpop.f32.mrf.mxu0
    %v5204 = vpop.f32.mrf.mxu0
    %5205 = vdwg.mxu0
    %v5206 = vadd.f32 %v3254, %v5200
    %v5207 = vadd.f32 %v3256, %v5202
    %5209 = vrot.lane.b32.xlu0 %v4703, 64
    %v5210 = vpop.permute.xlu0 %5209
    %v5211 = vsel %vm2098, %v5210, 0
    %5213 = vmatprep.subr.mxu0 0.0
    %5214 = vmatpush1.msra.mxu0 0.0
    %5215 = vmatprep.subr.mxu0 0.0
    %5216 = vmatpush1.msra.mxu0 0.0
    %5217 = vmatprep.subr.mxu0 0.0
    %5218 = vmatpush1.msra.mxu0 0.0
    %5219 = vmatprep.subr.mxu0 0.0
    %5220 = vmatpush1.msra.mxu0 0.0
    %5221 = vmatprep.subr.mxu0 0.0
    %5222 = vmatpush1.msra.mxu0 0.0
    %5223 = vmatprep.subr.mxu0 0.0
    %5224 = vmatpush1.msra.mxu0 0.0
    %5225 = vmatprep.subr.mxu0 0.0
    %5226 = vmatpush1.msra.mxu0 0.0
    %5227 = vmatprep.subr.mxu0 0.0
    %5228 = vmatpush1.msra.mxu0 0.0
    %5229 = vmatprep.subr.mxu0 %v2545
    %5230 = vmatpush1.msra.mxu0 %v2544
    %5231 = vmatprep.subr.mxu0 %v2543
    %5232 = vmatpush1.msra.mxu0 %v2542
    %5233 = vmatprep.subr.mxu0 %v2541
    %5234 = vmatpush1.msra.mxu0 %v2540
    %5235 = vmatprep.subr.mxu0 %v2539
    %5236 = vmatpush1.msra.mxu0 %v2538
    %5237 = vmatprep.subr.mxu0 %v2537
    %5238 = vmatpush1.msra.mxu0 %v2536
    %5239 = vmatprep.subr.mxu0 %v2535
    %5240 = vmatpush1.msra.mxu0 %v2534
    %5241 = vmatprep.subr.mxu0 %v2533
    %5242 = vmatpush1.msra.mxu0 %v2532
    %5243 = vmatprep.subr.mxu0 %v2531
    %5244 = vmatpush1.msra.mxu0 %v2530
    %5245 = vmatprep.subr.mxu0 0.0
    %5246 = vmatpush2.msra.mxu0 0.0
    %5247 = vmatprep.subr.mxu0 0.0
    %5248 = vmatpush2.msra.mxu0 0.0
    %5249 = vmatprep.subr.mxu0 0.0
    %5250 = vmatpush2.msra.mxu0 0.0
    %5251 = vmatprep.subr.mxu0 0.0
    %5252 = vmatpush2.msra.mxu0 0.0
    %5253 = vmatprep.subr.mxu0 0.0
    %5254 = vmatpush2.msra.mxu0 0.0
    %5255 = vmatprep.subr.mxu0 0.0
    %5256 = vmatpush2.msra.mxu0 0.0
    %5257 = vmatprep.subr.mxu0 0.0
    %5258 = vmatpush2.msra.mxu0 0.0
    %5259 = vmatprep.subr.mxu0 0.0
    %5260 = vmatpush2.msra.mxu0 0.0
    %5261 = vmatprep.subr.mxu0 0.0
    %5262 = vmatpush2.msra.mxu0 0.0
    %5263 = vmatprep.subr.mxu0 0.0
    %5264 = vmatpush2.msra.mxu0 0.0
    %5265 = vmatprep.subr.mxu0 0.0
    %5266 = vmatpush2.msra.mxu0 0.0
    %5267 = vmatprep.subr.mxu0 0.0
    %5268 = vmatpush2.msra.mxu0 0.0
    %5269 = vmatprep.subr.mxu0 0.0
    %5270 = vmatpush2.msra.mxu0 0.0
    %5271 = vmatprep.subr.mxu0 0.0
    %5272 = vmatpush2.msra.mxu0 0.0
    %5273 = vmatprep.subr.mxu0 0.0
    %5274 = vmatpush2.msra.mxu0 0.0
    %5275 = vmatprep.subr.mxu0 0.0
    %5276 = vmatpush2.msra.mxu0 0.0
    %5277 = vmatprep.mubr.f32.mxu0 0.0
    %5278 = vmatmul.mubr.f32.gmra.mxu0 %v5211
    %v5279 = vpop.f32.mrf.mxu0
    %v5280 = vadd.f32 0.0, %v5279
    %v5281 = vpop.f32.mrf.mxu0
    %v5282 = vadd.f32 0.0, %v5281
    %5283 = vdwg.mxu0
    %v5284 = vadd.f32 %v5206, %v5280
    %v5285 = vadd.f32 %v5207, %v5282
    %v5286 = vadd.f32 %v5284, %v3420
    %v5287 = vadd.f32 %v5285, %v3422
    %5288 = vmatprep.subr.mxu0 0.0
    %5289 = vmatpush1.msra.mxu0 0.0
    %5290 = vmatprep.subr.mxu0 0.0
    %5291 = vmatpush1.msra.mxu0 0.0
    %5292 = vmatprep.subr.mxu0 0.0
    %5293 = vmatpush1.msra.mxu0 0.0
    %5294 = vmatprep.subr.mxu0 0.0
    %5295 = vmatpush1.msra.mxu0 0.0
    %5296 = vmatprep.subr.mxu0 0.0
    %5297 = vmatpush1.msra.mxu0 0.0
    %5298 = vmatprep.subr.mxu0 0.0
    %5299 = vmatpush1.msra.mxu0 0.0
    %5300 = vmatprep.subr.mxu0 0.0
    %5301 = vmatpush1.msra.mxu0 0.0
    %5302 = vmatprep.subr.mxu0 0.0
    %5303 = vmatpush1.msra.mxu0 0.0
    %5304 = vmatprep.subr.mxu0 %v2561
    %5305 = vmatpush1.msra.mxu0 %v2560
    %5306 = vmatprep.subr.mxu0 %v2559
    %5307 = vmatpush1.msra.mxu0 %v2558
    %5308 = vmatprep.subr.mxu0 %v2557
    %5309 = vmatpush1.msra.mxu0 %v2556
    %5310 = vmatprep.subr.mxu0 %v2555
    %5311 = vmatpush1.msra.mxu0 %v2554
    %5312 = vmatprep.subr.mxu0 %v2553
    %5313 = vmatpush1.msra.mxu0 %v2552
    %5314 = vmatprep.subr.mxu0 %v2551
    %5315 = vmatpush1.msra.mxu0 %v2550
    %5316 = vmatprep.subr.mxu0 %v2549
    %5317 = vmatpush1.msra.mxu0 %v2548
    %5318 = vmatprep.subr.mxu0 %v2547
    %5319 = vmatpush1.msra.mxu0 %v2546
    %5320 = vmatprep.subr.mxu0 0.0
    %5321 = vmatpush2.msra.mxu0 0.0
    %5322 = vmatprep.subr.mxu0 0.0
    %5323 = vmatpush2.msra.mxu0 0.0
    %5324 = vmatprep.subr.mxu0 0.0
    %5325 = vmatpush2.msra.mxu0 0.0
    %5326 = vmatprep.subr.mxu0 0.0
    %5327 = vmatpush2.msra.mxu0 0.0
    %5328 = vmatprep.subr.mxu0 0.0
    %5329 = vmatpush2.msra.mxu0 0.0
    %5330 = vmatprep.subr.mxu0 0.0
    %5331 = vmatpush2.msra.mxu0 0.0
    %5332 = vmatprep.subr.mxu0 0.0
    %5333 = vmatpush2.msra.mxu0 0.0
    %5334 = vmatprep.subr.mxu0 0.0
    %5335 = vmatpush2.msra.mxu0 0.0
    %5336 = vmatprep.subr.mxu0 0.0
    %5337 = vmatpush2.msra.mxu0 0.0
    %5338 = vmatprep.subr.mxu0 0.0
    %5339 = vmatpush2.msra.mxu0 0.0
    %5340 = vmatprep.subr.mxu0 0.0
    %5341 = vmatpush2.msra.mxu0 0.0
    %5342 = vmatprep.subr.mxu0 0.0
    %5343 = vmatpush2.msra.mxu0 0.0
    %5344 = vmatprep.subr.mxu0 0.0
    %5345 = vmatpush2.msra.mxu0 0.0
    %5346 = vmatprep.subr.mxu0 0.0
    %5347 = vmatpush2.msra.mxu0 0.0
    %5348 = vmatprep.subr.mxu0 0.0
    %5349 = vmatpush2.msra.mxu0 0.0
    %5350 = vmatprep.subr.mxu0 0.0
    %5351 = vmatpush2.msra.mxu0 0.0
    %5352 = vmatprep.mubr.f32.mxu0 0.0
    %5353 = vmatmul.mubr.f32.gmra.mxu0 %v4419
    %v5354 = vpop.f32.mrf.mxu0
    %v5355 = vadd.f32 0.0, %v5354
    %v5356 = vpop.f32.mrf.mxu0
    %v5357 = vadd.f32 0.0, %v5356
    %5358 = vdwg.mxu0
    %v5359 = vadd.f32 %v5286, %v5355
    %v5360 = vadd.f32 %v5287, %v5357
    %v5361 = vadd.f32 %v5359, %v4383
    %v5362 = vadd.f32 %v5360, %v4387
    %v5363 = vmul.f32 %v5361, 0.5
    %v5364 = vtanh.pop %v5363
    %v5365 = vadd.f32 %v5364, 1.0
    %v5366 = vmul.f32 %v5365, 0.5
    %v5367 = vtanh.pop %v5362
    %v5368 = vmul.f32 %v5362, 0.5
    %v5369 = vtanh.pop %v5368
    %v5370 = vadd.f32 %v5369, 1.0
    %v5371 = vmul.f32 %v5370, 0.5
    %v5372 = vmul.f32 %v5366, %v4407
    %v5373 = vmul.f32 %v5366, %v5367
    %5375 = vrot.lane.b32.xlu0 %v5373, 64
    %v5376 = vpop.permute.xlu0 %5375
    %v5378 = vadd.f32 %v5372, %v5376
    %v5379 = vtanh.pop %v5378
    %v5380 = vmul.f32 %v5371, %v5379
    %5382 = vrot.lane.b32.xlu0 %v5380, 64
    %v5383 = vpop.permute.xlu0 %5382
    %v5384 = vsel %vm2098, %v5383, 0
    %5386 = vmatprep.subr.mxu0 0.0
    %5387 = vmatpush1.msra.mxu0 0.0
    %5388 = vmatprep.subr.mxu0 0.0
    %5389 = vmatpush1.msra.mxu0 0.0
    %5390 = vmatprep.subr.mxu0 0.0
    %5391 = vmatpush1.msra.mxu0 0.0
    %5392 = vmatprep.subr.mxu0 0.0
    %5393 = vmatpush1.msra.mxu0 0.0
    %5394 = vmatprep.subr.mxu0 0.0
    %5395 = vmatpush1.msra.mxu0 0.0
    %5396 = vmatprep.subr.mxu0 0.0
    %5397 = vmatpush1.msra.mxu0 0.0
    %5398 = vmatprep.subr.mxu0 0.0
    %5399 = vmatpush1.msra.mxu0 0.0
    %5400 = vmatprep.subr.mxu0 0.0
    %5401 = vmatpush1.msra.mxu0 0.0
    %5402 = vmatprep.subr.mxu0 0.0
    %5403 = vmatpush1.msra.mxu0 %v2591
    %5404 = vmatprep.subr.mxu0 0.0
    %5405 = vmatpush1.msra.mxu0 %v2590
    %5406 = vmatprep.subr.mxu0 0.0
    %5407 = vmatpush1.msra.mxu0 %v2589
    %5408 = vmatprep.subr.mxu0 0.0
    %5409 = vmatpush1.msra.mxu0 %v2588
    %5410 = vmatprep.subr.mxu0 0.0
    %5411 = vmatpush1.msra.mxu0 %v2587
    %5412 = vmatprep.subr.mxu0 0.0
    %5413 = vmatpush1.msra.mxu0 %v2586
    %5414 = vmatprep.subr.mxu0 0.0
    %5415 = vmatpush1.msra.mxu0 %v2585
    %5416 = vmatprep.subr.mxu0 0.0
    %5417 = vmatpush1.msra.mxu0 %v2584
    %5418 = vmatprep.subr.mxu0 0.0
    %5419 = vmatpush2.msra.mxu0 0.0
    %5420 = vmatprep.subr.mxu0 0.0
    %5421 = vmatpush2.msra.mxu0 0.0
    %5422 = vmatprep.subr.mxu0 0.0
    %5423 = vmatpush2.msra.mxu0 0.0
    %5424 = vmatprep.subr.mxu0 0.0
    %5425 = vmatpush2.msra.mxu0 0.0
    %5426 = vmatprep.subr.mxu0 0.0
    %5427 = vmatpush2.msra.mxu0 0.0
    %5428 = vmatprep.subr.mxu0 0.0
    %5429 = vmatpush2.msra.mxu0 0.0
    %5430 = vmatprep.subr.mxu0 0.0
    %5431 = vmatpush2.msra.mxu0 0.0
    %5432 = vmatprep.subr.mxu0 0.0
    %5433 = vmatpush2.msra.mxu0 0.0
    %5434 = vmatprep.subr.mxu0 0.0
    %5435 = vmatpush2.msra.mxu0 0.0
    %5436 = vmatprep.subr.mxu0 0.0
    %5437 = vmatpush2.msra.mxu0 0.0
    %5438 = vmatprep.subr.mxu0 0.0
    %5439 = vmatpush2.msra.mxu0 0.0
    %5440 = vmatprep.subr.mxu0 0.0
    %5441 = vmatpush2.msra.mxu0 0.0
    %5442 = vmatprep.subr.mxu0 0.0
    %5443 = vmatpush2.msra.mxu0 0.0
    %5444 = vmatprep.subr.mxu0 0.0
    %5445 = vmatpush2.msra.mxu0 0.0
    %5446 = vmatprep.subr.mxu0 0.0
    %5447 = vmatpush2.msra.mxu0 0.0
    %5448 = vmatprep.subr.mxu0 0.0
    %5449 = vmatpush2.msra.mxu0 0.0
    %5450 = vmatprep.mubr.f32.mxu0 0.0
    %5451 = vmatmul.mubr.f32.gmra.mxu0 %v5384
    %v5452 = vpop.f32.mrf.mxu0
    %v5453 = vadd.f32 %v4414, %v5452
    %v5454 = vpop.f32.mrf.mxu0
    %5455 = vdwg.mxu0
    %v5456 = vmul.f32 %v5453, 0.5
    %v5457 = vmul.f32 %v5456, 1.442695
    %v5458 = vpow.pop %v5457
    %s5459 = scalar_lea.vmem %s11, 2
    %v5460 = vld [vmem:[%s5459] sm:$0x3]
    %5462 = vrot.lane.b32.xlu0 %v5460, 16
    %v5463 = vpop.permute.xlu0 %5462
    %v5465 = vmul.f32 %v5458, %v5463
    %5467 = vrot.lane.b32.xlu0 %v5465, 112
    %v5468 = vpop.permute.xlu0 %5467
    %v5470 = vadd.f32 %v5453, %v5468
    %v5471 = vmul.f32 %v5453, %v5453
    %v5472 = vmul.f32 %v5453, 1.442695
    %v5473 = vpow.pop %v5472
    %5475 = vrot.lane.b32.xlu0 %v5473, 112
    %v5476 = vpop.permute.xlu0 %5475
    %v5478 = vadd.f32 %v5471, %v5476
    %5480 = vrot.lane.b32.xlu0 %v5453, 112
    %v5481 = vpop.permute.xlu0 %5480
    %v5483 = vsub.f32 %v5478, %v5481
    %v5484 = vsub.f32 %v5483, 1.0
    %v5485 = vsel %vm4519, %v5484, 0.0
    %5486 = vadd.xlane.f32.xlu0 %v5485
    %v5487 = vpop.xlane.xlu0 %5486
    %v5488 = vmul.f32 %v5487, 0.5
    %v5489 = vadd.f32 %v4524, %v5488
    %v5491 = vsel %vm4525, %v5470, 0
    %5493 = vmatprep.subr.mxu0 0.0
    %5494 = vmatpush1.msra.mxu0 0.0
    %5495 = vmatprep.subr.mxu0 0.0
    %5496 = vmatpush1.msra.mxu0 0.0
    %5497 = vmatprep.subr.mxu0 0.0
    %5498 = vmatpush1.msra.mxu0 0.0
    %5499 = vmatprep.subr.mxu0 0.0
    %5500 = vmatpush1.msra.mxu0 0.0
    %5501 = vmatprep.subr.mxu0 0.0
    %5502 = vmatpush1.msra.mxu0 0.0
    %5503 = vmatprep.subr.mxu0 0.0
    %5504 = vmatpush1.msra.mxu0 0.0
    %5505 = vmatprep.subr.mxu0 0.0
    %5506 = vmatpush1.msra.mxu0 0.0
    %5507 = vmatprep.subr.mxu0 0.0
    %5508 = vmatpush1.msra.mxu0 0.0
    %5509 = vmatprep.subr.mxu0 0.0
    %5510 = vmatpush1.msra.mxu0 0.0
    %5511 = vmatprep.subr.mxu0 0.0
    %5512 = vmatpush1.msra.mxu0 0.0
    %5513 = vmatprep.subr.mxu0 0.0
    %5514 = vmatpush1.msra.mxu0 0.0
    %5515 = vmatprep.subr.mxu0 0.0
    %5516 = vmatpush1.msra.mxu0 0.0
    %5517 = vmatprep.subr.mxu0 0.0
    %5518 = vmatpush1.msra.mxu0 0.0
    %5519 = vmatprep.subr.mxu0 0.0
    %5520 = vmatpush1.msra.mxu0 0.0
    %5521 = vmatprep.subr.mxu0 %v2566
    %5522 = vmatpush1.msra.mxu0 %v2565
    %5523 = vmatprep.subr.mxu0 %v2564
    %5524 = vmatpush1.msra.mxu0 %v2563
    %5525 = vmatprep.subr.mxu0 0.0
    %5526 = vmatpush2.msra.mxu0 0.0
    %5527 = vmatprep.subr.mxu0 0.0
    %5528 = vmatpush2.msra.mxu0 0.0
    %5529 = vmatprep.subr.mxu0 0.0
    %5530 = vmatpush2.msra.mxu0 0.0
    %5531 = vmatprep.subr.mxu0 0.0
    %5532 = vmatpush2.msra.mxu0 0.0
    %5533 = vmatprep.subr.mxu0 0.0
    %5534 = vmatpush2.msra.mxu0 0.0
    %5535 = vmatprep.subr.mxu0 0.0
    %5536 = vmatpush2.msra.mxu0 0.0
    %5537 = vmatprep.subr.mxu0 0.0
    %5538 = vmatpush2.msra.mxu0 0.0
    %5539 = vmatprep.subr.mxu0 0.0
    %5540 = vmatpush2.msra.mxu0 0.0
    %5541 = vmatprep.subr.mxu0 0.0
    %5542 = vmatpush2.msra.mxu0 0.0
    %5543 = vmatprep.subr.mxu0 0.0
    %5544 = vmatpush2.msra.mxu0 0.0
    %5545 = vmatprep.subr.mxu0 0.0
    %5546 = vmatpush2.msra.mxu0 0.0
    %5547 = vmatprep.subr.mxu0 0.0
    %5548 = vmatpush2.msra.mxu0 0.0
    %5549 = vmatprep.subr.mxu0 0.0
    %5550 = vmatpush2.msra.mxu0 0.0
    %5551 = vmatprep.subr.mxu0 0.0
    %5552 = vmatpush2.msra.mxu0 0.0
    %5553 = vmatprep.subr.mxu0 0.0
    %5554 = vmatpush2.msra.mxu0 0.0
    %5555 = vmatprep.subr.mxu0 0.0
    %5556 = vmatpush2.msra.mxu0 0.0
    %5557 = vmatprep.mubr.f32.mxu0 0.0
    %5558 = vmatmul.mubr.f32.gmra.mxu0 %v5491
    %v5559 = vpop.f32.mrf.mxu0
    %v5560 = vadd.f32 %v3578, %v5559
    %v5561 = vpop.f32.mrf.mxu0
    %v5562 = vadd.f32 %v3580, %v5561
    %5563 = vdwg.mxu0
    %5564 = vmatprep.subr.mxu0 0.0
    %5565 = vmatpush1.msra.mxu0 0.0
    %5566 = vmatprep.subr.mxu0 0.0
    %5567 = vmatpush1.msra.mxu0 0.0
    %5568 = vmatprep.subr.mxu0 0.0
    %5569 = vmatpush1.msra.mxu0 0.0
    %5570 = vmatprep.subr.mxu0 0.0
    %5571 = vmatpush1.msra.mxu0 0.0
    %5572 = vmatprep.subr.mxu0 0.0
    %5573 = vmatpush1.msra.mxu0 0.0
    %5574 = vmatprep.subr.mxu0 0.0
    %5575 = vmatpush1.msra.mxu0 0.0
    %5576 = vmatprep.subr.mxu0 0.0
    %5577 = vmatpush1.msra.mxu0 0.0
    %5578 = vmatprep.subr.mxu0 0.0
    %5579 = vmatpush1.msra.mxu0 0.0
    %5580 = vmatprep.subr.mxu0 %v2582
    %5581 = vmatpush1.msra.mxu0 %v2581
    %5582 = vmatprep.subr.mxu0 %v2580
    %5583 = vmatpush1.msra.mxu0 %v2579
    %5584 = vmatprep.subr.mxu0 %v2578
    %5585 = vmatpush1.msra.mxu0 %v2577
    %5586 = vmatprep.subr.mxu0 %v2576
    %5587 = vmatpush1.msra.mxu0 %v2575
    %5588 = vmatprep.subr.mxu0 %v2574
    %5589 = vmatpush1.msra.mxu0 %v2573
    %5590 = vmatprep.subr.mxu0 %v2572
    %5591 = vmatpush1.msra.mxu0 %v2571
    %5592 = vmatprep.subr.mxu0 %v2570
    %5593 = vmatpush1.msra.mxu0 %v2569
    %5594 = vmatprep.subr.mxu0 %v2568
    %5595 = vmatpush1.msra.mxu0 %v2567
    %5596 = vmatprep.subr.mxu0 0.0
    %5597 = vmatpush2.msra.mxu0 0.0
    %5598 = vmatprep.subr.mxu0 0.0
    %5599 = vmatpush2.msra.mxu0 0.0
    %5600 = vmatprep.subr.mxu0 0.0
    %5601 = vmatpush2.msra.mxu0 0.0
    %5602 = vmatprep.subr.mxu0 0.0
    %5603 = vmatpush2.msra.mxu0 0.0
    %5604 = vmatprep.subr.mxu0 0.0
    %5605 = vmatpush2.msra.mxu0 0.0
    %5606 = vmatprep.subr.mxu0 0.0
    %5607 = vmatpush2.msra.mxu0 0.0
    %5608 = vmatprep.subr.mxu0 0.0
    %5609 = vmatpush2.msra.mxu0 0.0
    %5610 = vmatprep.subr.mxu0 0.0
    %5611 = vmatpush2.msra.mxu0 0.0
    %5612 = vmatprep.subr.mxu0 0.0
    %5613 = vmatpush2.msra.mxu0 0.0
    %5614 = vmatprep.subr.mxu0 0.0
    %5615 = vmatpush2.msra.mxu0 0.0
    %5616 = vmatprep.subr.mxu0 0.0
    %5617 = vmatpush2.msra.mxu0 0.0
    %5618 = vmatprep.subr.mxu0 0.0
    %5619 = vmatpush2.msra.mxu0 0.0
    %5620 = vmatprep.subr.mxu0 0.0
    %5621 = vmatpush2.msra.mxu0 0.0
    %5622 = vmatprep.subr.mxu0 0.0
    %5623 = vmatpush2.msra.mxu0 0.0
    %5624 = vmatprep.subr.mxu0 0.0
    %5625 = vmatpush2.msra.mxu0 0.0
    %5626 = vmatprep.subr.mxu0 0.0
    %5627 = vmatpush2.msra.mxu0 0.0
    %5628 = vmatprep.mubr.f32.mxu0 0.0
    %5629 = vmatmul.mubr.f32.gmra.mxu0 %v5211
    %v5630 = vpop.f32.mrf.mxu0
    %v5631 = vadd.f32 0.0, %v5630
    %v5632 = vpop.f32.mrf.mxu0
    %v5633 = vadd.f32 0.0, %v5632
    %5634 = vdwg.mxu0
    %v5635 = vadd.f32 %v5560, %v5631
    %v5636 = vadd.f32 %v5562, %v5633
    %v5637 = vadd.f32 %v5635, %v4677
    %v5638 = vadd.f32 %v5636, %v4681
    %v5639 = vmul.f32 %v5637, 0.5
    %v5640 = vtanh.pop %v5639
    %v5641 = vadd.f32 %v5640, 1.0
    %v5642 = vmul.f32 %v5641, 0.5
    %v5643 = vtanh.pop %v5638
    %v5644 = vmul.f32 %v5638, 0.5
    %v5645 = vtanh.pop %v5644
    %v5646 = vadd.f32 %v5645, 1.0
    %v5647 = vmul.f32 %v5646, 0.5
    %v5648 = vmul.f32 %v5642, %v4701
    %v5649 = vmul.f32 %v5642, %v5643
    %5651 = vrot.lane.b32.xlu0 %v5649, 64
    %v5652 = vpop.permute.xlu0 %5651
    %v5654 = vadd.f32 %v5648, %v5652
    %v5655 = vtanh.pop %v5654
    %v5656 = vmul.f32 %v5647, %v5655
    %v5657 = vpack.c.bf16 %v5656, %v5656
    %5659 = vrot.lane.b32.xlu0 %v5657, 64
    %v5660 = vpop.permute.xlu0 %5659
    %v5662 = vsel %vm2098, %v5660, 0
    %5664 = vmatprep.subr.bf16.mxu0 0
    %5665 = vmatpush1.bf16.msra.mxu0 0
    %5666 = vmatprep.subr.bf16.mxu0 0
    %5667 = vmatpush1.bf16.msra.mxu0 0
    %5668 = vmatprep.subr.bf16.mxu0 0
    %5669 = vmatpush1.bf16.msra.mxu0 0
    %5670 = vmatprep.subr.bf16.mxu0 0
    %5671 = vmatpush1.bf16.msra.mxu0 0
    %5672 = vmatprep.subr.bf16.mxu0 %v4830
    %5673 = vmatpush1.bf16.msra.mxu0 %v4829
    %5674 = vmatprep.subr.bf16.mxu0 %v4824
    %5675 = vmatpush1.bf16.msra.mxu0 %v4823
    %5676 = vmatprep.subr.bf16.mxu0 %v4818
    %5677 = vmatpush1.bf16.msra.mxu0 %v4817
    %5678 = vmatprep.subr.bf16.mxu0 %v4812
    %5679 = vmatpush1.bf16.msra.mxu0 %v4811
    %5680 = vmatprep.subr.bf16.mxu0 0
    %5681 = vmatpush2.bf16.msra.mxu0 0
    %5682 = vmatprep.subr.bf16.mxu0 0
    %5683 = vmatpush2.bf16.msra.mxu0 0
    %5684 = vmatprep.subr.bf16.mxu0 0
    %5685 = vmatpush2.bf16.msra.mxu0 0
    %5686 = vmatprep.subr.bf16.mxu0 0
    %5687 = vmatpush2.bf16.msra.mxu0 0
    %5688 = vmatprep.subr.bf16.mxu0 0
    %5689 = vmatpush2.bf16.msra.mxu0 0
    %5690 = vmatprep.subr.bf16.mxu0 0
    %5691 = vmatpush2.bf16.msra.mxu0 0
    %5692 = vmatprep.subr.bf16.mxu0 0
    %5693 = vmatpush2.bf16.msra.mxu0 0
    %5694 = vmatprep.subr.bf16.mxu0 0
    %5695 = vmatpush2.bf16.msra.mxu0 0
    %5696 = vmatprep.mubr.bf16.mxu0 0
    %5697 = vmatmul.mubr.bf16.gmra.mxu0 %v5662
    %v5698 = vpop.f32.mrf.mxu0
    %v5699 = vadd.f32 0.0, %v5698
    %v5700 = vpop.f32.mrf.mxu0
    %v5701 = vadd.f32 0.0, %v5700
    %v5702 = vpop.f32.mrf.mxu0
    %v5703 = vpop.f32.mrf.mxu0
    %5704 = vdwg.mxu0
    %5705 = vmatprep.subr.bf16.mxu0 0
    %5706 = vmatpush1.bf16.msra.mxu0 0
    %5707 = vmatprep.subr.bf16.mxu0 0
    %5708 = vmatpush1.bf16.msra.mxu0 0
    %5709 = vmatprep.subr.bf16.mxu0 0
    %5710 = vmatpush1.bf16.msra.mxu0 0
    %5711 = vmatprep.subr.bf16.mxu0 0
    %5712 = vmatpush1.bf16.msra.mxu0 0
    %5713 = vmatprep.subr.bf16.mxu0 %v4832
    %5714 = vmatpush1.bf16.msra.mxu0 %v4831
    %5715 = vmatprep.subr.bf16.mxu0 %v4826
    %5716 = vmatpush1.bf16.msra.mxu0 %v4825
    %5717 = vmatprep.subr.bf16.mxu0 %v4820
    %5718 = vmatpush1.bf16.msra.mxu0 %v4819
    %5719 = vmatprep.subr.bf16.mxu0 %v4814
    %5720 = vmatpush1.bf16.msra.mxu0 %v4813
    %5721 = vmatprep.subr.bf16.mxu0 0
    %5722 = vmatpush2.bf16.msra.mxu0 0
    %5723 = vmatprep.subr.bf16.mxu0 0
    %5724 = vmatpush2.bf16.msra.mxu0 0
    %5725 = vmatprep.subr.bf16.mxu0 0
    %5726 = vmatpush2.bf16.msra.mxu0 0
    %5727 = vmatprep.subr.bf16.mxu0 0
    %5728 = vmatpush2.bf16.msra.mxu0 0
    %5729 = vmatprep.subr.bf16.mxu0 0
    %5730 = vmatpush2.bf16.msra.mxu0 0
    %5731 = vmatprep.subr.bf16.mxu0 0
    %5732 = vmatpush2.bf16.msra.mxu0 0
    %5733 = vmatprep.subr.bf16.mxu0 0
    %5734 = vmatpush2.bf16.msra.mxu0 0
    %5735 = vmatprep.subr.bf16.mxu0 0
    %5736 = vmatpush2.bf16.msra.mxu0 0
    %5737 = vmatprep.mubr.bf16.mxu0 0
    %5738 = vmatmul.mubr.bf16.gmra.mxu0 %v5662
    %v5739 = vpop.f32.mrf.mxu0
    %v5740 = vadd.f32 0.0, %v5739
    %v5741 = vpop.f32.mrf.mxu0
    %v5742 = vadd.f32 0.0, %v5741
    %v5743 = vpop.f32.mrf.mxu0
    %v5744 = vpop.f32.mrf.mxu0
    %5745 = vdwg.mxu0
    %5746 = vmatprep.subr.bf16.mxu0 0
    %5747 = vmatpush1.bf16.msra.mxu0 0
    %5748 = vmatprep.subr.bf16.mxu0 0
    %5749 = vmatpush1.bf16.msra.mxu0 0
    %5750 = vmatprep.subr.bf16.mxu0 0
    %5751 = vmatpush1.bf16.msra.mxu0 0
    %5752 = vmatprep.subr.bf16.mxu0 0
    %5753 = vmatpush1.bf16.msra.mxu0 0
    %5754 = vmatprep.subr.bf16.mxu0 %v4834
    %5755 = vmatpush1.bf16.msra.mxu0 %v4833
    %5756 = vmatprep.subr.bf16.mxu0 %v4828
    %5757 = vmatpush1.bf16.msra.mxu0 %v4827
    %5758 = vmatprep.subr.bf16.mxu0 %v4822
    %5759 = vmatpush1.bf16.msra.mxu0 %v4821
    %5760 = vmatprep.subr.bf16.mxu0 %v4816
    %5761 = vmatpush1.bf16.msra.mxu0 %v4815
    %5762 = vmatprep.subr.bf16.mxu0 0
    %5763 = vmatpush2.bf16.msra.mxu0 0
    %5764 = vmatprep.subr.bf16.mxu0 0
    %5765 = vmatpush2.bf16.msra.mxu0 0
    %5766 = vmatprep.subr.bf16.mxu0 0
    %5767 = vmatpush2.bf16.msra.mxu0 0
    %5768 = vmatprep.subr.bf16.mxu0 0
    %5769 = vmatpush2.bf16.msra.mxu0 0
    %5770 = vmatprep.subr.bf16.mxu0 0
    %5771 = vmatpush2.bf16.msra.mxu0 0
    %5772 = vmatprep.subr.bf16.mxu0 0
    %5773 = vmatpush2.bf16.msra.mxu0 0
    %5774 = vmatprep.subr.bf16.mxu0 0
    %5775 = vmatpush2.bf16.msra.mxu0 0
    %5776 = vmatprep.subr.bf16.mxu0 0
    %5777 = vmatpush2.bf16.msra.mxu0 0
    %5778 = vmatprep.mubr.bf16.mxu0 0
    %5779 = vmatmul.mubr.bf16.gmra.mxu0 %v5662
    %v5780 = vpop.f32.mrf.mxu0
    %v5781 = vadd.f32 0.0, %v5780
    %v5782 = vpop.f32.mrf.mxu0
    %v5783 = vadd.f32 0.0, %v5782
    %v5784 = vpop.f32.mrf.mxu0
    %v5785 = vpop.f32.mrf.mxu0
    %5786 = vdwg.mxu0
    %v5787 = vadd.f32 %v4897, %v5699
    %v5788 = vadd.f32 %v4899, %v5701
    %v5789 = vadd.f32 %v4938, %v5740
    %v5790 = vadd.f32 %v4940, %v5742
    %v5791 = vadd.f32 %v4979, %v5781
    %v5792 = vadd.f32 %v4981, %v5783
    %v5793 = vadd.f32 %v5787, %v4709
    %v5794 = vadd.f32 %v5788, %v4713
    %v5795 = vadd.f32 %v5789, %v4717
    %v5796 = vadd.f32 %v5790, %v4721
    %v5797 = vadd.f32 %v5791, %v4725
    %v5798 = vadd.f32 %v5792, %v4729
    %v5799 = vmul.f32 %v5793, 0.5
    %v5800 = vmul.f32 %v5794, 0.5
    %v5801 = vmul.f32 %v5795, 0.5
    %v5802 = vmul.f32 %v5796, 0.5
    %v5803 = vmul.f32 %v5797, 0.5
    %v5804 = vmul.f32 %v5798, 0.5
    %v5805 = vtanh.pop %v5799
    %v5806 = vtanh.pop %v5800
    %v5807 = vtanh.pop %v5801
    %v5808 = vtanh.pop %v5802
    %v5809 = vtanh.pop %v5803
    %v5810 = vtanh.pop %v5804
    %v5811 = vadd.f32 %v5805, 1.0
    %v5812 = vadd.f32 %v5806, 1.0
    %v5813 = vadd.f32 %v5807, 1.0
    %v5814 = vadd.f32 %v5808, 1.0
    %v5815 = vadd.f32 %v5809, 1.0
    %v5816 = vadd.f32 %v5810, 1.0
    %v5817 = vmul.f32 %v5811, 0.5
    %v5818 = vmul.f32 %v5812, 0.5
    %v5819 = vmul.f32 %v5813, 0.5
    %v5820 = vmul.f32 %v5814, 0.5
    %v5821 = vmul.f32 %v5815, 0.5
    %v5822 = vmul.f32 %v5816, 0.5
    %v5829 = vcombine.low %v5817, %v5818
    %v5830 = vcombine.low %v5819, %v5820
    %v5832 = vunpack.c.l.s4 1983009808
    %v5833 = vunpack.c.0.s8 %v5832
    %v5834 = vlaneseq
    %v5835 = vshrl.u32 %v5834, 7
    %v5836 = vsub.s32 %v5833, %v5835
    %v5837 = vrot.slane %v5829, %v5836
    %v5839 = vunpack.c.l.s4 1983009808
    %v5840 = vunpack.c.0.s8 %v5839
    %v5841 = vlaneseq
    %v5842 = vshrl.u32 %v5841, 7
    %v5843 = vsub.s32 %v5840, %v5842
    %v5844 = vrot.slane %v5830, %v5843
    %v5845 = vcombine.low %v5837, %v5844
    %v5846 = vcombine.low %v5821, %v5822
    %v5848 = vunpack.c.l.s4 1983009808
    %v5849 = vunpack.c.0.s8 %v5848
    %v5850 = vlaneseq
    %v5851 = vshrl.u32 %v5850, 7
    %v5852 = vsub.s32 %v5849, %v5851
    %v5853 = vrot.slane %v5846, %v5852
    %v5856 = vsub.f32 %v2336, %v5845
    %v5857 = vsub.f32 %v2337, %v5853
    %v5860 = vcombine.high %v5856, %v5856
    %v5862 = vunpack.c.l.s4 1983009808
    %v5863 = vunpack.c.0.s8 %v5862
    %v5864 = vlaneseq
    %v5865 = vshrl.u32 %v5864, 7
    %v5866 = vsub.s32 %v5863, %v5865
    %v5867 = vrot.slane %v5856, %v5866
    %v5869 = vunpack.c.l.s4 1983009808
    %v5870 = vunpack.c.0.s8 %v5869
    %v5871 = vlaneseq
    %v5872 = vshrl.u32 %v5871, 7
    %v5873 = vsub.s32 %v5870, %v5872
    %v5874 = vrot.slane %v5860, %v5873
    %v5875 = vcombine.high %v5867, %v5867
    %v5876 = vcombine.high %v5874, %v5874
    %v5878 = vunpack.c.l.s4 1983009808
    %v5879 = vunpack.c.0.s8 %v5878
    %v5880 = vlaneseq
    %v5881 = vshrl.u32 %v5880, 7
    %v5882 = vsub.s32 %v5879, %v5881
    %v5883 = vrot.slane %v5857, %v5882
    %v5884 = vcombine.high %v5883, %v5883
    %v5891 = vpack.c.bf16 %v5867, %v5867
    %v5892 = vpack.c.bf16 %v5875, %v5875
    %v5893 = vpack.c.bf16 %v5874, %v5874
    %v5894 = vpack.c.bf16 %v5876, %v5876
    %v5895 = vpack.c.bf16 %v5883, %v5883
    %v5896 = vpack.c.bf16 %v5884, %v5884
    %5897 = vmatprep.subr.bf16.mxu0 %v3926
    %5898 = vmatpush1.bf16.msra.mxu0 %v3925
    %5899 = vmatprep.subr.bf16.mxu0 %v3924
    %5900 = vmatpush1.bf16.msra.mxu0 %v3923
    %5901 = vmatprep.subr.bf16.mxu0 %v3922
    %5902 = vmatpush1.bf16.msra.mxu0 %v3921
    %5903 = vmatprep.subr.bf16.mxu0 %v3920
    %5904 = vmatpush1.bf16.msra.mxu0 %v3919
    %5905 = vmatprep.subr.bf16.mxu0 %v3918
    %5906 = vmatpush1.bf16.msra.mxu0 %v3917
    %5907 = vmatprep.subr.bf16.mxu0 %v3916
    %5908 = vmatpush1.bf16.msra.mxu0 %v3915
    %5909 = vmatprep.subr.bf16.mxu0 %v3914
    %5910 = vmatpush1.bf16.msra.mxu0 %v3913
    %5911 = vmatprep.subr.bf16.mxu0 %v3912
    %5912 = vmatpush1.bf16.msra.mxu0 %v3911
    %5913 = vmatprep.subr.bf16.mxu0 %v3942
    %5914 = vmatpush2.bf16.msra.mxu0 %v3941
    %5915 = vmatprep.subr.bf16.mxu0 %v3940
    %5916 = vmatpush2.bf16.msra.mxu0 %v3939
    %5917 = vmatprep.subr.bf16.mxu0 %v3938
    %5918 = vmatpush2.bf16.msra.mxu0 %v3937
    %5919 = vmatprep.subr.bf16.mxu0 %v3936
    %5920 = vmatpush2.bf16.msra.mxu0 %v3935
    %5921 = vmatprep.subr.bf16.mxu0 %v3934
    %5922 = vmatpush2.bf16.msra.mxu0 %v3933
    %5923 = vmatprep.subr.bf16.mxu0 %v3932
    %5924 = vmatpush2.bf16.msra.mxu0 %v3931
    %5925 = vmatprep.subr.bf16.mxu0 %v3930
    %5926 = vmatpush2.bf16.msra.mxu0 %v3929
    %5927 = vmatprep.subr.bf16.mxu0 %v3928
    %5928 = vmatpush2.bf16.msra.mxu0 %v3927
    %5929 = vmatprep.mubr.bf16.mxu0 %v5892
    %5930 = vmatmul.mubr.bf16.gmra.mxu0 %v5891
    %v5931 = vpop.f32.mrf.mxu0
    %v5932 = vadd.f32 0.0, %v5931
    %v5933 = vpop.f32.mrf.mxu0
    %v5934 = vadd.f32 0.0, %v5933
    %v5935 = vpop.f32.mrf.mxu0
    %v5936 = vpop.f32.mrf.mxu0
    %5937 = vdwg.mxu0
    %5938 = vmatprep.subr.bf16.mxu0 %v3958
    %5939 = vmatpush1.bf16.msra.mxu0 %v3957
    %5940 = vmatprep.subr.bf16.mxu0 %v3956
    %5941 = vmatpush1.bf16.msra.mxu0 %v3955
    %5942 = vmatprep.subr.bf16.mxu0 %v3954
    %5943 = vmatpush1.bf16.msra.mxu0 %v3953
    %5944 = vmatprep.subr.bf16.mxu0 %v3952
    %5945 = vmatpush1.bf16.msra.mxu0 %v3951
    %5946 = vmatprep.subr.bf16.mxu0 %v3950
    %5947 = vmatpush1.bf16.msra.mxu0 %v3949
    %5948 = vmatprep.subr.bf16.mxu0 %v3948
    %5949 = vmatpush1.bf16.msra.mxu0 %v3947
    %5950 = vmatprep.subr.bf16.mxu0 %v3946
    %5951 = vmatpush1.bf16.msra.mxu0 %v3945
    %5952 = vmatprep.subr.bf16.mxu0 %v3944
    %5953 = vmatpush1.bf16.msra.mxu0 %v3943
    %5954 = vmatprep.subr.bf16.mxu0 %v3974
    %5955 = vmatpush2.bf16.msra.mxu0 %v3973
    %5956 = vmatprep.subr.bf16.mxu0 %v3972
    %5957 = vmatpush2.bf16.msra.mxu0 %v3971
    %5958 = vmatprep.subr.bf16.mxu0 %v3970
    %5959 = vmatpush2.bf16.msra.mxu0 %v3969
    %5960 = vmatprep.subr.bf16.mxu0 %v3968
    %5961 = vmatpush2.bf16.msra.mxu0 %v3967
    %5962 = vmatprep.subr.bf16.mxu0 %v3966
    %5963 = vmatpush2.bf16.msra.mxu0 %v3965
    %5964 = vmatprep.subr.bf16.mxu0 %v3964
    %5965 = vmatpush2.bf16.msra.mxu0 %v3963
    %5966 = vmatprep.subr.bf16.mxu0 %v3962
    %5967 = vmatpush2.bf16.msra.mxu0 %v3961
    %5968 = vmatprep.subr.bf16.mxu0 %v3960
    %5969 = vmatpush2.bf16.msra.mxu0 %v3959
    %5970 = vmatprep.mubr.bf16.mxu0 %v5894
    %5971 = vmatmul.mubr.bf16.gmra.mxu0 %v5893
    %v5972 = vpop.f32.mrf.mxu0
    %v5973 = vadd.f32 %v5932, %v5972
    %v5974 = vpop.f32.mrf.mxu0
    %v5975 = vadd.f32 %v5934, %v5974
    %v5976 = vpop.f32.mrf.mxu0
    %v5977 = vpop.f32.mrf.mxu0
    %5978 = vdwg.mxu0
    %5979 = vmatprep.subr.bf16.mxu0 %v3990
    %5980 = vmatpush1.bf16.msra.mxu0 %v3989
    %5981 = vmatprep.subr.bf16.mxu0 %v3988
    %5982 = vmatpush1.bf16.msra.mxu0 %v3987
    %5983 = vmatprep.subr.bf16.mxu0 %v3986
    %5984 = vmatpush1.bf16.msra.mxu0 %v3985
    %5985 = vmatprep.subr.bf16.mxu0 %v3984
    %5986 = vmatpush1.bf16.msra.mxu0 %v3983
    %5987 = vmatprep.subr.bf16.mxu0 %v3982
    %5988 = vmatpush1.bf16.msra.mxu0 %v3981
    %5989 = vmatprep.subr.bf16.mxu0 %v3980
    %5990 = vmatpush1.bf16.msra.mxu0 %v3979
    %5991 = vmatprep.subr.bf16.mxu0 %v3978
    %5992 = vmatpush1.bf16.msra.mxu0 %v3977
    %5993 = vmatprep.subr.bf16.mxu0 %v3976
    %5994 = vmatpush1.bf16.msra.mxu0 %v3975
    %5995 = vmatprep.subr.bf16.mxu0 %v4006
    %5996 = vmatpush2.bf16.msra.mxu0 %v4005
    %5997 = vmatprep.subr.bf16.mxu0 %v4004
    %5998 = vmatpush2.bf16.msra.mxu0 %v4003
    %5999 = vmatprep.subr.bf16.mxu0 %v4002
    %6000 = vmatpush2.bf16.msra.mxu0 %v4001
    %6001 = vmatprep.subr.bf16.mxu0 %v4000
    %6002 = vmatpush2.bf16.msra.mxu0 %v3999
    %6003 = vmatprep.subr.bf16.mxu0 %v3998
    %6004 = vmatpush2.bf16.msra.mxu0 %v3997
    %6005 = vmatprep.subr.bf16.mxu0 %v3996
    %6006 = vmatpush2.bf16.msra.mxu0 %v3995
    %6007 = vmatprep.subr.bf16.mxu0 %v3994
    %6008 = vmatpush2.bf16.msra.mxu0 %v3993
    %6009 = vmatprep.subr.bf16.mxu0 %v3992
    %6010 = vmatpush2.bf16.msra.mxu0 %v3991
    %6011 = vmatprep.mubr.bf16.mxu0 %v5896
    %6012 = vmatmul.mubr.bf16.gmra.mxu0 %v5895
    %v6013 = vpop.f32.mrf.mxu0
    %v6014 = vadd.f32 %v5973, %v6013
    %v6015 = vpop.f32.mrf.mxu0
    %v6016 = vadd.f32 %v5975, %v6015
    %v6017 = vpop.f32.mrf.mxu0
    %v6018 = vpop.f32.mrf.mxu0
    %6019 = vdwg.mxu0
    %v6020 = vadd.f32 %v3254, %v6014
    %v6021 = vadd.f32 %v3256, %v6016
    %6023 = vrot.lane.b32.xlu0 %v5656, 64
    %v6024 = vpop.permute.xlu0 %6023
    %v6025 = vsel %vm2098, %v6024, 0
    %6027 = vmatprep.subr.mxu0 0.0
    %6028 = vmatpush1.msra.mxu0 0.0
    %6029 = vmatprep.subr.mxu0 0.0
    %6030 = vmatpush1.msra.mxu0 0.0
    %6031 = vmatprep.subr.mxu0 0.0
    %6032 = vmatpush1.msra.mxu0 0.0
    %6033 = vmatprep.subr.mxu0 0.0
    %6034 = vmatpush1.msra.mxu0 0.0
    %6035 = vmatprep.subr.mxu0 0.0
    %6036 = vmatpush1.msra.mxu0 0.0
    %6037 = vmatprep.subr.mxu0 0.0
    %6038 = vmatpush1.msra.mxu0 0.0
    %6039 = vmatprep.subr.mxu0 0.0
    %6040 = vmatpush1.msra.mxu0 0.0
    %6041 = vmatprep.subr.mxu0 0.0
    %6042 = vmatpush1.msra.mxu0 0.0
    %6043 = vmatprep.subr.mxu0 %v2545
    %6044 = vmatpush1.msra.mxu0 %v2544
    %6045 = vmatprep.subr.mxu0 %v2543
    %6046 = vmatpush1.msra.mxu0 %v2542
    %6047 = vmatprep.subr.mxu0 %v2541
    %6048 = vmatpush1.msra.mxu0 %v2540
    %6049 = vmatprep.subr.mxu0 %v2539
    %6050 = vmatpush1.msra.mxu0 %v2538
    %6051 = vmatprep.subr.mxu0 %v2537
    %6052 = vmatpush1.msra.mxu0 %v2536
    %6053 = vmatprep.subr.mxu0 %v2535
    %6054 = vmatpush1.msra.mxu0 %v2534
    %6055 = vmatprep.subr.mxu0 %v2533
    %6056 = vmatpush1.msra.mxu0 %v2532
    %6057 = vmatprep.subr.mxu0 %v2531
    %6058 = vmatpush1.msra.mxu0 %v2530
    %6059 = vmatprep.subr.mxu0 0.0
    %6060 = vmatpush2.msra.mxu0 0.0
    %6061 = vmatprep.subr.mxu0 0.0
    %6062 = vmatpush2.msra.mxu0 0.0
    %6063 = vmatprep.subr.mxu0 0.0
    %6064 = vmatpush2.msra.mxu0 0.0
    %6065 = vmatprep.subr.mxu0 0.0
    %6066 = vmatpush2.msra.mxu0 0.0
    %6067 = vmatprep.subr.mxu0 0.0
    %6068 = vmatpush2.msra.mxu0 0.0
    %6069 = vmatprep.subr.mxu0 0.0
    %6070 = vmatpush2.msra.mxu0 0.0
    %6071 = vmatprep.subr.mxu0 0.0
    %6072 = vmatpush2.msra.mxu0 0.0
    %6073 = vmatprep.subr.mxu0 0.0
    %6074 = vmatpush2.msra.mxu0 0.0
    %6075 = vmatprep.subr.mxu0 0.0
    %6076 = vmatpush2.msra.mxu0 0.0
    %6077 = vmatprep.subr.mxu0 0.0
    %6078 = vmatpush2.msra.mxu0 0.0
    %6079 = vmatprep.subr.mxu0 0.0
    %6080 = vmatpush2.msra.mxu0 0.0
    %6081 = vmatprep.subr.mxu0 0.0
    %6082 = vmatpush2.msra.mxu0 0.0
    %6083 = vmatprep.subr.mxu0 0.0
    %6084 = vmatpush2.msra.mxu0 0.0
    %6085 = vmatprep.subr.mxu0 0.0
    %6086 = vmatpush2.msra.mxu0 0.0
    %6087 = vmatprep.subr.mxu0 0.0
    %6088 = vmatpush2.msra.mxu0 0.0
    %6089 = vmatprep.subr.mxu0 0.0
    %6090 = vmatpush2.msra.mxu0 0.0
    %6091 = vmatprep.mubr.f32.mxu0 0.0
    %6092 = vmatmul.mubr.f32.gmra.mxu0 %v6025
    %v6093 = vpop.f32.mrf.mxu0
    %v6094 = vadd.f32 0.0, %v6093
    %v6095 = vpop.f32.mrf.mxu0
    %v6096 = vadd.f32 0.0, %v6095
    %6097 = vdwg.mxu0
    %v6098 = vadd.f32 %v6020, %v6094
    %v6099 = vadd.f32 %v6021, %v6096
    %v6100 = vadd.f32 %v6098, %v3420
    %v6101 = vadd.f32 %v6099, %v3422
    %6102 = vmatprep.subr.mxu0 0.0
    %6103 = vmatpush1.msra.mxu0 0.0
    %6104 = vmatprep.subr.mxu0 0.0
    %6105 = vmatpush1.msra.mxu0 0.0
    %6106 = vmatprep.subr.mxu0 0.0
    %6107 = vmatpush1.msra.mxu0 0.0
    %6108 = vmatprep.subr.mxu0 0.0
    %6109 = vmatpush1.msra.mxu0 0.0
    %6110 = vmatprep.subr.mxu0 0.0
    %6111 = vmatpush1.msra.mxu0 0.0
    %6112 = vmatprep.subr.mxu0 0.0
    %6113 = vmatpush1.msra.mxu0 0.0
    %6114 = vmatprep.subr.mxu0 0.0
    %6115 = vmatpush1.msra.mxu0 0.0
    %6116 = vmatprep.subr.mxu0 0.0
    %6117 = vmatpush1.msra.mxu0 0.0
    %6118 = vmatprep.subr.mxu0 %v2561
    %6119 = vmatpush1.msra.mxu0 %v2560
    %6120 = vmatprep.subr.mxu0 %v2559
    %6121 = vmatpush1.msra.mxu0 %v2558
    %6122 = vmatprep.subr.mxu0 %v2557
    %6123 = vmatpush1.msra.mxu0 %v2556
    %6124 = vmatprep.subr.mxu0 %v2555
    %6125 = vmatpush1.msra.mxu0 %v2554
    %6126 = vmatprep.subr.mxu0 %v2553
    %6127 = vmatpush1.msra.mxu0 %v2552
    %6128 = vmatprep.subr.mxu0 %v2551
    %6129 = vmatpush1.msra.mxu0 %v2550
    %6130 = vmatprep.subr.mxu0 %v2549
    %6131 = vmatpush1.msra.mxu0 %v2548
    %6132 = vmatprep.subr.mxu0 %v2547
    %6133 = vmatpush1.msra.mxu0 %v2546
    %6134 = vmatprep.subr.mxu0 0.0
    %6135 = vmatpush2.msra.mxu0 0.0
    %6136 = vmatprep.subr.mxu0 0.0
    %6137 = vmatpush2.msra.mxu0 0.0
    %6138 = vmatprep.subr.mxu0 0.0
    %6139 = vmatpush2.msra.mxu0 0.0
    %6140 = vmatprep.subr.mxu0 0.0
    %6141 = vmatpush2.msra.mxu0 0.0
    %6142 = vmatprep.subr.mxu0 0.0
    %6143 = vmatpush2.msra.mxu0 0.0
    %6144 = vmatprep.subr.mxu0 0.0
    %6145 = vmatpush2.msra.mxu0 0.0
    %6146 = vmatprep.subr.mxu0 0.0
    %6147 = vmatpush2.msra.mxu0 0.0
    %6148 = vmatprep.subr.mxu0 0.0
    %6149 = vmatpush2.msra.mxu0 0.0
    %6150 = vmatprep.subr.mxu0 0.0
    %6151 = vmatpush2.msra.mxu0 0.0
    %6152 = vmatprep.subr.mxu0 0.0
    %6153 = vmatpush2.msra.mxu0 0.0
    %6154 = vmatprep.subr.mxu0 0.0
    %6155 = vmatpush2.msra.mxu0 0.0
    %6156 = vmatprep.subr.mxu0 0.0
    %6157 = vmatpush2.msra.mxu0 0.0
    %6158 = vmatprep.subr.mxu0 0.0
    %6159 = vmatpush2.msra.mxu0 0.0
    %6160 = vmatprep.subr.mxu0 0.0
    %6161 = vmatpush2.msra.mxu0 0.0
    %6162 = vmatprep.subr.mxu0 0.0
    %6163 = vmatpush2.msra.mxu0 0.0
    %6164 = vmatprep.subr.mxu0 0.0
    %6165 = vmatpush2.msra.mxu0 0.0
    %6166 = vmatprep.mubr.f32.mxu0 0.0
    %6167 = vmatmul.mubr.f32.gmra.mxu0 %v5384
    %v6168 = vpop.f32.mrf.mxu0
    %v6169 = vadd.f32 0.0, %v6168
    %v6170 = vpop.f32.mrf.mxu0
    %v6171 = vadd.f32 0.0, %v6170
    %6172 = vdwg.mxu0
    %v6173 = vadd.f32 %v6100, %v6169
    %v6174 = vadd.f32 %v6101, %v6171
    %v6175 = vadd.f32 %v6173, %v4383
    %v6176 = vadd.f32 %v6174, %v4387
    %v6177 = vmul.f32 %v6175, 0.5
    %v6178 = vtanh.pop %v6177
    %v6179 = vadd.f32 %v6178, 1.0
    %v6180 = vmul.f32 %v6179, 0.5
    %v6181 = vtanh.pop %v6176
    %v6182 = vmul.f32 %v6176, 0.5
    %v6183 = vtanh.pop %v6182
    %v6184 = vadd.f32 %v6183, 1.0
    %v6185 = vmul.f32 %v6184, 0.5
    %v6186 = vmul.f32 %v6180, %v5378
    %v6187 = vmul.f32 %v6180, %v6181
    %6189 = vrot.lane.b32.xlu0 %v6187, 64
    %v6190 = vpop.permute.xlu0 %6189
    %v6192 = vadd.f32 %v6186, %v6190
    %v6193 = vtanh.pop %v6192
    %v6194 = vmul.f32 %v6185, %v6193
    %6196 = vrot.lane.b32.xlu0 %v6194, 64
    %v6197 = vpop.permute.xlu0 %6196
    %v6198 = vsel %vm2098, %v6197, 0
    %6200 = vmatprep.subr.mxu0 0.0
    %6201 = vmatpush1.msra.mxu0 0.0
    %6202 = vmatprep.subr.mxu0 0.0
    %6203 = vmatpush1.msra.mxu0 0.0
    %6204 = vmatprep.subr.mxu0 0.0
    %6205 = vmatpush1.msra.mxu0 0.0
    %6206 = vmatprep.subr.mxu0 0.0
    %6207 = vmatpush1.msra.mxu0 0.0
    %6208 = vmatprep.subr.mxu0 0.0
    %6209 = vmatpush1.msra.mxu0 0.0
    %6210 = vmatprep.subr.mxu0 0.0
    %6211 = vmatpush1.msra.mxu0 0.0
    %6212 = vmatprep.subr.mxu0 0.0
    %6213 = vmatpush1.msra.mxu0 0.0
    %6214 = vmatprep.subr.mxu0 0.0
    %6215 = vmatpush1.msra.mxu0 0.0
    %6216 = vmatprep.subr.mxu0 0.0
    %6217 = vmatpush1.msra.mxu0 %v2591
    %6218 = vmatprep.subr.mxu0 0.0
    %6219 = vmatpush1.msra.mxu0 %v2590
    %6220 = vmatprep.subr.mxu0 0.0
    %6221 = vmatpush1.msra.mxu0 %v2589
    %6222 = vmatprep.subr.mxu0 0.0
    %6223 = vmatpush1.msra.mxu0 %v2588
    %6224 = vmatprep.subr.mxu0 0.0
    %6225 = vmatpush1.msra.mxu0 %v2587
    %6226 = vmatprep.subr.mxu0 0.0
    %6227 = vmatpush1.msra.mxu0 %v2586
    %6228 = vmatprep.subr.mxu0 0.0
    %6229 = vmatpush1.msra.mxu0 %v2585
    %6230 = vmatprep.subr.mxu0 0.0
    %6231 = vmatpush1.msra.mxu0 %v2584
    %6232 = vmatprep.subr.mxu0 0.0
    %6233 = vmatpush2.msra.mxu0 0.0
    %6234 = vmatprep.subr.mxu0 0.0
    %6235 = vmatpush2.msra.mxu0 0.0
    %6236 = vmatprep.subr.mxu0 0.0
    %6237 = vmatpush2.msra.mxu0 0.0
    %6238 = vmatprep.subr.mxu0 0.0
    %6239 = vmatpush2.msra.mxu0 0.0
    %6240 = vmatprep.subr.mxu0 0.0
    %6241 = vmatpush2.msra.mxu0 0.0
    %6242 = vmatprep.subr.mxu0 0.0
    %6243 = vmatpush2.msra.mxu0 0.0
    %6244 = vmatprep.subr.mxu0 0.0
    %6245 = vmatpush2.msra.mxu0 0.0
    %6246 = vmatprep.subr.mxu0 0.0
    %6247 = vmatpush2.msra.mxu0 0.0
    %6248 = vmatprep.subr.mxu0 0.0
    %6249 = vmatpush2.msra.mxu0 0.0
    %6250 = vmatprep.subr.mxu0 0.0
    %6251 = vmatpush2.msra.mxu0 0.0
    %6252 = vmatprep.subr.mxu0 0.0
    %6253 = vmatpush2.msra.mxu0 0.0
    %6254 = vmatprep.subr.mxu0 0.0
    %6255 = vmatpush2.msra.mxu0 0.0
    %6256 = vmatprep.subr.mxu0 0.0
    %6257 = vmatpush2.msra.mxu0 0.0
    %6258 = vmatprep.subr.mxu0 0.0
    %6259 = vmatpush2.msra.mxu0 0.0
    %6260 = vmatprep.subr.mxu0 0.0
    %6261 = vmatpush2.msra.mxu0 0.0
    %6262 = vmatprep.subr.mxu0 0.0
    %6263 = vmatpush2.msra.mxu0 0.0
    %6264 = vmatprep.mubr.f32.mxu0 0.0
    %6265 = vmatmul.mubr.f32.gmra.mxu0 %v6198
    %v6266 = vpop.f32.mrf.mxu0
    %v6267 = vadd.f32 %v4414, %v6266
    %v6268 = vpop.f32.mrf.mxu0
    %6269 = vdwg.mxu0
    %v6270 = vmul.f32 %v6267, 0.5
    %v6271 = vmul.f32 %v6270, 1.442695
    %v6272 = vpow.pop %v6271
    %s6273 = scalar_lea.vmem %s11, 4
    %v6274 = vld [vmem:[%s6273] sm:$0x3]
    %6276 = vrot.lane.b32.xlu0 %v6274, 16
    %v6277 = vpop.permute.xlu0 %6276
    %v6279 = vmul.f32 %v6272, %v6277
    %6281 = vrot.lane.b32.xlu0 %v6279, 112
    %v6282 = vpop.permute.xlu0 %6281
    %v6284 = vadd.f32 %v6267, %v6282
    %v6285 = vmul.f32 %v6267, %v6267
    %v6286 = vmul.f32 %v6267, 1.442695
    %v6287 = vpow.pop %v6286
    %6289 = vrot.lane.b32.xlu0 %v6287, 112
    %v6290 = vpop.permute.xlu0 %6289
    %v6292 = vadd.f32 %v6285, %v6290
    %6294 = vrot.lane.b32.xlu0 %v6267, 112
    %v6295 = vpop.permute.xlu0 %6294
    %v6297 = vsub.f32 %v6292, %v6295
    %v6298 = vsub.f32 %v6297, 1.0
    %v6299 = vsel %vm4519, %v6298, 0.0
    %6300 = vadd.xlane.f32.xlu0 %v6299
    %v6301 = vpop.xlane.xlu0 %6300
    %v6302 = vmul.f32 %v6301, 0.5
    %v6303 = vadd.f32 %v5489, %v6302
    %v6305 = vsel %vm4525, %v6284, 0
    %6307 = vmatprep.subr.mxu0 0.0
    %6308 = vmatpush1.msra.mxu0 0.0
    %6309 = vmatprep.subr.mxu0 0.0
    %6310 = vmatpush1.msra.mxu0 0.0
    %6311 = vmatprep.subr.mxu0 0.0
    %6312 = vmatpush1.msra.mxu0 0.0
    %6313 = vmatprep.subr.mxu0 0.0
    %6314 = vmatpush1.msra.mxu0 0.0
    %6315 = vmatprep.subr.mxu0 0.0
    %6316 = vmatpush1.msra.mxu0 0.0
    %6317 = vmatprep.subr.mxu0 0.0
    %6318 = vmatpush1.msra.mxu0 0.0
    %6319 = vmatprep.subr.mxu0 0.0
    %6320 = vmatpush1.msra.mxu0 0.0
    %6321 = vmatprep.subr.mxu0 0.0
    %6322 = vmatpush1.msra.mxu0 0.0
    %6323 = vmatprep.subr.mxu0 0.0
    %6324 = vmatpush1.msra.mxu0 0.0
    %6325 = vmatprep.subr.mxu0 0.0
    %6326 = vmatpush1.msra.mxu0 0.0
    %6327 = vmatprep.subr.mxu0 0.0
    %6328 = vmatpush1.msra.mxu0 0.0
    %6329 = vmatprep.subr.mxu0 0.0
    %6330 = vmatpush1.msra.mxu0 0.0
    %6331 = vmatprep.subr.mxu0 0.0
    %6332 = vmatpush1.msra.mxu0 0.0
    %6333 = vmatprep.subr.mxu0 0.0
    %6334 = vmatpush1.msra.mxu0 0.0
    %6335 = vmatprep.subr.mxu0 %v2566
    %6336 = vmatpush1.msra.mxu0 %v2565
    %6337 = vmatprep.subr.mxu0 %v2564
    %6338 = vmatpush1.msra.mxu0 %v2563
    %6339 = vmatprep.subr.mxu0 0.0
    %6340 = vmatpush2.msra.mxu0 0.0
    %6341 = vmatprep.subr.mxu0 0.0
    %6342 = vmatpush2.msra.mxu0 0.0
    %6343 = vmatprep.subr.mxu0 0.0
    %6344 = vmatpush2.msra.mxu0 0.0
    %6345 = vmatprep.subr.mxu0 0.0
    %6346 = vmatpush2.msra.mxu0 0.0
    %6347 = vmatprep.subr.mxu0 0.0
    %6348 = vmatpush2.msra.mxu0 0.0
    %6349 = vmatprep.subr.mxu0 0.0
    %6350 = vmatpush2.msra.mxu0 0.0
    %6351 = vmatprep.subr.mxu0 0.0
    %6352 = vmatpush2.msra.mxu0 0.0
    %6353 = vmatprep.subr.mxu0 0.0
    %6354 = vmatpush2.msra.mxu0 0.0
    %6355 = vmatprep.subr.mxu0 0.0
    %6356 = vmatpush2.msra.mxu0 0.0
    %6357 = vmatprep.subr.mxu0 0.0
    %6358 = vmatpush2.msra.mxu0 0.0
    %6359 = vmatprep.subr.mxu0 0.0
    %6360 = vmatpush2.msra.mxu0 0.0
    %6361 = vmatprep.subr.mxu0 0.0
    %6362 = vmatpush2.msra.mxu0 0.0
    %6363 = vmatprep.subr.mxu0 0.0
    %6364 = vmatpush2.msra.mxu0 0.0
    %6365 = vmatprep.subr.mxu0 0.0
    %6366 = vmatpush2.msra.mxu0 0.0
    %6367 = vmatprep.subr.mxu0 0.0
    %6368 = vmatpush2.msra.mxu0 0.0
    %6369 = vmatprep.subr.mxu0 0.0
    %6370 = vmatpush2.msra.mxu0 0.0
    %6371 = vmatprep.mubr.f32.mxu0 0.0
    %6372 = vmatmul.mubr.f32.gmra.mxu0 %v6305
    %v6373 = vpop.f32.mrf.mxu0
    %v6374 = vadd.f32 %v3578, %v6373
    %v6375 = vpop.f32.mrf.mxu0
    %v6376 = vadd.f32 %v3580, %v6375
    %6377 = vdwg.mxu0
    %6378 = vmatprep.subr.mxu0 0.0
    %6379 = vmatpush1.msra.mxu0 0.0
    %6380 = vmatprep.subr.mxu0 0.0
    %6381 = vmatpush1.msra.mxu0 0.0
    %6382 = vmatprep.subr.mxu0 0.0
    %6383 = vmatpush1.msra.mxu0 0.0
    %6384 = vmatprep.subr.mxu0 0.0
    %6385 = vmatpush1.msra.mxu0 0.0
    %6386 = vmatprep.subr.mxu0 0.0
    %6387 = vmatpush1.msra.mxu0 0.0
    %6388 = vmatprep.subr.mxu0 0.0
    %6389 = vmatpush1.msra.mxu0 0.0
    %6390 = vmatprep.subr.mxu0 0.0
    %6391 = vmatpush1.msra.mxu0 0.0
    %6392 = vmatprep.subr.mxu0 0.0
    %6393 = vmatpush1.msra.mxu0 0.0
    %6394 = vmatprep.subr.mxu0 %v2582
    %6395 = vmatpush1.msra.mxu0 %v2581
    %6396 = vmatprep.subr.mxu0 %v2580
    %6397 = vmatpush1.msra.mxu0 %v2579
    %6398 = vmatprep.subr.mxu0 %v2578
    %6399 = vmatpush1.msra.mxu0 %v2577
    %6400 = vmatprep.subr.mxu0 %v2576
    %6401 = vmatpush1.msra.mxu0 %v2575
    %6402 = vmatprep.subr.mxu0 %v2574
    %6403 = vmatpush1.msra.mxu0 %v2573
    %6404 = vmatprep.subr.mxu0 %v2572
    %6405 = vmatpush1.msra.mxu0 %v2571
    %6406 = vmatprep.subr.mxu0 %v2570
    %6407 = vmatpush1.msra.mxu0 %v2569
    %6408 = vmatprep.subr.mxu0 %v2568
    %6409 = vmatpush1.msra.mxu0 %v2567
    %6410 = vmatprep.subr.mxu0 0.0
    %6411 = vmatpush2.msra.mxu0 0.0
    %6412 = vmatprep.subr.mxu0 0.0
    %6413 = vmatpush2.msra.mxu0 0.0
    %6414 = vmatprep.subr.mxu0 0.0
    %6415 = vmatpush2.msra.mxu0 0.0
    %6416 = vmatprep.subr.mxu0 0.0
    %6417 = vmatpush2.msra.mxu0 0.0
    %6418 = vmatprep.subr.mxu0 0.0
    %6419 = vmatpush2.msra.mxu0 0.0
    %6420 = vmatprep.subr.mxu0 0.0
    %6421 = vmatpush2.msra.mxu0 0.0
    %6422 = vmatprep.subr.mxu0 0.0
    %6423 = vmatpush2.msra.mxu0 0.0
    %6424 = vmatprep.subr.mxu0 0.0
    %6425 = vmatpush2.msra.mxu0 0.0
    %6426 = vmatprep.subr.mxu0 0.0
    %6427 = vmatpush2.msra.mxu0 0.0
    %6428 = vmatprep.subr.mxu0 0.0
    %6429 = vmatpush2.msra.mxu0 0.0
    %6430 = vmatprep.subr.mxu0 0.0
    %6431 = vmatpush2.msra.mxu0 0.0
    %6432 = vmatprep.subr.mxu0 0.0
    %6433 = vmatpush2.msra.mxu0 0.0
    %6434 = vmatprep.subr.mxu0 0.0
    %6435 = vmatpush2.msra.mxu0 0.0
    %6436 = vmatprep.subr.mxu0 0.0
    %6437 = vmatpush2.msra.mxu0 0.0
    %6438 = vmatprep.subr.mxu0 0.0
    %6439 = vmatpush2.msra.mxu0 0.0
    %6440 = vmatprep.subr.mxu0 0.0
    %6441 = vmatpush2.msra.mxu0 0.0
    %6442 = vmatprep.mubr.f32.mxu0 0.0
    %6443 = vmatmul.mubr.f32.gmra.mxu0 %v6025
    %v6444 = vpop.f32.mrf.mxu0
    %v6445 = vadd.f32 0.0, %v6444
    %v6446 = vpop.f32.mrf.mxu0
    %v6447 = vadd.f32 0.0, %v6446
    %6448 = vdwg.mxu0
    %v6449 = vadd.f32 %v6374, %v6445
    %v6450 = vadd.f32 %v6376, %v6447
    %v6451 = vadd.f32 %v6449, %v4677
    %v6452 = vadd.f32 %v6450, %v4681
    %v6453 = vmul.f32 %v6451, 0.5
    %v6454 = vtanh.pop %v6453
    %v6455 = vadd.f32 %v6454, 1.0
    %v6456 = vmul.f32 %v6455, 0.5
    %v6457 = vtanh.pop %v6452
    %v6458 = vmul.f32 %v6452, 0.5
    %v6459 = vtanh.pop %v6458
    %v6460 = vadd.f32 %v6459, 1.0
    %v6461 = vmul.f32 %v6460, 0.5
    %v6462 = vmul.f32 %v6456, %v5654
    %v6463 = vmul.f32 %v6456, %v6457
    %6465 = vrot.lane.b32.xlu0 %v6463, 64
    %v6466 = vpop.permute.xlu0 %6465
    %v6468 = vadd.f32 %v6462, %v6466
    %v6469 = vtanh.pop %v6468
    %v6470 = vmul.f32 %v6461, %v6469
    %v6471 = vpack.c.bf16 %v6470, %v6470
    %6473 = vrot.lane.b32.xlu0 %v6471, 64
    %v6474 = vpop.permute.xlu0 %6473
    %v6476 = vsel %vm2098, %v6474, 0
    %6478 = vmatprep.subr.bf16.mxu0 0
    %6479 = vmatpush1.bf16.msra.mxu0 0
    %6480 = vmatprep.subr.bf16.mxu0 0
    %6481 = vmatpush1.bf16.msra.mxu0 0
    %6482 = vmatprep.subr.bf16.mxu0 0
    %6483 = vmatpush1.bf16.msra.mxu0 0
    %6484 = vmatprep.subr.bf16.mxu0 0
    %6485 = vmatpush1.bf16.msra.mxu0 0
    %6486 = vmatprep.subr.bf16.mxu0 %v4830
    %6487 = vmatpush1.bf16.msra.mxu0 %v4829
    %6488 = vmatprep.subr.bf16.mxu0 %v4824
    %6489 = vmatpush1.bf16.msra.mxu0 %v4823
    %6490 = vmatprep.subr.bf16.mxu0 %v4818
    %6491 = vmatpush1.bf16.msra.mxu0 %v4817
    %6492 = vmatprep.subr.bf16.mxu0 %v4812
    %6493 = vmatpush1.bf16.msra.mxu0 %v4811
    %6494 = vmatprep.subr.bf16.mxu0 0
    %6495 = vmatpush2.bf16.msra.mxu0 0
    %6496 = vmatprep.subr.bf16.mxu0 0
    %6497 = vmatpush2.bf16.msra.mxu0 0
    %6498 = vmatprep.subr.bf16.mxu0 0
    %6499 = vmatpush2.bf16.msra.mxu0 0
    %6500 = vmatprep.subr.bf16.mxu0 0
    %6501 = vmatpush2.bf16.msra.mxu0 0
    %6502 = vmatprep.subr.bf16.mxu0 0
    %6503 = vmatpush2.bf16.msra.mxu0 0
    %6504 = vmatprep.subr.bf16.mxu0 0
    %6505 = vmatpush2.bf16.msra.mxu0 0
    %6506 = vmatprep.subr.bf16.mxu0 0
    %6507 = vmatpush2.bf16.msra.mxu0 0
    %6508 = vmatprep.subr.bf16.mxu0 0
    %6509 = vmatpush2.bf16.msra.mxu0 0
    %6510 = vmatprep.mubr.bf16.mxu0 0
    %6511 = vmatmul.mubr.bf16.gmra.mxu0 %v6476
    %v6512 = vpop.f32.mrf.mxu0
    %v6513 = vadd.f32 0.0, %v6512
    %v6514 = vpop.f32.mrf.mxu0
    %v6515 = vadd.f32 0.0, %v6514
    %v6516 = vpop.f32.mrf.mxu0
    %v6517 = vpop.f32.mrf.mxu0
    %6518 = vdwg.mxu0
    %6519 = vmatprep.subr.bf16.mxu0 0
    %6520 = vmatpush1.bf16.msra.mxu0 0
    %6521 = vmatprep.subr.bf16.mxu0 0
    %6522 = vmatpush1.bf16.msra.mxu0 0
    %6523 = vmatprep.subr.bf16.mxu0 0
    %6524 = vmatpush1.bf16.msra.mxu0 0
    %6525 = vmatprep.subr.bf16.mxu0 0
    %6526 = vmatpush1.bf16.msra.mxu0 0
    %6527 = vmatprep.subr.bf16.mxu0 %v4832
    %6528 = vmatpush1.bf16.msra.mxu0 %v4831
    %6529 = vmatprep.subr.bf16.mxu0 %v4826
    %6530 = vmatpush1.bf16.msra.mxu0 %v4825
    %6531 = vmatprep.subr.bf16.mxu0 %v4820
    %6532 = vmatpush1.bf16.msra.mxu0 %v4819
    %6533 = vmatprep.subr.bf16.mxu0 %v4814
    %6534 = vmatpush1.bf16.msra.mxu0 %v4813
    %6535 = vmatprep.subr.bf16.mxu0 0
    %6536 = vmatpush2.bf16.msra.mxu0 0
    %6537 = vmatprep.subr.bf16.mxu0 0
    %6538 = vmatpush2.bf16.msra.mxu0 0
    %6539 = vmatprep.subr.bf16.mxu0 0
    %6540 = vmatpush2.bf16.msra.mxu0 0
    %6541 = vmatprep.subr.bf16.mxu0 0
    %6542 = vmatpush2.bf16.msra.mxu0 0
    %6543 = vmatprep.subr.bf16.mxu0 0
    %6544 = vmatpush2.bf16.msra.mxu0 0
    %6545 = vmatprep.subr.bf16.mxu0 0
    %6546 = vmatpush2.bf16.msra.mxu0 0
    %6547 = vmatprep.subr.bf16.mxu0 0
    %6548 = vmatpush2.bf16.msra.mxu0 0
    %6549 = vmatprep.subr.bf16.mxu0 0
    %6550 = vmatpush2.bf16.msra.mxu0 0
    %6551 = vmatprep.mubr.bf16.mxu0 0
    %6552 = vmatmul.mubr.bf16.gmra.mxu0 %v6476
    %v6553 = vpop.f32.mrf.mxu0
    %v6554 = vadd.f32 0.0, %v6553
    %v6555 = vpop.f32.mrf.mxu0
    %v6556 = vadd.f32 0.0, %v6555
    %v6557 = vpop.f32.mrf.mxu0
    %v6558 = vpop.f32.mrf.mxu0
    %6559 = vdwg.mxu0
    %6560 = vmatprep.subr.bf16.mxu0 0
    %6561 = vmatpush1.bf16.msra.mxu0 0
    %6562 = vmatprep.subr.bf16.mxu0 0
    %6563 = vmatpush1.bf16.msra.mxu0 0
    %6564 = vmatprep.subr.bf16.mxu0 0
    %6565 = vmatpush1.bf16.msra.mxu0 0
    %6566 = vmatprep.subr.bf16.mxu0 0
    %6567 = vmatpush1.bf16.msra.mxu0 0
    %6568 = vmatprep.subr.bf16.mxu0 %v4834
    %6569 = vmatpush1.bf16.msra.mxu0 %v4833
    %6570 = vmatprep.subr.bf16.mxu0 %v4828
    %6571 = vmatpush1.bf16.msra.mxu0 %v4827
    %6572 = vmatprep.subr.bf16.mxu0 %v4822
    %6573 = vmatpush1.bf16.msra.mxu0 %v4821
    %6574 = vmatprep.subr.bf16.mxu0 %v4816
    %6575 = vmatpush1.bf16.msra.mxu0 %v4815
    %6576 = vmatprep.subr.bf16.mxu0 0
    %6577 = vmatpush2.bf16.msra.mxu0 0
    %6578 = vmatprep.subr.bf16.mxu0 0
    %6579 = vmatpush2.bf16.msra.mxu0 0
    %6580 = vmatprep.subr.bf16.mxu0 0
    %6581 = vmatpush2.bf16.msra.mxu0 0
    %6582 = vmatprep.subr.bf16.mxu0 0
    %6583 = vmatpush2.bf16.msra.mxu0 0
    %6584 = vmatprep.subr.bf16.mxu0 0
    %6585 = vmatpush2.bf16.msra.mxu0 0
    %6586 = vmatprep.subr.bf16.mxu0 0
    %6587 = vmatpush2.bf16.msra.mxu0 0
    %6588 = vmatprep.subr.bf16.mxu0 0
    %6589 = vmatpush2.bf16.msra.mxu0 0
    %6590 = vmatprep.subr.bf16.mxu0 0
    %6591 = vmatpush2.bf16.msra.mxu0 0
    %6592 = vmatprep.mubr.bf16.mxu0 0
    %6593 = vmatmul.mubr.bf16.gmra.mxu0 %v6476
    %v6594 = vpop.f32.mrf.mxu0
    %v6595 = vadd.f32 0.0, %v6594
    %v6596 = vpop.f32.mrf.mxu0
    %v6597 = vadd.f32 0.0, %v6596
    %v6598 = vpop.f32.mrf.mxu0
    %v6599 = vpop.f32.mrf.mxu0
    %6600 = vdwg.mxu0
    %v6601 = vadd.f32 %v5793, %v6513
    %v6602 = vadd.f32 %v5794, %v6515
    %v6603 = vadd.f32 %v5795, %v6554
    %v6604 = vadd.f32 %v5796, %v6556
    %v6605 = vadd.f32 %v5797, %v6595
    %v6606 = vadd.f32 %v5798, %v6597
    %v6607 = vadd.f32 %v6601, %v4709
    %v6608 = vadd.f32 %v6602, %v4713
    %v6609 = vadd.f32 %v6603, %v4717
    %v6610 = vadd.f32 %v6604, %v4721
    %v6611 = vadd.f32 %v6605, %v4725
    %v6612 = vadd.f32 %v6606, %v4729
    %v6613 = vmul.f32 %v6607, 0.5
    %v6614 = vmul.f32 %v6608, 0.5
    %v6615 = vmul.f32 %v6609, 0.5
    %v6616 = vmul.f32 %v6610, 0.5
    %v6617 = vmul.f32 %v6611, 0.5
    %v6618 = vmul.f32 %v6612, 0.5
    %v6619 = vtanh.pop %v6613
    %v6620 = vtanh.pop %v6614
    %v6621 = vtanh.pop %v6615
    %v6622 = vtanh.pop %v6616
    %v6623 = vtanh.pop %v6617
    %v6624 = vtanh.pop %v6618
    %v6625 = vadd.f32 %v6619, 1.0
    %v6626 = vadd.f32 %v6620, 1.0
    %v6627 = vadd.f32 %v6621, 1.0
    %v6628 = vadd.f32 %v6622, 1.0
    %v6629 = vadd.f32 %v6623, 1.0
    %v6630 = vadd.f32 %v6624, 1.0
    %v6631 = vmul.f32 %v6625, 0.5
    %v6632 = vmul.f32 %v6626, 0.5
    %v6633 = vmul.f32 %v6627, 0.5
    %v6634 = vmul.f32 %v6628, 0.5
    %v6635 = vmul.f32 %v6629, 0.5
    %v6636 = vmul.f32 %v6630, 0.5
    %v6643 = vcombine.low %v6631, %v6632
    %v6644 = vcombine.low %v6633, %v6634
    %v6646 = vunpack.c.l.s4 1983009808
    %v6647 = vunpack.c.0.s8 %v6646
    %v6648 = vlaneseq
    %v6649 = vshrl.u32 %v6648, 7
    %v6650 = vsub.s32 %v6647, %v6649
    %v6651 = vrot.slane %v6643, %v6650
    %v6653 = vunpack.c.l.s4 1983009808
    %v6654 = vunpack.c.0.s8 %v6653
    %v6655 = vlaneseq
    %v6656 = vshrl.u32 %v6655, 7
    %v6657 = vsub.s32 %v6654, %v6656
    %v6658 = vrot.slane %v6644, %v6657
    %v6659 = vcombine.low %v6651, %v6658
    %v6660 = vcombine.low %v6635, %v6636
    %v6662 = vunpack.c.l.s4 1983009808
    %v6663 = vunpack.c.0.s8 %v6662
    %v6664 = vlaneseq
    %v6665 = vshrl.u32 %v6664, 7
    %v6666 = vsub.s32 %v6663, %v6665
    %v6667 = vrot.slane %v6660, %v6666
    %v6670 = vsub.f32 %v2336, %v6659
    %v6671 = vsub.f32 %v2337, %v6667
    %v6674 = vcombine.high %v6670, %v6670
    %v6676 = vunpack.c.l.s4 1983009808
    %v6677 = vunpack.c.0.s8 %v6676
    %v6678 = vlaneseq
    %v6679 = vshrl.u32 %v6678, 7
    %v6680 = vsub.s32 %v6677, %v6679
    %v6681 = vrot.slane %v6670, %v6680
    %v6683 = vunpack.c.l.s4 1983009808
    %v6684 = vunpack.c.0.s8 %v6683
    %v6685 = vlaneseq
    %v6686 = vshrl.u32 %v6685, 7
    %v6687 = vsub.s32 %v6684, %v6686
    %v6688 = vrot.slane %v6674, %v6687
    %v6689 = vcombine.high %v6681, %v6681
    %v6690 = vcombine.high %v6688, %v6688
    %v6692 = vunpack.c.l.s4 1983009808
    %v6693 = vunpack.c.0.s8 %v6692
    %v6694 = vlaneseq
    %v6695 = vshrl.u32 %v6694, 7
    %v6696 = vsub.s32 %v6693, %v6695
    %v6697 = vrot.slane %v6671, %v6696
    %v6698 = vcombine.high %v6697, %v6697
    %v6705 = vpack.c.bf16 %v6681, %v6681
    %v6706 = vpack.c.bf16 %v6689, %v6689
    %v6707 = vpack.c.bf16 %v6688, %v6688
    %v6708 = vpack.c.bf16 %v6690, %v6690
    %v6709 = vpack.c.bf16 %v6697, %v6697
    %v6710 = vpack.c.bf16 %v6698, %v6698
    %6711 = vmatprep.subr.bf16.mxu0 %v3926
    %6712 = vmatpush1.bf16.msra.mxu0 %v3925
    %6713 = vmatprep.subr.bf16.mxu0 %v3924
    %6714 = vmatpush1.bf16.msra.mxu0 %v3923
    %6715 = vmatprep.subr.bf16.mxu0 %v3922
    %6716 = vmatpush1.bf16.msra.mxu0 %v3921
    %6717 = vmatprep.subr.bf16.mxu0 %v3920
    %6718 = vmatpush1.bf16.msra.mxu0 %v3919
    %6719 = vmatprep.subr.bf16.mxu0 %v3918
    %6720 = vmatpush1.bf16.msra.mxu0 %v3917
    %6721 = vmatprep.subr.bf16.mxu0 %v3916
    %6722 = vmatpush1.bf16.msra.mxu0 %v3915
    %6723 = vmatprep.subr.bf16.mxu0 %v3914
    %6724 = vmatpush1.bf16.msra.mxu0 %v3913
    %6725 = vmatprep.subr.bf16.mxu0 %v3912
    %6726 = vmatpush1.bf16.msra.mxu0 %v3911
    %6727 = vmatprep.subr.bf16.mxu0 %v3942
    %6728 = vmatpush2.bf16.msra.mxu0 %v3941
    %6729 = vmatprep.subr.bf16.mxu0 %v3940
    %6730 = vmatpush2.bf16.msra.mxu0 %v3939
    %6731 = vmatprep.subr.bf16.mxu0 %v3938
    %6732 = vmatpush2.bf16.msra.mxu0 %v3937
    %6733 = vmatprep.subr.bf16.mxu0 %v3936
    %6734 = vmatpush2.bf16.msra.mxu0 %v3935
    %6735 = vmatprep.subr.bf16.mxu0 %v3934
    %6736 = vmatpush2.bf16.msra.mxu0 %v3933
    %6737 = vmatprep.subr.bf16.mxu0 %v3932
    %6738 = vmatpush2.bf16.msra.mxu0 %v3931
    %6739 = vmatprep.subr.bf16.mxu0 %v3930
    %6740 = vmatpush2.bf16.msra.mxu0 %v3929
    %6741 = vmatprep.subr.bf16.mxu0 %v3928
    %6742 = vmatpush2.bf16.msra.mxu0 %v3927
    %6743 = vmatprep.mubr.bf16.mxu0 %v6706
    %6744 = vmatmul.mubr.bf16.gmra.mxu0 %v6705
    %v6745 = vpop.f32.mrf.mxu0
    %v6746 = vadd.f32 0.0, %v6745
    %v6747 = vpop.f32.mrf.mxu0
    %v6748 = vadd.f32 0.0, %v6747
    %v6749 = vpop.f32.mrf.mxu0
    %v6750 = vpop.f32.mrf.mxu0
    %6751 = vdwg.mxu0
    %6752 = vmatprep.subr.bf16.mxu0 %v3958
    %6753 = vmatpush1.bf16.msra.mxu0 %v3957
    %6754 = vmatprep.subr.bf16.mxu0 %v3956
    %6755 = vmatpush1.bf16.msra.mxu0 %v3955
    %6756 = vmatprep.subr.bf16.mxu0 %v3954
    %6757 = vmatpush1.bf16.msra.mxu0 %v3953
    %6758 = vmatprep.subr.bf16.mxu0 %v3952
    %6759 = vmatpush1.bf16.msra.mxu0 %v3951
    %6760 = vmatprep.subr.bf16.mxu0 %v3950
    %6761 = vmatpush1.bf16.msra.mxu0 %v3949
    %6762 = vmatprep.subr.bf16.mxu0 %v3948
    %6763 = vmatpush1.bf16.msra.mxu0 %v3947
    %6764 = vmatprep.subr.bf16.mxu0 %v3946
    %6765 = vmatpush1.bf16.msra.mxu0 %v3945
    %6766 = vmatprep.subr.bf16.mxu0 %v3944
    %6767 = vmatpush1.bf16.msra.mxu0 %v3943
    %6768 = vmatprep.subr.bf16.mxu0 %v3974
    %6769 = vmatpush2.bf16.msra.mxu0 %v3973
    %6770 = vmatprep.subr.bf16.mxu0 %v3972
    %6771 = vmatpush2.bf16.msra.mxu0 %v3971
    %6772 = vmatprep.subr.bf16.mxu0 %v3970
    %6773 = vmatpush2.bf16.msra.mxu0 %v3969
    %6774 = vmatprep.subr.bf16.mxu0 %v3968
    %6775 = vmatpush2.bf16.msra.mxu0 %v3967
    %6776 = vmatprep.subr.bf16.mxu0 %v3966
    %6777 = vmatpush2.bf16.msra.mxu0 %v3965
    %6778 = vmatprep.subr.bf16.mxu0 %v3964
    %6779 = vmatpush2.bf16.msra.mxu0 %v3963
    %6780 = vmatprep.subr.bf16.mxu0 %v3962
    %6781 = vmatpush2.bf16.msra.mxu0 %v3961
    %6782 = vmatprep.subr.bf16.mxu0 %v3960
    %6783 = vmatpush2.bf16.msra.mxu0 %v3959
    %6784 = vmatprep.mubr.bf16.mxu0 %v6708
    %6785 = vmatmul.mubr.bf16.gmra.mxu0 %v6707
    %v6786 = vpop.f32.mrf.mxu0
    %v6787 = vadd.f32 %v6746, %v6786
    %v6788 = vpop.f32.mrf.mxu0
    %v6789 = vadd.f32 %v6748, %v6788
    %v6790 = vpop.f32.mrf.mxu0
    %v6791 = vpop.f32.mrf.mxu0
    %6792 = vdwg.mxu0
    %6793 = vmatprep.subr.bf16.mxu0 %v3990
    %6794 = vmatpush1.bf16.msra.mxu0 %v3989
    %6795 = vmatprep.subr.bf16.mxu0 %v3988
    %6796 = vmatpush1.bf16.msra.mxu0 %v3987
    %6797 = vmatprep.subr.bf16.mxu0 %v3986
    %6798 = vmatpush1.bf16.msra.mxu0 %v3985
    %6799 = vmatprep.subr.bf16.mxu0 %v3984
    %6800 = vmatpush1.bf16.msra.mxu0 %v3983
    %6801 = vmatprep.subr.bf16.mxu0 %v3982
    %6802 = vmatpush1.bf16.msra.mxu0 %v3981
    %6803 = vmatprep.subr.bf16.mxu0 %v3980
    %6804 = vmatpush1.bf16.msra.mxu0 %v3979
    %6805 = vmatprep.subr.bf16.mxu0 %v3978
    %6806 = vmatpush1.bf16.msra.mxu0 %v3977
    %6807 = vmatprep.subr.bf16.mxu0 %v3976
    %6808 = vmatpush1.bf16.msra.mxu0 %v3975
    %6809 = vmatprep.subr.bf16.mxu0 %v4006
    %6810 = vmatpush2.bf16.msra.mxu0 %v4005
    %6811 = vmatprep.subr.bf16.mxu0 %v4004
    %6812 = vmatpush2.bf16.msra.mxu0 %v4003
    %6813 = vmatprep.subr.bf16.mxu0 %v4002
    %6814 = vmatpush2.bf16.msra.mxu0 %v4001
    %6815 = vmatprep.subr.bf16.mxu0 %v4000
    %6816 = vmatpush2.bf16.msra.mxu0 %v3999
    %6817 = vmatprep.subr.bf16.mxu0 %v3998
    %6818 = vmatpush2.bf16.msra.mxu0 %v3997
    %6819 = vmatprep.subr.bf16.mxu0 %v3996
    %6820 = vmatpush2.bf16.msra.mxu0 %v3995
    %6821 = vmatprep.subr.bf16.mxu0 %v3994
    %6822 = vmatpush2.bf16.msra.mxu0 %v3993
    %6823 = vmatprep.subr.bf16.mxu0 %v3992
    %6824 = vmatpush2.bf16.msra.mxu0 %v3991
    %6825 = vmatprep.mubr.bf16.mxu0 %v6710
    %6826 = vmatmul.mubr.bf16.gmra.mxu0 %v6709
    %v6827 = vpop.f32.mrf.mxu0
    %v6828 = vadd.f32 %v6787, %v6827
    %v6829 = vpop.f32.mrf.mxu0
    %v6830 = vadd.f32 %v6789, %v6829
    %v6831 = vpop.f32.mrf.mxu0
    %v6832 = vpop.f32.mrf.mxu0
    %6833 = vdwg.mxu0
    %v6834 = vadd.f32 %v3254, %v6828
    %v6835 = vadd.f32 %v3256, %v6830
    %6837 = vrot.lane.b32.xlu0 %v6470, 64
    %v6838 = vpop.permute.xlu0 %6837
    %v6839 = vsel %vm2098, %v6838, 0
    %6841 = vmatprep.subr.mxu0 0.0
    %6842 = vmatpush1.msra.mxu0 0.0
    %6843 = vmatprep.subr.mxu0 0.0
    %6844 = vmatpush1.msra.mxu0 0.0
    %6845 = vmatprep.subr.mxu0 0.0
    %6846 = vmatpush1.msra.mxu0 0.0
    %6847 = vmatprep.subr.mxu0 0.0
    %6848 = vmatpush1.msra.mxu0 0.0
    %6849 = vmatprep.subr.mxu0 0.0
    %6850 = vmatpush1.msra.mxu0 0.0
    %6851 = vmatprep.subr.mxu0 0.0
    %6852 = vmatpush1.msra.mxu0 0.0
    %6853 = vmatprep.subr.mxu0 0.0
    %6854 = vmatpush1.msra.mxu0 0.0
    %6855 = vmatprep.subr.mxu0 0.0
    %6856 = vmatpush1.msra.mxu0 0.0
    %6857 = vmatprep.subr.mxu0 %v2545
    %6858 = vmatpush1.msra.mxu0 %v2544
    %6859 = vmatprep.subr.mxu0 %v2543
    %6860 = vmatpush1.msra.mxu0 %v2542
    %6861 = vmatprep.subr.mxu0 %v2541
    %6862 = vmatpush1.msra.mxu0 %v2540
    %6863 = vmatprep.subr.mxu0 %v2539
    %6864 = vmatpush1.msra.mxu0 %v2538
    %6865 = vmatprep.subr.mxu0 %v2537
    %6866 = vmatpush1.msra.mxu0 %v2536
    %6867 = vmatprep.subr.mxu0 %v2535
    %6868 = vmatpush1.msra.mxu0 %v2534
    %6869 = vmatprep.subr.mxu0 %v2533
    %6870 = vmatpush1.msra.mxu0 %v2532
    %6871 = vmatprep.subr.mxu0 %v2531
    %6872 = vmatpush1.msra.mxu0 %v2530
    %6873 = vmatprep.subr.mxu0 0.0
    %6874 = vmatpush2.msra.mxu0 0.0
    %6875 = vmatprep.subr.mxu0 0.0
    %6876 = vmatpush2.msra.mxu0 0.0
    %6877 = vmatprep.subr.mxu0 0.0
    %6878 = vmatpush2.msra.mxu0 0.0
    %6879 = vmatprep.subr.mxu0 0.0
    %6880 = vmatpush2.msra.mxu0 0.0
    %6881 = vmatprep.subr.mxu0 0.0
    %6882 = vmatpush2.msra.mxu0 0.0
    %6883 = vmatprep.subr.mxu0 0.0
    %6884 = vmatpush2.msra.mxu0 0.0
    %6885 = vmatprep.subr.mxu0 0.0
    %6886 = vmatpush2.msra.mxu0 0.0
    %6887 = vmatprep.subr.mxu0 0.0
    %6888 = vmatpush2.msra.mxu0 0.0
    %6889 = vmatprep.subr.mxu0 0.0
    %6890 = vmatpush2.msra.mxu0 0.0
    %6891 = vmatprep.subr.mxu0 0.0
    %6892 = vmatpush2.msra.mxu0 0.0
    %6893 = vmatprep.subr.mxu0 0.0
    %6894 = vmatpush2.msra.mxu0 0.0
    %6895 = vmatprep.subr.mxu0 0.0
    %6896 = vmatpush2.msra.mxu0 0.0
    %6897 = vmatprep.subr.mxu0 0.0
    %6898 = vmatpush2.msra.mxu0 0.0
    %6899 = vmatprep.subr.mxu0 0.0
    %6900 = vmatpush2.msra.mxu0 0.0
    %6901 = vmatprep.subr.mxu0 0.0
    %6902 = vmatpush2.msra.mxu0 0.0
    %6903 = vmatprep.subr.mxu0 0.0
    %6904 = vmatpush2.msra.mxu0 0.0
    %6905 = vmatprep.mubr.f32.mxu0 0.0
    %6906 = vmatmul.mubr.f32.gmra.mxu0 %v6839
    %v6907 = vpop.f32.mrf.mxu0
    %v6908 = vadd.f32 0.0, %v6907
    %v6909 = vpop.f32.mrf.mxu0
    %v6910 = vadd.f32 0.0, %v6909
    %6911 = vdwg.mxu0
    %v6912 = vadd.f32 %v6834, %v6908
    %v6913 = vadd.f32 %v6835, %v6910
    %v6914 = vadd.f32 %v6912, %v3420
    %v6915 = vadd.f32 %v6913, %v3422
    %6916 = vmatprep.subr.mxu0 0.0
    %6917 = vmatpush1.msra.mxu0 0.0
    %6918 = vmatprep.subr.mxu0 0.0
    %6919 = vmatpush1.msra.mxu0 0.0
    %6920 = vmatprep.subr.mxu0 0.0
    %6921 = vmatpush1.msra.mxu0 0.0
    %6922 = vmatprep.subr.mxu0 0.0
    %6923 = vmatpush1.msra.mxu0 0.0
    %6924 = vmatprep.subr.mxu0 0.0
    %6925 = vmatpush1.msra.mxu0 0.0
    %6926 = vmatprep.subr.mxu0 0.0
    %6927 = vmatpush1.msra.mxu0 0.0
    %6928 = vmatprep.subr.mxu0 0.0
    %6929 = vmatpush1.msra.mxu0 0.0
    %6930 = vmatprep.subr.mxu0 0.0
    %6931 = vmatpush1.msra.mxu0 0.0
    %6932 = vmatprep.subr.mxu0 %v2561
    %6933 = vmatpush1.msra.mxu0 %v2560
    %6934 = vmatprep.subr.mxu0 %v2559
    %6935 = vmatpush1.msra.mxu0 %v2558
    %6936 = vmatprep.subr.mxu0 %v2557
    %6937 = vmatpush1.msra.mxu0 %v2556
    %6938 = vmatprep.subr.mxu0 %v2555
    %6939 = vmatpush1.msra.mxu0 %v2554
    %6940 = vmatprep.subr.mxu0 %v2553
    %6941 = vmatpush1.msra.mxu0 %v2552
    %6942 = vmatprep.subr.mxu0 %v2551
    %6943 = vmatpush1.msra.mxu0 %v2550
    %6944 = vmatprep.subr.mxu0 %v2549
    %6945 = vmatpush1.msra.mxu0 %v2548
    %6946 = vmatprep.subr.mxu0 %v2547
    %6947 = vmatpush1.msra.mxu0 %v2546
    %6948 = vmatprep.subr.mxu0 0.0
    %6949 = vmatpush2.msra.mxu0 0.0
    %6950 = vmatprep.subr.mxu0 0.0
    %6951 = vmatpush2.msra.mxu0 0.0
    %6952 = vmatprep.subr.mxu0 0.0
    %6953 = vmatpush2.msra.mxu0 0.0
    %6954 = vmatprep.subr.mxu0 0.0
    %6955 = vmatpush2.msra.mxu0 0.0
    %6956 = vmatprep.subr.mxu0 0.0
    %6957 = vmatpush2.msra.mxu0 0.0
    %6958 = vmatprep.subr.mxu0 0.0
    %6959 = vmatpush2.msra.mxu0 0.0
    %6960 = vmatprep.subr.mxu0 0.0
    %6961 = vmatpush2.msra.mxu0 0.0
    %6962 = vmatprep.subr.mxu0 0.0
    %6963 = vmatpush2.msra.mxu0 0.0
    %6964 = vmatprep.subr.mxu0 0.0
    %6965 = vmatpush2.msra.mxu0 0.0
    %6966 = vmatprep.subr.mxu0 0.0
    %6967 = vmatpush2.msra.mxu0 0.0
    %6968 = vmatprep.subr.mxu0 0.0
    %6969 = vmatpush2.msra.mxu0 0.0
    %6970 = vmatprep.subr.mxu0 0.0
    %6971 = vmatpush2.msra.mxu0 0.0
    %6972 = vmatprep.subr.mxu0 0.0
    %6973 = vmatpush2.msra.mxu0 0.0
    %6974 = vmatprep.subr.mxu0 0.0
    %6975 = vmatpush2.msra.mxu0 0.0
    %6976 = vmatprep.subr.mxu0 0.0
    %6977 = vmatpush2.msra.mxu0 0.0
    %6978 = vmatprep.subr.mxu0 0.0
    %6979 = vmatpush2.msra.mxu0 0.0
    %6980 = vmatprep.mubr.f32.mxu0 0.0
    %6981 = vmatmul.mubr.f32.gmra.mxu0 %v6198
    %v6982 = vpop.f32.mrf.mxu0
    %v6983 = vadd.f32 0.0, %v6982
    %v6984 = vpop.f32.mrf.mxu0
    %v6985 = vadd.f32 0.0, %v6984
    %6986 = vdwg.mxu0
    %v6987 = vadd.f32 %v6914, %v6983
    %v6988 = vadd.f32 %v6915, %v6985
    %v6989 = vadd.f32 %v6987, %v4383
    %v6990 = vadd.f32 %v6988, %v4387
    %v6991 = vmul.f32 %v6989, 0.5
    %v6992 = vtanh.pop %v6991
    %v6993 = vadd.f32 %v6992, 1.0
    %v6994 = vmul.f32 %v6993, 0.5
    %v6995 = vtanh.pop %v6990
    %v6996 = vmul.f32 %v6990, 0.5
    %v6997 = vtanh.pop %v6996
    %v6998 = vadd.f32 %v6997, 1.0
    %v6999 = vmul.f32 %v6998, 0.5
    %v7000 = vmul.f32 %v6994, %v6192
    %v7001 = vmul.f32 %v6994, %v6995
    %7003 = vrot.lane.b32.xlu0 %v7001, 64
    %v7004 = vpop.permute.xlu0 %7003
    %v7006 = vadd.f32 %v7000, %v7004
    %v7007 = vtanh.pop %v7006
    %v7008 = vmul.f32 %v6999, %v7007
    %7010 = vrot.lane.b32.xlu0 %v7008, 64
    %v7011 = vpop.permute.xlu0 %7010
    %v7012 = vsel %vm2098, %v7011, 0
    %7014 = vmatprep.subr.mxu0 0.0
    %7015 = vmatpush1.msra.mxu0 0.0
    %7016 = vmatprep.subr.mxu0 0.0
    %7017 = vmatpush1.msra.mxu0 0.0
    %7018 = vmatprep.subr.mxu0 0.0
    %7019 = vmatpush1.msra.mxu0 0.0
    %7020 = vmatprep.subr.mxu0 0.0
    %7021 = vmatpush1.msra.mxu0 0.0
    %7022 = vmatprep.subr.mxu0 0.0
    %7023 = vmatpush1.msra.mxu0 0.0
    %7024 = vmatprep.subr.mxu0 0.0
    %7025 = vmatpush1.msra.mxu0 0.0
    %7026 = vmatprep.subr.mxu0 0.0
    %7027 = vmatpush1.msra.mxu0 0.0
    %7028 = vmatprep.subr.mxu0 0.0
    %7029 = vmatpush1.msra.mxu0 0.0
    %7030 = vmatprep.subr.mxu0 0.0
    %7031 = vmatpush1.msra.mxu0 %v2591
    %7032 = vmatprep.subr.mxu0 0.0
    %7033 = vmatpush1.msra.mxu0 %v2590
    %7034 = vmatprep.subr.mxu0 0.0
    %7035 = vmatpush1.msra.mxu0 %v2589
    %7036 = vmatprep.subr.mxu0 0.0
    %7037 = vmatpush1.msra.mxu0 %v2588
    %7038 = vmatprep.subr.mxu0 0.0
    %7039 = vmatpush1.msra.mxu0 %v2587
    %7040 = vmatprep.subr.mxu0 0.0
    %7041 = vmatpush1.msra.mxu0 %v2586
    %7042 = vmatprep.subr.mxu0 0.0
    %7043 = vmatpush1.msra.mxu0 %v2585
    %7044 = vmatprep.subr.mxu0 0.0
    %7045 = vmatpush1.msra.mxu0 %v2584
    %7046 = vmatprep.subr.mxu0 0.0
    %7047 = vmatpush2.msra.mxu0 0.0
    %7048 = vmatprep.subr.mxu0 0.0
    %7049 = vmatpush2.msra.mxu0 0.0
    %7050 = vmatprep.subr.mxu0 0.0
    %7051 = vmatpush2.msra.mxu0 0.0
    %7052 = vmatprep.subr.mxu0 0.0
    %7053 = vmatpush2.msra.mxu0 0.0
    %7054 = vmatprep.subr.mxu0 0.0
    %7055 = vmatpush2.msra.mxu0 0.0
    %7056 = vmatprep.subr.mxu0 0.0
    %7057 = vmatpush2.msra.mxu0 0.0
    %7058 = vmatprep.subr.mxu0 0.0
    %7059 = vmatpush2.msra.mxu0 0.0
    %7060 = vmatprep.subr.mxu0 0.0
    %7061 = vmatpush2.msra.mxu0 0.0
    %7062 = vmatprep.subr.mxu0 0.0
    %7063 = vmatpush2.msra.mxu0 0.0
    %7064 = vmatprep.subr.mxu0 0.0
    %7065 = vmatpush2.msra.mxu0 0.0
    %7066 = vmatprep.subr.mxu0 0.0
    %7067 = vmatpush2.msra.mxu0 0.0
    %7068 = vmatprep.subr.mxu0 0.0
    %7069 = vmatpush2.msra.mxu0 0.0
    %7070 = vmatprep.subr.mxu0 0.0
    %7071 = vmatpush2.msra.mxu0 0.0
    %7072 = vmatprep.subr.mxu0 0.0
    %7073 = vmatpush2.msra.mxu0 0.0
    %7074 = vmatprep.subr.mxu0 0.0
    %7075 = vmatpush2.msra.mxu0 0.0
    %7076 = vmatprep.subr.mxu0 0.0
    %7077 = vmatpush2.msra.mxu0 0.0
    %7078 = vmatprep.mubr.f32.mxu0 0.0
    %7079 = vmatmul.mubr.f32.gmra.mxu0 %v7012
    %v7080 = vpop.f32.mrf.mxu0
    %v7081 = vadd.f32 %v4414, %v7080
    %v7082 = vpop.f32.mrf.mxu0
    %7083 = vdwg.mxu0
    %v7084 = vmul.f32 %v7081, 0.5
    %v7085 = vmul.f32 %v7084, 1.442695
    %v7086 = vpow.pop %v7085
    %s7087 = scalar_lea.vmem %s11, 6
    %v7088 = vld [vmem:[%s7087] sm:$0x3]
    %7090 = vrot.lane.b32.xlu0 %v7088, 16
    %v7091 = vpop.permute.xlu0 %7090
    %v7093 = vmul.f32 %v7086, %v7091
    %7095 = vrot.lane.b32.xlu0 %v7093, 112
    %v7096 = vpop.permute.xlu0 %7095
    %v7098 = vadd.f32 %v7081, %v7096
    %v7099 = vmul.f32 %v7081, %v7081
    %v7100 = vmul.f32 %v7081, 1.442695
    %v7101 = vpow.pop %v7100
    %7103 = vrot.lane.b32.xlu0 %v7101, 112
    %v7104 = vpop.permute.xlu0 %7103
    %v7106 = vadd.f32 %v7099, %v7104
    %7108 = vrot.lane.b32.xlu0 %v7081, 112
    %v7109 = vpop.permute.xlu0 %7108
    %v7111 = vsub.f32 %v7106, %v7109
    %v7112 = vsub.f32 %v7111, 1.0
    %v7113 = vsel %vm4519, %v7112, 0.0
    %7114 = vadd.xlane.f32.xlu0 %v7113
    %v7115 = vpop.xlane.xlu0 %7114
    %v7116 = vmul.f32 %v7115, 0.5
    %v7117 = vadd.f32 %v6303, %v7116
    %v7119 = vsel %vm4525, %v7098, 0
    %7121 = vmatprep.subr.mxu0 0.0
    %7122 = vmatpush1.msra.mxu0 0.0
    %7123 = vmatprep.subr.mxu0 0.0
    %7124 = vmatpush1.msra.mxu0 0.0
    %7125 = vmatprep.subr.mxu0 0.0
    %7126 = vmatpush1.msra.mxu0 0.0
    %7127 = vmatprep.subr.mxu0 0.0
    %7128 = vmatpush1.msra.mxu0 0.0
    %7129 = vmatprep.subr.mxu0 0.0
    %7130 = vmatpush1.msra.mxu0 0.0
    %7131 = vmatprep.subr.mxu0 0.0
    %7132 = vmatpush1.msra.mxu0 0.0
    %7133 = vmatprep.subr.mxu0 0.0
    %7134 = vmatpush1.msra.mxu0 0.0
    %7135 = vmatprep.subr.mxu0 0.0
    %7136 = vmatpush1.msra.mxu0 0.0
    %7137 = vmatprep.subr.mxu0 0.0
    %7138 = vmatpush1.msra.mxu0 0.0
    %7139 = vmatprep.subr.mxu0 0.0
    %7140 = vmatpush1.msra.mxu0 0.0
    %7141 = vmatprep.subr.mxu0 0.0
    %7142 = vmatpush1.msra.mxu0 0.0
    %7143 = vmatprep.subr.mxu0 0.0
    %7144 = vmatpush1.msra.mxu0 0.0
    %7145 = vmatprep.subr.mxu0 0.0
    %7146 = vmatpush1.msra.mxu0 0.0
    %7147 = vmatprep.subr.mxu0 0.0
    %7148 = vmatpush1.msra.mxu0 0.0
    %7149 = vmatprep.subr.mxu0 %v2566
    %7150 = vmatpush1.msra.mxu0 %v2565
    %7151 = vmatprep.subr.mxu0 %v2564
    %7152 = vmatpush1.msra.mxu0 %v2563
    %7153 = vmatprep.subr.mxu0 0.0
    %7154 = vmatpush2.msra.mxu0 0.0
    %7155 = vmatprep.subr.mxu0 0.0
    %7156 = vmatpush2.msra.mxu0 0.0
    %7157 = vmatprep.subr.mxu0 0.0
    %7158 = vmatpush2.msra.mxu0 0.0
    %7159 = vmatprep.subr.mxu0 0.0
    %7160 = vmatpush2.msra.mxu0 0.0
    %7161 = vmatprep.subr.mxu0 0.0
    %7162 = vmatpush2.msra.mxu0 0.0
    %7163 = vmatprep.subr.mxu0 0.0
    %7164 = vmatpush2.msra.mxu0 0.0
    %7165 = vmatprep.subr.mxu0 0.0
    %7166 = vmatpush2.msra.mxu0 0.0
    %7167 = vmatprep.subr.mxu0 0.0
    %7168 = vmatpush2.msra.mxu0 0.0
    %7169 = vmatprep.subr.mxu0 0.0
    %7170 = vmatpush2.msra.mxu0 0.0
    %7171 = vmatprep.subr.mxu0 0.0
    %7172 = vmatpush2.msra.mxu0 0.0
    %7173 = vmatprep.subr.mxu0 0.0
    %7174 = vmatpush2.msra.mxu0 0.0
    %7175 = vmatprep.subr.mxu0 0.0
    %7176 = vmatpush2.msra.mxu0 0.0
    %7177 = vmatprep.subr.mxu0 0.0
    %7178 = vmatpush2.msra.mxu0 0.0
    %7179 = vmatprep.subr.mxu0 0.0
    %7180 = vmatpush2.msra.mxu0 0.0
    %7181 = vmatprep.subr.mxu0 0.0
    %7182 = vmatpush2.msra.mxu0 0.0
    %7183 = vmatprep.subr.mxu0 0.0
    %7184 = vmatpush2.msra.mxu0 0.0
    %7185 = vmatprep.mubr.f32.mxu0 0.0
    %7186 = vmatmul.mubr.f32.gmra.mxu0 %v7119
    %v7187 = vpop.f32.mrf.mxu0
    %v7188 = vadd.f32 %v3578, %v7187
    %v7189 = vpop.f32.mrf.mxu0
    %v7190 = vadd.f32 %v3580, %v7189
    %7191 = vdwg.mxu0
    %7192 = vmatprep.subr.mxu0 0.0
    %7193 = vmatpush1.msra.mxu0 0.0
    %7194 = vmatprep.subr.mxu0 0.0
    %7195 = vmatpush1.msra.mxu0 0.0
    %7196 = vmatprep.subr.mxu0 0.0
    %7197 = vmatpush1.msra.mxu0 0.0
    %7198 = vmatprep.subr.mxu0 0.0
    %7199 = vmatpush1.msra.mxu0 0.0
    %7200 = vmatprep.subr.mxu0 0.0
    %7201 = vmatpush1.msra.mxu0 0.0
    %7202 = vmatprep.subr.mxu0 0.0
    %7203 = vmatpush1.msra.mxu0 0.0
    %7204 = vmatprep.subr.mxu0 0.0
    %7205 = vmatpush1.msra.mxu0 0.0
    %7206 = vmatprep.subr.mxu0 0.0
    %7207 = vmatpush1.msra.mxu0 0.0
    %7208 = vmatprep.subr.mxu0 %v2582
    %7209 = vmatpush1.msra.mxu0 %v2581
    %7210 = vmatprep.subr.mxu0 %v2580
    %7211 = vmatpush1.msra.mxu0 %v2579
    %7212 = vmatprep.subr.mxu0 %v2578
    %7213 = vmatpush1.msra.mxu0 %v2577
    %7214 = vmatprep.subr.mxu0 %v2576
    %7215 = vmatpush1.msra.mxu0 %v2575
    %7216 = vmatprep.subr.mxu0 %v2574
    %7217 = vmatpush1.msra.mxu0 %v2573
    %7218 = vmatprep.subr.mxu0 %v2572
    %7219 = vmatpush1.msra.mxu0 %v2571
    %7220 = vmatprep.subr.mxu0 %v2570
    %7221 = vmatpush1.msra.mxu0 %v2569
    %7222 = vmatprep.subr.mxu0 %v2568
    %7223 = vmatpush1.msra.mxu0 %v2567
    %7224 = vmatprep.subr.mxu0 0.0
    %7225 = vmatpush2.msra.mxu0 0.0
    %7226 = vmatprep.subr.mxu0 0.0
    %7227 = vmatpush2.msra.mxu0 0.0
    %7228 = vmatprep.subr.mxu0 0.0
    %7229 = vmatpush2.msra.mxu0 0.0
    %7230 = vmatprep.subr.mxu0 0.0
    %7231 = vmatpush2.msra.mxu0 0.0
    %7232 = vmatprep.subr.mxu0 0.0
    %7233 = vmatpush2.msra.mxu0 0.0
    %7234 = vmatprep.subr.mxu0 0.0
    %7235 = vmatpush2.msra.mxu0 0.0
    %7236 = vmatprep.subr.mxu0 0.0
    %7237 = vmatpush2.msra.mxu0 0.0
    %7238 = vmatprep.subr.mxu0 0.0
    %7239 = vmatpush2.msra.mxu0 0.0
    %7240 = vmatprep.subr.mxu0 0.0
    %7241 = vmatpush2.msra.mxu0 0.0
    %7242 = vmatprep.subr.mxu0 0.0
    %7243 = vmatpush2.msra.mxu0 0.0
    %7244 = vmatprep.subr.mxu0 0.0
    %7245 = vmatpush2.msra.mxu0 0.0
    %7246 = vmatprep.subr.mxu0 0.0
    %7247 = vmatpush2.msra.mxu0 0.0
    %7248 = vmatprep.subr.mxu0 0.0
    %7249 = vmatpush2.msra.mxu0 0.0
    %7250 = vmatprep.subr.mxu0 0.0
    %7251 = vmatpush2.msra.mxu0 0.0
    %7252 = vmatprep.subr.mxu0 0.0
    %7253 = vmatpush2.msra.mxu0 0.0
    %7254 = vmatprep.subr.mxu0 0.0
    %7255 = vmatpush2.msra.mxu0 0.0
    %7256 = vmatprep.mubr.f32.mxu0 0.0
    %7257 = vmatmul.mubr.f32.gmra.mxu0 %v6839
    %v7258 = vpop.f32.mrf.mxu0
    %v7259 = vadd.f32 0.0, %v7258
    %v7260 = vpop.f32.mrf.mxu0
    %v7261 = vadd.f32 0.0, %v7260
    %7262 = vdwg.mxu0
    %v7263 = vadd.f32 %v7188, %v7259
    %v7264 = vadd.f32 %v7190, %v7261
    %v7265 = vadd.f32 %v7263, %v4677
    %v7266 = vadd.f32 %v7264, %v4681
    %v7267 = vmul.f32 %v7265, 0.5
    %v7268 = vtanh.pop %v7267
    %v7269 = vadd.f32 %v7268, 1.0
    %v7270 = vmul.f32 %v7269, 0.5
    %v7271 = vtanh.pop %v7266
    %v7272 = vmul.f32 %v7266, 0.5
    %v7273 = vtanh.pop %v7272
    %v7274 = vadd.f32 %v7273, 1.0
    %v7275 = vmul.f32 %v7274, 0.5
    %v7276 = vmul.f32 %v7270, %v6468
    %v7277 = vmul.f32 %v7270, %v7271
    %7279 = vrot.lane.b32.xlu0 %v7277, 64
    %v7280 = vpop.permute.xlu0 %7279
    %v7282 = vadd.f32 %v7276, %v7280
    %v7283 = vtanh.pop %v7282
    %v7284 = vmul.f32 %v7275, %v7283
    %v7285 = vpack.c.bf16 %v7284, %v7284
    %7287 = vrot.lane.b32.xlu0 %v7285, 64
    %v7288 = vpop.permute.xlu0 %7287
    %v7290 = vsel %vm2098, %v7288, 0
    %7292 = vmatprep.subr.bf16.mxu0 0
    %7293 = vmatpush1.bf16.msra.mxu0 0
    %7294 = vmatprep.subr.bf16.mxu0 0
    %7295 = vmatpush1.bf16.msra.mxu0 0
    %7296 = vmatprep.subr.bf16.mxu0 0
    %7297 = vmatpush1.bf16.msra.mxu0 0
    %7298 = vmatprep.subr.bf16.mxu0 0
    %7299 = vmatpush1.bf16.msra.mxu0 0
    %7300 = vmatprep.subr.bf16.mxu0 %v4830
    %7301 = vmatpush1.bf16.msra.mxu0 %v4829
    %7302 = vmatprep.subr.bf16.mxu0 %v4824
    %7303 = vmatpush1.bf16.msra.mxu0 %v4823
    %7304 = vmatprep.subr.bf16.mxu0 %v4818
    %7305 = vmatpush1.bf16.msra.mxu0 %v4817
    %7306 = vmatprep.subr.bf16.mxu0 %v4812
    %7307 = vmatpush1.bf16.msra.mxu0 %v4811
    %7308 = vmatprep.subr.bf16.mxu0 0
    %7309 = vmatpush2.bf16.msra.mxu0 0
    %7310 = vmatprep.subr.bf16.mxu0 0
    %7311 = vmatpush2.bf16.msra.mxu0 0
    %7312 = vmatprep.subr.bf16.mxu0 0
    %7313 = vmatpush2.bf16.msra.mxu0 0
    %7314 = vmatprep.subr.bf16.mxu0 0
    %7315 = vmatpush2.bf16.msra.mxu0 0
    %7316 = vmatprep.subr.bf16.mxu0 0
    %7317 = vmatpush2.bf16.msra.mxu0 0
    %7318 = vmatprep.subr.bf16.mxu0 0
    %7319 = vmatpush2.bf16.msra.mxu0 0
    %7320 = vmatprep.subr.bf16.mxu0 0
    %7321 = vmatpush2.bf16.msra.mxu0 0
    %7322 = vmatprep.subr.bf16.mxu0 0
    %7323 = vmatpush2.bf16.msra.mxu0 0
    %7324 = vmatprep.mubr.bf16.mxu0 0
    %7325 = vmatmul.mubr.bf16.gmra.mxu0 %v7290
    %v7326 = vpop.f32.mrf.mxu0
    %v7327 = vadd.f32 0.0, %v7326
    %v7328 = vpop.f32.mrf.mxu0
    %v7329 = vadd.f32 0.0, %v7328
    %v7330 = vpop.f32.mrf.mxu0
    %v7331 = vpop.f32.mrf.mxu0
    %7332 = vdwg.mxu0
    %7333 = vmatprep.subr.bf16.mxu0 0
    %7334 = vmatpush1.bf16.msra.mxu0 0
    %7335 = vmatprep.subr.bf16.mxu0 0
    %7336 = vmatpush1.bf16.msra.mxu0 0
    %7337 = vmatprep.subr.bf16.mxu0 0
    %7338 = vmatpush1.bf16.msra.mxu0 0
    %7339 = vmatprep.subr.bf16.mxu0 0
    %7340 = vmatpush1.bf16.msra.mxu0 0
    %7341 = vmatprep.subr.bf16.mxu0 %v4832
    %7342 = vmatpush1.bf16.msra.mxu0 %v4831
    %7343 = vmatprep.subr.bf16.mxu0 %v4826
    %7344 = vmatpush1.bf16.msra.mxu0 %v4825
    %7345 = vmatprep.subr.bf16.mxu0 %v4820
    %7346 = vmatpush1.bf16.msra.mxu0 %v4819
    %7347 = vmatprep.subr.bf16.mxu0 %v4814
    %7348 = vmatpush1.bf16.msra.mxu0 %v4813
    %7349 = vmatprep.subr.bf16.mxu0 0
    %7350 = vmatpush2.bf16.msra.mxu0 0
    %7351 = vmatprep.subr.bf16.mxu0 0
    %7352 = vmatpush2.bf16.msra.mxu0 0
    %7353 = vmatprep.subr.bf16.mxu0 0
    %7354 = vmatpush2.bf16.msra.mxu0 0
    %7355 = vmatprep.subr.bf16.mxu0 0
    %7356 = vmatpush2.bf16.msra.mxu0 0
    %7357 = vmatprep.subr.bf16.mxu0 0
    %7358 = vmatpush2.bf16.msra.mxu0 0
    %7359 = vmatprep.subr.bf16.mxu0 0
    %7360 = vmatpush2.bf16.msra.mxu0 0
    %7361 = vmatprep.subr.bf16.mxu0 0
    %7362 = vmatpush2.bf16.msra.mxu0 0
    %7363 = vmatprep.subr.bf16.mxu0 0
    %7364 = vmatpush2.bf16.msra.mxu0 0
    %7365 = vmatprep.mubr.bf16.mxu0 0
    %7366 = vmatmul.mubr.bf16.gmra.mxu0 %v7290
    %v7367 = vpop.f32.mrf.mxu0
    %v7368 = vadd.f32 0.0, %v7367
    %v7369 = vpop.f32.mrf.mxu0
    %v7370 = vadd.f32 0.0, %v7369
    %v7371 = vpop.f32.mrf.mxu0
    %v7372 = vpop.f32.mrf.mxu0
    %7373 = vdwg.mxu0
    %7374 = vmatprep.subr.bf16.mxu0 0
    %7375 = vmatpush1.bf16.msra.mxu0 0
    %7376 = vmatprep.subr.bf16.mxu0 0
    %7377 = vmatpush1.bf16.msra.mxu0 0
    %7378 = vmatprep.subr.bf16.mxu0 0
    %7379 = vmatpush1.bf16.msra.mxu0 0
    %7380 = vmatprep.subr.bf16.mxu0 0
    %7381 = vmatpush1.bf16.msra.mxu0 0
    %7382 = vmatprep.subr.bf16.mxu0 %v4834
    %7383 = vmatpush1.bf16.msra.mxu0 %v4833
    %7384 = vmatprep.subr.bf16.mxu0 %v4828
    %7385 = vmatpush1.bf16.msra.mxu0 %v4827
    %7386 = vmatprep.subr.bf16.mxu0 %v4822
    %7387 = vmatpush1.bf16.msra.mxu0 %v4821
    %7388 = vmatprep.subr.bf16.mxu0 %v4816
    %7389 = vmatpush1.bf16.msra.mxu0 %v4815
    %7390 = vmatprep.subr.bf16.mxu0 0
    %7391 = vmatpush2.bf16.msra.mxu0 0
    %7392 = vmatprep.subr.bf16.mxu0 0
    %7393 = vmatpush2.bf16.msra.mxu0 0
    %7394 = vmatprep.subr.bf16.mxu0 0
    %7395 = vmatpush2.bf16.msra.mxu0 0
    %7396 = vmatprep.subr.bf16.mxu0 0
    %7397 = vmatpush2.bf16.msra.mxu0 0
    %7398 = vmatprep.subr.bf16.mxu0 0
    %7399 = vmatpush2.bf16.msra.mxu0 0
    %7400 = vmatprep.subr.bf16.mxu0 0
    %7401 = vmatpush2.bf16.msra.mxu0 0
    %7402 = vmatprep.subr.bf16.mxu0 0
    %7403 = vmatpush2.bf16.msra.mxu0 0
    %7404 = vmatprep.subr.bf16.mxu0 0
    %7405 = vmatpush2.bf16.msra.mxu0 0
    %7406 = vmatprep.mubr.bf16.mxu0 0
    %7407 = vmatmul.mubr.bf16.gmra.mxu0 %v7290
    %v7408 = vpop.f32.mrf.mxu0
    %v7409 = vadd.f32 0.0, %v7408
    %v7410 = vpop.f32.mrf.mxu0
    %v7411 = vadd.f32 0.0, %v7410
    %v7412 = vpop.f32.mrf.mxu0
    %v7413 = vpop.f32.mrf.mxu0
    %7414 = vdwg.mxu0
    %v7415 = vadd.f32 %v6607, %v7327
    %v7416 = vadd.f32 %v6608, %v7329
    %v7417 = vadd.f32 %v6609, %v7368
    %v7418 = vadd.f32 %v6610, %v7370
    %v7419 = vadd.f32 %v6611, %v7409
    %v7420 = vadd.f32 %v6612, %v7411
    %v7421 = vadd.f32 %v7415, %v4709
    %v7422 = vadd.f32 %v7416, %v4713
    %v7423 = vadd.f32 %v7417, %v4717
    %v7424 = vadd.f32 %v7418, %v4721
    %v7425 = vadd.f32 %v7419, %v4725
    %v7426 = vadd.f32 %v7420, %v4729
    %v7427 = vmul.f32 %v7421, 0.5
    %v7428 = vmul.f32 %v7422, 0.5
    %v7429 = vmul.f32 %v7423, 0.5
    %v7430 = vmul.f32 %v7424, 0.5
    %v7431 = vmul.f32 %v7425, 0.5
    %v7432 = vmul.f32 %v7426, 0.5
    %v7433 = vtanh.pop %v7427
    %v7434 = vtanh.pop %v7428
    %v7435 = vtanh.pop %v7429
    %v7436 = vtanh.pop %v7430
    %v7437 = vtanh.pop %v7431
    %v7438 = vtanh.pop %v7432
    %v7439 = vadd.f32 %v7433, 1.0
    %v7440 = vadd.f32 %v7434, 1.0
    %v7441 = vadd.f32 %v7435, 1.0
    %v7442 = vadd.f32 %v7436, 1.0
    %v7443 = vadd.f32 %v7437, 1.0
    %v7444 = vadd.f32 %v7438, 1.0
    %v7445 = vmul.f32 %v7439, 0.5
    %v7446 = vmul.f32 %v7440, 0.5
    %v7447 = vmul.f32 %v7441, 0.5
    %v7448 = vmul.f32 %v7442, 0.5
    %v7449 = vmul.f32 %v7443, 0.5
    %v7450 = vmul.f32 %v7444, 0.5
    %v7457 = vcombine.low %v7445, %v7446
    %v7458 = vcombine.low %v7447, %v7448
    %v7460 = vunpack.c.l.s4 1983009808
    %v7461 = vunpack.c.0.s8 %v7460
    %v7462 = vlaneseq
    %v7463 = vshrl.u32 %v7462, 7
    %v7464 = vsub.s32 %v7461, %v7463
    %v7465 = vrot.slane %v7457, %v7464
    %v7467 = vunpack.c.l.s4 1983009808
    %v7468 = vunpack.c.0.s8 %v7467
    %v7469 = vlaneseq
    %v7470 = vshrl.u32 %v7469, 7
    %v7471 = vsub.s32 %v7468, %v7470
    %v7472 = vrot.slane %v7458, %v7471
    %v7473 = vcombine.low %v7465, %v7472
    %v7474 = vcombine.low %v7449, %v7450
    %v7476 = vunpack.c.l.s4 1983009808
    %v7477 = vunpack.c.0.s8 %v7476
    %v7478 = vlaneseq
    %v7479 = vshrl.u32 %v7478, 7
    %v7480 = vsub.s32 %v7477, %v7479
    %v7481 = vrot.slane %v7474, %v7480
    %7484 = vst [vmem:[#allocation40] sm:$0xff] %v7473
    %7485 = vst [vmem:[#allocation40 + $0x8] sm:$0xf] %v7481
    %v7486 = vsub.f32 %v2336, %v7473
    %v7487 = vsub.f32 %v2337, %v7481
    %v7488 = vmul.f32 %v7486, %v7486
    %v7489 = vmul.f32 %v7487, %v7487
    %v7492 = vcombine.high %v7488, %v7488
    %v7494 = vunpack.c.l.s4 1983009808
    %v7495 = vunpack.c.0.s8 %v7494
    %v7496 = vlaneseq
    %v7497 = vshrl.u32 %v7496, 7
    %v7498 = vsub.s32 %v7495, %v7497
    %v7499 = vrot.slane %v7488, %v7498
    %v7501 = vunpack.c.l.s4 1983009808
    %v7502 = vunpack.c.0.s8 %v7501
    %v7503 = vlaneseq
    %v7504 = vshrl.u32 %v7503, 7
    %v7505 = vsub.s32 %v7502, %v7504
    %v7506 = vrot.slane %v7492, %v7505
    %v7507 = vcombine.high %v7499, %v7499
    %v7508 = vcombine.high %v7506, %v7506
    %v7510 = vunpack.c.l.s4 1983009808
    %v7511 = vunpack.c.0.s8 %v7510
    %v7512 = vlaneseq
    %v7513 = vshrl.u32 %v7512, 7
    %v7514 = vsub.s32 %v7511, %v7513
    %v7515 = vrot.slane %v7489, %v7514
    %v7516 = vcombine.high %v7515, %v7515
    %vm7523 = vcmask 1041408
    %v7524 = vsel %vm7523, %v7499, 0.0
    %v7525 = vsel %vm7523, %v7507, 0.0
    %v7526 = vadd.f32 %v7524, %v7525
    %v7527 = vsel %vm7523, %v7506, 0.0
    %v7528 = vadd.f32 %v7526, %v7527
    %v7529 = vsel %vm7523, %v7508, 0.0
    %v7530 = vadd.f32 %v7528, %v7529
    %v7531 = vsel %vm7523, %v7515, 0.0
    %v7532 = vadd.f32 %v7530, %v7531
    %v7533 = vsel %vm7523, %v7516, 0.0
    %v7534 = vadd.f32 %v7532, %v7533
    %7535 = vadd.xlane.f32.xlu0 %v7534
    %v7536 = vpop.xlane.xlu0 %7535
    %v7537 = vmul.f32 %v7536, 1.0204082
    %v7538 = vadd.f32 %v7537, 431.81845
    %v7539 = vlaneseq
    %v7540 = vand.u32 %v7539, 127
    %vm7541 = vcmp.eq.s32.totalorder %v7540, 0
    %v7542 = vsel %vm7541, %v7117, %v7538
    %vm7543 = vcmask 9216
    %7544 = vst.msk [vmem:[%s77] sm:$0x3] %vm7543, %v7542
    // Predicated region
    $region246: #{slim_forward.1} parent=1 // pred_check
      _
    $region247: #{slim_forward.1} parent=1 // pred_check_branch
      %7546 = sbr.rel (0) target = $region249
    $region248: #{slim_forward.1} parent=1 // pred_region
      %s7548 = ssub.s32 192, 192
      %7549 = vsyncadd [#allocation4], %s7548
      %s7551 = sshll.u32 [#allocation40], 4
      %s7552 = int_to_ptr.vmem [resolvable:$true] %s7551
      %7554 = dma.vmem_to_hbm [thread:$0]  %s7552, 192, %s75, [#allocation4]
    $region249: #{slim_forward.1} parent=1 // pred_fallthru
      _
    // Predicated region
    $region250: #{slim_forward.1} parent=1 // pred_check
      _
    $region251: #{slim_forward.1} parent=1 // pred_check_branch
      %7556 = sbr.rel (0) target = $region253
    $region252: #{slim_forward.1} parent=1 // pred_region
      _
    $region253: #{slim_forward.1} parent=1 // pred_fallthru
      _
    // Predicated region
    $region254: #{slim_forward.1} parent=1 // pred_check
      _
    $region255: #{slim_forward.1} parent=1 // pred_check_branch
      %7558 = sbr.rel (0) target = $region257
    $region256: #{slim_forward.1} parent=1 // pred_region
      %7559 = dma.done [#allocation4], 192
    $region257: #{slim_forward.1} parent=1 // pred_fallthru
      _
    // Predicated region
    $region258: #{slim_forward.1} parent=1 // pred_check
      _
    $region259: #{slim_forward.1} parent=1 // pred_check_branch
      %7561 = sbr.rel (0) target = $region261
    $region260: #{slim_forward.1} parent=1 // pred_region
      _
    $region261: #{slim_forward.1} parent=1 // pred_fallthru
      _
    %7562 = vsyncpa [#allocation3], 1
    %7563 = vsyncpa [#allocation6], 1
    %7564 = vsyncpa [#allocation9], 1
    %7565 = vsyncpa [#allocation12], 1
    %7566 = vsyncpa [#allocation15], 1
    %7567 = vsyncpa [#allocation18], 1
    %7568 = vsyncpa [#allocation21], 1
    %7569 = vsyncpa [#allocation24], 1
    %7570 = vsyncpa [#allocation27], 1
    %7571 = vsyncpa [#allocation30], 1
    %7572 = vsyncpa [#allocation33], 1
    %7573 = vsyncpa [#allocation36], 1
    %7574 = vsyncpa [#allocation39], 1
    %7575 = vsyncpa [#allocation4], 1

</llo_original>
